<compile_context>
chip_gen: v6e
topology: v6e:2x2x1
jax: 0.10.0
libtpu: 0.0.40
codegen_flags: <defaults>
</compile_context>

<pallas_src>
import functools

import jax
import jax.numpy as jnp
from jax.experimental import pallas as pl
from jax.experimental.pallas import tpu as pltpu


# ----------------------------------------------------------------------------
# Fused Pallas kernels (one pallas_call per conv layer)
# ----------------------------------------------------------------------------
def _gemm_lrelu_kernel(x_ref, w_ref, o_ref):
    """[Mp,K]x[K,Cout] GEMM (bf16 in, f32 acc) + LeakyReLU(0.2)."""
    acc = jnp.dot(x_ref[...], w_ref[...], preferred_element_type=jnp.float32)
    o_ref[...] = jnp.where(acc >= 0, acc, 0.2 * acc)


def _gemm_bn_lrelu_kernel(*refs, real_m, absdiff):
    """GEMM + training-mode BatchNorm (stats over the valid M rows) + LeakyReLU.

    If absdiff=True the kernel takes two patch matrices and contracts
    |p1 - p2| (fuses the torch.abs(out1 - out2) step into the head conv).
    Padded patch rows are exact zeros, so sum / sum-of-squares over the full
    block divided by the *true* row count give exact batch statistics.
    """
    if absdiff:
        p1_ref, p2_ref, w_ref, g_ref, b_ref, o_ref = refs
        x = jnp.abs(p1_ref[...] - p2_ref[...]).astype(w_ref.dtype)
    else:
        x_ref, w_ref, g_ref, b_ref, o_ref = refs
        x = x_ref[...]
    acc = jnp.dot(x, w_ref[...], preferred_element_type=jnp.float32)   # [Mp, Cout] f32
    inv_m = 1.0 / real_m
    s = jnp.sum(acc, axis=0, keepdims=True)
    sq = jnp.sum(acc * acc, axis=0, keepdims=True)
    mean = s * inv_m
    var = sq * inv_m - mean * mean                  # biased variance (train-mode BN)
    scale = g_ref[...] * jax.lax.rsqrt(var + 1e-5)
    shift = b_ref[...] - mean * scale
    y = acc * scale + shift
    o_ref[...] = jnp.where(y >= 0, y, 0.2 * y)


def _gemm_bias_sigmoid_kernel(x_ref, w_ref, b_ref, o_ref):
    """Final 512->1 conv: GEMM + scalar bias (SMEM) + sigmoid."""
    acc = jnp.dot(x_ref[...], w_ref[...], preferred_element_type=jnp.float32)
    o_ref[...] = jax.nn.sigmoid(acc + b_ref[0])


# ----------------------------------------------------------------------------
# Glue: im2col (stride 1), layer wrappers, parameter init
# ----------------------------------------------------------------------------
def _round_up(m, mult=8):
    return -(-m // mult) * mult


def im2col(x, k, pad):
    """NHWC -> patch matrix [N*Ho*Wo, k*k*C] (kernel-position major, channel fastest).

    A PyTorch conv weight [Cout, Cin, kh, kw] maps to this layout via
    transpose(2, 3, 1, 0).reshape(kh*kw*Cin, Cout).
    """
    N, H, W, C = x.shape
    xp = jnp.pad(x, ((0, 0), (pad, pad), (pad, pad), (0, 0))) if pad else x
    Ho = H + 2 * pad - k + 1
    Wo = W + 2 * pad - k + 1
    cols = [xp[:, i:i + Ho, j:j + Wo, :] for i in range(k) for j in range(k)]
    patches = jnp.stack(cols, axis=3)                     # N, Ho, Wo, k*k, C
    return patches.reshape(N * Ho * Wo, k * k * C), (N, Ho, Wo)


def _prep_patches(patches, dtype=jnp.bfloat16):
    """Cast to the MXU dtype and pad M up to a sublane multiple (zeros)."""
    M, K = patches.shape
    Mp = _round_up(M)
    p = patches.astype(dtype)
    if Mp != M:
        p = jnp.pad(p, ((0, Mp - M), (0, 0)))
    return p, M, Mp, K


def conv_lrelu(x, w, k, pad):
    """conv1: Conv(bias=False) + LeakyReLU fused."""
    patches, (N, Ho, Wo) = im2col(x, k, pad)
    p, M, Mp, K = _prep_patches(patches)
    Cout = w.shape[1]
    y = pl.pallas_call(
        _gemm_lrelu_kernel,
        out_shape=jax.ShapeDtypeStruct((Mp, Cout), jnp.float32),
        grid=(1,),
        in_specs=[pl.BlockSpec((Mp, K), lambda i: (0, 0)),
                  pl.BlockSpec((K, Cout), lambda i: (0, 0))],
        out_specs=pl.BlockSpec((Mp, Cout), lambda i: (0, 0)),
    )(p, w)
    return y[:M].reshape(N, Ho, Wo, Cout)


def conv_bn_lrelu(x, w, gamma, beta, k, pad):
    """conv2 / conv3: Conv(bias=False) + BatchNorm(train stats) + LeakyReLU fused."""
    patches, (N, Ho, Wo) = im2col(x, k, pad)
    p, M, Mp, K = _prep_patches(patches)
    Cout = w.shape[1]
    y = pl.pallas_call(
        functools.partial(_gemm_bn_lrelu_kernel, real_m=float(M), absdiff=False),
        out_shape=jax.ShapeDtypeStruct((Mp, Cout), jnp.float32),
        grid=(1,),
        in_specs=[pl.BlockSpec((Mp, K), lambda i: (0, 0)),
                  pl.BlockSpec((K, Cout), lambda i: (0, 0)),
                  pl.BlockSpec((1, Cout), lambda i: (0, 0)),
                  pl.BlockSpec((1, Cout), lambda i: (0, 0))],
        out_specs=pl.BlockSpec((Mp, Cout), lambda i: (0, 0)),
    )(p, w, gamma.reshape(1, Cout), beta.reshape(1, Cout))
    return y[:M].reshape(N, Ho, Wo, Cout)


def absdiff_conv_bn_lrelu(a, b, w, gamma, beta, k):
    """|a - b| -> Conv(256->512, k=4) -> BatchNorm -> LeakyReLU, all in one kernel.

    (The conv bias of out[0] is mathematically cancelled by the train-mode BN.)
    """
    p1, (N, Ho, Wo) = im2col(a, k, 0)
    p2, _ = im2col(b, k, 0)
    p1, M, Mp, K = _prep_patches(p1, dtype=jnp.float32)   # abs-diff done in f32
    p2, _, _, _ = _prep_patches(p2, dtype=jnp.float32)
    Cout = w.shape[1]
    y = pl.pallas_call(
        functools.partial(_gemm_bn_lrelu_kernel, real_m=float(M), absdiff=True),
        out_shape=jax.ShapeDtypeStruct((Mp, Cout), jnp.float32),
        grid=(1,),
        in_specs=[pl.BlockSpec((Mp, K), lambda i: (0, 0)),
                  pl.BlockSpec((Mp, K), lambda i: (0, 0)),
                  pl.BlockSpec((K, Cout), lambda i: (0, 0)),
                  pl.BlockSpec((1, Cout), lambda i: (0, 0)),
                  pl.BlockSpec((1, Cout), lambda i: (0, 0))],
        out_specs=pl.BlockSpec((Mp, Cout), lambda i: (0, 0)),
    )(p1, p2, w, gamma.reshape(1, Cout), beta.reshape(1, Cout))
    return y[:M].reshape(N, Ho, Wo, Cout)


def conv_bias_sigmoid(x, w, bias, k):
    """Final Conv(512->1, k=2, bias=True) + sigmoid fused; bias lives in SMEM."""
    patches, (N, Ho, Wo) = im2col(x, k, 0)
    p, M, Mp, K = _prep_patches(patches)
    y = pl.pallas_call(
        _gemm_bias_sigmoid_kernel,
        out_shape=jax.ShapeDtypeStruct((Mp, 1), jnp.float32),
        grid=(1,),
        in_specs=[pl.BlockSpec((Mp, K), lambda i: (0, 0)),
                  pl.BlockSpec((K, 1), lambda i: (0, 0)),
                  pl.BlockSpec(memory_space=pltpu.MemorySpace.SMEM)],
        out_specs=pl.BlockSpec((Mp, 1), lambda i: (0, 0)),
    )(p, w, bias)
    return y[:M].reshape(N, Ho, Wo, 1)


def make_params(key):
    """Matches init_weights: conv W ~ N(0, 0.02); BN gamma ~ N(1, 0.02), beta = 0.
    Conv weights stored as [kh*kw*Cin, Cout] bf16 (MXU dtype)."""
    ndf = 64
    ks = jax.random.split(key, 9)

    def conv_w(k, kh, cin, cout):
        w = 0.02 * jax.random.normal(k, (kh * kh * cin, cout), jnp.float32)
        return w.astype(jnp.bfloat16)

    p = {
        "conv1_w": conv_w(ks[0], 2, 256, ndf),           # Conv2d(256, 64, 2, pad=1)
        "conv2_w": conv_w(ks[1], 3, ndf, ndf * 2),       # Conv2d(64, 128, 3, pad=1)
        "conv3_w": conv_w(ks[2], 3, ndf * 2, ndf * 4),   # Conv2d(128, 256, 3, pad=1)
        "out0_w": conv_w(ks[3], 4, ndf * 4, ndf * 8),    # Conv2d(256, 512, 4)
        "out3_w": conv_w(ks[4], 2, ndf * 8, 1),          # Conv2d(512, 1, 2, bias=True)
        "bn1_g": 1.0 + 0.02 * jax.random.normal(ks[5], (ndf * 2,), jnp.float32),
        "bn1_b": jnp.zeros((ndf * 2,), jnp.float32),
        "bn2_g": 1.0 + 0.02 * jax.random.normal(ks[6], (ndf * 4,), jnp.float32),
        "bn2_b": jnp.zeros((ndf * 4,), jnp.float32),
        "out0_bn_g": 1.0 + 0.02 * jax.random.normal(ks[7], (ndf * 8,), jnp.float32),
        "out0_bn_b": jnp.zeros((ndf * 8,), jnp.float32),
    }
    # out[3] keeps PyTorch's default bias init U(-1/sqrt(fan_in), 1/sqrt(fan_in)).
    fan_in = 2 * 2 * ndf * 8
    bound = 1.0 / (fan_in ** 0.5)
    p["out3_b"] = jax.random.uniform(ks[8], (1,), jnp.float32, -bound, bound)
    return p


def forward_one(x_nhwc, params):
    h = conv_lrelu(x_nhwc, params["conv1_w"], k=2, pad=1)                       # (N,H+1,W+1,64)
    h = conv_bn_lrelu(h, params["conv2_w"], params["bn1_g"], params["bn1_b"], 3, 1)
    h = conv_bn_lrelu(h, params["conv3_w"], params["bn2_g"], params["bn2_b"], 3, 1)
    return h                                                                    # (N,H+1,W+1,256)


@jax.jit
def discriminator_forward(x1_nchw, x2_nchw, params):
    a = forward_one(jnp.transpose(x1_nchw, (0, 2, 3, 1)), params)
    b = forward_one(jnp.transpose(x2_nchw, (0, 2, 3, 1)), params)
    # |a - b| fused into the head conv kernel.
    h = absdiff_conv_bn_lrelu(a, b, params["out0_w"],
                              params["out0_bn_g"], params["out0_bn_b"], k=4)
    h = conv_bias_sigmoid(h, params["out3_w"], params["out3_b"], k=2)           # sigmoid in-kernel
    out = jnp.transpose(h, (0, 3, 1, 2))                                        # NHWC -> NCHW
    out = jnp.squeeze(jnp.squeeze(out, axis=1), axis=1)                         # matches torch.squeeze x2
    return out


if __name__ == "__main__":
    key = jax.random.PRNGKey(0)
    k1, k2, kp = jax.random.split(key, 3)
    # in_channels is fixed to 256 by the module; small 4x4 feature maps:
    #   4x4 -> conv1(k2,p1) 5x5 -> conv2/3(k3,p1) 5x5 -> out conv(k4) 2x2 -> conv(k2) 1x1.
    batch, cin, hw = 2, 256, 4
    x1 = jax.random.normal(k1, (batch, cin, hw, hw), dtype=jnp.float32)
    x2 = jax.random.normal(k2, (batch, cin, hw, hw), dtype=jnp.float32)
    params = make_params(kp)

    out = jax.block_until_ready(discriminator_forward(x1, x2, params))

    assert out.shape == (batch, 1), out.shape
    assert bool(jnp.all(jnp.isfinite(out)))
    assert bool(jnp.all((out >= 0.0) & (out <= 1.0)))
    print("KERNEL_OK")
</pallas_src>

<mosaic_0001>
module attributes {stable_mosaic.version = 11 : i64} {
  func.func @_gemm_lrelu_kernel(%arg0: i32, %arg1: memref<56x1024xbf16, #tpu.memory_space<vmem>>, %arg2: memref<1024x64xbf16, #tpu.memory_space<vmem>>, %arg3: memref<56x64xf32, #tpu.memory_space<vmem>>) attributes {dimension_semantics = [#tpu.dimension_semantics<arbitrary>], iteration_bounds = array<i64: 1>, scalar_prefetch = 0 : i64, scratch_operands = 0 : i64, tpu.core_type = #tpu.core_type<tc>, window_params = [{pipeline_mode = #tpu.pipeline_mode<synchronous>, transform_indices = @transform_0, window_bounds = array<i64: 56, 1024>}, {pipeline_mode = #tpu.pipeline_mode<synchronous>, transform_indices = @transform_1, window_bounds = array<i64: 1024, 64>}, {pipeline_mode = #tpu.pipeline_mode<synchronous>, transform_indices = @transform_2, window_bounds = array<i64: 56, 64>}]} {
    %c0 = arith.constant 0 : index
    %c0_0 = arith.constant 0 : index
    %0 = vector.load %arg1[%c0, %c0_0] : memref<56x1024xbf16, #tpu.memory_space<vmem>>, vector<56x1024xbf16>
    %c0_1 = arith.constant 0 : index
    %c0_2 = arith.constant 0 : index
    %1 = vector.load %arg2[%c0_1, %c0_2] : memref<1024x64xbf16, #tpu.memory_space<vmem>>, vector<1024x64xbf16>
    %cst = arith.constant dense<0.000000e+00> : vector<56x64xf32>
    %2 = tpu.matmul %0, %1, %cst {dimension_numbers = #tpu.dot_dimension_numbers<[1], [0], [0], [1], [0, 0, 1, 1], [], []>} : vector<56x1024xbf16>, vector<1024x64xbf16>, vector<56x64xf32> -> vector<56x64xf32>
    %cst_3 = arith.constant 0.000000e+00 : f32
    %3 = vector.broadcast %cst_3 : f32 to vector<56x64xf32>
    %4 = arith.cmpf oge, %2, %3 : vector<56x64xf32>
    %cst_4 = arith.constant 2.000000e-01 : f32
    %5 = vector.broadcast %cst_4 : f32 to vector<56x64xf32>
    %6 = arith.mulf %5, %2 : vector<56x64xf32>
    %7 = arith.select %4, %2, %6 : vector<56x64xi1>, vector<56x64xf32>
    %c0_5 = arith.constant 0 : index
    %c0_6 = arith.constant 0 : index
    %8 = vector.load %arg3[%c0_5, %c0_6] : memref<56x64xf32, #tpu.memory_space<vmem>>, vector<56x64xf32>
    tpu.vector_store %arg3[%c0_5, %c0_6], %7 {strides = array<i32>} : memref<56x64xf32, #tpu.memory_space<vmem>>, vector<56x64xf32>,
    return
  }
  func.func @transform_0(%arg0: i32) -> (i32, i32) {
    %c0_i32 = arith.constant 0 : i32
    %c0_i32_0 = arith.constant 0 : i32
    %c0_i32_1 = arith.constant 0 : i32
    return %c0_i32, %c0_i32_0 : i32, i32
  }
  func.func @transform_1(%arg0: i32) -> (i32, i32) {
    %c0_i32 = arith.constant 0 : i32
    %c0_i32_0 = arith.constant 0 : i32
    %c0_i32_1 = arith.constant 0 : i32
    return %c0_i32, %c0_i32_0 : i32, i32
  }
  func.func @transform_2(%arg0: i32) -> (i32, i32) {
    %c0_i32 = arith.constant 0 : i32
    %c0_i32_0 = arith.constant 0 : i32
    %c0_i32_1 = arith.constant 0 : i32
    return %c0_i32, %c0_i32_0 : i32, i32
  }
}

module attributes {stable_mosaic.version = 11 : i64} {
  func.func @_gemm_bn_lrelu_kernel(%arg0: i32, %arg1: memref<56x576xbf16, #tpu.memory_space<vmem>>, %arg2: memref<576x128xbf16, #tpu.memory_space<vmem>>, %arg3: memref<1x128xf32, #tpu.memory_space<vmem>>, %arg4: memref<1x128xf32, #tpu.memory_space<vmem>>, %arg5: memref<56x128xf32, #tpu.memory_space<vmem>>) attributes {dimension_semantics = [#tpu.dimension_semantics<arbitrary>], iteration_bounds = array<i64: 1>, scalar_prefetch = 0 : i64, scratch_operands = 0 : i64, tpu.core_type = #tpu.core_type<tc>, window_params = [{pipeline_mode = #tpu.pipeline_mode<synchronous>, transform_indices = @transform_0, window_bounds = array<i64: 56, 576>}, {pipeline_mode = #tpu.pipeline_mode<synchronous>, transform_indices = @transform_1, window_bounds = array<i64: 576, 128>}, {pipeline_mode = #tpu.pipeline_mode<synchronous>, transform_indices = @transform_2, window_bounds = array<i64: 1, 128>}, {pipeline_mode = #tpu.pipeline_mode<synchronous>, transform_indices = @transform_3, window_bounds = array<i64: 1, 128>}, {pipeline_mode = #tpu.pipeline_mode<synchronous>, transform_indices = @transform_4, window_bounds = array<i64: 56, 128>}]} {
    %c0 = arith.constant 0 : index
    %c0_0 = arith.constant 0 : index
    %0 = vector.load %arg1[%c0, %c0_0] : memref<56x576xbf16, #tpu.memory_space<vmem>>, vector<56x576xbf16>
    %c0_1 = arith.constant 0 : index
    %c0_2 = arith.constant 0 : index
    %1 = vector.load %arg2[%c0_1, %c0_2] : memref<576x128xbf16, #tpu.memory_space<vmem>>, vector<576x128xbf16>
    %cst = arith.constant dense<0.000000e+00> : vector<56x128xf32>
    %2 = tpu.matmul %0, %1, %cst {dimension_numbers = #tpu.dot_dimension_numbers<[1], [0], [0], [1], [0, 0, 1, 1], [], []>} : vector<56x576xbf16>, vector<576x128xbf16>, vector<56x128xf32> -> vector<56x128xf32>
    %cst_3 = arith.constant dense<0.000000e+00> : vector<128xf32>
    %3 = vector.multi_reduction <add>, %2, %cst_3 [0] : vector<56x128xf32> to vector<128xf32>
    %4 = vector.shape_cast %3 : vector<128xf32> to vector<1x128xf32>
    %5 = arith.mulf %2, %2 : vector<56x128xf32>
    %cst_4 = arith.constant dense<0.000000e+00> : vector<128xf32>
    %6 = vector.multi_reduction <add>, %5, %cst_4 [0] : vector<56x128xf32> to vector<128xf32>
    %7 = vector.shape_cast %6 : vector<128xf32> to vector<1x128xf32>
    %cst_5 = arith.constant 2.000000e-02 : f32
    %8 = vector.broadcast %cst_5 : f32 to vector<1x128xf32>
    %9 = arith.mulf %4, %8 : vector<1x128xf32>
    %cst_6 = arith.constant 2.000000e-02 : f32
    %10 = vector.broadcast %cst_6 : f32 to vector<1x128xf32>
    %11 = arith.mulf %7, %10 : vector<1x128xf32>
    %12 = arith.mulf %9, %9 : vector<1x128xf32>
    %13 = arith.subf %11, %12 : vector<1x128xf32>
    %c0_7 = arith.constant 0 : index
    %c0_8 = arith.constant 0 : index
    %14 = vector.load %arg3[%c0_7, %c0_8] : memref<1x128xf32, #tpu.memory_space<vmem>>, vector<1x128xf32>
    %cst_9 = arith.constant 9.99999974E-6 : f32
    %15 = vector.broadcast %cst_9 : f32 to vector<1x128xf32>
    %16 = arith.addf %13, %15 : vector<1x128xf32>
    %17 = math.rsqrt %16 : vector<1x128xf32>
    %18 = arith.mulf %14, %17 : vector<1x128xf32>
    %c0_10 = arith.constant 0 : index
    %c0_11 = arith.constant 0 : index
    %19 = vector.load %arg4[%c0_10, %c0_11] : memref<1x128xf32, #tpu.memory_space<vmem>>, vector<1x128xf32>
    %20 = arith.mulf %9, %18 : vector<1x128xf32>
    %21 = arith.subf %19, %20 : vector<1x128xf32>
    %22 = vector.broadcast %18 : vector<1x128xf32> to vector<56x128xf32>
    %23 = arith.mulf %2, %22 : vector<56x128xf32>
    %24 = vector.broadcast %21 : vector<1x128xf32> to vector<56x128xf32>
    %25 = arith.addf %23, %24 : vector<56x128xf32>
    %cst_12 = arith.constant 0.000000e+00 : f32
    %26 = vector.broadcast %cst_12 : f32 to vector<56x128xf32>
    %27 = arith.cmpf oge, %25, %26 : vector<56x128xf32>
    %cst_13 = arith.constant 2.000000e-01 : f32
    %28 = vector.broadcast %cst_13 : f32 to vector<56x128xf32>
    %29 = arith.mulf %28, %25 : vector<56x128xf32>
    %30 = arith.select %27, %25, %29 : vector<56x128xi1>, vector<56x128xf32>
    %c0_14 = arith.constant 0 : index
    %c0_15 = arith.constant 0 : index
    %31 = vector.load %arg5[%c0_14, %c0_15] : memref<56x128xf32, #tpu.memory_space<vmem>>, vector<56x128xf32>
    tpu.vector_store %arg5[%c0_14, %c0_15], %30 {strides = array<i32>} : memref<56x128xf32, #tpu.memory_space<vmem>>, vector<56x128xf32>,
    return
  }
  func.func @transform_0(%arg0: i32) -> (i32, i32) {
    %c0_i32 = arith.constant 0 : i32
    %c0_i32_0 = arith.constant 0 : i32
    %c0_i32_1 = arith.constant 0 : i32
    return %c0_i32, %c0_i32_0 : i32, i32
  }
  func.func @transform_1(%arg0: i32) -> (i32, i32) {
    %c0_i32 = arith.constant 0 : i32
    %c0_i32_0 = arith.constant 0 : i32
    %c0_i32_1 = arith.constant 0 : i32
    return %c0_i32, %c0_i32_0 : i32, i32
  }
  func.func @transform_2(%arg0: i32) -> (i32, i32) {
    %c0_i32 = arith.constant 0 : i32
    %c0_i32_0 = arith.constant 0 : i32
    %c0_i32_1 = arith.constant 0 : i32
    return %c0_i32, %c0_i32_0 : i32, i32
  }
  func.func @transform_3(%arg0: i32) -> (i32, i32) {
    %c0_i32 = arith.constant 0 : i32
    %c0_i32_0 = arith.constant 0 : i32
    %c0_i32_1 = arith.constant 0 : i32
    return %c0_i32, %c0_i32_0 : i32, i32
  }
  func.func @transform_4(%arg0: i32) -> (i32, i32) {
    %c0_i32 = arith.constant 0 : i32
    %c0_i32_0 = arith.constant 0 : i32
    %c0_i32_1 = arith.constant 0 : i32
    return %c0_i32, %c0_i32_0 : i32, i32
  }
}

module attributes {stable_mosaic.version = 11 : i64} {
  func.func @_gemm_bn_lrelu_kernel(%arg0: i32, %arg1: memref<56x1152xbf16, #tpu.memory_space<vmem>>, %arg2: memref<1152x256xbf16, #tpu.memory_space<vmem>>, %arg3: memref<1x256xf32, #tpu.memory_space<vmem>>, %arg4: memref<1x256xf32, #tpu.memory_space<vmem>>, %arg5: memref<56x256xf32, #tpu.memory_space<vmem>>) attributes {dimension_semantics = [#tpu.dimension_semantics<arbitrary>], iteration_bounds = array<i64: 1>, scalar_prefetch = 0 : i64, scratch_operands = 0 : i64, tpu.core_type = #tpu.core_type<tc>, window_params = [{pipeline_mode = #tpu.pipeline_mode<synchronous>, transform_indices = @transform_0, window_bounds = array<i64: 56, 1152>}, {pipeline_mode = #tpu.pipeline_mode<synchronous>, transform_indices = @transform_1, window_bounds = array<i64: 1152, 256>}, {pipeline_mode = #tpu.pipeline_mode<synchronous>, transform_indices = @transform_2, window_bounds = array<i64: 1, 256>}, {pipeline_mode = #tpu.pipeline_mode<synchronous>, transform_indices = @transform_3, window_bounds = array<i64: 1, 256>}, {pipeline_mode = #tpu.pipeline_mode<synchronous>, transform_indices = @transform_4, window_bounds = array<i64: 56, 256>}]} {
    %c0 = arith.constant 0 : index
    %c0_0 = arith.constant 0 : index
    %0 = vector.load %arg1[%c0, %c0_0] : memref<56x1152xbf16, #tpu.memory_space<vmem>>, vector<56x1152xbf16>
    %c0_1 = arith.constant 0 : index
    %c0_2 = arith.constant 0 : index
    %1 = vector.load %arg2[%c0_1, %c0_2] : memref<1152x256xbf16, #tpu.memory_space<vmem>>, vector<1152x256xbf16>
    %cst = arith.constant dense<0.000000e+00> : vector<56x256xf32>
    %2 = tpu.matmul %0, %1, %cst {dimension_numbers = #tpu.dot_dimension_numbers<[1], [0], [0], [1], [0, 0, 1, 1], [], []>} : vector<56x1152xbf16>, vector<1152x256xbf16>, vector<56x256xf32> -> vector<56x256xf32>
    %cst_3 = arith.constant dense<0.000000e+00> : vector<256xf32>
    %3 = vector.multi_reduction <add>, %2, %cst_3 [0] : vector<56x256xf32> to vector<256xf32>
    %4 = vector.shape_cast %3 : vector<256xf32> to vector<1x256xf32>
    %5 = arith.mulf %2, %2 : vector<56x256xf32>
    %cst_4 = arith.constant dense<0.000000e+00> : vector<256xf32>
    %6 = vector.multi_reduction <add>, %5, %cst_4 [0] : vector<56x256xf32> to vector<256xf32>
    %7 = vector.shape_cast %6 : vector<256xf32> to vector<1x256xf32>
    %cst_5 = arith.constant 2.000000e-02 : f32
    %8 = vector.broadcast %cst_5 : f32 to vector<1x256xf32>
    %9 = arith.mulf %4, %8 : vector<1x256xf32>
    %cst_6 = arith.constant 2.000000e-02 : f32
    %10 = vector.broadcast %cst_6 : f32 to vector<1x256xf32>
    %11 = arith.mulf %7, %10 : vector<1x256xf32>
    %12 = arith.mulf %9, %9 : vector<1x256xf32>
    %13 = arith.subf %11, %12 : vector<1x256xf32>
    %c0_7 = arith.constant 0 : index
    %c0_8 = arith.constant 0 : index
    %14 = vector.load %arg3[%c0_7, %c0_8] : memref<1x256xf32, #tpu.memory_space<vmem>>, vector<1x256xf32>
    %cst_9 = arith.constant 9.99999974E-6 : f32
    %15 = vector.broadcast %cst_9 : f32 to vector<1x256xf32>
    %16 = arith.addf %13, %15 : vector<1x256xf32>
    %17 = math.rsqrt %16 : vector<1x256xf32>
    %18 = arith.mulf %14, %17 : vector<1x256xf32>
    %c0_10 = arith.constant 0 : index
    %c0_11 = arith.constant 0 : index
    %19 = vector.load %arg4[%c0_10, %c0_11] : memref<1x256xf32, #tpu.memory_space<vmem>>, vector<1x256xf32>
    %20 = arith.mulf %9, %18 : vector<1x256xf32>
    %21 = arith.subf %19, %20 : vector<1x256xf32>
    %22 = vector.broadcast %18 : vector<1x256xf32> to vector<56x256xf32>
    %23 = arith.mulf %2, %22 : vector<56x256xf32>
    %24 = vector.broadcast %21 : vector<1x256xf32> to vector<56x256xf32>
    %25 = arith.addf %23, %24 : vector<56x256xf32>
    %cst_12 = arith.constant 0.000000e+00 : f32
    %26 = vector.broadcast %cst_12 : f32 to vector<56x256xf32>
    %27 = arith.cmpf oge, %25, %26 : vector<56x256xf32>
    %cst_13 = arith.constant 2.000000e-01 : f32
    %28 = vector.broadcast %cst_13 : f32 to vector<56x256xf32>
    %29 = arith.mulf %28, %25 : vector<56x256xf32>
    %30 = arith.select %27, %25, %29 : vector<56x256xi1>, vector<56x256xf32>
    %c0_14 = arith.constant 0 : index
    %c0_15 = arith.constant 0 : index
    %31 = vector.load %arg5[%c0_14, %c0_15] : memref<56x256xf32, #tpu.memory_space<vmem>>, vector<56x256xf32>
    tpu.vector_store %arg5[%c0_14, %c0_15], %30 {strides = array<i32>} : memref<56x256xf32, #tpu.memory_space<vmem>>, vector<56x256xf32>,
    return
  }
  func.func @transform_0(%arg0: i32) -> (i32, i32) {
    %c0_i32 = arith.constant 0 : i32
    %c0_i32_0 = arith.constant 0 : i32
    %c0_i32_1 = arith.constant 0 : i32
    return %c0_i32, %c0_i32_0 : i32, i32
  }
  func.func @transform_1(%arg0: i32) -> (i32, i32) {
    %c0_i32 = arith.constant 0 : i32
    %c0_i32_0 = arith.constant 0 : i32
    %c0_i32_1 = arith.constant 0 : i32
    return %c0_i32, %c0_i32_0 : i32, i32
  }
  func.func @transform_2(%arg0: i32) -> (i32, i32) {
    %c0_i32 = arith.constant 0 : i32
    %c0_i32_0 = arith.constant 0 : i32
    %c0_i32_1 = arith.constant 0 : i32
    return %c0_i32, %c0_i32_0 : i32, i32
  }
  func.func @transform_3(%arg0: i32) -> (i32, i32) {
    %c0_i32 = arith.constant 0 : i32
    %c0_i32_0 = arith.constant 0 : i32
    %c0_i32_1 = arith.constant 0 : i32
    return %c0_i32, %c0_i32_0 : i32, i32
  }
  func.func @transform_4(%arg0: i32) -> (i32, i32) {
    %c0_i32 = arith.constant 0 : i32
    %c0_i32_0 = arith.constant 0 : i32
    %c0_i32_1 = arith.constant 0 : i32
    return %c0_i32, %c0_i32_0 : i32, i32
  }
}

module attributes {stable_mosaic.version = 11 : i64} {
  func.func @_gemm_bn_lrelu_kernel(%arg0: i32, %arg1: memref<8x4096xf32, #tpu.memory_space<vmem>>, %arg2: memref<8x4096xf32, #tpu.memory_space<vmem>>, %arg3: memref<4096x512xbf16, #tpu.memory_space<vmem>>, %arg4: memref<1x512xf32, #tpu.memory_space<vmem>>, %arg5: memref<1x512xf32, #tpu.memory_space<vmem>>, %arg6: memref<8x512xf32, #tpu.memory_space<vmem>>) attributes {dimension_semantics = [#tpu.dimension_semantics<arbitrary>], iteration_bounds = array<i64: 1>, scalar_prefetch = 0 : i64, scratch_operands = 0 : i64, tpu.core_type = #tpu.core_type<tc>, window_params = [{pipeline_mode = #tpu.pipeline_mode<synchronous>, transform_indices = @transform_0, window_bounds = array<i64: 8, 4096>}, {pipeline_mode = #tpu.pipeline_mode<synchronous>, transform_indices = @transform_1, window_bounds = array<i64: 8, 4096>}, {pipeline_mode = #tpu.pipeline_mode<synchronous>, transform_indices = @transform_2, window_bounds = array<i64: 4096, 512>}, {pipeline_mode = #tpu.pipeline_mode<synchronous>, transform_indices = @transform_3, window_bounds = array<i64: 1, 512>}, {pipeline_mode = #tpu.pipeline_mode<synchronous>, transform_indices = @transform_4, window_bounds = array<i64: 1, 512>}, {pipeline_mode = #tpu.pipeline_mode<synchronous>, transform_indices = @transform_5, window_bounds = array<i64: 8, 512>}]} {
    %c0 = arith.constant 0 : index
    %c0_0 = arith.constant 0 : index
    %0 = vector.load %arg1[%c0, %c0_0] : memref<8x4096xf32, #tpu.memory_space<vmem>>, vector<8x4096xf32>
    %c0_1 = arith.constant 0 : index
    %c0_2 = arith.constant 0 : index
    %1 = vector.load %arg2[%c0_1, %c0_2] : memref<8x4096xf32, #tpu.memory_space<vmem>>, vector<8x4096xf32>
    %2 = arith.subf %0, %1 : vector<8x4096xf32>
    %3 = math.absf %2 : vector<8x4096xf32>
    %4 = arith.truncf %3 : vector<8x4096xf32> to vector<8x4096xbf16>
    %c0_3 = arith.constant 0 : index
    %c0_4 = arith.constant 0 : index
    %5 = vector.load %arg3[%c0_3, %c0_4] : memref<4096x512xbf16, #tpu.memory_space<vmem>>, vector<4096x512xbf16>
    %cst = arith.constant dense<0.000000e+00> : vector<8x512xf32>
    %6 = tpu.matmul %4, %5, %cst {dimension_numbers = #tpu.dot_dimension_numbers<[1], [0], [0], [1], [0, 0, 1, 1], [], []>} : vector<8x4096xbf16>, vector<4096x512xbf16>, vector<8x512xf32> -> vector<8x512xf32>
    %cst_5 = arith.constant dense<0.000000e+00> : vector<512xf32>
    %7 = vector.multi_reduction <add>, %6, %cst_5 [0] : vector<8x512xf32> to vector<512xf32>
    %8 = vector.shape_cast %7 : vector<512xf32> to vector<1x512xf32>
    %9 = arith.mulf %6, %6 : vector<8x512xf32>
    %cst_6 = arith.constant dense<0.000000e+00> : vector<512xf32>
    %10 = vector.multi_reduction <add>, %9, %cst_6 [0] : vector<8x512xf32> to vector<512xf32>
    %11 = vector.shape_cast %10 : vector<512xf32> to vector<1x512xf32>
    %cst_7 = arith.constant 1.250000e-01 : f32
    %12 = vector.broadcast %cst_7 : f32 to vector<1x512xf32>
    %13 = arith.mulf %8, %12 : vector<1x512xf32>
    %cst_8 = arith.constant 1.250000e-01 : f32
    %14 = vector.broadcast %cst_8 : f32 to vector<1x512xf32>
    %15 = arith.mulf %11, %14 : vector<1x512xf32>
    %16 = arith.mulf %13, %13 : vector<1x512xf32>
    %17 = arith.subf %15, %16 : vector<1x512xf32>
    %c0_9 = arith.constant 0 : index
    %c0_10 = arith.constant 0 : index
    %18 = vector.load %arg4[%c0_9, %c0_10] : memref<1x512xf32, #tpu.memory_space<vmem>>, vector<1x512xf32>
    %cst_11 = arith.constant 9.99999974E-6 : f32
    %19 = vector.broadcast %cst_11 : f32 to vector<1x512xf32>
    %20 = arith.addf %17, %19 : vector<1x512xf32>
    %21 = math.rsqrt %20 : vector<1x512xf32>
    %22 = arith.mulf %18, %21 : vector<1x512xf32>
    %c0_12 = arith.constant 0 : index
    %c0_13 = arith.constant 0 : index
    %23 = vector.load %arg5[%c0_12, %c0_13] : memref<1x512xf32, #tpu.memory_space<vmem>>, vector<1x512xf32>
    %24 = arith.mulf %13, %22 : vector<1x512xf32>
    %25 = arith.subf %23, %24 : vector<1x512xf32>
    %26 = vector.broadcast %22 : vector<1x512xf32> to vector<8x512xf32>
    %27 = arith.mulf %6, %26 : vector<8x512xf32>
    %28 = vector.broadcast %25 : vector<1x512xf32> to vector<8x512xf32>
    %29 = arith.addf %27, %28 : vector<8x512xf32>
    %cst_14 = arith.constant 0.000000e+00 : f32
    %30 = vector.broadcast %cst_14 : f32 to vector<8x512xf32>
    %31 = arith.cmpf oge, %29, %30 : vector<8x512xf32>
    %cst_15 = arith.constant 2.000000e-01 : f32
    %32 = vector.broadcast %cst_15 : f32 to vector<8x512xf32>
    %33 = arith.mulf %32, %29 : vector<8x512xf32>
    %34 = arith.select %31, %29, %33 : vector<8x512xi1>, vector<8x512xf32>
    %c0_16 = arith.constant 0 : index
    %c0_17 = arith.constant 0 : index
    %35 = vector.load %arg6[%c0_16, %c0_17] : memref<8x512xf32, #tpu.memory_space<vmem>>, vector<8x512xf32>
    tpu.vector_store %arg6[%c0_16, %c0_17], %34 {strides = array<i32>} : memref<8x512xf32, #tpu.memory_space<vmem>>, vector<8x512xf32>,
    return
  }
  func.func @transform_0(%arg0: i32) -> (i32, i32) {
    %c0_i32 = arith.constant 0 : i32
    %c0_i32_0 = arith.constant 0 : i32
    %c0_i32_1 = arith.constant 0 : i32
    return %c0_i32, %c0_i32_0 : i32, i32
  }
  func.func @transform_1(%arg0: i32) -> (i32, i32) {
    %c0_i32 = arith.constant 0 : i32
    %c0_i32_0 = arith.constant 0 : i32
    %c0_i32_1 = arith.constant 0 : i32
    return %c0_i32, %c0_i32_0 : i32, i32
  }
  func.func @transform_2(%arg0: i32) -> (i32, i32) {
    %c0_i32 = arith.constant 0 : i32
    %c0_i32_0 = arith.constant 0 : i32
    %c0_i32_1 = arith.constant 0 : i32
    return %c0_i32, %c0_i32_0 : i32, i32
  }
  func.func @transform_3(%arg0: i32) -> (i32, i32) {
    %c0_i32 = arith.constant 0 : i32
    %c0_i32_0 = arith.constant 0 : i32
    %c0_i32_1 = arith.constant 0 : i32
    return %c0_i32, %c0_i32_0 : i32, i32
  }
  func.func @transform_4(%arg0: i32) -> (i32, i32) {
    %c0_i32 = arith.constant 0 : i32
    %c0_i32_0 = arith.constant 0 : i32
    %c0_i32_1 = arith.constant 0 : i32
    return %c0_i32, %c0_i32_0 : i32, i32
  }
  func.func @transform_5(%arg0: i32) -> (i32, i32) {
    %c0_i32 = arith.constant 0 : i32
    %c0_i32_0 = arith.constant 0 : i32
    %c0_i32_1 = arith.constant 0 : i32
    return %c0_i32, %c0_i32_0 : i32, i32
  }
}

module attributes {stable_mosaic.version = 11 : i64} {
  func.func @_gemm_bias_sigmoid_kernel(%arg0: i32, %arg1: memref<8x2048xbf16, #tpu.memory_space<vmem>>, %arg2: memref<2048x1xbf16, #tpu.memory_space<vmem>>, %arg3: memref<1xf32, #tpu.memory_space<smem>>, %arg4: memref<8x1xf32, #tpu.memory_space<vmem>>) attributes {dimension_semantics = [#tpu.dimension_semantics<arbitrary>], iteration_bounds = array<i64: 1>, scalar_prefetch = 0 : i64, scratch_operands = 0 : i64, tpu.core_type = #tpu.core_type<tc>, window_params = [{pipeline_mode = #tpu.pipeline_mode<synchronous>, transform_indices = @transform_0, window_bounds = array<i64: 8, 2048>}, {pipeline_mode = #tpu.pipeline_mode<synchronous>, transform_indices = @transform_1, window_bounds = array<i64: 2048, 1>}, {transform_indices = @transform_2, window_bounds = array<i64: 1>}, {pipeline_mode = #tpu.pipeline_mode<synchronous>, transform_indices = @transform_3, window_bounds = array<i64: 8, 1>}]} {
    %c0 = arith.constant 0 : index
    %c0_0 = arith.constant 0 : index
    %0 = vector.load %arg1[%c0, %c0_0] : memref<8x2048xbf16, #tpu.memory_space<vmem>>, vector<8x2048xbf16>
    %c0_1 = arith.constant 0 : index
    %c0_2 = arith.constant 0 : index
    %1 = vector.load %arg2[%c0_1, %c0_2] : memref<2048x1xbf16, #tpu.memory_space<vmem>>, vector<2048x1xbf16>
    %cst = arith.constant dense<0.000000e+00> : vector<8x1xf32>
    %2 = tpu.matmul %0, %1, %cst {dimension_numbers = #tpu.dot_dimension_numbers<[1], [0], [0], [1], [0, 0, 1, 1], [], []>} : vector<8x2048xbf16>, vector<2048x1xbf16>, vector<8x1xf32> -> vector<8x1xf32>
    %c0_3 = arith.constant 0 : index
    %3 = memref.load %arg3[%c0_3] : memref<1xf32, #tpu.memory_space<smem>>
    %4 = vector.broadcast %3 : f32 to vector<8x1xf32>
    %5 = arith.addf %2, %4 : vector<8x1xf32>
    %6 = arith.negf %5 : vector<8x1xf32>
    %7 = math.exp %6 : vector<8x1xf32>
    %cst_4 = arith.constant 1.000000e+00 : f32
    %8 = vector.broadcast %cst_4 : f32 to vector<8x1xf32>
    %9 = arith.addf %8, %7 : vector<8x1xf32>
    %10 = arith.divf %8, %9 : vector<8x1xf32>
    %c0_5 = arith.constant 0 : index
    %c0_6 = arith.constant 0 : index
    %11 = vector.load %arg4[%c0_5, %c0_6] : memref<8x1xf32, #tpu.memory_space<vmem>>, vector<8x1xf32>
    tpu.vector_store %arg4[%c0_5, %c0_6], %10 {strides = array<i32>} : memref<8x1xf32, #tpu.memory_space<vmem>>, vector<8x1xf32>,
    return
  }
  func.func @transform_0(%arg0: i32) -> (i32, i32) {
    %c0_i32 = arith.constant 0 : i32
    %c0_i32_0 = arith.constant 0 : i32
    %c0_i32_1 = arith.constant 0 : i32
    return %c0_i32, %c0_i32_0 : i32, i32
  }
  func.func @transform_1(%arg0: i32) -> (i32, i32) {
    %c0_i32 = arith.constant 0 : i32
    %c0_i32_0 = arith.constant 0 : i32
    %c0_i32_1 = arith.constant 0 : i32
    return %c0_i32, %c0_i32_0 : i32, i32
  }
  func.func @transform_2(%arg0: i32) -> i32 {
    %c0_i32 = arith.constant 0 : i32
    %c0_i32_0 = arith.constant 0 : i32
    return %c0_i32 : i32
  }
  func.func @transform_3(%arg0: i32) -> (i32, i32) {
    %c0_i32 = arith.constant 0 : i32
    %c0_i32_0 = arith.constant 0 : i32
    %c0_i32_1 = arith.constant 0 : i32
    return %c0_i32, %c0_i32_0 : i32, i32
  }
}

</mosaic_0001>

<llo_original>
// kernel: discriminator_forward.11
$region0: #{discriminator_forward.11}
  #allocation0 [shape = 'u32[]', space=smem, size = 0x4, offset = 0x4, fixed_abs, tag = 'smem constant byte address 0x4 - core index']
  #allocation1 [shape = 'u32[144,128]{1,0:T(1,128)}', space=vmem, size = 0x12000, scoped, tag = 'internal scratch']
  %s0 = inlined_call_operand.vmem [shape: bf16[56,1024], index: 0, kind: input, shape index: {}]
  %s1 = inlined_call_operand.vmem [shape: bf16[1024,64], index: 1, kind: input, shape index: {}]
  %s2 = inlined_call_operand.vmem [shape: f32[56,64], index: 2, kind: output, shape index: {}]
  %s3 = sld [smem:[#allocation0]]
  $region18: #{discriminator_forward.11} parent=0
    _
  %s5 = ssub.s32 1, %s3
  %s6 = scalar_select 0, %s5, %s3
  // Predicated region
  $region2: #{discriminator_forward.11} parent=0 // pred_check
    _
  $region3: #{discriminator_forward.11} parent=0 // pred_check_branch
    %8 = sbr.rel (0) target = $region5
  $region4: #{discriminator_forward.11} parent=0 // pred_region
    _
  $region5: #{discriminator_forward.11} parent=0 // pred_fallthru
    _
  // Predicated region
  $region6: #{discriminator_forward.11} parent=0 // pred_check
    _
  $region7: #{discriminator_forward.11} parent=0 // pred_check_branch
    %10 = sbr.rel (0) target = $region9
  $region8: #{discriminator_forward.11} parent=0 // pred_region
    _
  $region9: #{discriminator_forward.11} parent=0 // pred_fallthru
    _
  %v12 = vld [vmem:[%s0] sm:$0xff]
  %v13 = vld [vmem:[%s0 + $0x8] sm:$0xff]
  %v14 = vld [vmem:[%s0 + $0x10] sm:$0xff]
  %v15 = vld [vmem:[%s0 + $0x18] sm:$0xff]
  %v16 = vld [vmem:[%s0 + $0x20] sm:$0xff]
  %v17 = vld [vmem:[%s0 + $0x28] sm:$0xff]
  %v18 = vld [vmem:[%s0 + $0x30] sm:$0xff]
  %v19 = vld [vmem:[%s0 + $0x38] sm:$0xff]
  %v20 = vld [vmem:[%s0 + $0x40] sm:$0xff]
  %v21 = vld [vmem:[%s0 + $0x48] sm:$0xff]
  %v22 = vld [vmem:[%s0 + $0x50] sm:$0xff]
  %v23 = vld [vmem:[%s0 + $0x58] sm:$0xff]
  %v24 = vld [vmem:[%s0 + $0x60] sm:$0xff]
  %v25 = vld [vmem:[%s0 + $0x68] sm:$0xff]
  %v26 = vld [vmem:[%s0 + $0x70] sm:$0xff]
  %v27 = vld [vmem:[%s0 + $0x78] sm:$0xff]
  %v28 = vld [vmem:[%s0 + $0x80] sm:$0xff]
  %v29 = vld [vmem:[%s0 + $0x88] sm:$0xff]
  %v30 = vld [vmem:[%s0 + $0x90] sm:$0xff]
  %v31 = vld [vmem:[%s0 + $0x98] sm:$0xff]
  %v32 = vld [vmem:[%s0 + $0xa0] sm:$0xff]
  %v33 = vld [vmem:[%s0 + $0xa8] sm:$0xff]
  %v34 = vld [vmem:[%s0 + $0xb0] sm:$0xff]
  %v35 = vld [vmem:[%s0 + $0xb8] sm:$0xff]
  %v36 = vld [vmem:[%s0 + $0xc0] sm:$0xff]
  %v37 = vld [vmem:[%s0 + $0xc8] sm:$0xff]
  %v38 = vld [vmem:[%s0 + $0xd0] sm:$0xff]
  %v39 = vld [vmem:[%s0 + $0xd8] sm:$0xff]
  %v40 = vld [vmem:[%s1] sm:$0xf]
  %v41 = vld [vmem:[%s1 + $0x4] sm:$0xf]
  %v42 = vld [vmem:[%s1 + $0x8] sm:$0xf]
  %v43 = vld [vmem:[%s1 + $0xc] sm:$0xf]
  %v44 = vld [vmem:[%s1 + $0x10] sm:$0xf]
  %v45 = vld [vmem:[%s1 + $0x14] sm:$0xf]
  %v46 = vld [vmem:[%s1 + $0x18] sm:$0xf]
  %v47 = vld [vmem:[%s1 + $0x1c] sm:$0xf]
  %v48 = vld [vmem:[%s1 + $0x20] sm:$0xf]
  %v49 = vld [vmem:[%s1 + $0x24] sm:$0xf]
  %v50 = vld [vmem:[%s1 + $0x28] sm:$0xf]
  %v51 = vld [vmem:[%s1 + $0x2c] sm:$0xf]
  %v52 = vld [vmem:[%s1 + $0x30] sm:$0xf]
  %v53 = vld [vmem:[%s1 + $0x34] sm:$0xf]
  %v54 = vld [vmem:[%s1 + $0x38] sm:$0xf]
  %v55 = vld [vmem:[%s1 + $0x3c] sm:$0xf]
  %v56 = vld [vmem:[%s1 + $0x40] sm:$0xf]
  %v57 = vld [vmem:[%s1 + $0x44] sm:$0xf]
  %v58 = vld [vmem:[%s1 + $0x48] sm:$0xf]
  %v59 = vld [vmem:[%s1 + $0x4c] sm:$0xf]
  %v60 = vld [vmem:[%s1 + $0x50] sm:$0xf]
  %v61 = vld [vmem:[%s1 + $0x54] sm:$0xf]
  %v62 = vld [vmem:[%s1 + $0x58] sm:$0xf]
  %v63 = vld [vmem:[%s1 + $0x5c] sm:$0xf]
  %v64 = vld [vmem:[%s1 + $0x60] sm:$0xf]
  %v65 = vld [vmem:[%s1 + $0x64] sm:$0xf]
  %v66 = vld [vmem:[%s1 + $0x68] sm:$0xf]
  %v67 = vld [vmem:[%s1 + $0x6c] sm:$0xf]
  %v68 = vld [vmem:[%s1 + $0x70] sm:$0xf]
  %v69 = vld [vmem:[%s1 + $0x74] sm:$0xf]
  %v70 = vld [vmem:[%s1 + $0x78] sm:$0xf]
  %v71 = vld [vmem:[%s1 + $0x7c] sm:$0xf]
  %v72 = vld [vmem:[%s1 + $0x80] sm:$0xf]
  %v73 = vld [vmem:[%s1 + $0x84] sm:$0xf]
  %v74 = vld [vmem:[%s1 + $0x88] sm:$0xf]
  %v75 = vld [vmem:[%s1 + $0x8c] sm:$0xf]
  %v76 = vld [vmem:[%s1 + $0x90] sm:$0xf]
  %v77 = vld [vmem:[%s1 + $0x94] sm:$0xf]
  %v78 = vld [vmem:[%s1 + $0x98] sm:$0xf]
  %v79 = vld [vmem:[%s1 + $0x9c] sm:$0xf]
  %v80 = vld [vmem:[%s1 + $0xa0] sm:$0xf]
  %v81 = vld [vmem:[%s1 + $0xa4] sm:$0xf]
  %v82 = vld [vmem:[%s1 + $0xa8] sm:$0xf]
  %v83 = vld [vmem:[%s1 + $0xac] sm:$0xf]
  %v84 = vld [vmem:[%s1 + $0xb0] sm:$0xf]
  %v85 = vld [vmem:[%s1 + $0xb4] sm:$0xf]
  %v86 = vld [vmem:[%s1 + $0xb8] sm:$0xf]
  %v87 = vld [vmem:[%s1 + $0xbc] sm:$0xf]
  %v88 = vld [vmem:[%s1 + $0xc0] sm:$0xf]
  %v89 = vld [vmem:[%s1 + $0xc4] sm:$0xf]
  %v90 = vld [vmem:[%s1 + $0xc8] sm:$0xf]
  %v91 = vld [vmem:[%s1 + $0xcc] sm:$0xf]
  %v92 = vld [vmem:[%s1 + $0xd0] sm:$0xf]
  %v93 = vld [vmem:[%s1 + $0xd4] sm:$0xf]
  %v94 = vld [vmem:[%s1 + $0xd8] sm:$0xf]
  %v95 = vld [vmem:[%s1 + $0xdc] sm:$0xf]
  %v96 = vld [vmem:[%s1 + $0xe0] sm:$0xf]
  %v97 = vld [vmem:[%s1 + $0xe4] sm:$0xf]
  %v98 = vld [vmem:[%s1 + $0xe8] sm:$0xf]
  %v99 = vld [vmem:[%s1 + $0xec] sm:$0xf]
  %v100 = vld [vmem:[%s1 + $0xf0] sm:$0xf]
  %v101 = vld [vmem:[%s1 + $0xf4] sm:$0xf]
  %v102 = vld [vmem:[%s1 + $0xf8] sm:$0xf]
  %v103 = vld [vmem:[%s1 + $0xfc] sm:$0xf]
  %v104 = vld [vmem:[%s1 + $0x100] sm:$0xf]
  %v105 = vld [vmem:[%s1 + $0x104] sm:$0xf]
  %v106 = vld [vmem:[%s1 + $0x108] sm:$0xf]
  %v107 = vld [vmem:[%s1 + $0x10c] sm:$0xf]
  %v108 = vld [vmem:[%s1 + $0x110] sm:$0xf]
  %v109 = vld [vmem:[%s1 + $0x114] sm:$0xf]
  %v110 = vld [vmem:[%s1 + $0x118] sm:$0xf]
  %v111 = vld [vmem:[%s1 + $0x11c] sm:$0xf]
  %v112 = vld [vmem:[%s1 + $0x120] sm:$0xf]
  %v113 = vld [vmem:[%s1 + $0x124] sm:$0xf]
  %v114 = vld [vmem:[%s1 + $0x128] sm:$0xf]
  %v115 = vld [vmem:[%s1 + $0x12c] sm:$0xf]
  %v116 = vld [vmem:[%s1 + $0x130] sm:$0xf]
  %v117 = vld [vmem:[%s1 + $0x134] sm:$0xf]
  %v118 = vld [vmem:[%s1 + $0x138] sm:$0xf]
  %v119 = vld [vmem:[%s1 + $0x13c] sm:$0xf]
  %v120 = vld [vmem:[%s1 + $0x140] sm:$0xf]
  %v121 = vld [vmem:[%s1 + $0x144] sm:$0xf]
  %v122 = vld [vmem:[%s1 + $0x148] sm:$0xf]
  %v123 = vld [vmem:[%s1 + $0x14c] sm:$0xf]
  %v124 = vld [vmem:[%s1 + $0x150] sm:$0xf]
  %v125 = vld [vmem:[%s1 + $0x154] sm:$0xf]
  %v126 = vld [vmem:[%s1 + $0x158] sm:$0xf]
  %v127 = vld [vmem:[%s1 + $0x15c] sm:$0xf]
  %v128 = vld [vmem:[%s1 + $0x160] sm:$0xf]
  %v129 = vld [vmem:[%s1 + $0x164] sm:$0xf]
  %v130 = vld [vmem:[%s1 + $0x168] sm:$0xf]
  %v131 = vld [vmem:[%s1 + $0x16c] sm:$0xf]
  %v132 = vld [vmem:[%s1 + $0x170] sm:$0xf]
  %v133 = vld [vmem:[%s1 + $0x174] sm:$0xf]
  %v134 = vld [vmem:[%s1 + $0x178] sm:$0xf]
  %v135 = vld [vmem:[%s1 + $0x17c] sm:$0xf]
  %v136 = vld [vmem:[%s1 + $0x180] sm:$0xf]
  %v137 = vld [vmem:[%s1 + $0x184] sm:$0xf]
  %v138 = vld [vmem:[%s1 + $0x188] sm:$0xf]
  %v139 = vld [vmem:[%s1 + $0x18c] sm:$0xf]
  %v140 = vld [vmem:[%s1 + $0x190] sm:$0xf]
  %v141 = vld [vmem:[%s1 + $0x194] sm:$0xf]
  %v142 = vld [vmem:[%s1 + $0x198] sm:$0xf]
  %v143 = vld [vmem:[%s1 + $0x19c] sm:$0xf]
  %v144 = vld [vmem:[%s1 + $0x1a0] sm:$0xf]
  %v145 = vld [vmem:[%s1 + $0x1a4] sm:$0xf]
  %v146 = vld [vmem:[%s1 + $0x1a8] sm:$0xf]
  %v147 = vld [vmem:[%s1 + $0x1ac] sm:$0xf]
  %v148 = vld [vmem:[%s1 + $0x1b0] sm:$0xf]
  %v149 = vld [vmem:[%s1 + $0x1b4] sm:$0xf]
  %v150 = vld [vmem:[%s1 + $0x1b8] sm:$0xf]
  %v151 = vld [vmem:[%s1 + $0x1bc] sm:$0xf]
  %v152 = vld [vmem:[%s1 + $0x1c0] sm:$0xf]
  %v153 = vld [vmem:[%s1 + $0x1c4] sm:$0xf]
  %v154 = vld [vmem:[%s1 + $0x1c8] sm:$0xf]
  %v155 = vld [vmem:[%s1 + $0x1cc] sm:$0xf]
  %v156 = vld [vmem:[%s1 + $0x1d0] sm:$0xf]
  %v157 = vld [vmem:[%s1 + $0x1d4] sm:$0xf]
  %v158 = vld [vmem:[%s1 + $0x1d8] sm:$0xf]
  %v159 = vld [vmem:[%s1 + $0x1dc] sm:$0xf]
  %v160 = vld [vmem:[%s1 + $0x1e0] sm:$0xf]
  %v161 = vld [vmem:[%s1 + $0x1e4] sm:$0xf]
  %v162 = vld [vmem:[%s1 + $0x1e8] sm:$0xf]
  %v163 = vld [vmem:[%s1 + $0x1ec] sm:$0xf]
  %v164 = vld [vmem:[%s1 + $0x1f0] sm:$0xf]
  %v165 = vld [vmem:[%s1 + $0x1f4] sm:$0xf]
  %v166 = vld [vmem:[%s1 + $0x1f8] sm:$0xf]
  %v167 = vld [vmem:[%s1 + $0x1fc] sm:$0xf]
  %v196 = vunpack.c.l.b16 %v12
  %v197 = vunpack.c.h.b16 %v12
  %v198 = vunpack.c.l.b16 %v13
  %v199 = vunpack.c.h.b16 %v13
  %v200 = vunpack.c.l.b16 %v14
  %v201 = vunpack.c.h.b16 %v14
  %v202 = vunpack.c.l.b16 %v15
  %v203 = vunpack.c.h.b16 %v15
  %v204 = vunpack.c.l.b16 %v16
  %v205 = vunpack.c.h.b16 %v16
  %v206 = vunpack.c.l.b16 %v17
  %v207 = vunpack.c.h.b16 %v17
  %v208 = vunpack.c.l.b16 %v18
  %v209 = vunpack.c.h.b16 %v18
  %v210 = vunpack.c.l.b16 %v19
  %v211 = vunpack.c.h.b16 %v19
  %v212 = vunpack.c.l.b16 %v20
  %v213 = vunpack.c.h.b16 %v20
  %v214 = vunpack.c.l.b16 %v21
  %v215 = vunpack.c.h.b16 %v21
  %v216 = vunpack.c.l.b16 %v22
  %v217 = vunpack.c.h.b16 %v22
  %v218 = vunpack.c.l.b16 %v23
  %v219 = vunpack.c.h.b16 %v23
  %v220 = vunpack.c.l.b16 %v24
  %v221 = vunpack.c.h.b16 %v24
  %v222 = vunpack.c.l.b16 %v25
  %v223 = vunpack.c.h.b16 %v25
  %v224 = vunpack.c.l.b16 %v26
  %v225 = vunpack.c.h.b16 %v26
  %v226 = vunpack.c.l.b16 %v27
  %v227 = vunpack.c.h.b16 %v27
  %v228 = vunpack.c.l.b16 %v28
  %v229 = vunpack.c.h.b16 %v28
  %v230 = vunpack.c.l.b16 %v29
  %v231 = vunpack.c.h.b16 %v29
  %v232 = vunpack.c.l.b16 %v30
  %v233 = vunpack.c.h.b16 %v30
  %v234 = vunpack.c.l.b16 %v31
  %v235 = vunpack.c.h.b16 %v31
  %v236 = vunpack.c.l.b16 %v32
  %v237 = vunpack.c.h.b16 %v32
  %v238 = vunpack.c.l.b16 %v33
  %v239 = vunpack.c.h.b16 %v33
  %v240 = vunpack.c.l.b16 %v34
  %v241 = vunpack.c.h.b16 %v34
  %v242 = vunpack.c.l.b16 %v35
  %v243 = vunpack.c.h.b16 %v35
  %v244 = vunpack.c.l.b16 %v36
  %v245 = vunpack.c.h.b16 %v36
  %v246 = vunpack.c.l.b16 %v37
  %v247 = vunpack.c.h.b16 %v37
  %v248 = vunpack.c.l.b16 %v38
  %v249 = vunpack.c.h.b16 %v38
  %v250 = vunpack.c.l.b16 %v39
  %v251 = vunpack.c.h.b16 %v39
  %v252 = vpack.c.b16 %v204, %v196
  %v253 = vpack.c.b16 %v205, %v197
  %v254 = vpack.c.b16 %v206, %v198
  %v255 = vpack.c.b16 %v207, %v199
  %v256 = vpack.c.b16 %v208, %v200
  %v257 = vpack.c.b16 %v209, %v201
  %v258 = vpack.c.b16 %v210, %v202
  %v259 = vpack.c.b16 %v211, %v203
  %v260 = vpack.c.b16 %v220, %v212
  %v261 = vpack.c.b16 %v221, %v213
  %v262 = vpack.c.b16 %v222, %v214
  %v263 = vpack.c.b16 %v223, %v215
  %v264 = vpack.c.b16 %v224, %v216
  %v265 = vpack.c.b16 %v225, %v217
  %v266 = vpack.c.b16 %v226, %v218
  %v267 = vpack.c.b16 %v227, %v219
  %v268 = vpack.c.b16 %v236, %v228
  %v269 = vpack.c.b16 %v237, %v229
  %v270 = vpack.c.b16 %v238, %v230
  %v271 = vpack.c.b16 %v239, %v231
  %v272 = vpack.c.b16 %v240, %v232
  %v273 = vpack.c.b16 %v241, %v233
  %v274 = vpack.c.b16 %v242, %v234
  %v275 = vpack.c.b16 %v243, %v235
  %v276 = vpack.c.b16 %v244, %v244
  %v277 = vpack.c.b16 %v245, %v245
  %v278 = vpack.c.b16 %v246, %v246
  %v279 = vpack.c.b16 %v247, %v247
  %v280 = vpack.c.b16 %v248, %v248
  %v281 = vpack.c.b16 %v249, %v249
  %v282 = vpack.c.b16 %v250, %v250
  %v283 = vpack.c.b16 %v251, %v251
  %v444 = vunpack.c.l.b16 %v40
  %v445 = vunpack.c.l.b16 %v41
  %v446 = vunpack.c.l.b16 %v42
  %v447 = vunpack.c.l.b16 %v43
  %v448 = vunpack.c.l.b16 %v44
  %v449 = vunpack.c.l.b16 %v45
  %v450 = vunpack.c.l.b16 %v46
  %v451 = vunpack.c.l.b16 %v47
  %v452 = vunpack.c.l.b16 %v48
  %v453 = vunpack.c.l.b16 %v49
  %v454 = vunpack.c.l.b16 %v50
  %v455 = vunpack.c.l.b16 %v51
  %v456 = vunpack.c.l.b16 %v52
  %v457 = vunpack.c.l.b16 %v53
  %v458 = vunpack.c.l.b16 %v54
  %v459 = vunpack.c.l.b16 %v55
  %v460 = vunpack.c.l.b16 %v56
  %v461 = vunpack.c.l.b16 %v57
  %v462 = vunpack.c.l.b16 %v58
  %v463 = vunpack.c.l.b16 %v59
  %v464 = vunpack.c.l.b16 %v60
  %v465 = vunpack.c.l.b16 %v61
  %v466 = vunpack.c.l.b16 %v62
  %v467 = vunpack.c.l.b16 %v63
  %v468 = vunpack.c.l.b16 %v64
  %v469 = vunpack.c.l.b16 %v65
  %v470 = vunpack.c.l.b16 %v66
  %v471 = vunpack.c.l.b16 %v67
  %v472 = vunpack.c.l.b16 %v68
  %v473 = vunpack.c.l.b16 %v69
  %v474 = vunpack.c.l.b16 %v70
  %v475 = vunpack.c.l.b16 %v71
  %v476 = vunpack.c.l.b16 %v72
  %v477 = vunpack.c.l.b16 %v73
  %v478 = vunpack.c.l.b16 %v74
  %v479 = vunpack.c.l.b16 %v75
  %v480 = vunpack.c.l.b16 %v76
  %v481 = vunpack.c.l.b16 %v77
  %v482 = vunpack.c.l.b16 %v78
  %v483 = vunpack.c.l.b16 %v79
  %v484 = vunpack.c.l.b16 %v80
  %v485 = vunpack.c.l.b16 %v81
  %v486 = vunpack.c.l.b16 %v82
  %v487 = vunpack.c.l.b16 %v83
  %v488 = vunpack.c.l.b16 %v84
  %v489 = vunpack.c.l.b16 %v85
  %v490 = vunpack.c.l.b16 %v86
  %v491 = vunpack.c.l.b16 %v87
  %v492 = vunpack.c.l.b16 %v88
  %v493 = vunpack.c.l.b16 %v89
  %v494 = vunpack.c.l.b16 %v90
  %v495 = vunpack.c.l.b16 %v91
  %v496 = vunpack.c.l.b16 %v92
  %v497 = vunpack.c.l.b16 %v93
  %v498 = vunpack.c.l.b16 %v94
  %v499 = vunpack.c.l.b16 %v95
  %v500 = vunpack.c.l.b16 %v96
  %v501 = vunpack.c.l.b16 %v97
  %v502 = vunpack.c.l.b16 %v98
  %v503 = vunpack.c.l.b16 %v99
  %v504 = vunpack.c.l.b16 %v100
  %v505 = vunpack.c.l.b16 %v101
  %v506 = vunpack.c.l.b16 %v102
  %v507 = vunpack.c.l.b16 %v103
  %v508 = vunpack.c.l.b16 %v104
  %v509 = vunpack.c.l.b16 %v105
  %v510 = vunpack.c.l.b16 %v106
  %v511 = vunpack.c.l.b16 %v107
  %v512 = vunpack.c.l.b16 %v108
  %v513 = vunpack.c.l.b16 %v109
  %v514 = vunpack.c.l.b16 %v110
  %v515 = vunpack.c.l.b16 %v111
  %v516 = vunpack.c.l.b16 %v112
  %v517 = vunpack.c.l.b16 %v113
  %v518 = vunpack.c.l.b16 %v114
  %v519 = vunpack.c.l.b16 %v115
  %v520 = vunpack.c.l.b16 %v116
  %v521 = vunpack.c.l.b16 %v117
  %v522 = vunpack.c.l.b16 %v118
  %v523 = vunpack.c.l.b16 %v119
  %v524 = vunpack.c.l.b16 %v120
  %v525 = vunpack.c.l.b16 %v121
  %v526 = vunpack.c.l.b16 %v122
  %v527 = vunpack.c.l.b16 %v123
  %v528 = vunpack.c.l.b16 %v124
  %v529 = vunpack.c.l.b16 %v125
  %v530 = vunpack.c.l.b16 %v126
  %v531 = vunpack.c.l.b16 %v127
  %v532 = vunpack.c.l.b16 %v128
  %v533 = vunpack.c.l.b16 %v129
  %v534 = vunpack.c.l.b16 %v130
  %v535 = vunpack.c.l.b16 %v131
  %v536 = vunpack.c.l.b16 %v132
  %v537 = vunpack.c.l.b16 %v133
  %v538 = vunpack.c.l.b16 %v134
  %v539 = vunpack.c.l.b16 %v135
  %v540 = vunpack.c.l.b16 %v136
  %v541 = vunpack.c.l.b16 %v137
  %v542 = vunpack.c.l.b16 %v138
  %v543 = vunpack.c.l.b16 %v139
  %v544 = vunpack.c.l.b16 %v140
  %v545 = vunpack.c.l.b16 %v141
  %v546 = vunpack.c.l.b16 %v142
  %v547 = vunpack.c.l.b16 %v143
  %v548 = vunpack.c.l.b16 %v144
  %v549 = vunpack.c.l.b16 %v145
  %v550 = vunpack.c.l.b16 %v146
  %v551 = vunpack.c.l.b16 %v147
  %v552 = vunpack.c.l.b16 %v148
  %v553 = vunpack.c.l.b16 %v149
  %v554 = vunpack.c.l.b16 %v150
  %v555 = vunpack.c.l.b16 %v151
  %v556 = vunpack.c.l.b16 %v152
  %v557 = vunpack.c.l.b16 %v153
  %v558 = vunpack.c.l.b16 %v154
  %v559 = vunpack.c.l.b16 %v155
  %v560 = vunpack.c.l.b16 %v156
  %v561 = vunpack.c.l.b16 %v157
  %v562 = vunpack.c.l.b16 %v158
  %v563 = vunpack.c.l.b16 %v159
  %v564 = vunpack.c.l.b16 %v160
  %v565 = vunpack.c.l.b16 %v161
  %v566 = vunpack.c.l.b16 %v162
  %v567 = vunpack.c.l.b16 %v163
  %v568 = vunpack.c.l.b16 %v164
  %v569 = vunpack.c.l.b16 %v165
  %v570 = vunpack.c.l.b16 %v166
  %v571 = vunpack.c.l.b16 %v167
  %v572 = vpack.c.b16 %v445, %v444
  %v573 = vpack.c.b16 %v447, %v446
  %v574 = vpack.c.b16 %v449, %v448
  %v575 = vpack.c.b16 %v451, %v450
  %v576 = vpack.c.b16 %v453, %v452
  %v577 = vpack.c.b16 %v455, %v454
  %v578 = vpack.c.b16 %v457, %v456
  %v579 = vpack.c.b16 %v459, %v458
  %v580 = vpack.c.b16 %v461, %v460
  %v581 = vpack.c.b16 %v463, %v462
  %v582 = vpack.c.b16 %v465, %v464
  %v583 = vpack.c.b16 %v467, %v466
  %v584 = vpack.c.b16 %v469, %v468
  %v585 = vpack.c.b16 %v471, %v470
  %v586 = vpack.c.b16 %v473, %v472
  %v587 = vpack.c.b16 %v475, %v474
  %v588 = vpack.c.b16 %v477, %v476
  %v589 = vpack.c.b16 %v479, %v478
  %v590 = vpack.c.b16 %v481, %v480
  %v591 = vpack.c.b16 %v483, %v482
  %v592 = vpack.c.b16 %v485, %v484
  %v593 = vpack.c.b16 %v487, %v486
  %v594 = vpack.c.b16 %v489, %v488
  %v595 = vpack.c.b16 %v491, %v490
  %v596 = vpack.c.b16 %v493, %v492
  %v597 = vpack.c.b16 %v495, %v494
  %v598 = vpack.c.b16 %v497, %v496
  %v599 = vpack.c.b16 %v499, %v498
  %v600 = vpack.c.b16 %v501, %v500
  %v601 = vpack.c.b16 %v503, %v502
  %v602 = vpack.c.b16 %v505, %v504
  %v603 = vpack.c.b16 %v507, %v506
  %v604 = vpack.c.b16 %v509, %v508
  %v605 = vpack.c.b16 %v511, %v510
  %v606 = vpack.c.b16 %v513, %v512
  %v607 = vpack.c.b16 %v515, %v514
  %v608 = vpack.c.b16 %v517, %v516
  %v609 = vpack.c.b16 %v519, %v518
  %v610 = vpack.c.b16 %v521, %v520
  %v611 = vpack.c.b16 %v523, %v522
  %v612 = vpack.c.b16 %v525, %v524
  %v613 = vpack.c.b16 %v527, %v526
  %v614 = vpack.c.b16 %v529, %v528
  %v615 = vpack.c.b16 %v531, %v530
  %v616 = vpack.c.b16 %v533, %v532
  %v617 = vpack.c.b16 %v535, %v534
  %v618 = vpack.c.b16 %v537, %v536
  %v619 = vpack.c.b16 %v539, %v538
  %v620 = vpack.c.b16 %v541, %v540
  %v621 = vpack.c.b16 %v543, %v542
  %v622 = vpack.c.b16 %v545, %v544
  %v623 = vpack.c.b16 %v547, %v546
  %v624 = vpack.c.b16 %v549, %v548
  %v625 = vpack.c.b16 %v551, %v550
  %v626 = vpack.c.b16 %v553, %v552
  %v627 = vpack.c.b16 %v555, %v554
  %v628 = vpack.c.b16 %v557, %v556
  %v629 = vpack.c.b16 %v559, %v558
  %v630 = vpack.c.b16 %v561, %v560
  %v631 = vpack.c.b16 %v563, %v562
  %v632 = vpack.c.b16 %v565, %v564
  %v633 = vpack.c.b16 %v567, %v566
  %v634 = vpack.c.b16 %v569, %v568
  %v635 = vpack.c.b16 %v571, %v570
  %700 = vmatprep.subr.bf16.mxu0 0
  %701 = vmatpush1.bf16.msra.mxu0 %v579
  %702 = vmatprep.subr.bf16.mxu0 0
  %703 = vmatpush1.bf16.msra.mxu0 %v578
  %704 = vmatprep.subr.bf16.mxu0 0
  %705 = vmatpush1.bf16.msra.mxu0 %v577
  %706 = vmatprep.subr.bf16.mxu0 0
  %707 = vmatpush1.bf16.msra.mxu0 %v576
  %708 = vmatprep.subr.bf16.mxu0 0
  %709 = vmatpush1.bf16.msra.mxu0 %v575
  %710 = vmatprep.subr.bf16.mxu0 0
  %711 = vmatpush1.bf16.msra.mxu0 %v574
  %712 = vmatprep.subr.bf16.mxu0 0
  %713 = vmatpush1.bf16.msra.mxu0 %v573
  %714 = vmatprep.subr.bf16.mxu0 0
  %715 = vmatpush1.bf16.msra.mxu0 %v572
  %716 = vmatprep.subr.bf16.mxu0 0
  %717 = vmatpush2.bf16.msra.mxu0 %v587
  %718 = vmatprep.subr.bf16.mxu0 0
  %719 = vmatpush2.bf16.msra.mxu0 %v586
  %720 = vmatprep.subr.bf16.mxu0 0
  %721 = vmatpush2.bf16.msra.mxu0 %v585
  %722 = vmatprep.subr.bf16.mxu0 0
  %723 = vmatpush2.bf16.msra.mxu0 %v584
  %724 = vmatprep.subr.bf16.mxu0 0
  %725 = vmatpush2.bf16.msra.mxu0 %v583
  %726 = vmatprep.subr.bf16.mxu0 0
  %727 = vmatpush2.bf16.msra.mxu0 %v582
  %728 = vmatprep.subr.bf16.mxu0 0
  %729 = vmatpush2.bf16.msra.mxu0 %v581
  %730 = vmatprep.subr.bf16.mxu0 0
  %731 = vmatpush2.bf16.msra.mxu0 %v580
  %732 = vmatprep.mubr.bf16.mxu0 %v253
  %733 = vmatmul.mubr.bf16.gmra.mxu0 %v252
  %v734 = vpop.f32.mrf.mxu0
  %v735 = vadd.f32 0.0, %v734
  %v736 = vpop.f32.mrf.mxu0
  %v737 = vpop.f32.mrf.mxu0
  %v738 = vadd.f32 0.0, %v737
  %v739 = vpop.f32.mrf.mxu0
  %740 = vmatprep.mubr.bf16.mxu0 %v261
  %741 = vmatmul.mubr.bf16.gmra.mxu0 %v260
  %v742 = vpop.f32.mrf.mxu0
  %v743 = vadd.f32 0.0, %v742
  %v744 = vpop.f32.mrf.mxu0
  %v745 = vpop.f32.mrf.mxu0
  %v746 = vadd.f32 0.0, %v745
  %v747 = vpop.f32.mrf.mxu0
  %748 = vmatprep.mubr.bf16.mxu0 %v269
  %749 = vmatmul.mubr.bf16.gmra.mxu0 %v268
  %v750 = vpop.f32.mrf.mxu0
  %v751 = vadd.f32 0.0, %v750
  %v752 = vpop.f32.mrf.mxu0
  %v753 = vpop.f32.mrf.mxu0
  %v754 = vadd.f32 0.0, %v753
  %v755 = vpop.f32.mrf.mxu0
  %756 = vmatprep.mubr.bf16.mxu0 %v277
  %757 = vmatmul.mubr.bf16.gmra.mxu0 %v276
  %v758 = vpop.f32.mrf.mxu0
  %v759 = vadd.f32 0.0, %v758
  %v760 = vpop.f32.mrf.mxu0
  %v761 = vpop.f32.mrf.mxu0
  %v762 = vpop.f32.mrf.mxu0
  %763 = vdwg.mxu0
  %764 = vmatprep.subr.bf16.mxu0 0
  %765 = vmatpush1.bf16.msra.mxu0 %v595
  %766 = vmatprep.subr.bf16.mxu0 0
  %767 = vmatpush1.bf16.msra.mxu0 %v594
  %768 = vmatprep.subr.bf16.mxu0 0
  %769 = vmatpush1.bf16.msra.mxu0 %v593
  %770 = vmatprep.subr.bf16.mxu0 0
  %771 = vmatpush1.bf16.msra.mxu0 %v592
  %772 = vmatprep.subr.bf16.mxu0 0
  %773 = vmatpush1.bf16.msra.mxu0 %v591
  %774 = vmatprep.subr.bf16.mxu0 0
  %775 = vmatpush1.bf16.msra.mxu0 %v590
  %776 = vmatprep.subr.bf16.mxu0 0
  %777 = vmatpush1.bf16.msra.mxu0 %v589
  %778 = vmatprep.subr.bf16.mxu0 0
  %779 = vmatpush1.bf16.msra.mxu0 %v588
  %780 = vmatprep.subr.bf16.mxu0 0
  %781 = vmatpush2.bf16.msra.mxu0 %v603
  %782 = vmatprep.subr.bf16.mxu0 0
  %783 = vmatpush2.bf16.msra.mxu0 %v602
  %784 = vmatprep.subr.bf16.mxu0 0
  %785 = vmatpush2.bf16.msra.mxu0 %v601
  %786 = vmatprep.subr.bf16.mxu0 0
  %787 = vmatpush2.bf16.msra.mxu0 %v600
  %788 = vmatprep.subr.bf16.mxu0 0
  %789 = vmatpush2.bf16.msra.mxu0 %v599
  %790 = vmatprep.subr.bf16.mxu0 0
  %791 = vmatpush2.bf16.msra.mxu0 %v598
  %792 = vmatprep.subr.bf16.mxu0 0
  %793 = vmatpush2.bf16.msra.mxu0 %v597
  %794 = vmatprep.subr.bf16.mxu0 0
  %795 = vmatpush2.bf16.msra.mxu0 %v596
  %796 = vmatprep.mubr.bf16.mxu0 %v255
  %797 = vmatmul.mubr.bf16.gmra.mxu0 %v254
  %v798 = vpop.f32.mrf.mxu0
  %v799 = vadd.f32 %v735, %v798
  %v800 = vpop.f32.mrf.mxu0
  %v801 = vpop.f32.mrf.mxu0
  %v802 = vadd.f32 %v738, %v801
  %v803 = vpop.f32.mrf.mxu0
  %804 = vmatprep.mubr.bf16.mxu0 %v263
  %805 = vmatmul.mubr.bf16.gmra.mxu0 %v262
  %v806 = vpop.f32.mrf.mxu0
  %v807 = vadd.f32 %v743, %v806
  %v808 = vpop.f32.mrf.mxu0
  %v809 = vpop.f32.mrf.mxu0
  %v810 = vadd.f32 %v746, %v809
  %v811 = vpop.f32.mrf.mxu0
  %812 = vmatprep.mubr.bf16.mxu0 %v271
  %813 = vmatmul.mubr.bf16.gmra.mxu0 %v270
  %v814 = vpop.f32.mrf.mxu0
  %v815 = vadd.f32 %v751, %v814
  %v816 = vpop.f32.mrf.mxu0
  %v817 = vpop.f32.mrf.mxu0
  %v818 = vadd.f32 %v754, %v817
  %v819 = vpop.f32.mrf.mxu0
  %820 = vmatprep.mubr.bf16.mxu0 %v279
  %821 = vmatmul.mubr.bf16.gmra.mxu0 %v278
  %v822 = vpop.f32.mrf.mxu0
  %v823 = vadd.f32 %v759, %v822
  %v824 = vpop.f32.mrf.mxu0
  %v825 = vpop.f32.mrf.mxu0
  %v826 = vpop.f32.mrf.mxu0
  %827 = vdwg.mxu0
  %828 = vmatprep.subr.bf16.mxu0 0
  %829 = vmatpush1.bf16.msra.mxu0 %v611
  %830 = vmatprep.subr.bf16.mxu0 0
  %831 = vmatpush1.bf16.msra.mxu0 %v610
  %832 = vmatprep.subr.bf16.mxu0 0
  %833 = vmatpush1.bf16.msra.mxu0 %v609
  %834 = vmatprep.subr.bf16.mxu0 0
  %835 = vmatpush1.bf16.msra.mxu0 %v608
  %836 = vmatprep.subr.bf16.mxu0 0
  %837 = vmatpush1.bf16.msra.mxu0 %v607
  %838 = vmatprep.subr.bf16.mxu0 0
  %839 = vmatpush1.bf16.msra.mxu0 %v606
  %840 = vmatprep.subr.bf16.mxu0 0
  %841 = vmatpush1.bf16.msra.mxu0 %v605
  %842 = vmatprep.subr.bf16.mxu0 0
  %843 = vmatpush1.bf16.msra.mxu0 %v604
  %844 = vmatprep.subr.bf16.mxu0 0
  %845 = vmatpush2.bf16.msra.mxu0 %v619
  %846 = vmatprep.subr.bf16.mxu0 0
  %847 = vmatpush2.bf16.msra.mxu0 %v618
  %848 = vmatprep.subr.bf16.mxu0 0
  %849 = vmatpush2.bf16.msra.mxu0 %v617
  %850 = vmatprep.subr.bf16.mxu0 0
  %851 = vmatpush2.bf16.msra.mxu0 %v616
  %852 = vmatprep.subr.bf16.mxu0 0
  %853 = vmatpush2.bf16.msra.mxu0 %v615
  %854 = vmatprep.subr.bf16.mxu0 0
  %855 = vmatpush2.bf16.msra.mxu0 %v614
  %856 = vmatprep.subr.bf16.mxu0 0
  %857 = vmatpush2.bf16.msra.mxu0 %v613
  %858 = vmatprep.subr.bf16.mxu0 0
  %859 = vmatpush2.bf16.msra.mxu0 %v612
  %860 = vmatprep.mubr.bf16.mxu0 %v257
  %861 = vmatmul.mubr.bf16.gmra.mxu0 %v256
  %v862 = vpop.f32.mrf.mxu0
  %v863 = vadd.f32 %v799, %v862
  %v864 = vpop.f32.mrf.mxu0
  %v865 = vpop.f32.mrf.mxu0
  %v866 = vadd.f32 %v802, %v865
  %v867 = vpop.f32.mrf.mxu0
  %868 = vmatprep.mubr.bf16.mxu0 %v265
  %869 = vmatmul.mubr.bf16.gmra.mxu0 %v264
  %v870 = vpop.f32.mrf.mxu0
  %v871 = vadd.f32 %v807, %v870
  %v872 = vpop.f32.mrf.mxu0
  %v873 = vpop.f32.mrf.mxu0
  %v874 = vadd.f32 %v810, %v873
  %v875 = vpop.f32.mrf.mxu0
  %876 = vmatprep.mubr.bf16.mxu0 %v273
  %877 = vmatmul.mubr.bf16.gmra.mxu0 %v272
  %v878 = vpop.f32.mrf.mxu0
  %v879 = vadd.f32 %v815, %v878
  %v880 = vpop.f32.mrf.mxu0
  %v881 = vpop.f32.mrf.mxu0
  %v882 = vadd.f32 %v818, %v881
  %v883 = vpop.f32.mrf.mxu0
  %884 = vmatprep.mubr.bf16.mxu0 %v281
  %885 = vmatmul.mubr.bf16.gmra.mxu0 %v280
  %v886 = vpop.f32.mrf.mxu0
  %v887 = vadd.f32 %v823, %v886
  %v888 = vpop.f32.mrf.mxu0
  %v889 = vpop.f32.mrf.mxu0
  %v890 = vpop.f32.mrf.mxu0
  %891 = vdwg.mxu0
  %892 = vmatprep.subr.bf16.mxu0 0
  %893 = vmatpush1.bf16.msra.mxu0 %v627
  %894 = vmatprep.subr.bf16.mxu0 0
  %895 = vmatpush1.bf16.msra.mxu0 %v626
  %896 = vmatprep.subr.bf16.mxu0 0
  %897 = vmatpush1.bf16.msra.mxu0 %v625
  %898 = vmatprep.subr.bf16.mxu0 0
  %899 = vmatpush1.bf16.msra.mxu0 %v624
  %900 = vmatprep.subr.bf16.mxu0 0
  %901 = vmatpush1.bf16.msra.mxu0 %v623
  %902 = vmatprep.subr.bf16.mxu0 0
  %903 = vmatpush1.bf16.msra.mxu0 %v622
  %904 = vmatprep.subr.bf16.mxu0 0
  %905 = vmatpush1.bf16.msra.mxu0 %v621
  %906 = vmatprep.subr.bf16.mxu0 0
  %907 = vmatpush1.bf16.msra.mxu0 %v620
  %908 = vmatprep.subr.bf16.mxu0 0
  %909 = vmatpush2.bf16.msra.mxu0 %v635
  %910 = vmatprep.subr.bf16.mxu0 0
  %911 = vmatpush2.bf16.msra.mxu0 %v634
  %912 = vmatprep.subr.bf16.mxu0 0
  %913 = vmatpush2.bf16.msra.mxu0 %v633
  %914 = vmatprep.subr.bf16.mxu0 0
  %915 = vmatpush2.bf16.msra.mxu0 %v632
  %916 = vmatprep.subr.bf16.mxu0 0
  %917 = vmatpush2.bf16.msra.mxu0 %v631
  %918 = vmatprep.subr.bf16.mxu0 0
  %919 = vmatpush2.bf16.msra.mxu0 %v630
  %920 = vmatprep.subr.bf16.mxu0 0
  %921 = vmatpush2.bf16.msra.mxu0 %v629
  %922 = vmatprep.subr.bf16.mxu0 0
  %923 = vmatpush2.bf16.msra.mxu0 %v628
  %924 = vmatprep.mubr.bf16.mxu0 %v259
  %925 = vmatmul.mubr.bf16.gmra.mxu0 %v258
  %v926 = vpop.f32.mrf.mxu0
  %v927 = vadd.f32 %v863, %v926
  %v928 = vpop.f32.mrf.mxu0
  %v929 = vpop.f32.mrf.mxu0
  %v930 = vadd.f32 %v866, %v929
  %v931 = vpop.f32.mrf.mxu0
  %932 = vmatprep.mubr.bf16.mxu0 %v267
  %933 = vmatmul.mubr.bf16.gmra.mxu0 %v266
  %v934 = vpop.f32.mrf.mxu0
  %v935 = vadd.f32 %v871, %v934
  %v936 = vpop.f32.mrf.mxu0
  %v937 = vpop.f32.mrf.mxu0
  %v938 = vadd.f32 %v874, %v937
  %v939 = vpop.f32.mrf.mxu0
  %940 = vmatprep.mubr.bf16.mxu0 %v275
  %941 = vmatmul.mubr.bf16.gmra.mxu0 %v274
  %v942 = vpop.f32.mrf.mxu0
  %v943 = vadd.f32 %v879, %v942
  %v944 = vpop.f32.mrf.mxu0
  %v945 = vpop.f32.mrf.mxu0
  %v946 = vadd.f32 %v882, %v945
  %v947 = vpop.f32.mrf.mxu0
  %948 = vmatprep.mubr.bf16.mxu0 %v283
  %949 = vmatmul.mubr.bf16.gmra.mxu0 %v282
  %v950 = vpop.f32.mrf.mxu0
  %v951 = vadd.f32 %v887, %v950
  %v952 = vpop.f32.mrf.mxu0
  %v953 = vpop.f32.mrf.mxu0
  %v954 = vpop.f32.mrf.mxu0
  %955 = vdwg.mxu0
  %vm956 = vcmp.ge.f32.partialorder %v927, 0.0
  %vm957 = vcmp.ge.f32.partialorder %v930, 0.0
  %vm958 = vcmp.ge.f32.partialorder %v935, 0.0
  %vm959 = vcmp.ge.f32.partialorder %v938, 0.0
  %vm960 = vcmp.ge.f32.partialorder %v943, 0.0
  %vm961 = vcmp.ge.f32.partialorder %v946, 0.0
  %vm962 = vcmp.ge.f32.partialorder %v951, 0.0
  %v963 = vmul.f32 %v927, 0.2
  %v964 = vmul.f32 %v930, 0.2
  %v965 = vmul.f32 %v935, 0.2
  %v966 = vmul.f32 %v938, 0.2
  %v967 = vmul.f32 %v943, 0.2
  %v968 = vmul.f32 %v946, 0.2
  %v969 = vmul.f32 %v951, 0.2
  %v970 = vsel %vm956, %v927, %v963
  %v971 = vsel %vm957, %v930, %v964
  %v972 = vsel %vm958, %v935, %v965
  %v973 = vsel %vm959, %v938, %v966
  %v974 = vsel %vm960, %v943, %v967
  %v975 = vsel %vm961, %v946, %v968
  %v976 = vsel %vm962, %v951, %v969
  %vm977 = vcmask 523264
  %978 = vst.msk [vmem:[%s2] sm:$0xff] %vm977, %v970
  %979 = vst.msk [vmem:[%s2 + $0x8] sm:$0xff] %vm977, %v971
  %980 = vst.msk [vmem:[%s2 + $0x10] sm:$0xff] %vm977, %v972
  %981 = vst.msk [vmem:[%s2 + $0x18] sm:$0xff] %vm977, %v973
  %982 = vst.msk [vmem:[%s2 + $0x20] sm:$0xff] %vm977, %v974
  %983 = vst.msk [vmem:[%s2 + $0x28] sm:$0xff] %vm977, %v975
  %984 = vst.msk [vmem:[%s2 + $0x30] sm:$0xff] %vm977, %v976
  // Predicated region
  $region10: #{discriminator_forward.11} parent=0 // pred_check
    _
  $region11: #{discriminator_forward.11} parent=0 // pred_check_branch
    %986 = sbr.rel (0) target = $region13
  $region12: #{discriminator_forward.11} parent=0 // pred_region
    _
  $region13: #{discriminator_forward.11} parent=0 // pred_fallthru
    _
  // Predicated region
  $region14: #{discriminator_forward.11} parent=0 // pred_check
    _
  $region15: #{discriminator_forward.11} parent=0 // pred_check_branch
    %988 = sbr.rel (0) target = $region17
  $region16: #{discriminator_forward.11} parent=0 // pred_region
    _
  $region17: #{discriminator_forward.11} parent=0 // pred_fallthru
    _

// kernel: discriminator_forward.9
$region0: #{discriminator_forward.9}
  #allocation0 [shape = 'u32[]', space=smem, size = 0x4, offset = 0x4, fixed_abs, tag = 'smem constant byte address 0x4 - core index']
  #allocation1 [shape = 'u32[144,128]{1,0:T(1,128)}', space=vmem, size = 0x12000, scoped, tag = 'internal scratch']
  %s0 = inlined_call_operand.vmem [shape: bf16[56,576], index: 0, kind: input, shape index: {}]
  %s1 = inlined_call_operand.vmem [shape: bf16[576,128], index: 1, kind: input, shape index: {}]
  %s2 = inlined_call_operand.vmem [shape: f32[1,128], index: 2, kind: input, shape index: {}]
  %s3 = inlined_call_operand.vmem [shape: f32[1,128], index: 3, kind: input, shape index: {}]
  %s4 = inlined_call_operand.vmem [shape: f32[56,128], index: 4, kind: output, shape index: {}]
  %s5 = sld [smem:[#allocation0]]
  $region26: #{discriminator_forward.9} parent=0
    _
  %s7 = ssub.s32 1, %s5
  %s8 = scalar_select 0, %s7, %s5
  // Predicated region
  $region2: #{discriminator_forward.9} parent=0 // pred_check
    _
  $region3: #{discriminator_forward.9} parent=0 // pred_check_branch
    %10 = sbr.rel (0) target = $region5
  $region4: #{discriminator_forward.9} parent=0 // pred_region
    _
  $region5: #{discriminator_forward.9} parent=0 // pred_fallthru
    _
  // Predicated region
  $region6: #{discriminator_forward.9} parent=0 // pred_check
    _
  $region7: #{discriminator_forward.9} parent=0 // pred_check_branch
    %12 = sbr.rel (0) target = $region9
  $region8: #{discriminator_forward.9} parent=0 // pred_region
    _
  $region9: #{discriminator_forward.9} parent=0 // pred_fallthru
    _
  // Predicated region
  $region10: #{discriminator_forward.9} parent=0 // pred_check
    _
  $region11: #{discriminator_forward.9} parent=0 // pred_check_branch
    %14 = sbr.rel (0) target = $region13
  $region12: #{discriminator_forward.9} parent=0 // pred_region
    _
  $region13: #{discriminator_forward.9} parent=0 // pred_fallthru
    _
  // Predicated region
  $region14: #{discriminator_forward.9} parent=0 // pred_check
    _
  $region15: #{discriminator_forward.9} parent=0 // pred_check_branch
    %16 = sbr.rel (0) target = $region17
  $region16: #{discriminator_forward.9} parent=0 // pred_region
    _
  $region17: #{discriminator_forward.9} parent=0 // pred_fallthru
    _
  %v18 = vld [vmem:[%s0] sm:$0xff]
  %v19 = vld [vmem:[%s0 + $0x8] sm:$0xff]
  %v20 = vld [vmem:[%s0 + $0x10] sm:$0xf]
  %v21 = vld [vmem:[%s0 + $0x14] sm:$0xff]
  %v22 = vld [vmem:[%s0 + $0x1c] sm:$0xff]
  %v23 = vld [vmem:[%s0 + $0x24] sm:$0xf]
  %v24 = vld [vmem:[%s0 + $0x28] sm:$0xff]
  %v25 = vld [vmem:[%s0 + $0x30] sm:$0xff]
  %v26 = vld [vmem:[%s0 + $0x38] sm:$0xf]
  %v27 = vld [vmem:[%s0 + $0x3c] sm:$0xff]
  %v28 = vld [vmem:[%s0 + $0x44] sm:$0xff]
  %v29 = vld [vmem:[%s0 + $0x4c] sm:$0xf]
  %v30 = vld [vmem:[%s0 + $0x50] sm:$0xff]
  %v31 = vld [vmem:[%s0 + $0x58] sm:$0xff]
  %v32 = vld [vmem:[%s0 + $0x60] sm:$0xf]
  %v33 = vld [vmem:[%s0 + $0x64] sm:$0xff]
  %v34 = vld [vmem:[%s0 + $0x6c] sm:$0xff]
  %v35 = vld [vmem:[%s0 + $0x74] sm:$0xf]
  %v36 = vld [vmem:[%s0 + $0x78] sm:$0xff]
  %v37 = vld [vmem:[%s0 + $0x80] sm:$0xff]
  %v38 = vld [vmem:[%s0 + $0x88] sm:$0xf]
  %v39 = vld [vmem:[%s1] sm:$0xf]
  %v40 = vld [vmem:[%s1 + $0x4] sm:$0xf]
  %v41 = vld [vmem:[%s1 + $0x8] sm:$0xf]
  %v42 = vld [vmem:[%s1 + $0xc] sm:$0xf]
  %v43 = vld [vmem:[%s1 + $0x10] sm:$0xf]
  %v44 = vld [vmem:[%s1 + $0x14] sm:$0xf]
  %v45 = vld [vmem:[%s1 + $0x18] sm:$0xf]
  %v46 = vld [vmem:[%s1 + $0x1c] sm:$0xf]
  %v47 = vld [vmem:[%s1 + $0x20] sm:$0xf]
  %v48 = vld [vmem:[%s1 + $0x24] sm:$0xf]
  %v49 = vld [vmem:[%s1 + $0x28] sm:$0xf]
  %v50 = vld [vmem:[%s1 + $0x2c] sm:$0xf]
  %v51 = vld [vmem:[%s1 + $0x30] sm:$0xf]
  %v52 = vld [vmem:[%s1 + $0x34] sm:$0xf]
  %v53 = vld [vmem:[%s1 + $0x38] sm:$0xf]
  %v54 = vld [vmem:[%s1 + $0x3c] sm:$0xf]
  %v55 = vld [vmem:[%s1 + $0x40] sm:$0xf]
  %v56 = vld [vmem:[%s1 + $0x44] sm:$0xf]
  %v57 = vld [vmem:[%s1 + $0x48] sm:$0xf]
  %v58 = vld [vmem:[%s1 + $0x4c] sm:$0xf]
  %v59 = vld [vmem:[%s1 + $0x50] sm:$0xf]
  %v60 = vld [vmem:[%s1 + $0x54] sm:$0xf]
  %v61 = vld [vmem:[%s1 + $0x58] sm:$0xf]
  %v62 = vld [vmem:[%s1 + $0x5c] sm:$0xf]
  %v63 = vld [vmem:[%s1 + $0x60] sm:$0xf]
  %v64 = vld [vmem:[%s1 + $0x64] sm:$0xf]
  %v65 = vld [vmem:[%s1 + $0x68] sm:$0xf]
  %v66 = vld [vmem:[%s1 + $0x6c] sm:$0xf]
  %v67 = vld [vmem:[%s1 + $0x70] sm:$0xf]
  %v68 = vld [vmem:[%s1 + $0x74] sm:$0xf]
  %v69 = vld [vmem:[%s1 + $0x78] sm:$0xf]
  %v70 = vld [vmem:[%s1 + $0x7c] sm:$0xf]
  %v71 = vld [vmem:[%s1 + $0x80] sm:$0xf]
  %v72 = vld [vmem:[%s1 + $0x84] sm:$0xf]
  %v73 = vld [vmem:[%s1 + $0x88] sm:$0xf]
  %v74 = vld [vmem:[%s1 + $0x8c] sm:$0xf]
  %v75 = vld [vmem:[%s1 + $0x90] sm:$0xf]
  %v76 = vld [vmem:[%s1 + $0x94] sm:$0xf]
  %v77 = vld [vmem:[%s1 + $0x98] sm:$0xf]
  %v78 = vld [vmem:[%s1 + $0x9c] sm:$0xf]
  %v79 = vld [vmem:[%s1 + $0xa0] sm:$0xf]
  %v80 = vld [vmem:[%s1 + $0xa4] sm:$0xf]
  %v81 = vld [vmem:[%s1 + $0xa8] sm:$0xf]
  %v82 = vld [vmem:[%s1 + $0xac] sm:$0xf]
  %v83 = vld [vmem:[%s1 + $0xb0] sm:$0xf]
  %v84 = vld [vmem:[%s1 + $0xb4] sm:$0xf]
  %v85 = vld [vmem:[%s1 + $0xb8] sm:$0xf]
  %v86 = vld [vmem:[%s1 + $0xbc] sm:$0xf]
  %v87 = vld [vmem:[%s1 + $0xc0] sm:$0xf]
  %v88 = vld [vmem:[%s1 + $0xc4] sm:$0xf]
  %v89 = vld [vmem:[%s1 + $0xc8] sm:$0xf]
  %v90 = vld [vmem:[%s1 + $0xcc] sm:$0xf]
  %v91 = vld [vmem:[%s1 + $0xd0] sm:$0xf]
  %v92 = vld [vmem:[%s1 + $0xd4] sm:$0xf]
  %v93 = vld [vmem:[%s1 + $0xd8] sm:$0xf]
  %v94 = vld [vmem:[%s1 + $0xdc] sm:$0xf]
  %v95 = vld [vmem:[%s1 + $0xe0] sm:$0xf]
  %v96 = vld [vmem:[%s1 + $0xe4] sm:$0xf]
  %v97 = vld [vmem:[%s1 + $0xe8] sm:$0xf]
  %v98 = vld [vmem:[%s1 + $0xec] sm:$0xf]
  %v99 = vld [vmem:[%s1 + $0xf0] sm:$0xf]
  %v100 = vld [vmem:[%s1 + $0xf4] sm:$0xf]
  %v101 = vld [vmem:[%s1 + $0xf8] sm:$0xf]
  %v102 = vld [vmem:[%s1 + $0xfc] sm:$0xf]
  %v103 = vld [vmem:[%s1 + $0x100] sm:$0xf]
  %v104 = vld [vmem:[%s1 + $0x104] sm:$0xf]
  %v105 = vld [vmem:[%s1 + $0x108] sm:$0xf]
  %v106 = vld [vmem:[%s1 + $0x10c] sm:$0xf]
  %v107 = vld [vmem:[%s1 + $0x110] sm:$0xf]
  %v108 = vld [vmem:[%s1 + $0x114] sm:$0xf]
  %v109 = vld [vmem:[%s1 + $0x118] sm:$0xf]
  %v110 = vld [vmem:[%s1 + $0x11c] sm:$0xf]
  %v132 = vunpack.c.l.b16 %v18
  %v133 = vunpack.c.h.b16 %v18
  %v134 = vunpack.c.l.b16 %v19
  %v135 = vunpack.c.h.b16 %v19
  %v136 = vunpack.c.l.b16 %v20
  %v137 = vunpack.c.l.b16 %v21
  %v138 = vunpack.c.h.b16 %v21
  %v139 = vunpack.c.l.b16 %v22
  %v140 = vunpack.c.h.b16 %v22
  %v141 = vunpack.c.l.b16 %v23
  %v142 = vunpack.c.l.b16 %v24
  %v143 = vunpack.c.h.b16 %v24
  %v144 = vunpack.c.l.b16 %v25
  %v145 = vunpack.c.h.b16 %v25
  %v146 = vunpack.c.l.b16 %v26
  %v147 = vunpack.c.l.b16 %v27
  %v148 = vunpack.c.h.b16 %v27
  %v149 = vunpack.c.l.b16 %v28
  %v150 = vunpack.c.h.b16 %v28
  %v151 = vunpack.c.l.b16 %v29
  %v152 = vunpack.c.l.b16 %v30
  %v153 = vunpack.c.h.b16 %v30
  %v154 = vunpack.c.l.b16 %v31
  %v155 = vunpack.c.h.b16 %v31
  %v156 = vunpack.c.l.b16 %v32
  %v157 = vunpack.c.l.b16 %v33
  %v158 = vunpack.c.h.b16 %v33
  %v159 = vunpack.c.l.b16 %v34
  %v160 = vunpack.c.h.b16 %v34
  %v161 = vunpack.c.l.b16 %v35
  %v162 = vunpack.c.l.b16 %v36
  %v163 = vunpack.c.h.b16 %v36
  %v164 = vunpack.c.l.b16 %v37
  %v165 = vunpack.c.h.b16 %v37
  %v166 = vunpack.c.l.b16 %v38
  %v167 = vpack.c.b16 %v137, %v132
  %v168 = vpack.c.b16 %v138, %v133
  %v169 = vpack.c.b16 %v139, %v134
  %v170 = vpack.c.b16 %v140, %v135
  %v171 = vpack.c.b16 %v141, %v136
  %v172 = vpack.c.b16 %v147, %v142
  %v173 = vpack.c.b16 %v148, %v143
  %v174 = vpack.c.b16 %v149, %v144
  %v175 = vpack.c.b16 %v150, %v145
  %v176 = vpack.c.b16 %v151, %v146
  %v177 = vpack.c.b16 %v157, %v152
  %v178 = vpack.c.b16 %v158, %v153
  %v179 = vpack.c.b16 %v159, %v154
  %v180 = vpack.c.b16 %v160, %v155
  %v181 = vpack.c.b16 %v161, %v156
  %v182 = vpack.c.b16 %v162, %v162
  %v183 = vpack.c.b16 %v163, %v163
  %v184 = vpack.c.b16 %v164, %v164
  %v185 = vpack.c.b16 %v165, %v165
  %v186 = vpack.c.b16 %v166, %v166
  %v275 = vunpack.c.l.b16 %v39
  %v276 = vunpack.c.l.b16 %v40
  %v277 = vunpack.c.l.b16 %v41
  %v278 = vunpack.c.l.b16 %v42
  %v279 = vunpack.c.l.b16 %v43
  %v280 = vunpack.c.l.b16 %v44
  %v281 = vunpack.c.l.b16 %v45
  %v282 = vunpack.c.l.b16 %v46
  %v283 = vunpack.c.l.b16 %v47
  %v284 = vunpack.c.l.b16 %v48
  %v285 = vunpack.c.l.b16 %v49
  %v286 = vunpack.c.l.b16 %v50
  %v287 = vunpack.c.l.b16 %v51
  %v288 = vunpack.c.l.b16 %v52
  %v289 = vunpack.c.l.b16 %v53
  %v290 = vunpack.c.l.b16 %v54
  %v291 = vunpack.c.l.b16 %v55
  %v292 = vunpack.c.l.b16 %v56
  %v293 = vunpack.c.l.b16 %v57
  %v294 = vunpack.c.l.b16 %v58
  %v295 = vunpack.c.l.b16 %v59
  %v296 = vunpack.c.l.b16 %v60
  %v297 = vunpack.c.l.b16 %v61
  %v298 = vunpack.c.l.b16 %v62
  %v299 = vunpack.c.l.b16 %v63
  %v300 = vunpack.c.l.b16 %v64
  %v301 = vunpack.c.l.b16 %v65
  %v302 = vunpack.c.l.b16 %v66
  %v303 = vunpack.c.l.b16 %v67
  %v304 = vunpack.c.l.b16 %v68
  %v305 = vunpack.c.l.b16 %v69
  %v306 = vunpack.c.l.b16 %v70
  %v307 = vunpack.c.l.b16 %v71
  %v308 = vunpack.c.l.b16 %v72
  %v309 = vunpack.c.l.b16 %v73
  %v310 = vunpack.c.l.b16 %v74
  %v311 = vunpack.c.l.b16 %v75
  %v312 = vunpack.c.l.b16 %v76
  %v313 = vunpack.c.l.b16 %v77
  %v314 = vunpack.c.l.b16 %v78
  %v315 = vunpack.c.l.b16 %v79
  %v316 = vunpack.c.l.b16 %v80
  %v317 = vunpack.c.l.b16 %v81
  %v318 = vunpack.c.l.b16 %v82
  %v319 = vunpack.c.l.b16 %v83
  %v320 = vunpack.c.l.b16 %v84
  %v321 = vunpack.c.l.b16 %v85
  %v322 = vunpack.c.l.b16 %v86
  %v323 = vunpack.c.l.b16 %v87
  %v324 = vunpack.c.l.b16 %v88
  %v325 = vunpack.c.l.b16 %v89
  %v326 = vunpack.c.l.b16 %v90
  %v327 = vunpack.c.l.b16 %v91
  %v328 = vunpack.c.l.b16 %v92
  %v329 = vunpack.c.l.b16 %v93
  %v330 = vunpack.c.l.b16 %v94
  %v331 = vunpack.c.l.b16 %v95
  %v332 = vunpack.c.l.b16 %v96
  %v333 = vunpack.c.l.b16 %v97
  %v334 = vunpack.c.l.b16 %v98
  %v335 = vunpack.c.l.b16 %v99
  %v336 = vunpack.c.l.b16 %v100
  %v337 = vunpack.c.l.b16 %v101
  %v338 = vunpack.c.l.b16 %v102
  %v339 = vunpack.c.l.b16 %v103
  %v340 = vunpack.c.l.b16 %v104
  %v341 = vunpack.c.l.b16 %v105
  %v342 = vunpack.c.l.b16 %v106
  %v343 = vunpack.c.l.b16 %v107
  %v344 = vunpack.c.l.b16 %v108
  %v345 = vunpack.c.l.b16 %v109
  %v346 = vunpack.c.l.b16 %v110
  %v347 = vpack.c.b16 %v276, %v275
  %v348 = vpack.c.b16 %v278, %v277
  %v349 = vpack.c.b16 %v280, %v279
  %v350 = vpack.c.b16 %v282, %v281
  %v351 = vpack.c.b16 %v284, %v283
  %v352 = vpack.c.b16 %v286, %v285
  %v353 = vpack.c.b16 %v288, %v287
  %v354 = vpack.c.b16 %v290, %v289
  %v355 = vpack.c.b16 %v292, %v291
  %v356 = vpack.c.b16 %v294, %v293
  %v357 = vpack.c.b16 %v296, %v295
  %v358 = vpack.c.b16 %v298, %v297
  %v359 = vpack.c.b16 %v300, %v299
  %v360 = vpack.c.b16 %v302, %v301
  %v361 = vpack.c.b16 %v304, %v303
  %v362 = vpack.c.b16 %v306, %v305
  %v363 = vpack.c.b16 %v308, %v307
  %v364 = vpack.c.b16 %v310, %v309
  %v365 = vpack.c.b16 %v312, %v311
  %v366 = vpack.c.b16 %v314, %v313
  %v367 = vpack.c.b16 %v316, %v315
  %v368 = vpack.c.b16 %v318, %v317
  %v369 = vpack.c.b16 %v320, %v319
  %v370 = vpack.c.b16 %v322, %v321
  %v371 = vpack.c.b16 %v324, %v323
  %v372 = vpack.c.b16 %v326, %v325
  %v373 = vpack.c.b16 %v328, %v327
  %v374 = vpack.c.b16 %v330, %v329
  %v375 = vpack.c.b16 %v332, %v331
  %v376 = vpack.c.b16 %v334, %v333
  %v377 = vpack.c.b16 %v336, %v335
  %v378 = vpack.c.b16 %v338, %v337
  %v379 = vpack.c.b16 %v340, %v339
  %v380 = vpack.c.b16 %v342, %v341
  %v381 = vpack.c.b16 %v344, %v343
  %v382 = vpack.c.b16 %v346, %v345
  %vm419 = vcmask 523264
  %v421 = vsel %vm419, %v171, 0
  %v424 = vsel %vm419, %v176, 0
  %v427 = vsel %vm419, %v181, 0
  %v430 = vsel %vm419, %v186, 0
  %432 = vmatprep.subr.bf16.mxu0 0
  %433 = vmatpush1.bf16.msra.mxu0 %v354
  %434 = vmatprep.subr.bf16.mxu0 0
  %435 = vmatpush1.bf16.msra.mxu0 %v353
  %436 = vmatprep.subr.bf16.mxu0 0
  %437 = vmatpush1.bf16.msra.mxu0 %v352
  %438 = vmatprep.subr.bf16.mxu0 0
  %439 = vmatpush1.bf16.msra.mxu0 %v351
  %440 = vmatprep.subr.bf16.mxu0 0
  %441 = vmatpush1.bf16.msra.mxu0 %v350
  %442 = vmatprep.subr.bf16.mxu0 0
  %443 = vmatpush1.bf16.msra.mxu0 %v349
  %444 = vmatprep.subr.bf16.mxu0 0
  %445 = vmatpush1.bf16.msra.mxu0 %v348
  %446 = vmatprep.subr.bf16.mxu0 0
  %447 = vmatpush1.bf16.msra.mxu0 %v347
  %448 = vmatprep.subr.bf16.mxu0 0
  %449 = vmatpush2.bf16.msra.mxu0 %v362
  %450 = vmatprep.subr.bf16.mxu0 0
  %451 = vmatpush2.bf16.msra.mxu0 %v361
  %452 = vmatprep.subr.bf16.mxu0 0
  %453 = vmatpush2.bf16.msra.mxu0 %v360
  %454 = vmatprep.subr.bf16.mxu0 0
  %455 = vmatpush2.bf16.msra.mxu0 %v359
  %456 = vmatprep.subr.bf16.mxu0 0
  %457 = vmatpush2.bf16.msra.mxu0 %v358
  %458 = vmatprep.subr.bf16.mxu0 0
  %459 = vmatpush2.bf16.msra.mxu0 %v357
  %460 = vmatprep.subr.bf16.mxu0 0
  %461 = vmatpush2.bf16.msra.mxu0 %v356
  %462 = vmatprep.subr.bf16.mxu0 0
  %463 = vmatpush2.bf16.msra.mxu0 %v355
  %464 = vmatprep.mubr.bf16.mxu0 %v168
  %465 = vmatmul.mubr.bf16.gmra.mxu0 %v167
  %v466 = vpop.f32.mrf.mxu0
  %v467 = vadd.f32 0.0, %v466
  %v468 = vpop.f32.mrf.mxu0
  %v469 = vpop.f32.mrf.mxu0
  %v470 = vadd.f32 0.0, %v469
  %v471 = vpop.f32.mrf.mxu0
  %472 = vmatprep.mubr.bf16.mxu0 %v173
  %473 = vmatmul.mubr.bf16.gmra.mxu0 %v172
  %v474 = vpop.f32.mrf.mxu0
  %v475 = vadd.f32 0.0, %v474
  %v476 = vpop.f32.mrf.mxu0
  %v477 = vpop.f32.mrf.mxu0
  %v478 = vadd.f32 0.0, %v477
  %v479 = vpop.f32.mrf.mxu0
  %480 = vmatprep.mubr.bf16.mxu0 %v178
  %481 = vmatmul.mubr.bf16.gmra.mxu0 %v177
  %v482 = vpop.f32.mrf.mxu0
  %v483 = vadd.f32 0.0, %v482
  %v484 = vpop.f32.mrf.mxu0
  %v485 = vpop.f32.mrf.mxu0
  %v486 = vadd.f32 0.0, %v485
  %v487 = vpop.f32.mrf.mxu0
  %488 = vmatprep.mubr.bf16.mxu0 %v183
  %489 = vmatmul.mubr.bf16.gmra.mxu0 %v182
  %v490 = vpop.f32.mrf.mxu0
  %v491 = vadd.f32 0.0, %v490
  %v492 = vpop.f32.mrf.mxu0
  %v493 = vpop.f32.mrf.mxu0
  %v494 = vpop.f32.mrf.mxu0
  %495 = vdwg.mxu0
  %496 = vmatprep.subr.bf16.mxu0 0
  %497 = vmatpush1.bf16.msra.mxu0 %v370
  %498 = vmatprep.subr.bf16.mxu0 0
  %499 = vmatpush1.bf16.msra.mxu0 %v369
  %500 = vmatprep.subr.bf16.mxu0 0
  %501 = vmatpush1.bf16.msra.mxu0 %v368
  %502 = vmatprep.subr.bf16.mxu0 0
  %503 = vmatpush1.bf16.msra.mxu0 %v367
  %504 = vmatprep.subr.bf16.mxu0 0
  %505 = vmatpush1.bf16.msra.mxu0 %v366
  %506 = vmatprep.subr.bf16.mxu0 0
  %507 = vmatpush1.bf16.msra.mxu0 %v365
  %508 = vmatprep.subr.bf16.mxu0 0
  %509 = vmatpush1.bf16.msra.mxu0 %v364
  %510 = vmatprep.subr.bf16.mxu0 0
  %511 = vmatpush1.bf16.msra.mxu0 %v363
  %512 = vmatprep.subr.bf16.mxu0 0
  %513 = vmatpush2.bf16.msra.mxu0 %v378
  %514 = vmatprep.subr.bf16.mxu0 0
  %515 = vmatpush2.bf16.msra.mxu0 %v377
  %516 = vmatprep.subr.bf16.mxu0 0
  %517 = vmatpush2.bf16.msra.mxu0 %v376
  %518 = vmatprep.subr.bf16.mxu0 0
  %519 = vmatpush2.bf16.msra.mxu0 %v375
  %520 = vmatprep.subr.bf16.mxu0 0
  %521 = vmatpush2.bf16.msra.mxu0 %v374
  %522 = vmatprep.subr.bf16.mxu0 0
  %523 = vmatpush2.bf16.msra.mxu0 %v373
  %524 = vmatprep.subr.bf16.mxu0 0
  %525 = vmatpush2.bf16.msra.mxu0 %v372
  %526 = vmatprep.subr.bf16.mxu0 0
  %527 = vmatpush2.bf16.msra.mxu0 %v371
  %528 = vmatprep.mubr.bf16.mxu0 %v170
  %529 = vmatmul.mubr.bf16.gmra.mxu0 %v169
  %v530 = vpop.f32.mrf.mxu0
  %v531 = vadd.f32 %v467, %v530
  %v532 = vpop.f32.mrf.mxu0
  %v533 = vpop.f32.mrf.mxu0
  %v534 = vadd.f32 %v470, %v533
  %v535 = vpop.f32.mrf.mxu0
  %536 = vmatprep.mubr.bf16.mxu0 %v175
  %537 = vmatmul.mubr.bf16.gmra.mxu0 %v174
  %v538 = vpop.f32.mrf.mxu0
  %v539 = vadd.f32 %v475, %v538
  %v540 = vpop.f32.mrf.mxu0
  %v541 = vpop.f32.mrf.mxu0
  %v542 = vadd.f32 %v478, %v541
  %v543 = vpop.f32.mrf.mxu0
  %544 = vmatprep.mubr.bf16.mxu0 %v180
  %545 = vmatmul.mubr.bf16.gmra.mxu0 %v179
  %v546 = vpop.f32.mrf.mxu0
  %v547 = vadd.f32 %v483, %v546
  %v548 = vpop.f32.mrf.mxu0
  %v549 = vpop.f32.mrf.mxu0
  %v550 = vadd.f32 %v486, %v549
  %v551 = vpop.f32.mrf.mxu0
  %552 = vmatprep.mubr.bf16.mxu0 %v185
  %553 = vmatmul.mubr.bf16.gmra.mxu0 %v184
  %v554 = vpop.f32.mrf.mxu0
  %v555 = vadd.f32 %v491, %v554
  %v556 = vpop.f32.mrf.mxu0
  %v557 = vpop.f32.mrf.mxu0
  %v558 = vpop.f32.mrf.mxu0
  %559 = vdwg.mxu0
  %560 = vmatprep.subr.bf16.mxu0 0
  %561 = vmatpush1.bf16.msra.mxu0 0
  %562 = vmatprep.subr.bf16.mxu0 0
  %563 = vmatpush1.bf16.msra.mxu0 0
  %564 = vmatprep.subr.bf16.mxu0 0
  %565 = vmatpush1.bf16.msra.mxu0 0
  %566 = vmatprep.subr.bf16.mxu0 0
  %567 = vmatpush1.bf16.msra.mxu0 0
  %568 = vmatprep.subr.bf16.mxu0 0
  %569 = vmatpush1.bf16.msra.mxu0 %v382
  %570 = vmatprep.subr.bf16.mxu0 0
  %571 = vmatpush1.bf16.msra.mxu0 %v381
  %572 = vmatprep.subr.bf16.mxu0 0
  %573 = vmatpush1.bf16.msra.mxu0 %v380
  %574 = vmatprep.subr.bf16.mxu0 0
  %575 = vmatpush1.bf16.msra.mxu0 %v379
  %576 = vmatprep.subr.bf16.mxu0 0
  %577 = vmatpush2.bf16.msra.mxu0 0
  %578 = vmatprep.subr.bf16.mxu0 0
  %579 = vmatpush2.bf16.msra.mxu0 0
  %580 = vmatprep.subr.bf16.mxu0 0
  %581 = vmatpush2.bf16.msra.mxu0 0
  %582 = vmatprep.subr.bf16.mxu0 0
  %583 = vmatpush2.bf16.msra.mxu0 0
  %584 = vmatprep.subr.bf16.mxu0 0
  %585 = vmatpush2.bf16.msra.mxu0 0
  %586 = vmatprep.subr.bf16.mxu0 0
  %587 = vmatpush2.bf16.msra.mxu0 0
  %588 = vmatprep.subr.bf16.mxu0 0
  %589 = vmatpush2.bf16.msra.mxu0 0
  %590 = vmatprep.subr.bf16.mxu0 0
  %591 = vmatpush2.bf16.msra.mxu0 0
  %592 = vmatprep.mubr.bf16.mxu0 0
  %593 = vmatmul.mubr.bf16.gmra.mxu0 %v421
  %v594 = vpop.f32.mrf.mxu0
  %v595 = vadd.f32 %v531, %v594
  %v596 = vpop.f32.mrf.mxu0
  %v597 = vpop.f32.mrf.mxu0
  %v598 = vadd.f32 %v534, %v597
  %v599 = vpop.f32.mrf.mxu0
  %600 = vmatprep.mubr.bf16.mxu0 0
  %601 = vmatmul.mubr.bf16.gmra.mxu0 %v424
  %v602 = vpop.f32.mrf.mxu0
  %v603 = vadd.f32 %v539, %v602
  %v604 = vpop.f32.mrf.mxu0
  %v605 = vpop.f32.mrf.mxu0
  %v606 = vadd.f32 %v542, %v605
  %v607 = vpop.f32.mrf.mxu0
  %608 = vmatprep.mubr.bf16.mxu0 0
  %609 = vmatmul.mubr.bf16.gmra.mxu0 %v427
  %v610 = vpop.f32.mrf.mxu0
  %v611 = vadd.f32 %v547, %v610
  %v612 = vpop.f32.mrf.mxu0
  %v613 = vpop.f32.mrf.mxu0
  %v614 = vadd.f32 %v550, %v613
  %v615 = vpop.f32.mrf.mxu0
  %616 = vmatprep.mubr.bf16.mxu0 0
  %617 = vmatmul.mubr.bf16.gmra.mxu0 %v430
  %v618 = vpop.f32.mrf.mxu0
  %v619 = vadd.f32 %v555, %v618
  %v620 = vpop.f32.mrf.mxu0
  %v621 = vpop.f32.mrf.mxu0
  %v622 = vpop.f32.mrf.mxu0
  %623 = vdwg.mxu0
  %v624 = vadd.f32 %v595, %v598
  %v625 = vadd.f32 %v624, %v603
  %v626 = vadd.f32 %v625, %v606
  %v627 = vadd.f32 %v626, %v611
  %v628 = vadd.f32 %v627, %v614
  %v629 = vadd.f32 %v628, %v619
  %v630 = vrot.slane %v629, 4
  %v631 = vadd.f32 %v629, %v630
  %v632 = vrot.slane %v631, 2
  %v633 = vadd.f32 %v631, %v632
  %v634 = vrot.slane %v633, 1
  %v635 = vadd.f32 %v633, %v634
  %v636 = vmul.f32 %v595, %v595
  %v637 = vmul.f32 %v598, %v598
  %v638 = vmul.f32 %v603, %v603
  %v639 = vmul.f32 %v606, %v606
  %v640 = vmul.f32 %v611, %v611
  %v641 = vmul.f32 %v614, %v614
  %v642 = vmul.f32 %v619, %v619
  %v643 = vadd.f32 %v636, %v637
  %v644 = vadd.f32 %v643, %v638
  %v645 = vadd.f32 %v644, %v639
  %v646 = vadd.f32 %v645, %v640
  %v647 = vadd.f32 %v646, %v641
  %v648 = vadd.f32 %v647, %v642
  %v649 = vrot.slane %v648, 4
  %v650 = vadd.f32 %v648, %v649
  %v651 = vrot.slane %v650, 2
  %v652 = vadd.f32 %v650, %v651
  %v653 = vrot.slane %v652, 1
  %v654 = vadd.f32 %v652, %v653
  %v655 = vmul.f32 %v635, 0.02
  %v656 = vmul.f32 %v654, 0.02
  %v657 = vmul.f32 %v655, %v655
  %v658 = vsub.f32 %v656, %v657
  %v659 = vld [vmem:[%s2] sm:$0x1]
  %v660 = vadd.f32 %v658, 1e-05
  %v661 = vrsqrt.pop %v660
  %v662 = vmul.f32 %v659, %v661
  %v663 = vld [vmem:[%s3] sm:$0x1]
  %v664 = vmul.f32 %v655, %v662
  %v665 = vsub.f32 %v663, %v664
  %v667 = vlaneseq
  %v668 = vshrl.u32 %v667, 7
  %v669 = vsub.s32 0, %v668
  %v670 = vrot.slane %v662, %v669
  %v672 = vmul.f32 %v595, %v670
  %v673 = vmul.f32 %v598, %v670
  %v674 = vmul.f32 %v603, %v670
  %v675 = vmul.f32 %v606, %v670
  %v676 = vmul.f32 %v611, %v670
  %v677 = vmul.f32 %v614, %v670
  %v678 = vmul.f32 %v619, %v670
  %v680 = vlaneseq
  %v681 = vshrl.u32 %v680, 7
  %v682 = vsub.s32 0, %v681
  %v683 = vrot.slane %v665, %v682
  %v685 = vadd.f32 %v672, %v683
  %v686 = vadd.f32 %v673, %v683
  %v687 = vadd.f32 %v674, %v683
  %v688 = vadd.f32 %v675, %v683
  %v689 = vadd.f32 %v676, %v683
  %v690 = vadd.f32 %v677, %v683
  %v691 = vadd.f32 %v678, %v683
  %vm692 = vcmp.ge.f32.partialorder %v685, 0.0
  %vm693 = vcmp.ge.f32.partialorder %v686, 0.0
  %vm694 = vcmp.ge.f32.partialorder %v687, 0.0
  %vm695 = vcmp.ge.f32.partialorder %v688, 0.0
  %vm696 = vcmp.ge.f32.partialorder %v689, 0.0
  %vm697 = vcmp.ge.f32.partialorder %v690, 0.0
  %vm698 = vcmp.ge.f32.partialorder %v691, 0.0
  %v699 = vmul.f32 %v685, 0.2
  %v700 = vmul.f32 %v686, 0.2
  %v701 = vmul.f32 %v687, 0.2
  %v702 = vmul.f32 %v688, 0.2
  %v703 = vmul.f32 %v689, 0.2
  %v704 = vmul.f32 %v690, 0.2
  %v705 = vmul.f32 %v691, 0.2
  %v706 = vsel %vm692, %v685, %v699
  %v707 = vsel %vm693, %v686, %v700
  %v708 = vsel %vm694, %v687, %v701
  %v709 = vsel %vm695, %v688, %v702
  %v710 = vsel %vm696, %v689, %v703
  %v711 = vsel %vm697, %v690, %v704
  %v712 = vsel %vm698, %v691, %v705
  %713 = vst [vmem:[%s4] sm:$0xff] %v706
  %714 = vst [vmem:[%s4 + $0x8] sm:$0xff] %v707
  %715 = vst [vmem:[%s4 + $0x10] sm:$0xff] %v708
  %716 = vst [vmem:[%s4 + $0x18] sm:$0xff] %v709
  %717 = vst [vmem:[%s4 + $0x20] sm:$0xff] %v710
  %718 = vst [vmem:[%s4 + $0x28] sm:$0xff] %v711
  %719 = vst [vmem:[%s4 + $0x30] sm:$0xff] %v712
  // Predicated region
  $region18: #{discriminator_forward.9} parent=0 // pred_check
    _
  $region19: #{discriminator_forward.9} parent=0 // pred_check_branch
    %721 = sbr.rel (0) target = $region21
  $region20: #{discriminator_forward.9} parent=0 // pred_region
    _
  $region21: #{discriminator_forward.9} parent=0 // pred_fallthru
    _
  // Predicated region
  $region22: #{discriminator_forward.9} parent=0 // pred_check
    _
  $region23: #{discriminator_forward.9} parent=0 // pred_check_branch
    %723 = sbr.rel (0) target = $region25
  $region24: #{discriminator_forward.9} parent=0 // pred_region
    _
  $region25: #{discriminator_forward.9} parent=0 // pred_fallthru
    _

// kernel: discriminator_forward.10
$region0: #{discriminator_forward.10}
  #allocation0 [shape = 'u32[]', space=smem, size = 0x4, offset = 0x4, fixed_abs, tag = 'smem constant byte address 0x4 - core index']
  #allocation1 [shape = 'u32[144,128]{1,0:T(1,128)}', space=vmem, size = 0x12000, scoped, tag = 'internal scratch']
  %s0 = inlined_call_operand.vmem [shape: bf16[56,1152], index: 0, kind: input, shape index: {}]
  %s1 = inlined_call_operand.vmem [shape: bf16[1152,256], index: 1, kind: input, shape index: {}]
  %s2 = inlined_call_operand.vmem [shape: f32[1,256], index: 2, kind: input, shape index: {}]
  %s3 = inlined_call_operand.vmem [shape: f32[1,256], index: 3, kind: input, shape index: {}]
  %s4 = inlined_call_operand.vmem [shape: f32[56,256], index: 4, kind: output, shape index: {}]
  %s5 = sld [smem:[#allocation0]]
  $region26: #{discriminator_forward.10} parent=0
    _
  %s7 = ssub.s32 1, %s5
  %s8 = scalar_select 0, %s7, %s5
  // Predicated region
  $region2: #{discriminator_forward.10} parent=0 // pred_check
    _
  $region3: #{discriminator_forward.10} parent=0 // pred_check_branch
    %10 = sbr.rel (0) target = $region5
  $region4: #{discriminator_forward.10} parent=0 // pred_region
    _
  $region5: #{discriminator_forward.10} parent=0 // pred_fallthru
    _
  // Predicated region
  $region6: #{discriminator_forward.10} parent=0 // pred_check
    _
  $region7: #{discriminator_forward.10} parent=0 // pred_check_branch
    %12 = sbr.rel (0) target = $region9
  $region8: #{discriminator_forward.10} parent=0 // pred_region
    _
  $region9: #{discriminator_forward.10} parent=0 // pred_fallthru
    _
  // Predicated region
  $region10: #{discriminator_forward.10} parent=0 // pred_check
    _
  $region11: #{discriminator_forward.10} parent=0 // pred_check_branch
    %14 = sbr.rel (0) target = $region13
  $region12: #{discriminator_forward.10} parent=0 // pred_region
    _
  $region13: #{discriminator_forward.10} parent=0 // pred_fallthru
    _
  // Predicated region
  $region14: #{discriminator_forward.10} parent=0 // pred_check
    _
  $region15: #{discriminator_forward.10} parent=0 // pred_check_branch
    %16 = sbr.rel (0) target = $region17
  $region16: #{discriminator_forward.10} parent=0 // pred_region
    _
  $region17: #{discriminator_forward.10} parent=0 // pred_fallthru
    _
  %v18 = vld [vmem:[%s0] sm:$0xff]
  %v19 = vld [vmem:[%s0 + $0x8] sm:$0xff]
  %v20 = vld [vmem:[%s0 + $0x10] sm:$0xff]
  %v21 = vld [vmem:[%s0 + $0x18] sm:$0xff]
  %v22 = vld [vmem:[%s0 + $0x20] sm:$0xf]
  %v23 = vld [vmem:[%s0 + $0x24] sm:$0xff]
  %v24 = vld [vmem:[%s0 + $0x2c] sm:$0xff]
  %v25 = vld [vmem:[%s0 + $0x34] sm:$0xff]
  %v26 = vld [vmem:[%s0 + $0x3c] sm:$0xff]
  %v27 = vld [vmem:[%s0 + $0x44] sm:$0xf]
  %v28 = vld [vmem:[%s0 + $0x48] sm:$0xff]
  %v29 = vld [vmem:[%s0 + $0x50] sm:$0xff]
  %v30 = vld [vmem:[%s0 + $0x58] sm:$0xff]
  %v31 = vld [vmem:[%s0 + $0x60] sm:$0xff]
  %v32 = vld [vmem:[%s0 + $0x68] sm:$0xf]
  %v33 = vld [vmem:[%s0 + $0x6c] sm:$0xff]
  %v34 = vld [vmem:[%s0 + $0x74] sm:$0xff]
  %v35 = vld [vmem:[%s0 + $0x7c] sm:$0xff]
  %v36 = vld [vmem:[%s0 + $0x84] sm:$0xff]
  %v37 = vld [vmem:[%s0 + $0x8c] sm:$0xf]
  %v38 = vld [vmem:[%s0 + $0x90] sm:$0xff]
  %v39 = vld [vmem:[%s0 + $0x98] sm:$0xff]
  %v40 = vld [vmem:[%s0 + $0xa0] sm:$0xff]
  %v41 = vld [vmem:[%s0 + $0xa8] sm:$0xff]
  %v42 = vld [vmem:[%s0 + $0xb0] sm:$0xf]
  %v43 = vld [vmem:[%s0 + $0xb4] sm:$0xff]
  %v44 = vld [vmem:[%s0 + $0xbc] sm:$0xff]
  %v45 = vld [vmem:[%s0 + $0xc4] sm:$0xff]
  %v46 = vld [vmem:[%s0 + $0xcc] sm:$0xff]
  %v47 = vld [vmem:[%s0 + $0xd4] sm:$0xf]
  %v48 = vld [vmem:[%s0 + $0xd8] sm:$0xff]
  %v49 = vld [vmem:[%s0 + $0xe0] sm:$0xff]
  %v50 = vld [vmem:[%s0 + $0xe8] sm:$0xff]
  %v51 = vld [vmem:[%s0 + $0xf0] sm:$0xff]
  %v52 = vld [vmem:[%s0 + $0xf8] sm:$0xf]
  %v53 = vld [vmem:[%s1] sm:$0xff]
  %v54 = vld [vmem:[%s1 + $0x8] sm:$0xff]
  %v55 = vld [vmem:[%s1 + $0x10] sm:$0xff]
  %v56 = vld [vmem:[%s1 + $0x18] sm:$0xff]
  %v57 = vld [vmem:[%s1 + $0x20] sm:$0xff]
  %v58 = vld [vmem:[%s1 + $0x28] sm:$0xff]
  %v59 = vld [vmem:[%s1 + $0x30] sm:$0xff]
  %v60 = vld [vmem:[%s1 + $0x38] sm:$0xff]
  %v61 = vld [vmem:[%s1 + $0x40] sm:$0xff]
  %v62 = vld [vmem:[%s1 + $0x48] sm:$0xff]
  %v63 = vld [vmem:[%s1 + $0x50] sm:$0xff]
  %v64 = vld [vmem:[%s1 + $0x58] sm:$0xff]
  %v65 = vld [vmem:[%s1 + $0x60] sm:$0xff]
  %v66 = vld [vmem:[%s1 + $0x68] sm:$0xff]
  %v67 = vld [vmem:[%s1 + $0x70] sm:$0xff]
  %v68 = vld [vmem:[%s1 + $0x78] sm:$0xff]
  %v69 = vld [vmem:[%s1 + $0x80] sm:$0xff]
  %v70 = vld [vmem:[%s1 + $0x88] sm:$0xff]
  %v71 = vld [vmem:[%s1 + $0x90] sm:$0xff]
  %v72 = vld [vmem:[%s1 + $0x98] sm:$0xff]
  %v73 = vld [vmem:[%s1 + $0xa0] sm:$0xff]
  %v74 = vld [vmem:[%s1 + $0xa8] sm:$0xff]
  %v75 = vld [vmem:[%s1 + $0xb0] sm:$0xff]
  %v76 = vld [vmem:[%s1 + $0xb8] sm:$0xff]
  %v77 = vld [vmem:[%s1 + $0xc0] sm:$0xff]
  %v78 = vld [vmem:[%s1 + $0xc8] sm:$0xff]
  %v79 = vld [vmem:[%s1 + $0xd0] sm:$0xff]
  %v80 = vld [vmem:[%s1 + $0xd8] sm:$0xff]
  %v81 = vld [vmem:[%s1 + $0xe0] sm:$0xff]
  %v82 = vld [vmem:[%s1 + $0xe8] sm:$0xff]
  %v83 = vld [vmem:[%s1 + $0xf0] sm:$0xff]
  %v84 = vld [vmem:[%s1 + $0xf8] sm:$0xff]
  %v85 = vld [vmem:[%s1 + $0x100] sm:$0xff]
  %v86 = vld [vmem:[%s1 + $0x108] sm:$0xff]
  %v87 = vld [vmem:[%s1 + $0x110] sm:$0xff]
  %v88 = vld [vmem:[%s1 + $0x118] sm:$0xff]
  %v89 = vld [vmem:[%s1 + $0x120] sm:$0xff]
  %v90 = vld [vmem:[%s1 + $0x128] sm:$0xff]
  %v91 = vld [vmem:[%s1 + $0x130] sm:$0xff]
  %v92 = vld [vmem:[%s1 + $0x138] sm:$0xff]
  %v93 = vld [vmem:[%s1 + $0x140] sm:$0xff]
  %v94 = vld [vmem:[%s1 + $0x148] sm:$0xff]
  %v95 = vld [vmem:[%s1 + $0x150] sm:$0xff]
  %v96 = vld [vmem:[%s1 + $0x158] sm:$0xff]
  %v97 = vld [vmem:[%s1 + $0x160] sm:$0xff]
  %v98 = vld [vmem:[%s1 + $0x168] sm:$0xff]
  %v99 = vld [vmem:[%s1 + $0x170] sm:$0xff]
  %v100 = vld [vmem:[%s1 + $0x178] sm:$0xff]
  %v101 = vld [vmem:[%s1 + $0x180] sm:$0xff]
  %v102 = vld [vmem:[%s1 + $0x188] sm:$0xff]
  %v103 = vld [vmem:[%s1 + $0x190] sm:$0xff]
  %v104 = vld [vmem:[%s1 + $0x198] sm:$0xff]
  %v105 = vld [vmem:[%s1 + $0x1a0] sm:$0xff]
  %v106 = vld [vmem:[%s1 + $0x1a8] sm:$0xff]
  %v107 = vld [vmem:[%s1 + $0x1b0] sm:$0xff]
  %v108 = vld [vmem:[%s1 + $0x1b8] sm:$0xff]
  %v109 = vld [vmem:[%s1 + $0x1c0] sm:$0xff]
  %v110 = vld [vmem:[%s1 + $0x1c8] sm:$0xff]
  %v111 = vld [vmem:[%s1 + $0x1d0] sm:$0xff]
  %v112 = vld [vmem:[%s1 + $0x1d8] sm:$0xff]
  %v113 = vld [vmem:[%s1 + $0x1e0] sm:$0xff]
  %v114 = vld [vmem:[%s1 + $0x1e8] sm:$0xff]
  %v115 = vld [vmem:[%s1 + $0x1f0] sm:$0xff]
  %v116 = vld [vmem:[%s1 + $0x1f8] sm:$0xff]
  %v117 = vld [vmem:[%s1 + $0x200] sm:$0xff]
  %v118 = vld [vmem:[%s1 + $0x208] sm:$0xff]
  %v119 = vld [vmem:[%s1 + $0x210] sm:$0xff]
  %v120 = vld [vmem:[%s1 + $0x218] sm:$0xff]
  %v121 = vld [vmem:[%s1 + $0x220] sm:$0xff]
  %v122 = vld [vmem:[%s1 + $0x228] sm:$0xff]
  %v123 = vld [vmem:[%s1 + $0x230] sm:$0xff]
  %v124 = vld [vmem:[%s1 + $0x238] sm:$0xff]
  %v125 = vld [vmem:[%s1 + $0x240] sm:$0xff]
  %v126 = vld [vmem:[%s1 + $0x248] sm:$0xff]
  %v127 = vld [vmem:[%s1 + $0x250] sm:$0xff]
  %v128 = vld [vmem:[%s1 + $0x258] sm:$0xff]
  %v129 = vld [vmem:[%s1 + $0x260] sm:$0xff]
  %v130 = vld [vmem:[%s1 + $0x268] sm:$0xff]
  %v131 = vld [vmem:[%s1 + $0x270] sm:$0xff]
  %v132 = vld [vmem:[%s1 + $0x278] sm:$0xff]
  %v133 = vld [vmem:[%s1 + $0x280] sm:$0xff]
  %v134 = vld [vmem:[%s1 + $0x288] sm:$0xff]
  %v135 = vld [vmem:[%s1 + $0x290] sm:$0xff]
  %v136 = vld [vmem:[%s1 + $0x298] sm:$0xff]
  %v137 = vld [vmem:[%s1 + $0x2a0] sm:$0xff]
  %v138 = vld [vmem:[%s1 + $0x2a8] sm:$0xff]
  %v139 = vld [vmem:[%s1 + $0x2b0] sm:$0xff]
  %v140 = vld [vmem:[%s1 + $0x2b8] sm:$0xff]
  %v141 = vld [vmem:[%s1 + $0x2c0] sm:$0xff]
  %v142 = vld [vmem:[%s1 + $0x2c8] sm:$0xff]
  %v143 = vld [vmem:[%s1 + $0x2d0] sm:$0xff]
  %v144 = vld [vmem:[%s1 + $0x2d8] sm:$0xff]
  %v145 = vld [vmem:[%s1 + $0x2e0] sm:$0xff]
  %v146 = vld [vmem:[%s1 + $0x2e8] sm:$0xff]
  %v147 = vld [vmem:[%s1 + $0x2f0] sm:$0xff]
  %v148 = vld [vmem:[%s1 + $0x2f8] sm:$0xff]
  %v149 = vld [vmem:[%s1 + $0x300] sm:$0xff]
  %v150 = vld [vmem:[%s1 + $0x308] sm:$0xff]
  %v151 = vld [vmem:[%s1 + $0x310] sm:$0xff]
  %v152 = vld [vmem:[%s1 + $0x318] sm:$0xff]
  %v153 = vld [vmem:[%s1 + $0x320] sm:$0xff]
  %v154 = vld [vmem:[%s1 + $0x328] sm:$0xff]
  %v155 = vld [vmem:[%s1 + $0x330] sm:$0xff]
  %v156 = vld [vmem:[%s1 + $0x338] sm:$0xff]
  %v157 = vld [vmem:[%s1 + $0x340] sm:$0xff]
  %v158 = vld [vmem:[%s1 + $0x348] sm:$0xff]
  %v159 = vld [vmem:[%s1 + $0x350] sm:$0xff]
  %v160 = vld [vmem:[%s1 + $0x358] sm:$0xff]
  %v161 = vld [vmem:[%s1 + $0x360] sm:$0xff]
  %v162 = vld [vmem:[%s1 + $0x368] sm:$0xff]
  %v163 = vld [vmem:[%s1 + $0x370] sm:$0xff]
  %v164 = vld [vmem:[%s1 + $0x378] sm:$0xff]
  %v165 = vld [vmem:[%s1 + $0x380] sm:$0xff]
  %v166 = vld [vmem:[%s1 + $0x388] sm:$0xff]
  %v167 = vld [vmem:[%s1 + $0x390] sm:$0xff]
  %v168 = vld [vmem:[%s1 + $0x398] sm:$0xff]
  %v169 = vld [vmem:[%s1 + $0x3a0] sm:$0xff]
  %v170 = vld [vmem:[%s1 + $0x3a8] sm:$0xff]
  %v171 = vld [vmem:[%s1 + $0x3b0] sm:$0xff]
  %v172 = vld [vmem:[%s1 + $0x3b8] sm:$0xff]
  %v173 = vld [vmem:[%s1 + $0x3c0] sm:$0xff]
  %v174 = vld [vmem:[%s1 + $0x3c8] sm:$0xff]
  %v175 = vld [vmem:[%s1 + $0x3d0] sm:$0xff]
  %v176 = vld [vmem:[%s1 + $0x3d8] sm:$0xff]
  %v177 = vld [vmem:[%s1 + $0x3e0] sm:$0xff]
  %v178 = vld [vmem:[%s1 + $0x3e8] sm:$0xff]
  %v179 = vld [vmem:[%s1 + $0x3f0] sm:$0xff]
  %v180 = vld [vmem:[%s1 + $0x3f8] sm:$0xff]
  %v181 = vld [vmem:[%s1 + $0x400] sm:$0xff]
  %v182 = vld [vmem:[%s1 + $0x408] sm:$0xff]
  %v183 = vld [vmem:[%s1 + $0x410] sm:$0xff]
  %v184 = vld [vmem:[%s1 + $0x418] sm:$0xff]
  %v185 = vld [vmem:[%s1 + $0x420] sm:$0xff]
  %v186 = vld [vmem:[%s1 + $0x428] sm:$0xff]
  %v187 = vld [vmem:[%s1 + $0x430] sm:$0xff]
  %v188 = vld [vmem:[%s1 + $0x438] sm:$0xff]
  %v189 = vld [vmem:[%s1 + $0x440] sm:$0xff]
  %v190 = vld [vmem:[%s1 + $0x448] sm:$0xff]
  %v191 = vld [vmem:[%s1 + $0x450] sm:$0xff]
  %v192 = vld [vmem:[%s1 + $0x458] sm:$0xff]
  %v193 = vld [vmem:[%s1 + $0x460] sm:$0xff]
  %v194 = vld [vmem:[%s1 + $0x468] sm:$0xff]
  %v195 = vld [vmem:[%s1 + $0x470] sm:$0xff]
  %v196 = vld [vmem:[%s1 + $0x478] sm:$0xff]
  %v232 = vunpack.c.l.b16 %v18
  %v233 = vunpack.c.h.b16 %v18
  %v234 = vunpack.c.l.b16 %v19
  %v235 = vunpack.c.h.b16 %v19
  %v236 = vunpack.c.l.b16 %v20
  %v237 = vunpack.c.h.b16 %v20
  %v238 = vunpack.c.l.b16 %v21
  %v239 = vunpack.c.h.b16 %v21
  %v240 = vunpack.c.l.b16 %v22
  %v241 = vunpack.c.l.b16 %v23
  %v242 = vunpack.c.h.b16 %v23
  %v243 = vunpack.c.l.b16 %v24
  %v244 = vunpack.c.h.b16 %v24
  %v245 = vunpack.c.l.b16 %v25
  %v246 = vunpack.c.h.b16 %v25
  %v247 = vunpack.c.l.b16 %v26
  %v248 = vunpack.c.h.b16 %v26
  %v249 = vunpack.c.l.b16 %v27
  %v250 = vunpack.c.l.b16 %v28
  %v251 = vunpack.c.h.b16 %v28
  %v252 = vunpack.c.l.b16 %v29
  %v253 = vunpack.c.h.b16 %v29
  %v254 = vunpack.c.l.b16 %v30
  %v255 = vunpack.c.h.b16 %v30
  %v256 = vunpack.c.l.b16 %v31
  %v257 = vunpack.c.h.b16 %v31
  %v258 = vunpack.c.l.b16 %v32
  %v259 = vunpack.c.l.b16 %v33
  %v260 = vunpack.c.h.b16 %v33
  %v261 = vunpack.c.l.b16 %v34
  %v262 = vunpack.c.h.b16 %v34
  %v263 = vunpack.c.l.b16 %v35
  %v264 = vunpack.c.h.b16 %v35
  %v265 = vunpack.c.l.b16 %v36
  %v266 = vunpack.c.h.b16 %v36
  %v267 = vunpack.c.l.b16 %v37
  %v268 = vunpack.c.l.b16 %v38
  %v269 = vunpack.c.h.b16 %v38
  %v270 = vunpack.c.l.b16 %v39
  %v271 = vunpack.c.h.b16 %v39
  %v272 = vunpack.c.l.b16 %v40
  %v273 = vunpack.c.h.b16 %v40
  %v274 = vunpack.c.l.b16 %v41
  %v275 = vunpack.c.h.b16 %v41
  %v276 = vunpack.c.l.b16 %v42
  %v277 = vunpack.c.l.b16 %v43
  %v278 = vunpack.c.h.b16 %v43
  %v279 = vunpack.c.l.b16 %v44
  %v280 = vunpack.c.h.b16 %v44
  %v281 = vunpack.c.l.b16 %v45
  %v282 = vunpack.c.h.b16 %v45
  %v283 = vunpack.c.l.b16 %v46
  %v284 = vunpack.c.h.b16 %v46
  %v285 = vunpack.c.l.b16 %v47
  %v286 = vunpack.c.l.b16 %v48
  %v287 = vunpack.c.h.b16 %v48
  %v288 = vunpack.c.l.b16 %v49
  %v289 = vunpack.c.h.b16 %v49
  %v290 = vunpack.c.l.b16 %v50
  %v291 = vunpack.c.h.b16 %v50
  %v292 = vunpack.c.l.b16 %v51
  %v293 = vunpack.c.h.b16 %v51
  %v294 = vunpack.c.l.b16 %v52
  %v295 = vpack.c.b16 %v241, %v232
  %v296 = vpack.c.b16 %v242, %v233
  %v297 = vpack.c.b16 %v243, %v234
  %v298 = vpack.c.b16 %v244, %v235
  %v299 = vpack.c.b16 %v245, %v236
  %v300 = vpack.c.b16 %v246, %v237
  %v301 = vpack.c.b16 %v247, %v238
  %v302 = vpack.c.b16 %v248, %v239
  %v303 = vpack.c.b16 %v249, %v240
  %v304 = vpack.c.b16 %v259, %v250
  %v305 = vpack.c.b16 %v260, %v251
  %v306 = vpack.c.b16 %v261, %v252
  %v307 = vpack.c.b16 %v262, %v253
  %v308 = vpack.c.b16 %v263, %v254
  %v309 = vpack.c.b16 %v264, %v255
  %v310 = vpack.c.b16 %v265, %v256
  %v311 = vpack.c.b16 %v266, %v257
  %v312 = vpack.c.b16 %v267, %v258
  %v313 = vpack.c.b16 %v277, %v268
  %v314 = vpack.c.b16 %v278, %v269
  %v315 = vpack.c.b16 %v279, %v270
  %v316 = vpack.c.b16 %v280, %v271
  %v317 = vpack.c.b16 %v281, %v272
  %v318 = vpack.c.b16 %v282, %v273
  %v319 = vpack.c.b16 %v283, %v274
  %v320 = vpack.c.b16 %v284, %v275
  %v321 = vpack.c.b16 %v285, %v276
  %v322 = vpack.c.b16 %v286, %v286
  %v323 = vpack.c.b16 %v287, %v287
  %v324 = vpack.c.b16 %v288, %v288
  %v325 = vpack.c.b16 %v289, %v289
  %v326 = vpack.c.b16 %v290, %v290
  %v327 = vpack.c.b16 %v291, %v291
  %v328 = vpack.c.b16 %v292, %v292
  %v329 = vpack.c.b16 %v293, %v293
  %v330 = vpack.c.b16 %v294, %v294
  %v511 = vunpack.c.l.b16 %v53
  %v512 = vunpack.c.h.b16 %v53
  %v513 = vunpack.c.l.b16 %v54
  %v514 = vunpack.c.h.b16 %v54
  %v515 = vunpack.c.l.b16 %v55
  %v516 = vunpack.c.h.b16 %v55
  %v517 = vunpack.c.l.b16 %v56
  %v518 = vunpack.c.h.b16 %v56
  %v519 = vunpack.c.l.b16 %v57
  %v520 = vunpack.c.h.b16 %v57
  %v521 = vunpack.c.l.b16 %v58
  %v522 = vunpack.c.h.b16 %v58
  %v523 = vunpack.c.l.b16 %v59
  %v524 = vunpack.c.h.b16 %v59
  %v525 = vunpack.c.l.b16 %v60
  %v526 = vunpack.c.h.b16 %v60
  %v527 = vunpack.c.l.b16 %v61
  %v528 = vunpack.c.h.b16 %v61
  %v529 = vunpack.c.l.b16 %v62
  %v530 = vunpack.c.h.b16 %v62
  %v531 = vunpack.c.l.b16 %v63
  %v532 = vunpack.c.h.b16 %v63
  %v533 = vunpack.c.l.b16 %v64
  %v534 = vunpack.c.h.b16 %v64
  %v535 = vunpack.c.l.b16 %v65
  %v536 = vunpack.c.h.b16 %v65
  %v537 = vunpack.c.l.b16 %v66
  %v538 = vunpack.c.h.b16 %v66
  %v539 = vunpack.c.l.b16 %v67
  %v540 = vunpack.c.h.b16 %v67
  %v541 = vunpack.c.l.b16 %v68
  %v542 = vunpack.c.h.b16 %v68
  %v543 = vunpack.c.l.b16 %v69
  %v544 = vunpack.c.h.b16 %v69
  %v545 = vunpack.c.l.b16 %v70
  %v546 = vunpack.c.h.b16 %v70
  %v547 = vunpack.c.l.b16 %v71
  %v548 = vunpack.c.h.b16 %v71
  %v549 = vunpack.c.l.b16 %v72
  %v550 = vunpack.c.h.b16 %v72
  %v551 = vunpack.c.l.b16 %v73
  %v552 = vunpack.c.h.b16 %v73
  %v553 = vunpack.c.l.b16 %v74
  %v554 = vunpack.c.h.b16 %v74
  %v555 = vunpack.c.l.b16 %v75
  %v556 = vunpack.c.h.b16 %v75
  %v557 = vunpack.c.l.b16 %v76
  %v558 = vunpack.c.h.b16 %v76
  %v559 = vunpack.c.l.b16 %v77
  %v560 = vunpack.c.h.b16 %v77
  %v561 = vunpack.c.l.b16 %v78
  %v562 = vunpack.c.h.b16 %v78
  %v563 = vunpack.c.l.b16 %v79
  %v564 = vunpack.c.h.b16 %v79
  %v565 = vunpack.c.l.b16 %v80
  %v566 = vunpack.c.h.b16 %v80
  %v567 = vunpack.c.l.b16 %v81
  %v568 = vunpack.c.h.b16 %v81
  %v569 = vunpack.c.l.b16 %v82
  %v570 = vunpack.c.h.b16 %v82
  %v571 = vunpack.c.l.b16 %v83
  %v572 = vunpack.c.h.b16 %v83
  %v573 = vunpack.c.l.b16 %v84
  %v574 = vunpack.c.h.b16 %v84
  %v575 = vunpack.c.l.b16 %v85
  %v576 = vunpack.c.h.b16 %v85
  %v577 = vunpack.c.l.b16 %v86
  %v578 = vunpack.c.h.b16 %v86
  %v579 = vunpack.c.l.b16 %v87
  %v580 = vunpack.c.h.b16 %v87
  %v581 = vunpack.c.l.b16 %v88
  %v582 = vunpack.c.h.b16 %v88
  %v583 = vunpack.c.l.b16 %v89
  %v584 = vunpack.c.h.b16 %v89
  %v585 = vunpack.c.l.b16 %v90
  %v586 = vunpack.c.h.b16 %v90
  %v587 = vunpack.c.l.b16 %v91
  %v588 = vunpack.c.h.b16 %v91
  %v589 = vunpack.c.l.b16 %v92
  %v590 = vunpack.c.h.b16 %v92
  %v591 = vunpack.c.l.b16 %v93
  %v592 = vunpack.c.h.b16 %v93
  %v593 = vunpack.c.l.b16 %v94
  %v594 = vunpack.c.h.b16 %v94
  %v595 = vunpack.c.l.b16 %v95
  %v596 = vunpack.c.h.b16 %v95
  %v597 = vunpack.c.l.b16 %v96
  %v598 = vunpack.c.h.b16 %v96
  %v599 = vunpack.c.l.b16 %v97
  %v600 = vunpack.c.h.b16 %v97
  %v601 = vunpack.c.l.b16 %v98
  %v602 = vunpack.c.h.b16 %v98
  %v603 = vunpack.c.l.b16 %v99
  %v604 = vunpack.c.h.b16 %v99
  %v605 = vunpack.c.l.b16 %v100
  %v606 = vunpack.c.h.b16 %v100
  %v607 = vunpack.c.l.b16 %v101
  %v608 = vunpack.c.h.b16 %v101
  %v609 = vunpack.c.l.b16 %v102
  %v610 = vunpack.c.h.b16 %v102
  %v611 = vunpack.c.l.b16 %v103
  %v612 = vunpack.c.h.b16 %v103
  %v613 = vunpack.c.l.b16 %v104
  %v614 = vunpack.c.h.b16 %v104
  %v615 = vunpack.c.l.b16 %v105
  %v616 = vunpack.c.h.b16 %v105
  %v617 = vunpack.c.l.b16 %v106
  %v618 = vunpack.c.h.b16 %v106
  %v619 = vunpack.c.l.b16 %v107
  %v620 = vunpack.c.h.b16 %v107
  %v621 = vunpack.c.l.b16 %v108
  %v622 = vunpack.c.h.b16 %v108
  %v623 = vunpack.c.l.b16 %v109
  %v624 = vunpack.c.h.b16 %v109
  %v625 = vunpack.c.l.b16 %v110
  %v626 = vunpack.c.h.b16 %v110
  %v627 = vunpack.c.l.b16 %v111
  %v628 = vunpack.c.h.b16 %v111
  %v629 = vunpack.c.l.b16 %v112
  %v630 = vunpack.c.h.b16 %v112
  %v631 = vunpack.c.l.b16 %v113
  %v632 = vunpack.c.h.b16 %v113
  %v633 = vunpack.c.l.b16 %v114
  %v634 = vunpack.c.h.b16 %v114
  %v635 = vunpack.c.l.b16 %v115
  %v636 = vunpack.c.h.b16 %v115
  %v637 = vunpack.c.l.b16 %v116
  %v638 = vunpack.c.h.b16 %v116
  %v639 = vunpack.c.l.b16 %v117
  %v640 = vunpack.c.h.b16 %v117
  %v641 = vunpack.c.l.b16 %v118
  %v642 = vunpack.c.h.b16 %v118
  %v643 = vunpack.c.l.b16 %v119
  %v644 = vunpack.c.h.b16 %v119
  %v645 = vunpack.c.l.b16 %v120
  %v646 = vunpack.c.h.b16 %v120
  %v647 = vunpack.c.l.b16 %v121
  %v648 = vunpack.c.h.b16 %v121
  %v649 = vunpack.c.l.b16 %v122
  %v650 = vunpack.c.h.b16 %v122
  %v651 = vunpack.c.l.b16 %v123
  %v652 = vunpack.c.h.b16 %v123
  %v653 = vunpack.c.l.b16 %v124
  %v654 = vunpack.c.h.b16 %v124
  %v655 = vunpack.c.l.b16 %v125
  %v656 = vunpack.c.h.b16 %v125
  %v657 = vunpack.c.l.b16 %v126
  %v658 = vunpack.c.h.b16 %v126
  %v659 = vunpack.c.l.b16 %v127
  %v660 = vunpack.c.h.b16 %v127
  %v661 = vunpack.c.l.b16 %v128
  %v662 = vunpack.c.h.b16 %v128
  %v663 = vunpack.c.l.b16 %v129
  %v664 = vunpack.c.h.b16 %v129
  %v665 = vunpack.c.l.b16 %v130
  %v666 = vunpack.c.h.b16 %v130
  %v667 = vunpack.c.l.b16 %v131
  %v668 = vunpack.c.h.b16 %v131
  %v669 = vunpack.c.l.b16 %v132
  %v670 = vunpack.c.h.b16 %v132
  %v671 = vunpack.c.l.b16 %v133
  %v672 = vunpack.c.h.b16 %v133
  %v673 = vunpack.c.l.b16 %v134
  %v674 = vunpack.c.h.b16 %v134
  %v675 = vunpack.c.l.b16 %v135
  %v676 = vunpack.c.h.b16 %v135
  %v677 = vunpack.c.l.b16 %v136
  %v678 = vunpack.c.h.b16 %v136
  %v679 = vunpack.c.l.b16 %v137
  %v680 = vunpack.c.h.b16 %v137
  %v681 = vunpack.c.l.b16 %v138
  %v682 = vunpack.c.h.b16 %v138
  %v683 = vunpack.c.l.b16 %v139
  %v684 = vunpack.c.h.b16 %v139
  %v685 = vunpack.c.l.b16 %v140
  %v686 = vunpack.c.h.b16 %v140
  %v687 = vunpack.c.l.b16 %v141
  %v688 = vunpack.c.h.b16 %v141
  %v689 = vunpack.c.l.b16 %v142
  %v690 = vunpack.c.h.b16 %v142
  %v691 = vunpack.c.l.b16 %v143
  %v692 = vunpack.c.h.b16 %v143
  %v693 = vunpack.c.l.b16 %v144
  %v694 = vunpack.c.h.b16 %v144
  %v695 = vunpack.c.l.b16 %v145
  %v696 = vunpack.c.h.b16 %v145
  %v697 = vunpack.c.l.b16 %v146
  %v698 = vunpack.c.h.b16 %v146
  %v699 = vunpack.c.l.b16 %v147
  %v700 = vunpack.c.h.b16 %v147
  %v701 = vunpack.c.l.b16 %v148
  %v702 = vunpack.c.h.b16 %v148
  %v703 = vunpack.c.l.b16 %v149
  %v704 = vunpack.c.h.b16 %v149
  %v705 = vunpack.c.l.b16 %v150
  %v706 = vunpack.c.h.b16 %v150
  %v707 = vunpack.c.l.b16 %v151
  %v708 = vunpack.c.h.b16 %v151
  %v709 = vunpack.c.l.b16 %v152
  %v710 = vunpack.c.h.b16 %v152
  %v711 = vunpack.c.l.b16 %v153
  %v712 = vunpack.c.h.b16 %v153
  %v713 = vunpack.c.l.b16 %v154
  %v714 = vunpack.c.h.b16 %v154
  %v715 = vunpack.c.l.b16 %v155
  %v716 = vunpack.c.h.b16 %v155
  %v717 = vunpack.c.l.b16 %v156
  %v718 = vunpack.c.h.b16 %v156
  %v719 = vunpack.c.l.b16 %v157
  %v720 = vunpack.c.h.b16 %v157
  %v721 = vunpack.c.l.b16 %v158
  %v722 = vunpack.c.h.b16 %v158
  %v723 = vunpack.c.l.b16 %v159
  %v724 = vunpack.c.h.b16 %v159
  %v725 = vunpack.c.l.b16 %v160
  %v726 = vunpack.c.h.b16 %v160
  %v727 = vunpack.c.l.b16 %v161
  %v728 = vunpack.c.h.b16 %v161
  %v729 = vunpack.c.l.b16 %v162
  %v730 = vunpack.c.h.b16 %v162
  %v731 = vunpack.c.l.b16 %v163
  %v732 = vunpack.c.h.b16 %v163
  %v733 = vunpack.c.l.b16 %v164
  %v734 = vunpack.c.h.b16 %v164
  %v735 = vunpack.c.l.b16 %v165
  %v736 = vunpack.c.h.b16 %v165
  %v737 = vunpack.c.l.b16 %v166
  %v738 = vunpack.c.h.b16 %v166
  %v739 = vunpack.c.l.b16 %v167
  %v740 = vunpack.c.h.b16 %v167
  %v741 = vunpack.c.l.b16 %v168
  %v742 = vunpack.c.h.b16 %v168
  %v743 = vunpack.c.l.b16 %v169
  %v744 = vunpack.c.h.b16 %v169
  %v745 = vunpack.c.l.b16 %v170
  %v746 = vunpack.c.h.b16 %v170
  %v747 = vunpack.c.l.b16 %v171
  %v748 = vunpack.c.h.b16 %v171
  %v749 = vunpack.c.l.b16 %v172
  %v750 = vunpack.c.h.b16 %v172
  %v751 = vunpack.c.l.b16 %v173
  %v752 = vunpack.c.h.b16 %v173
  %v753 = vunpack.c.l.b16 %v174
  %v754 = vunpack.c.h.b16 %v174
  %v755 = vunpack.c.l.b16 %v175
  %v756 = vunpack.c.h.b16 %v175
  %v757 = vunpack.c.l.b16 %v176
  %v758 = vunpack.c.h.b16 %v176
  %v759 = vunpack.c.l.b16 %v177
  %v760 = vunpack.c.h.b16 %v177
  %v761 = vunpack.c.l.b16 %v178
  %v762 = vunpack.c.h.b16 %v178
  %v763 = vunpack.c.l.b16 %v179
  %v764 = vunpack.c.h.b16 %v179
  %v765 = vunpack.c.l.b16 %v180
  %v766 = vunpack.c.h.b16 %v180
  %v767 = vunpack.c.l.b16 %v181
  %v768 = vunpack.c.h.b16 %v181
  %v769 = vunpack.c.l.b16 %v182
  %v770 = vunpack.c.h.b16 %v182
  %v771 = vunpack.c.l.b16 %v183
  %v772 = vunpack.c.h.b16 %v183
  %v773 = vunpack.c.l.b16 %v184
  %v774 = vunpack.c.h.b16 %v184
  %v775 = vunpack.c.l.b16 %v185
  %v776 = vunpack.c.h.b16 %v185
  %v777 = vunpack.c.l.b16 %v186
  %v778 = vunpack.c.h.b16 %v186
  %v779 = vunpack.c.l.b16 %v187
  %v780 = vunpack.c.h.b16 %v187
  %v781 = vunpack.c.l.b16 %v188
  %v782 = vunpack.c.h.b16 %v188
  %v783 = vunpack.c.l.b16 %v189
  %v784 = vunpack.c.h.b16 %v189
  %v785 = vunpack.c.l.b16 %v190
  %v786 = vunpack.c.h.b16 %v190
  %v787 = vunpack.c.l.b16 %v191
  %v788 = vunpack.c.h.b16 %v191
  %v789 = vunpack.c.l.b16 %v192
  %v790 = vunpack.c.h.b16 %v192
  %v791 = vunpack.c.l.b16 %v193
  %v792 = vunpack.c.h.b16 %v193
  %v793 = vunpack.c.l.b16 %v194
  %v794 = vunpack.c.h.b16 %v194
  %v795 = vunpack.c.l.b16 %v195
  %v796 = vunpack.c.h.b16 %v195
  %v797 = vunpack.c.l.b16 %v196
  %v798 = vunpack.c.h.b16 %v196
  %v799 = vpack.c.b16 %v513, %v511
  %v800 = vpack.c.b16 %v514, %v512
  %v801 = vpack.c.b16 %v517, %v515
  %v802 = vpack.c.b16 %v518, %v516
  %v803 = vpack.c.b16 %v521, %v519
  %v804 = vpack.c.b16 %v522, %v520
  %v805 = vpack.c.b16 %v525, %v523
  %v806 = vpack.c.b16 %v526, %v524
  %v807 = vpack.c.b16 %v529, %v527
  %v808 = vpack.c.b16 %v530, %v528
  %v809 = vpack.c.b16 %v533, %v531
  %v810 = vpack.c.b16 %v534, %v532
  %v811 = vpack.c.b16 %v537, %v535
  %v812 = vpack.c.b16 %v538, %v536
  %v813 = vpack.c.b16 %v541, %v539
  %v814 = vpack.c.b16 %v542, %v540
  %v815 = vpack.c.b16 %v545, %v543
  %v816 = vpack.c.b16 %v546, %v544
  %v817 = vpack.c.b16 %v549, %v547
  %v818 = vpack.c.b16 %v550, %v548
  %v819 = vpack.c.b16 %v553, %v551
  %v820 = vpack.c.b16 %v554, %v552
  %v821 = vpack.c.b16 %v557, %v555
  %v822 = vpack.c.b16 %v558, %v556
  %v823 = vpack.c.b16 %v561, %v559
  %v824 = vpack.c.b16 %v562, %v560
  %v825 = vpack.c.b16 %v565, %v563
  %v826 = vpack.c.b16 %v566, %v564
  %v827 = vpack.c.b16 %v569, %v567
  %v828 = vpack.c.b16 %v570, %v568
  %v829 = vpack.c.b16 %v573, %v571
  %v830 = vpack.c.b16 %v574, %v572
  %v831 = vpack.c.b16 %v577, %v575
  %v832 = vpack.c.b16 %v578, %v576
  %v833 = vpack.c.b16 %v581, %v579
  %v834 = vpack.c.b16 %v582, %v580
  %v835 = vpack.c.b16 %v585, %v583
  %v836 = vpack.c.b16 %v586, %v584
  %v837 = vpack.c.b16 %v589, %v587
  %v838 = vpack.c.b16 %v590, %v588
  %v839 = vpack.c.b16 %v593, %v591
  %v840 = vpack.c.b16 %v594, %v592
  %v841 = vpack.c.b16 %v597, %v595
  %v842 = vpack.c.b16 %v598, %v596
  %v843 = vpack.c.b16 %v601, %v599
  %v844 = vpack.c.b16 %v602, %v600
  %v845 = vpack.c.b16 %v605, %v603
  %v846 = vpack.c.b16 %v606, %v604
  %v847 = vpack.c.b16 %v609, %v607
  %v848 = vpack.c.b16 %v610, %v608
  %v849 = vpack.c.b16 %v613, %v611
  %v850 = vpack.c.b16 %v614, %v612
  %v851 = vpack.c.b16 %v617, %v615
  %v852 = vpack.c.b16 %v618, %v616
  %v853 = vpack.c.b16 %v621, %v619
  %v854 = vpack.c.b16 %v622, %v620
  %v855 = vpack.c.b16 %v625, %v623
  %v856 = vpack.c.b16 %v626, %v624
  %v857 = vpack.c.b16 %v629, %v627
  %v858 = vpack.c.b16 %v630, %v628
  %v859 = vpack.c.b16 %v633, %v631
  %v860 = vpack.c.b16 %v634, %v632
  %v861 = vpack.c.b16 %v637, %v635
  %v862 = vpack.c.b16 %v638, %v636
  %v863 = vpack.c.b16 %v641, %v639
  %v864 = vpack.c.b16 %v642, %v640
  %v865 = vpack.c.b16 %v645, %v643
  %v866 = vpack.c.b16 %v646, %v644
  %v867 = vpack.c.b16 %v649, %v647
  %v868 = vpack.c.b16 %v650, %v648
  %v869 = vpack.c.b16 %v653, %v651
  %v870 = vpack.c.b16 %v654, %v652
  %v871 = vpack.c.b16 %v657, %v655
  %v872 = vpack.c.b16 %v658, %v656
  %v873 = vpack.c.b16 %v661, %v659
  %v874 = vpack.c.b16 %v662, %v660
  %v875 = vpack.c.b16 %v665, %v663
  %v876 = vpack.c.b16 %v666, %v664
  %v877 = vpack.c.b16 %v669, %v667
  %v878 = vpack.c.b16 %v670, %v668
  %v879 = vpack.c.b16 %v673, %v671
  %v880 = vpack.c.b16 %v674, %v672
  %v881 = vpack.c.b16 %v677, %v675
  %v882 = vpack.c.b16 %v678, %v676
  %v883 = vpack.c.b16 %v681, %v679
  %v884 = vpack.c.b16 %v682, %v680
  %v885 = vpack.c.b16 %v685, %v683
  %v886 = vpack.c.b16 %v686, %v684
  %v887 = vpack.c.b16 %v689, %v687
  %v888 = vpack.c.b16 %v690, %v688
  %v889 = vpack.c.b16 %v693, %v691
  %v890 = vpack.c.b16 %v694, %v692
  %v891 = vpack.c.b16 %v697, %v695
  %v892 = vpack.c.b16 %v698, %v696
  %v893 = vpack.c.b16 %v701, %v699
  %v894 = vpack.c.b16 %v702, %v700
  %v895 = vpack.c.b16 %v705, %v703
  %v896 = vpack.c.b16 %v706, %v704
  %v897 = vpack.c.b16 %v709, %v707
  %v898 = vpack.c.b16 %v710, %v708
  %v899 = vpack.c.b16 %v713, %v711
  %v900 = vpack.c.b16 %v714, %v712
  %v901 = vpack.c.b16 %v717, %v715
  %v902 = vpack.c.b16 %v718, %v716
  %v903 = vpack.c.b16 %v721, %v719
  %v904 = vpack.c.b16 %v722, %v720
  %v905 = vpack.c.b16 %v725, %v723
  %v906 = vpack.c.b16 %v726, %v724
  %v907 = vpack.c.b16 %v729, %v727
  %v908 = vpack.c.b16 %v730, %v728
  %v909 = vpack.c.b16 %v733, %v731
  %v910 = vpack.c.b16 %v734, %v732
  %v911 = vpack.c.b16 %v737, %v735
  %v912 = vpack.c.b16 %v738, %v736
  %v913 = vpack.c.b16 %v741, %v739
  %v914 = vpack.c.b16 %v742, %v740
  %v915 = vpack.c.b16 %v745, %v743
  %v916 = vpack.c.b16 %v746, %v744
  %v917 = vpack.c.b16 %v749, %v747
  %v918 = vpack.c.b16 %v750, %v748
  %v919 = vpack.c.b16 %v753, %v751
  %v920 = vpack.c.b16 %v754, %v752
  %v921 = vpack.c.b16 %v757, %v755
  %v922 = vpack.c.b16 %v758, %v756
  %v923 = vpack.c.b16 %v761, %v759
  %v924 = vpack.c.b16 %v762, %v760
  %v925 = vpack.c.b16 %v765, %v763
  %v926 = vpack.c.b16 %v766, %v764
  %v927 = vpack.c.b16 %v769, %v767
  %v928 = vpack.c.b16 %v770, %v768
  %v929 = vpack.c.b16 %v773, %v771
  %v930 = vpack.c.b16 %v774, %v772
  %v931 = vpack.c.b16 %v777, %v775
  %v932 = vpack.c.b16 %v778, %v776
  %v933 = vpack.c.b16 %v781, %v779
  %v934 = vpack.c.b16 %v782, %v780
  %v935 = vpack.c.b16 %v785, %v783
  %v936 = vpack.c.b16 %v786, %v784
  %v937 = vpack.c.b16 %v789, %v787
  %v938 = vpack.c.b16 %v790, %v788
  %v939 = vpack.c.b16 %v793, %v791
  %v940 = vpack.c.b16 %v794, %v792
  %v941 = vpack.c.b16 %v797, %v795
  %v942 = vpack.c.b16 %v798, %v796
  %1087 = vmatprep.subr.bf16.mxu0 %v814
  %1088 = vmatpush1.bf16.msra.mxu0 %v813
  %1089 = vmatprep.subr.bf16.mxu0 %v812
  %1090 = vmatpush1.bf16.msra.mxu0 %v811
  %1091 = vmatprep.subr.bf16.mxu0 %v810
  %1092 = vmatpush1.bf16.msra.mxu0 %v809
  %1093 = vmatprep.subr.bf16.mxu0 %v808
  %1094 = vmatpush1.bf16.msra.mxu0 %v807
  %1095 = vmatprep.subr.bf16.mxu0 %v806
  %1096 = vmatpush1.bf16.msra.mxu0 %v805
  %1097 = vmatprep.subr.bf16.mxu0 %v804
  %1098 = vmatpush1.bf16.msra.mxu0 %v803
  %1099 = vmatprep.subr.bf16.mxu0 %v802
  %1100 = vmatpush1.bf16.msra.mxu0 %v801
  %1101 = vmatprep.subr.bf16.mxu0 %v800
  %1102 = vmatpush1.bf16.msra.mxu0 %v799
  %1103 = vmatprep.subr.bf16.mxu0 %v830
  %1104 = vmatpush2.bf16.msra.mxu0 %v829
  %1105 = vmatprep.subr.bf16.mxu0 %v828
  %1106 = vmatpush2.bf16.msra.mxu0 %v827
  %1107 = vmatprep.subr.bf16.mxu0 %v826
  %1108 = vmatpush2.bf16.msra.mxu0 %v825
  %1109 = vmatprep.subr.bf16.mxu0 %v824
  %1110 = vmatpush2.bf16.msra.mxu0 %v823
  %1111 = vmatprep.subr.bf16.mxu0 %v822
  %1112 = vmatpush2.bf16.msra.mxu0 %v821
  %1113 = vmatprep.subr.bf16.mxu0 %v820
  %1114 = vmatpush2.bf16.msra.mxu0 %v819
  %1115 = vmatprep.subr.bf16.mxu0 %v818
  %1116 = vmatpush2.bf16.msra.mxu0 %v817
  %1117 = vmatprep.subr.bf16.mxu0 %v816
  %1118 = vmatpush2.bf16.msra.mxu0 %v815
  %1119 = vmatprep.mubr.bf16.mxu0 %v296
  %1120 = vmatmul.mubr.bf16.gmra.mxu0 %v295
  %v1121 = vpop.f32.mrf.mxu0
  %v1122 = vadd.f32 0.0, %v1121
  %v1123 = vpop.f32.mrf.mxu0
  %v1124 = vadd.f32 0.0, %v1123
  %v1125 = vpop.f32.mrf.mxu0
  %v1126 = vadd.f32 0.0, %v1125
  %v1127 = vpop.f32.mrf.mxu0
  %v1128 = vadd.f32 0.0, %v1127
  %1129 = vmatprep.mubr.bf16.mxu0 %v305
  %1130 = vmatmul.mubr.bf16.gmra.mxu0 %v304
  %v1131 = vpop.f32.mrf.mxu0
  %v1132 = vadd.f32 0.0, %v1131
  %v1133 = vpop.f32.mrf.mxu0
  %v1134 = vadd.f32 0.0, %v1133
  %v1135 = vpop.f32.mrf.mxu0
  %v1136 = vadd.f32 0.0, %v1135
  %v1137 = vpop.f32.mrf.mxu0
  %v1138 = vadd.f32 0.0, %v1137
  %1139 = vmatprep.mubr.bf16.mxu0 %v314
  %1140 = vmatmul.mubr.bf16.gmra.mxu0 %v313
  %v1141 = vpop.f32.mrf.mxu0
  %v1142 = vadd.f32 0.0, %v1141
  %v1143 = vpop.f32.mrf.mxu0
  %v1144 = vadd.f32 0.0, %v1143
  %v1145 = vpop.f32.mrf.mxu0
  %v1146 = vadd.f32 0.0, %v1145
  %v1147 = vpop.f32.mrf.mxu0
  %v1148 = vadd.f32 0.0, %v1147
  %1149 = vmatprep.mubr.bf16.mxu0 %v323
  %1150 = vmatmul.mubr.bf16.gmra.mxu0 %v322
  %v1151 = vpop.f32.mrf.mxu0
  %v1152 = vadd.f32 0.0, %v1151
  %v1153 = vpop.f32.mrf.mxu0
  %v1154 = vadd.f32 0.0, %v1153
  %v1155 = vpop.f32.mrf.mxu0
  %v1156 = vpop.f32.mrf.mxu0
  %1157 = vdwg.mxu0
  %1158 = vmatprep.subr.bf16.mxu0 %v846
  %1159 = vmatpush1.bf16.msra.mxu0 %v845
  %1160 = vmatprep.subr.bf16.mxu0 %v844
  %1161 = vmatpush1.bf16.msra.mxu0 %v843
  %1162 = vmatprep.subr.bf16.mxu0 %v842
  %1163 = vmatpush1.bf16.msra.mxu0 %v841
  %1164 = vmatprep.subr.bf16.mxu0 %v840
  %1165 = vmatpush1.bf16.msra.mxu0 %v839
  %1166 = vmatprep.subr.bf16.mxu0 %v838
  %1167 = vmatpush1.bf16.msra.mxu0 %v837
  %1168 = vmatprep.subr.bf16.mxu0 %v836
  %1169 = vmatpush1.bf16.msra.mxu0 %v835
  %1170 = vmatprep.subr.bf16.mxu0 %v834
  %1171 = vmatpush1.bf16.msra.mxu0 %v833
  %1172 = vmatprep.subr.bf16.mxu0 %v832
  %1173 = vmatpush1.bf16.msra.mxu0 %v831
  %1174 = vmatprep.subr.bf16.mxu0 %v862
  %1175 = vmatpush2.bf16.msra.mxu0 %v861
  %1176 = vmatprep.subr.bf16.mxu0 %v860
  %1177 = vmatpush2.bf16.msra.mxu0 %v859
  %1178 = vmatprep.subr.bf16.mxu0 %v858
  %1179 = vmatpush2.bf16.msra.mxu0 %v857
  %1180 = vmatprep.subr.bf16.mxu0 %v856
  %1181 = vmatpush2.bf16.msra.mxu0 %v855
  %1182 = vmatprep.subr.bf16.mxu0 %v854
  %1183 = vmatpush2.bf16.msra.mxu0 %v853
  %1184 = vmatprep.subr.bf16.mxu0 %v852
  %1185 = vmatpush2.bf16.msra.mxu0 %v851
  %1186 = vmatprep.subr.bf16.mxu0 %v850
  %1187 = vmatpush2.bf16.msra.mxu0 %v849
  %1188 = vmatprep.subr.bf16.mxu0 %v848
  %1189 = vmatpush2.bf16.msra.mxu0 %v847
  %1190 = vmatprep.mubr.bf16.mxu0 %v298
  %1191 = vmatmul.mubr.bf16.gmra.mxu0 %v297
  %v1192 = vpop.f32.mrf.mxu0
  %v1193 = vadd.f32 %v1122, %v1192
  %v1194 = vpop.f32.mrf.mxu0
  %v1195 = vadd.f32 %v1124, %v1194
  %v1196 = vpop.f32.mrf.mxu0
  %v1197 = vadd.f32 %v1126, %v1196
  %v1198 = vpop.f32.mrf.mxu0
  %v1199 = vadd.f32 %v1128, %v1198
  %1200 = vmatprep.mubr.bf16.mxu0 %v307
  %1201 = vmatmul.mubr.bf16.gmra.mxu0 %v306
  %v1202 = vpop.f32.mrf.mxu0
  %v1203 = vadd.f32 %v1132, %v1202
  %v1204 = vpop.f32.mrf.mxu0
  %v1205 = vadd.f32 %v1134, %v1204
  %v1206 = vpop.f32.mrf.mxu0
  %v1207 = vadd.f32 %v1136, %v1206
  %v1208 = vpop.f32.mrf.mxu0
  %v1209 = vadd.f32 %v1138, %v1208
  %1210 = vmatprep.mubr.bf16.mxu0 %v316
  %1211 = vmatmul.mubr.bf16.gmra.mxu0 %v315
  %v1212 = vpop.f32.mrf.mxu0
  %v1213 = vadd.f32 %v1142, %v1212
  %v1214 = vpop.f32.mrf.mxu0
  %v1215 = vadd.f32 %v1144, %v1214
  %v1216 = vpop.f32.mrf.mxu0
  %v1217 = vadd.f32 %v1146, %v1216
  %v1218 = vpop.f32.mrf.mxu0
  %v1219 = vadd.f32 %v1148, %v1218
  %1220 = vmatprep.mubr.bf16.mxu0 %v325
  %1221 = vmatmul.mubr.bf16.gmra.mxu0 %v324
  %v1222 = vpop.f32.mrf.mxu0
  %v1223 = vadd.f32 %v1152, %v1222
  %v1224 = vpop.f32.mrf.mxu0
  %v1225 = vadd.f32 %v1154, %v1224
  %v1226 = vpop.f32.mrf.mxu0
  %v1227 = vpop.f32.mrf.mxu0
  %1228 = vdwg.mxu0
  %1229 = vmatprep.subr.bf16.mxu0 %v878
  %1230 = vmatpush1.bf16.msra.mxu0 %v877
  %1231 = vmatprep.subr.bf16.mxu0 %v876
  %1232 = vmatpush1.bf16.msra.mxu0 %v875
  %1233 = vmatprep.subr.bf16.mxu0 %v874
  %1234 = vmatpush1.bf16.msra.mxu0 %v873
  %1235 = vmatprep.subr.bf16.mxu0 %v872
  %1236 = vmatpush1.bf16.msra.mxu0 %v871
  %1237 = vmatprep.subr.bf16.mxu0 %v870
  %1238 = vmatpush1.bf16.msra.mxu0 %v869
  %1239 = vmatprep.subr.bf16.mxu0 %v868
  %1240 = vmatpush1.bf16.msra.mxu0 %v867
  %1241 = vmatprep.subr.bf16.mxu0 %v866
  %1242 = vmatpush1.bf16.msra.mxu0 %v865
  %1243 = vmatprep.subr.bf16.mxu0 %v864
  %1244 = vmatpush1.bf16.msra.mxu0 %v863
  %1245 = vmatprep.subr.bf16.mxu0 %v894
  %1246 = vmatpush2.bf16.msra.mxu0 %v893
  %1247 = vmatprep.subr.bf16.mxu0 %v892
  %1248 = vmatpush2.bf16.msra.mxu0 %v891
  %1249 = vmatprep.subr.bf16.mxu0 %v890
  %1250 = vmatpush2.bf16.msra.mxu0 %v889
  %1251 = vmatprep.subr.bf16.mxu0 %v888
  %1252 = vmatpush2.bf16.msra.mxu0 %v887
  %1253 = vmatprep.subr.bf16.mxu0 %v886
  %1254 = vmatpush2.bf16.msra.mxu0 %v885
  %1255 = vmatprep.subr.bf16.mxu0 %v884
  %1256 = vmatpush2.bf16.msra.mxu0 %v883
  %1257 = vmatprep.subr.bf16.mxu0 %v882
  %1258 = vmatpush2.bf16.msra.mxu0 %v881
  %1259 = vmatprep.subr.bf16.mxu0 %v880
  %1260 = vmatpush2.bf16.msra.mxu0 %v879
  %1261 = vmatprep.mubr.bf16.mxu0 %v300
  %1262 = vmatmul.mubr.bf16.gmra.mxu0 %v299
  %v1263 = vpop.f32.mrf.mxu0
  %v1264 = vadd.f32 %v1193, %v1263
  %v1265 = vpop.f32.mrf.mxu0
  %v1266 = vadd.f32 %v1195, %v1265
  %v1267 = vpop.f32.mrf.mxu0
  %v1268 = vadd.f32 %v1197, %v1267
  %v1269 = vpop.f32.mrf.mxu0
  %v1270 = vadd.f32 %v1199, %v1269
  %1271 = vmatprep.mubr.bf16.mxu0 %v309
  %1272 = vmatmul.mubr.bf16.gmra.mxu0 %v308
  %v1273 = vpop.f32.mrf.mxu0
  %v1274 = vadd.f32 %v1203, %v1273
  %v1275 = vpop.f32.mrf.mxu0
  %v1276 = vadd.f32 %v1205, %v1275
  %v1277 = vpop.f32.mrf.mxu0
  %v1278 = vadd.f32 %v1207, %v1277
  %v1279 = vpop.f32.mrf.mxu0
  %v1280 = vadd.f32 %v1209, %v1279
  %1281 = vmatprep.mubr.bf16.mxu0 %v318
  %1282 = vmatmul.mubr.bf16.gmra.mxu0 %v317
  %v1283 = vpop.f32.mrf.mxu0
  %v1284 = vadd.f32 %v1213, %v1283
  %v1285 = vpop.f32.mrf.mxu0
  %v1286 = vadd.f32 %v1215, %v1285
  %v1287 = vpop.f32.mrf.mxu0
  %v1288 = vadd.f32 %v1217, %v1287
  %v1289 = vpop.f32.mrf.mxu0
  %v1290 = vadd.f32 %v1219, %v1289
  %1291 = vmatprep.mubr.bf16.mxu0 %v327
  %1292 = vmatmul.mubr.bf16.gmra.mxu0 %v326
  %v1293 = vpop.f32.mrf.mxu0
  %v1294 = vadd.f32 %v1223, %v1293
  %v1295 = vpop.f32.mrf.mxu0
  %v1296 = vadd.f32 %v1225, %v1295
  %v1297 = vpop.f32.mrf.mxu0
  %v1298 = vpop.f32.mrf.mxu0
  %1299 = vdwg.mxu0
  %1300 = vmatprep.subr.bf16.mxu0 %v910
  %1301 = vmatpush1.bf16.msra.mxu0 %v909
  %1302 = vmatprep.subr.bf16.mxu0 %v908
  %1303 = vmatpush1.bf16.msra.mxu0 %v907
  %1304 = vmatprep.subr.bf16.mxu0 %v906
  %1305 = vmatpush1.bf16.msra.mxu0 %v905
  %1306 = vmatprep.subr.bf16.mxu0 %v904
  %1307 = vmatpush1.bf16.msra.mxu0 %v903
  %1308 = vmatprep.subr.bf16.mxu0 %v902
  %1309 = vmatpush1.bf16.msra.mxu0 %v901
  %1310 = vmatprep.subr.bf16.mxu0 %v900
  %1311 = vmatpush1.bf16.msra.mxu0 %v899
  %1312 = vmatprep.subr.bf16.mxu0 %v898
  %1313 = vmatpush1.bf16.msra.mxu0 %v897
  %1314 = vmatprep.subr.bf16.mxu0 %v896
  %1315 = vmatpush1.bf16.msra.mxu0 %v895
  %1316 = vmatprep.subr.bf16.mxu0 %v926
  %1317 = vmatpush2.bf16.msra.mxu0 %v925
  %1318 = vmatprep.subr.bf16.mxu0 %v924
  %1319 = vmatpush2.bf16.msra.mxu0 %v923
  %1320 = vmatprep.subr.bf16.mxu0 %v922
  %1321 = vmatpush2.bf16.msra.mxu0 %v921
  %1322 = vmatprep.subr.bf16.mxu0 %v920
  %1323 = vmatpush2.bf16.msra.mxu0 %v919
  %1324 = vmatprep.subr.bf16.mxu0 %v918
  %1325 = vmatpush2.bf16.msra.mxu0 %v917
  %1326 = vmatprep.subr.bf16.mxu0 %v916
  %1327 = vmatpush2.bf16.msra.mxu0 %v915
  %1328 = vmatprep.subr.bf16.mxu0 %v914
  %1329 = vmatpush2.bf16.msra.mxu0 %v913
  %1330 = vmatprep.subr.bf16.mxu0 %v912
  %1331 = vmatpush2.bf16.msra.mxu0 %v911
  %1332 = vmatprep.mubr.bf16.mxu0 %v302
  %1333 = vmatmul.mubr.bf16.gmra.mxu0 %v301
  %v1334 = vpop.f32.mrf.mxu0
  %v1335 = vadd.f32 %v1264, %v1334
  %v1336 = vpop.f32.mrf.mxu0
  %v1337 = vadd.f32 %v1266, %v1336
  %v1338 = vpop.f32.mrf.mxu0
  %v1339 = vadd.f32 %v1268, %v1338
  %v1340 = vpop.f32.mrf.mxu0
  %v1341 = vadd.f32 %v1270, %v1340
  %1342 = vmatprep.mubr.bf16.mxu0 %v311
  %1343 = vmatmul.mubr.bf16.gmra.mxu0 %v310
  %v1344 = vpop.f32.mrf.mxu0
  %v1345 = vadd.f32 %v1274, %v1344
  %v1346 = vpop.f32.mrf.mxu0
  %v1347 = vadd.f32 %v1276, %v1346
  %v1348 = vpop.f32.mrf.mxu0
  %v1349 = vadd.f32 %v1278, %v1348
  %v1350 = vpop.f32.mrf.mxu0
  %v1351 = vadd.f32 %v1280, %v1350
  %1352 = vmatprep.mubr.bf16.mxu0 %v320
  %1353 = vmatmul.mubr.bf16.gmra.mxu0 %v319
  %v1354 = vpop.f32.mrf.mxu0
  %v1355 = vadd.f32 %v1284, %v1354
  %v1356 = vpop.f32.mrf.mxu0
  %v1357 = vadd.f32 %v1286, %v1356
  %v1358 = vpop.f32.mrf.mxu0
  %v1359 = vadd.f32 %v1288, %v1358
  %v1360 = vpop.f32.mrf.mxu0
  %v1361 = vadd.f32 %v1290, %v1360
  %1362 = vmatprep.mubr.bf16.mxu0 %v329
  %1363 = vmatmul.mubr.bf16.gmra.mxu0 %v328
  %v1364 = vpop.f32.mrf.mxu0
  %v1365 = vadd.f32 %v1294, %v1364
  %v1366 = vpop.f32.mrf.mxu0
  %v1367 = vadd.f32 %v1296, %v1366
  %v1368 = vpop.f32.mrf.mxu0
  %v1369 = vpop.f32.mrf.mxu0
  %1370 = vdwg.mxu0
  %1371 = vmatprep.subr.bf16.mxu0 %v942
  %1372 = vmatpush1.bf16.msra.mxu0 %v941
  %1373 = vmatprep.subr.bf16.mxu0 %v940
  %1374 = vmatpush1.bf16.msra.mxu0 %v939
  %1375 = vmatprep.subr.bf16.mxu0 %v938
  %1376 = vmatpush1.bf16.msra.mxu0 %v937
  %1377 = vmatprep.subr.bf16.mxu0 %v936
  %1378 = vmatpush1.bf16.msra.mxu0 %v935
  %1379 = vmatprep.subr.bf16.mxu0 %v934
  %1380 = vmatpush1.bf16.msra.mxu0 %v933
  %1381 = vmatprep.subr.bf16.mxu0 %v932
  %1382 = vmatpush1.bf16.msra.mxu0 %v931
  %1383 = vmatprep.subr.bf16.mxu0 %v930
  %1384 = vmatpush1.bf16.msra.mxu0 %v929
  %1385 = vmatprep.subr.bf16.mxu0 %v928
  %1386 = vmatpush1.bf16.msra.mxu0 %v927
  %1387 = vmatprep.subr.bf16.mxu0 0
  %1388 = vmatpush2.bf16.msra.mxu0 0
  %1389 = vmatprep.subr.bf16.mxu0 0
  %1390 = vmatpush2.bf16.msra.mxu0 0
  %1391 = vmatprep.subr.bf16.mxu0 0
  %1392 = vmatpush2.bf16.msra.mxu0 0
  %1393 = vmatprep.subr.bf16.mxu0 0
  %1394 = vmatpush2.bf16.msra.mxu0 0
  %1395 = vmatprep.subr.bf16.mxu0 0
  %1396 = vmatpush2.bf16.msra.mxu0 0
  %1397 = vmatprep.subr.bf16.mxu0 0
  %1398 = vmatpush2.bf16.msra.mxu0 0
  %1399 = vmatprep.subr.bf16.mxu0 0
  %1400 = vmatpush2.bf16.msra.mxu0 0
  %1401 = vmatprep.subr.bf16.mxu0 0
  %1402 = vmatpush2.bf16.msra.mxu0 0
  %1403 = vmatprep.mubr.bf16.mxu0 0
  %1404 = vmatmul.mubr.bf16.gmra.mxu0 %v303
  %v1405 = vpop.f32.mrf.mxu0
  %v1406 = vadd.f32 %v1335, %v1405
  %v1407 = vpop.f32.mrf.mxu0
  %v1408 = vadd.f32 %v1337, %v1407
  %v1409 = vpop.f32.mrf.mxu0
  %v1410 = vadd.f32 %v1339, %v1409
  %v1411 = vpop.f32.mrf.mxu0
  %v1412 = vadd.f32 %v1341, %v1411
  %1413 = vmatprep.mubr.bf16.mxu0 0
  %1414 = vmatmul.mubr.bf16.gmra.mxu0 %v312
  %v1415 = vpop.f32.mrf.mxu0
  %v1416 = vadd.f32 %v1345, %v1415
  %v1417 = vpop.f32.mrf.mxu0
  %v1418 = vadd.f32 %v1347, %v1417
  %v1419 = vpop.f32.mrf.mxu0
  %v1420 = vadd.f32 %v1349, %v1419
  %v1421 = vpop.f32.mrf.mxu0
  %v1422 = vadd.f32 %v1351, %v1421
  %1423 = vmatprep.mubr.bf16.mxu0 0
  %1424 = vmatmul.mubr.bf16.gmra.mxu0 %v321
  %v1425 = vpop.f32.mrf.mxu0
  %v1426 = vadd.f32 %v1355, %v1425
  %v1427 = vpop.f32.mrf.mxu0
  %v1428 = vadd.f32 %v1357, %v1427
  %v1429 = vpop.f32.mrf.mxu0
  %v1430 = vadd.f32 %v1359, %v1429
  %v1431 = vpop.f32.mrf.mxu0
  %v1432 = vadd.f32 %v1361, %v1431
  %1433 = vmatprep.mubr.bf16.mxu0 0
  %1434 = vmatmul.mubr.bf16.gmra.mxu0 %v330
  %v1435 = vpop.f32.mrf.mxu0
  %v1436 = vadd.f32 %v1365, %v1435
  %v1437 = vpop.f32.mrf.mxu0
  %v1438 = vadd.f32 %v1367, %v1437
  %v1439 = vpop.f32.mrf.mxu0
  %v1440 = vpop.f32.mrf.mxu0
  %1441 = vdwg.mxu0
  %v1442 = vadd.f32 %v1406, %v1410
  %v1443 = vadd.f32 %v1442, %v1416
  %v1444 = vadd.f32 %v1443, %v1420
  %v1445 = vadd.f32 %v1444, %v1426
  %v1446 = vadd.f32 %v1445, %v1430
  %v1447 = vadd.f32 %v1446, %v1436
  %v1448 = vrot.slane %v1447, 4
  %v1449 = vadd.f32 %v1447, %v1448
  %v1450 = vrot.slane %v1449, 2
  %v1451 = vadd.f32 %v1449, %v1450
  %v1452 = vrot.slane %v1451, 1
  %v1453 = vadd.f32 %v1451, %v1452
  %v1454 = vadd.f32 %v1408, %v1412
  %v1455 = vadd.f32 %v1454, %v1418
  %v1456 = vadd.f32 %v1455, %v1422
  %v1457 = vadd.f32 %v1456, %v1428
  %v1458 = vadd.f32 %v1457, %v1432
  %v1459 = vadd.f32 %v1458, %v1438
  %v1460 = vrot.slane %v1459, 4
  %v1461 = vadd.f32 %v1459, %v1460
  %v1462 = vrot.slane %v1461, 2
  %v1463 = vadd.f32 %v1461, %v1462
  %v1464 = vrot.slane %v1463, 1
  %v1465 = vadd.f32 %v1463, %v1464
  %v1466 = vmul.f32 %v1406, %v1406
  %v1467 = vmul.f32 %v1408, %v1408
  %v1468 = vmul.f32 %v1410, %v1410
  %v1469 = vmul.f32 %v1412, %v1412
  %v1470 = vmul.f32 %v1416, %v1416
  %v1471 = vmul.f32 %v1418, %v1418
  %v1472 = vmul.f32 %v1420, %v1420
  %v1473 = vmul.f32 %v1422, %v1422
  %v1474 = vmul.f32 %v1426, %v1426
  %v1475 = vmul.f32 %v1428, %v1428
  %v1476 = vmul.f32 %v1430, %v1430
  %v1477 = vmul.f32 %v1432, %v1432
  %v1478 = vmul.f32 %v1436, %v1436
  %v1479 = vmul.f32 %v1438, %v1438
  %v1480 = vadd.f32 %v1466, %v1468
  %v1481 = vadd.f32 %v1480, %v1470
  %v1482 = vadd.f32 %v1481, %v1472
  %v1483 = vadd.f32 %v1482, %v1474
  %v1484 = vadd.f32 %v1483, %v1476
  %v1485 = vadd.f32 %v1484, %v1478
  %v1486 = vrot.slane %v1485, 4
  %v1487 = vadd.f32 %v1485, %v1486
  %v1488 = vrot.slane %v1487, 2
  %v1489 = vadd.f32 %v1487, %v1488
  %v1490 = vrot.slane %v1489, 1
  %v1491 = vadd.f32 %v1489, %v1490
  %v1492 = vadd.f32 %v1467, %v1469
  %v1493 = vadd.f32 %v1492, %v1471
  %v1494 = vadd.f32 %v1493, %v1473
  %v1495 = vadd.f32 %v1494, %v1475
  %v1496 = vadd.f32 %v1495, %v1477
  %v1497 = vadd.f32 %v1496, %v1479
  %v1498 = vrot.slane %v1497, 4
  %v1499 = vadd.f32 %v1497, %v1498
  %v1500 = vrot.slane %v1499, 2
  %v1501 = vadd.f32 %v1499, %v1500
  %v1502 = vrot.slane %v1501, 1
  %v1503 = vadd.f32 %v1501, %v1502
  %v1504 = vmul.f32 %v1453, 0.02
  %v1505 = vmul.f32 %v1465, 0.02
  %v1506 = vmul.f32 %v1491, 0.02
  %v1507 = vmul.f32 %v1503, 0.02
  %v1508 = vmul.f32 %v1504, %v1504
  %v1509 = vmul.f32 %v1505, %v1505
  %v1510 = vsub.f32 %v1506, %v1508
  %v1511 = vsub.f32 %v1507, %v1509
  %v1512 = vld [vmem:[%s2] sm:$0x3]
  %v1513 = vadd.f32 %v1510, 1e-05
  %v1514 = vadd.f32 %v1511, 1e-05
  %v1515 = vrsqrt.pop %v1513
  %v1516 = vrsqrt.pop %v1514
  %v1519 = vcombine.low %v1515, %v1516
  %v1521 = vunpack.c.l.s4 1966171168
  %v1522 = vunpack.c.0.s8 %v1521
  %v1523 = vlaneseq
  %v1524 = vshrl.u32 %v1523, 7
  %v1525 = vsub.s32 %v1522, %v1524
  %v1526 = vrot.slane %v1519, %v1525
  %v1528 = vunpack.c.l.s4 1966171168
  %v1529 = vunpack.c.0.s8 %v1528
  %v1530 = vlaneseq
  %v1531 = vshrl.u32 %v1530, 7
  %v1532 = vsub.s32 %v1529, %v1531
  %v1533 = vrot.slane %v1526, %v1532
  %v1535 = vmul.f32 %v1512, %v1533
  %v1536 = vld [vmem:[%s3] sm:$0x3]
  %v1538 = vlaneseq
  %v1539 = vshrl.u32 %v1538, 7
  %v1540 = vsub.s32 0, %v1539
  %v1541 = vrot.slane %v1535, %v1540
  %v1542 = vlaneseq
  %v1543 = vshrl.u32 %v1542, 7
  %v1544 = vsub.s32 1, %v1543
  %v1545 = vrot.slane %v1535, %v1544
  %v1548 = vmul.f32 %v1504, %v1541
  %v1549 = vmul.f32 %v1505, %v1545
  %v1552 = vcombine.low %v1548, %v1549
  %v1554 = vunpack.c.l.s4 1966171168
  %v1555 = vunpack.c.0.s8 %v1554
  %v1556 = vlaneseq
  %v1557 = vshrl.u32 %v1556, 7
  %v1558 = vsub.s32 %v1555, %v1557
  %v1559 = vrot.slane %v1552, %v1558
  %v1561 = vunpack.c.l.s4 1966171168
  %v1562 = vunpack.c.0.s8 %v1561
  %v1563 = vlaneseq
  %v1564 = vshrl.u32 %v1563, 7
  %v1565 = vsub.s32 %v1562, %v1564
  %v1566 = vrot.slane %v1559, %v1565
  %v1568 = vsub.f32 %v1536, %v1566
  %v1569 = vmul.f32 %v1406, %v1541
  %v1570 = vmul.f32 %v1408, %v1545
  %v1571 = vmul.f32 %v1410, %v1541
  %v1572 = vmul.f32 %v1412, %v1545
  %v1573 = vmul.f32 %v1416, %v1541
  %v1574 = vmul.f32 %v1418, %v1545
  %v1575 = vmul.f32 %v1420, %v1541
  %v1576 = vmul.f32 %v1422, %v1545
  %v1577 = vmul.f32 %v1426, %v1541
  %v1578 = vmul.f32 %v1428, %v1545
  %v1579 = vmul.f32 %v1430, %v1541
  %v1580 = vmul.f32 %v1432, %v1545
  %v1581 = vmul.f32 %v1436, %v1541
  %v1582 = vmul.f32 %v1438, %v1545
  %v1584 = vlaneseq
  %v1585 = vshrl.u32 %v1584, 7
  %v1586 = vsub.s32 0, %v1585
  %v1587 = vrot.slane %v1568, %v1586
  %v1588 = vlaneseq
  %v1589 = vshrl.u32 %v1588, 7
  %v1590 = vsub.s32 1, %v1589
  %v1591 = vrot.slane %v1568, %v1590
  %v1594 = vadd.f32 %v1569, %v1587
  %v1595 = vadd.f32 %v1570, %v1591
  %v1596 = vadd.f32 %v1571, %v1587
  %v1597 = vadd.f32 %v1572, %v1591
  %v1598 = vadd.f32 %v1573, %v1587
  %v1599 = vadd.f32 %v1574, %v1591
  %v1600 = vadd.f32 %v1575, %v1587
  %v1601 = vadd.f32 %v1576, %v1591
  %v1602 = vadd.f32 %v1577, %v1587
  %v1603 = vadd.f32 %v1578, %v1591
  %v1604 = vadd.f32 %v1579, %v1587
  %v1605 = vadd.f32 %v1580, %v1591
  %v1606 = vadd.f32 %v1581, %v1587
  %v1607 = vadd.f32 %v1582, %v1591
  %vm1608 = vcmp.ge.f32.partialorder %v1594, 0.0
  %vm1609 = vcmp.ge.f32.partialorder %v1595, 0.0
  %vm1610 = vcmp.ge.f32.partialorder %v1596, 0.0
  %vm1611 = vcmp.ge.f32.partialorder %v1597, 0.0
  %vm1612 = vcmp.ge.f32.partialorder %v1598, 0.0
  %vm1613 = vcmp.ge.f32.partialorder %v1599, 0.0
  %vm1614 = vcmp.ge.f32.partialorder %v1600, 0.0
  %vm1615 = vcmp.ge.f32.partialorder %v1601, 0.0
  %vm1616 = vcmp.ge.f32.partialorder %v1602, 0.0
  %vm1617 = vcmp.ge.f32.partialorder %v1603, 0.0
  %vm1618 = vcmp.ge.f32.partialorder %v1604, 0.0
  %vm1619 = vcmp.ge.f32.partialorder %v1605, 0.0
  %vm1620 = vcmp.ge.f32.partialorder %v1606, 0.0
  %vm1621 = vcmp.ge.f32.partialorder %v1607, 0.0
  %v1622 = vmul.f32 %v1594, 0.2
  %v1623 = vmul.f32 %v1595, 0.2
  %v1624 = vmul.f32 %v1596, 0.2
  %v1625 = vmul.f32 %v1597, 0.2
  %v1626 = vmul.f32 %v1598, 0.2
  %v1627 = vmul.f32 %v1599, 0.2
  %v1628 = vmul.f32 %v1600, 0.2
  %v1629 = vmul.f32 %v1601, 0.2
  %v1630 = vmul.f32 %v1602, 0.2
  %v1631 = vmul.f32 %v1603, 0.2
  %v1632 = vmul.f32 %v1604, 0.2
  %v1633 = vmul.f32 %v1605, 0.2
  %v1634 = vmul.f32 %v1606, 0.2
  %v1635 = vmul.f32 %v1607, 0.2
  %v1636 = vsel %vm1608, %v1594, %v1622
  %v1637 = vsel %vm1609, %v1595, %v1623
  %v1638 = vsel %vm1610, %v1596, %v1624
  %v1639 = vsel %vm1611, %v1597, %v1625
  %v1640 = vsel %vm1612, %v1598, %v1626
  %v1641 = vsel %vm1613, %v1599, %v1627
  %v1642 = vsel %vm1614, %v1600, %v1628
  %v1643 = vsel %vm1615, %v1601, %v1629
  %v1644 = vsel %vm1616, %v1602, %v1630
  %v1645 = vsel %vm1617, %v1603, %v1631
  %v1646 = vsel %vm1618, %v1604, %v1632
  %v1647 = vsel %vm1619, %v1605, %v1633
  %v1648 = vsel %vm1620, %v1606, %v1634
  %v1649 = vsel %vm1621, %v1607, %v1635
  %1650 = vst [vmem:[%s4] sm:$0xff] %v1636
  %1651 = vst [vmem:[%s4 + $0x8] sm:$0xff] %v1637
  %1652 = vst [vmem:[%s4 + $0x10] sm:$0xff] %v1638
  %1653 = vst [vmem:[%s4 + $0x18] sm:$0xff] %v1639
  %1654 = vst [vmem:[%s4 + $0x20] sm:$0xff] %v1640
  %1655 = vst [vmem:[%s4 + $0x28] sm:$0xff] %v1641
  %1656 = vst [vmem:[%s4 + $0x30] sm:$0xff] %v1642
  %1657 = vst [vmem:[%s4 + $0x38] sm:$0xff] %v1643
  %1658 = vst [vmem:[%s4 + $0x40] sm:$0xff] %v1644
  %1659 = vst [vmem:[%s4 + $0x48] sm:$0xff] %v1645
  %1660 = vst [vmem:[%s4 + $0x50] sm:$0xff] %v1646
  %1661 = vst [vmem:[%s4 + $0x58] sm:$0xff] %v1647
  %1662 = vst [vmem:[%s4 + $0x60] sm:$0xff] %v1648
  %1663 = vst [vmem:[%s4 + $0x68] sm:$0xff] %v1649
  // Predicated region
  $region18: #{discriminator_forward.10} parent=0 // pred_check
    _
  $region19: #{discriminator_forward.10} parent=0 // pred_check_branch
    %1665 = sbr.rel (0) target = $region21
  $region20: #{discriminator_forward.10} parent=0 // pred_region
    _
  $region21: #{discriminator_forward.10} parent=0 // pred_fallthru
    _
  // Predicated region
  $region22: #{discriminator_forward.10} parent=0 // pred_check
    _
  $region23: #{discriminator_forward.10} parent=0 // pred_check_branch
    %1667 = sbr.rel (0) target = $region25
  $region24: #{discriminator_forward.10} parent=0 // pred_region
    _
  $region25: #{discriminator_forward.10} parent=0 // pred_fallthru
    _

// kernel: discriminator_forward.15
$region0: #{discriminator_forward.15}
  #allocation0 [shape = 'u32[]', space=smem, size = 0x4, offset = 0x4, fixed_abs, tag = 'smem constant byte address 0x4 - core index']
  #allocation1 [shape = 'u32[144,128]{1,0:T(1,128)}', space=vmem, size = 0x12000, scoped, tag = 'internal scratch']
  #allocation2 [shape = 'f32[1]{0:T(128)S(6)}', space=smem, size = 0x200, scoped, tag = 'scoped memory for discriminator_forward.15']
  %s0 = inlined_call_operand.vmem [shape: bf16[8,2048], index: 0, kind: input, shape index: {}]
  %s1 = inlined_call_operand.vmem [shape: bf16[2048,1], index: 1, kind: input, shape index: {}]
  %s2 = inlined_call_operand.<no memory space> [shape: f32[1], index: 2, kind: input, shape index: {}]
  %s3 = inlined_call_operand.vmem [shape: f32[8,1], index: 3, kind: output, shape index: {}]
  %s4 = sld [smem:[#allocation0]]
  $region22: #{discriminator_forward.15} parent=0
    _
  %s6 = ssub.s32 1, %s4
  %s7 = scalar_select 0, %s6, %s4
  %8 = sst [smem:[#allocation2]] %s2
  // Predicated region
  $region2: #{discriminator_forward.15} parent=0 // pred_check
    _
  $region3: #{discriminator_forward.15} parent=0 // pred_check_branch
    %10 = sbr.rel (0) target = $region5
  $region4: #{discriminator_forward.15} parent=0 // pred_region
    _
  $region5: #{discriminator_forward.15} parent=0 // pred_fallthru
    _
  // Predicated region
  $region6: #{discriminator_forward.15} parent=0 // pred_check
    _
  $region7: #{discriminator_forward.15} parent=0 // pred_check_branch
    %12 = sbr.rel (0) target = $region9
  $region8: #{discriminator_forward.15} parent=0 // pred_region
    _
  $region9: #{discriminator_forward.15} parent=0 // pred_fallthru
    _
  // Predicated region
  $region10: #{discriminator_forward.15} parent=0 // pred_check
    _
  $region11: #{discriminator_forward.15} parent=0 // pred_check_branch
    %14 = sbr.rel (0) target = $region13
  $region12: #{discriminator_forward.15} parent=0 // pred_region
    _
  $region13: #{discriminator_forward.15} parent=0 // pred_fallthru
    _
  %v16 = vld [vmem:[%s0] sm:$0xff]
  %v17 = vld [vmem:[%s0 + $0x8] sm:$0xff]
  %v18 = vld [vmem:[%s0 + $0x10] sm:$0xff]
  %v19 = vld [vmem:[%s0 + $0x18] sm:$0xff]
  %v20 = vld [vmem:[%s0 + $0x20] sm:$0xff]
  %v21 = vld [vmem:[%s0 + $0x28] sm:$0xff]
  %v22 = vld [vmem:[%s0 + $0x30] sm:$0xff]
  %v23 = vld [vmem:[%s0 + $0x38] sm:$0xff]
  %v24 = vld [vmem:[%s1] sm:$0xf]
  %v25 = vld [vmem:[%s1 + $0x4] sm:$0xf]
  %v26 = vld [vmem:[%s1 + $0x8] sm:$0xf]
  %v27 = vld [vmem:[%s1 + $0xc] sm:$0xf]
  %v28 = vld [vmem:[%s1 + $0x10] sm:$0xf]
  %v29 = vld [vmem:[%s1 + $0x14] sm:$0xf]
  %v30 = vld [vmem:[%s1 + $0x18] sm:$0xf]
  %v31 = vld [vmem:[%s1 + $0x1c] sm:$0xf]
  %v32 = vld [vmem:[%s1 + $0x20] sm:$0xf]
  %v33 = vld [vmem:[%s1 + $0x24] sm:$0xf]
  %v34 = vld [vmem:[%s1 + $0x28] sm:$0xf]
  %v35 = vld [vmem:[%s1 + $0x2c] sm:$0xf]
  %v36 = vld [vmem:[%s1 + $0x30] sm:$0xf]
  %v37 = vld [vmem:[%s1 + $0x34] sm:$0xf]
  %v38 = vld [vmem:[%s1 + $0x38] sm:$0xf]
  %v39 = vld [vmem:[%s1 + $0x3c] sm:$0xf]
  %v40 = vld [vmem:[%s1 + $0x40] sm:$0xf]
  %v41 = vld [vmem:[%s1 + $0x44] sm:$0xf]
  %v42 = vld [vmem:[%s1 + $0x48] sm:$0xf]
  %v43 = vld [vmem:[%s1 + $0x4c] sm:$0xf]
  %v44 = vld [vmem:[%s1 + $0x50] sm:$0xf]
  %v45 = vld [vmem:[%s1 + $0x54] sm:$0xf]
  %v46 = vld [vmem:[%s1 + $0x58] sm:$0xf]
  %v47 = vld [vmem:[%s1 + $0x5c] sm:$0xf]
  %v48 = vld [vmem:[%s1 + $0x60] sm:$0xf]
  %v49 = vld [vmem:[%s1 + $0x64] sm:$0xf]
  %v50 = vld [vmem:[%s1 + $0x68] sm:$0xf]
  %v51 = vld [vmem:[%s1 + $0x6c] sm:$0xf]
  %v52 = vld [vmem:[%s1 + $0x70] sm:$0xf]
  %v53 = vld [vmem:[%s1 + $0x74] sm:$0xf]
  %v54 = vld [vmem:[%s1 + $0x78] sm:$0xf]
  %v55 = vld [vmem:[%s1 + $0x7c] sm:$0xf]
  %v56 = vld [vmem:[%s1 + $0x80] sm:$0xf]
  %v57 = vld [vmem:[%s1 + $0x84] sm:$0xf]
  %v58 = vld [vmem:[%s1 + $0x88] sm:$0xf]
  %v59 = vld [vmem:[%s1 + $0x8c] sm:$0xf]
  %v60 = vld [vmem:[%s1 + $0x90] sm:$0xf]
  %v61 = vld [vmem:[%s1 + $0x94] sm:$0xf]
  %v62 = vld [vmem:[%s1 + $0x98] sm:$0xf]
  %v63 = vld [vmem:[%s1 + $0x9c] sm:$0xf]
  %v64 = vld [vmem:[%s1 + $0xa0] sm:$0xf]
  %v65 = vld [vmem:[%s1 + $0xa4] sm:$0xf]
  %v66 = vld [vmem:[%s1 + $0xa8] sm:$0xf]
  %v67 = vld [vmem:[%s1 + $0xac] sm:$0xf]
  %v68 = vld [vmem:[%s1 + $0xb0] sm:$0xf]
  %v69 = vld [vmem:[%s1 + $0xb4] sm:$0xf]
  %v70 = vld [vmem:[%s1 + $0xb8] sm:$0xf]
  %v71 = vld [vmem:[%s1 + $0xbc] sm:$0xf]
  %v72 = vld [vmem:[%s1 + $0xc0] sm:$0xf]
  %v73 = vld [vmem:[%s1 + $0xc4] sm:$0xf]
  %v74 = vld [vmem:[%s1 + $0xc8] sm:$0xf]
  %v75 = vld [vmem:[%s1 + $0xcc] sm:$0xf]
  %v76 = vld [vmem:[%s1 + $0xd0] sm:$0xf]
  %v77 = vld [vmem:[%s1 + $0xd4] sm:$0xf]
  %v78 = vld [vmem:[%s1 + $0xd8] sm:$0xf]
  %v79 = vld [vmem:[%s1 + $0xdc] sm:$0xf]
  %v80 = vld [vmem:[%s1 + $0xe0] sm:$0xf]
  %v81 = vld [vmem:[%s1 + $0xe4] sm:$0xf]
  %v82 = vld [vmem:[%s1 + $0xe8] sm:$0xf]
  %v83 = vld [vmem:[%s1 + $0xec] sm:$0xf]
  %v84 = vld [vmem:[%s1 + $0xf0] sm:$0xf]
  %v85 = vld [vmem:[%s1 + $0xf4] sm:$0xf]
  %v86 = vld [vmem:[%s1 + $0xf8] sm:$0xf]
  %v87 = vld [vmem:[%s1 + $0xfc] sm:$0xf]
  %v88 = vld [vmem:[%s1 + $0x100] sm:$0xf]
  %v89 = vld [vmem:[%s1 + $0x104] sm:$0xf]
  %v90 = vld [vmem:[%s1 + $0x108] sm:$0xf]
  %v91 = vld [vmem:[%s1 + $0x10c] sm:$0xf]
  %v92 = vld [vmem:[%s1 + $0x110] sm:$0xf]
  %v93 = vld [vmem:[%s1 + $0x114] sm:$0xf]
  %v94 = vld [vmem:[%s1 + $0x118] sm:$0xf]
  %v95 = vld [vmem:[%s1 + $0x11c] sm:$0xf]
  %v96 = vld [vmem:[%s1 + $0x120] sm:$0xf]
  %v97 = vld [vmem:[%s1 + $0x124] sm:$0xf]
  %v98 = vld [vmem:[%s1 + $0x128] sm:$0xf]
  %v99 = vld [vmem:[%s1 + $0x12c] sm:$0xf]
  %v100 = vld [vmem:[%s1 + $0x130] sm:$0xf]
  %v101 = vld [vmem:[%s1 + $0x134] sm:$0xf]
  %v102 = vld [vmem:[%s1 + $0x138] sm:$0xf]
  %v103 = vld [vmem:[%s1 + $0x13c] sm:$0xf]
  %v104 = vld [vmem:[%s1 + $0x140] sm:$0xf]
  %v105 = vld [vmem:[%s1 + $0x144] sm:$0xf]
  %v106 = vld [vmem:[%s1 + $0x148] sm:$0xf]
  %v107 = vld [vmem:[%s1 + $0x14c] sm:$0xf]
  %v108 = vld [vmem:[%s1 + $0x150] sm:$0xf]
  %v109 = vld [vmem:[%s1 + $0x154] sm:$0xf]
  %v110 = vld [vmem:[%s1 + $0x158] sm:$0xf]
  %v111 = vld [vmem:[%s1 + $0x15c] sm:$0xf]
  %v112 = vld [vmem:[%s1 + $0x160] sm:$0xf]
  %v113 = vld [vmem:[%s1 + $0x164] sm:$0xf]
  %v114 = vld [vmem:[%s1 + $0x168] sm:$0xf]
  %v115 = vld [vmem:[%s1 + $0x16c] sm:$0xf]
  %v116 = vld [vmem:[%s1 + $0x170] sm:$0xf]
  %v117 = vld [vmem:[%s1 + $0x174] sm:$0xf]
  %v118 = vld [vmem:[%s1 + $0x178] sm:$0xf]
  %v119 = vld [vmem:[%s1 + $0x17c] sm:$0xf]
  %v120 = vld [vmem:[%s1 + $0x180] sm:$0xf]
  %v121 = vld [vmem:[%s1 + $0x184] sm:$0xf]
  %v122 = vld [vmem:[%s1 + $0x188] sm:$0xf]
  %v123 = vld [vmem:[%s1 + $0x18c] sm:$0xf]
  %v124 = vld [vmem:[%s1 + $0x190] sm:$0xf]
  %v125 = vld [vmem:[%s1 + $0x194] sm:$0xf]
  %v126 = vld [vmem:[%s1 + $0x198] sm:$0xf]
  %v127 = vld [vmem:[%s1 + $0x19c] sm:$0xf]
  %v128 = vld [vmem:[%s1 + $0x1a0] sm:$0xf]
  %v129 = vld [vmem:[%s1 + $0x1a4] sm:$0xf]
  %v130 = vld [vmem:[%s1 + $0x1a8] sm:$0xf]
  %v131 = vld [vmem:[%s1 + $0x1ac] sm:$0xf]
  %v132 = vld [vmem:[%s1 + $0x1b0] sm:$0xf]
  %v133 = vld [vmem:[%s1 + $0x1b4] sm:$0xf]
  %v134 = vld [vmem:[%s1 + $0x1b8] sm:$0xf]
  %v135 = vld [vmem:[%s1 + $0x1bc] sm:$0xf]
  %v136 = vld [vmem:[%s1 + $0x1c0] sm:$0xf]
  %v137 = vld [vmem:[%s1 + $0x1c4] sm:$0xf]
  %v138 = vld [vmem:[%s1 + $0x1c8] sm:$0xf]
  %v139 = vld [vmem:[%s1 + $0x1cc] sm:$0xf]
  %v140 = vld [vmem:[%s1 + $0x1d0] sm:$0xf]
  %v141 = vld [vmem:[%s1 + $0x1d4] sm:$0xf]
  %v142 = vld [vmem:[%s1 + $0x1d8] sm:$0xf]
  %v143 = vld [vmem:[%s1 + $0x1dc] sm:$0xf]
  %v144 = vld [vmem:[%s1 + $0x1e0] sm:$0xf]
  %v145 = vld [vmem:[%s1 + $0x1e4] sm:$0xf]
  %v146 = vld [vmem:[%s1 + $0x1e8] sm:$0xf]
  %v147 = vld [vmem:[%s1 + $0x1ec] sm:$0xf]
  %v148 = vld [vmem:[%s1 + $0x1f0] sm:$0xf]
  %v149 = vld [vmem:[%s1 + $0x1f4] sm:$0xf]
  %v150 = vld [vmem:[%s1 + $0x1f8] sm:$0xf]
  %v151 = vld [vmem:[%s1 + $0x1fc] sm:$0xf]
  %v152 = vld [vmem:[%s1 + $0x200] sm:$0xf]
  %v153 = vld [vmem:[%s1 + $0x204] sm:$0xf]
  %v154 = vld [vmem:[%s1 + $0x208] sm:$0xf]
  %v155 = vld [vmem:[%s1 + $0x20c] sm:$0xf]
  %v156 = vld [vmem:[%s1 + $0x210] sm:$0xf]
  %v157 = vld [vmem:[%s1 + $0x214] sm:$0xf]
  %v158 = vld [vmem:[%s1 + $0x218] sm:$0xf]
  %v159 = vld [vmem:[%s1 + $0x21c] sm:$0xf]
  %v160 = vld [vmem:[%s1 + $0x220] sm:$0xf]
  %v161 = vld [vmem:[%s1 + $0x224] sm:$0xf]
  %v162 = vld [vmem:[%s1 + $0x228] sm:$0xf]
  %v163 = vld [vmem:[%s1 + $0x22c] sm:$0xf]
  %v164 = vld [vmem:[%s1 + $0x230] sm:$0xf]
  %v165 = vld [vmem:[%s1 + $0x234] sm:$0xf]
  %v166 = vld [vmem:[%s1 + $0x238] sm:$0xf]
  %v167 = vld [vmem:[%s1 + $0x23c] sm:$0xf]
  %v168 = vld [vmem:[%s1 + $0x240] sm:$0xf]
  %v169 = vld [vmem:[%s1 + $0x244] sm:$0xf]
  %v170 = vld [vmem:[%s1 + $0x248] sm:$0xf]
  %v171 = vld [vmem:[%s1 + $0x24c] sm:$0xf]
  %v172 = vld [vmem:[%s1 + $0x250] sm:$0xf]
  %v173 = vld [vmem:[%s1 + $0x254] sm:$0xf]
  %v174 = vld [vmem:[%s1 + $0x258] sm:$0xf]
  %v175 = vld [vmem:[%s1 + $0x25c] sm:$0xf]
  %v176 = vld [vmem:[%s1 + $0x260] sm:$0xf]
  %v177 = vld [vmem:[%s1 + $0x264] sm:$0xf]
  %v178 = vld [vmem:[%s1 + $0x268] sm:$0xf]
  %v179 = vld [vmem:[%s1 + $0x26c] sm:$0xf]
  %v180 = vld [vmem:[%s1 + $0x270] sm:$0xf]
  %v181 = vld [vmem:[%s1 + $0x274] sm:$0xf]
  %v182 = vld [vmem:[%s1 + $0x278] sm:$0xf]
  %v183 = vld [vmem:[%s1 + $0x27c] sm:$0xf]
  %v184 = vld [vmem:[%s1 + $0x280] sm:$0xf]
  %v185 = vld [vmem:[%s1 + $0x284] sm:$0xf]
  %v186 = vld [vmem:[%s1 + $0x288] sm:$0xf]
  %v187 = vld [vmem:[%s1 + $0x28c] sm:$0xf]
  %v188 = vld [vmem:[%s1 + $0x290] sm:$0xf]
  %v189 = vld [vmem:[%s1 + $0x294] sm:$0xf]
  %v190 = vld [vmem:[%s1 + $0x298] sm:$0xf]
  %v191 = vld [vmem:[%s1 + $0x29c] sm:$0xf]
  %v192 = vld [vmem:[%s1 + $0x2a0] sm:$0xf]
  %v193 = vld [vmem:[%s1 + $0x2a4] sm:$0xf]
  %v194 = vld [vmem:[%s1 + $0x2a8] sm:$0xf]
  %v195 = vld [vmem:[%s1 + $0x2ac] sm:$0xf]
  %v196 = vld [vmem:[%s1 + $0x2b0] sm:$0xf]
  %v197 = vld [vmem:[%s1 + $0x2b4] sm:$0xf]
  %v198 = vld [vmem:[%s1 + $0x2b8] sm:$0xf]
  %v199 = vld [vmem:[%s1 + $0x2bc] sm:$0xf]
  %v200 = vld [vmem:[%s1 + $0x2c0] sm:$0xf]
  %v201 = vld [vmem:[%s1 + $0x2c4] sm:$0xf]
  %v202 = vld [vmem:[%s1 + $0x2c8] sm:$0xf]
  %v203 = vld [vmem:[%s1 + $0x2cc] sm:$0xf]
  %v204 = vld [vmem:[%s1 + $0x2d0] sm:$0xf]
  %v205 = vld [vmem:[%s1 + $0x2d4] sm:$0xf]
  %v206 = vld [vmem:[%s1 + $0x2d8] sm:$0xf]
  %v207 = vld [vmem:[%s1 + $0x2dc] sm:$0xf]
  %v208 = vld [vmem:[%s1 + $0x2e0] sm:$0xf]
  %v209 = vld [vmem:[%s1 + $0x2e4] sm:$0xf]
  %v210 = vld [vmem:[%s1 + $0x2e8] sm:$0xf]
  %v211 = vld [vmem:[%s1 + $0x2ec] sm:$0xf]
  %v212 = vld [vmem:[%s1 + $0x2f0] sm:$0xf]
  %v213 = vld [vmem:[%s1 + $0x2f4] sm:$0xf]
  %v214 = vld [vmem:[%s1 + $0x2f8] sm:$0xf]
  %v215 = vld [vmem:[%s1 + $0x2fc] sm:$0xf]
  %v216 = vld [vmem:[%s1 + $0x300] sm:$0xf]
  %v217 = vld [vmem:[%s1 + $0x304] sm:$0xf]
  %v218 = vld [vmem:[%s1 + $0x308] sm:$0xf]
  %v219 = vld [vmem:[%s1 + $0x30c] sm:$0xf]
  %v220 = vld [vmem:[%s1 + $0x310] sm:$0xf]
  %v221 = vld [vmem:[%s1 + $0x314] sm:$0xf]
  %v222 = vld [vmem:[%s1 + $0x318] sm:$0xf]
  %v223 = vld [vmem:[%s1 + $0x31c] sm:$0xf]
  %v224 = vld [vmem:[%s1 + $0x320] sm:$0xf]
  %v225 = vld [vmem:[%s1 + $0x324] sm:$0xf]
  %v226 = vld [vmem:[%s1 + $0x328] sm:$0xf]
  %v227 = vld [vmem:[%s1 + $0x32c] sm:$0xf]
  %v228 = vld [vmem:[%s1 + $0x330] sm:$0xf]
  %v229 = vld [vmem:[%s1 + $0x334] sm:$0xf]
  %v230 = vld [vmem:[%s1 + $0x338] sm:$0xf]
  %v231 = vld [vmem:[%s1 + $0x33c] sm:$0xf]
  %v232 = vld [vmem:[%s1 + $0x340] sm:$0xf]
  %v233 = vld [vmem:[%s1 + $0x344] sm:$0xf]
  %v234 = vld [vmem:[%s1 + $0x348] sm:$0xf]
  %v235 = vld [vmem:[%s1 + $0x34c] sm:$0xf]
  %v236 = vld [vmem:[%s1 + $0x350] sm:$0xf]
  %v237 = vld [vmem:[%s1 + $0x354] sm:$0xf]
  %v238 = vld [vmem:[%s1 + $0x358] sm:$0xf]
  %v239 = vld [vmem:[%s1 + $0x35c] sm:$0xf]
  %v240 = vld [vmem:[%s1 + $0x360] sm:$0xf]
  %v241 = vld [vmem:[%s1 + $0x364] sm:$0xf]
  %v242 = vld [vmem:[%s1 + $0x368] sm:$0xf]
  %v243 = vld [vmem:[%s1 + $0x36c] sm:$0xf]
  %v244 = vld [vmem:[%s1 + $0x370] sm:$0xf]
  %v245 = vld [vmem:[%s1 + $0x374] sm:$0xf]
  %v246 = vld [vmem:[%s1 + $0x378] sm:$0xf]
  %v247 = vld [vmem:[%s1 + $0x37c] sm:$0xf]
  %v248 = vld [vmem:[%s1 + $0x380] sm:$0xf]
  %v249 = vld [vmem:[%s1 + $0x384] sm:$0xf]
  %v250 = vld [vmem:[%s1 + $0x388] sm:$0xf]
  %v251 = vld [vmem:[%s1 + $0x38c] sm:$0xf]
  %v252 = vld [vmem:[%s1 + $0x390] sm:$0xf]
  %v253 = vld [vmem:[%s1 + $0x394] sm:$0xf]
  %v254 = vld [vmem:[%s1 + $0x398] sm:$0xf]
  %v255 = vld [vmem:[%s1 + $0x39c] sm:$0xf]
  %v256 = vld [vmem:[%s1 + $0x3a0] sm:$0xf]
  %v257 = vld [vmem:[%s1 + $0x3a4] sm:$0xf]
  %v258 = vld [vmem:[%s1 + $0x3a8] sm:$0xf]
  %v259 = vld [vmem:[%s1 + $0x3ac] sm:$0xf]
  %v260 = vld [vmem:[%s1 + $0x3b0] sm:$0xf]
  %v261 = vld [vmem:[%s1 + $0x3b4] sm:$0xf]
  %v262 = vld [vmem:[%s1 + $0x3b8] sm:$0xf]
  %v263 = vld [vmem:[%s1 + $0x3bc] sm:$0xf]
  %v264 = vld [vmem:[%s1 + $0x3c0] sm:$0xf]
  %v265 = vld [vmem:[%s1 + $0x3c4] sm:$0xf]
  %v266 = vld [vmem:[%s1 + $0x3c8] sm:$0xf]
  %v267 = vld [vmem:[%s1 + $0x3cc] sm:$0xf]
  %v268 = vld [vmem:[%s1 + $0x3d0] sm:$0xf]
  %v269 = vld [vmem:[%s1 + $0x3d4] sm:$0xf]
  %v270 = vld [vmem:[%s1 + $0x3d8] sm:$0xf]
  %v271 = vld [vmem:[%s1 + $0x3dc] sm:$0xf]
  %v272 = vld [vmem:[%s1 + $0x3e0] sm:$0xf]
  %v273 = vld [vmem:[%s1 + $0x3e4] sm:$0xf]
  %v274 = vld [vmem:[%s1 + $0x3e8] sm:$0xf]
  %v275 = vld [vmem:[%s1 + $0x3ec] sm:$0xf]
  %v276 = vld [vmem:[%s1 + $0x3f0] sm:$0xf]
  %v277 = vld [vmem:[%s1 + $0x3f4] sm:$0xf]
  %v278 = vld [vmem:[%s1 + $0x3f8] sm:$0xf]
  %v279 = vld [vmem:[%s1 + $0x3fc] sm:$0xf]
  %s280 = sld [smem:[#allocation2]]
  %v281 = vstv %s280
  %v290 = vunpack.c.l.b16 %v16
  %v291 = vunpack.c.h.b16 %v16
  %v292 = vunpack.c.l.b16 %v17
  %v293 = vunpack.c.h.b16 %v17
  %v294 = vunpack.c.l.b16 %v18
  %v295 = vunpack.c.h.b16 %v18
  %v296 = vunpack.c.l.b16 %v19
  %v297 = vunpack.c.h.b16 %v19
  %v298 = vunpack.c.l.b16 %v20
  %v299 = vunpack.c.h.b16 %v20
  %v300 = vunpack.c.l.b16 %v21
  %v301 = vunpack.c.h.b16 %v21
  %v302 = vunpack.c.l.b16 %v22
  %v303 = vunpack.c.h.b16 %v22
  %v304 = vunpack.c.l.b16 %v23
  %v305 = vunpack.c.h.b16 %v23
  %v306 = vpack.c.b16 %v290, %v290
  %v307 = vpack.c.b16 %v291, %v291
  %v308 = vpack.c.b16 %v292, %v292
  %v309 = vpack.c.b16 %v293, %v293
  %v310 = vpack.c.b16 %v294, %v294
  %v311 = vpack.c.b16 %v295, %v295
  %v312 = vpack.c.b16 %v296, %v296
  %v313 = vpack.c.b16 %v297, %v297
  %v314 = vpack.c.b16 %v298, %v298
  %v315 = vpack.c.b16 %v299, %v299
  %v316 = vpack.c.b16 %v300, %v300
  %v317 = vpack.c.b16 %v301, %v301
  %v318 = vpack.c.b16 %v302, %v302
  %v319 = vpack.c.b16 %v303, %v303
  %v320 = vpack.c.b16 %v304, %v304
  %v321 = vpack.c.b16 %v305, %v305
  %v594 = vunpack.c.l.b16 %v24
  %v595 = vunpack.c.l.b16 %v25
  %v596 = vunpack.c.l.b16 %v26
  %v597 = vunpack.c.l.b16 %v27
  %v598 = vunpack.c.l.b16 %v28
  %v599 = vunpack.c.l.b16 %v29
  %v600 = vunpack.c.l.b16 %v30
  %v601 = vunpack.c.l.b16 %v31
  %v602 = vunpack.c.l.b16 %v32
  %v603 = vunpack.c.l.b16 %v33
  %v604 = vunpack.c.l.b16 %v34
  %v605 = vunpack.c.l.b16 %v35
  %v606 = vunpack.c.l.b16 %v36
  %v607 = vunpack.c.l.b16 %v37
  %v608 = vunpack.c.l.b16 %v38
  %v609 = vunpack.c.l.b16 %v39
  %v610 = vunpack.c.l.b16 %v40
  %v611 = vunpack.c.l.b16 %v41
  %v612 = vunpack.c.l.b16 %v42
  %v613 = vunpack.c.l.b16 %v43
  %v614 = vunpack.c.l.b16 %v44
  %v615 = vunpack.c.l.b16 %v45
  %v616 = vunpack.c.l.b16 %v46
  %v617 = vunpack.c.l.b16 %v47
  %v618 = vunpack.c.l.b16 %v48
  %v619 = vunpack.c.l.b16 %v49
  %v620 = vunpack.c.l.b16 %v50
  %v621 = vunpack.c.l.b16 %v51
  %v622 = vunpack.c.l.b16 %v52
  %v623 = vunpack.c.l.b16 %v53
  %v624 = vunpack.c.l.b16 %v54
  %v625 = vunpack.c.l.b16 %v55
  %v626 = vunpack.c.l.b16 %v56
  %v627 = vunpack.c.l.b16 %v57
  %v628 = vunpack.c.l.b16 %v58
  %v629 = vunpack.c.l.b16 %v59
  %v630 = vunpack.c.l.b16 %v60
  %v631 = vunpack.c.l.b16 %v61
  %v632 = vunpack.c.l.b16 %v62
  %v633 = vunpack.c.l.b16 %v63
  %v634 = vunpack.c.l.b16 %v64
  %v635 = vunpack.c.l.b16 %v65
  %v636 = vunpack.c.l.b16 %v66
  %v637 = vunpack.c.l.b16 %v67
  %v638 = vunpack.c.l.b16 %v68
  %v639 = vunpack.c.l.b16 %v69
  %v640 = vunpack.c.l.b16 %v70
  %v641 = vunpack.c.l.b16 %v71
  %v642 = vunpack.c.l.b16 %v72
  %v643 = vunpack.c.l.b16 %v73
  %v644 = vunpack.c.l.b16 %v74
  %v645 = vunpack.c.l.b16 %v75
  %v646 = vunpack.c.l.b16 %v76
  %v647 = vunpack.c.l.b16 %v77
  %v648 = vunpack.c.l.b16 %v78
  %v649 = vunpack.c.l.b16 %v79
  %v650 = vunpack.c.l.b16 %v80
  %v651 = vunpack.c.l.b16 %v81
  %v652 = vunpack.c.l.b16 %v82
  %v653 = vunpack.c.l.b16 %v83
  %v654 = vunpack.c.l.b16 %v84
  %v655 = vunpack.c.l.b16 %v85
  %v656 = vunpack.c.l.b16 %v86
  %v657 = vunpack.c.l.b16 %v87
  %v658 = vunpack.c.l.b16 %v88
  %v659 = vunpack.c.l.b16 %v89
  %v660 = vunpack.c.l.b16 %v90
  %v661 = vunpack.c.l.b16 %v91
  %v662 = vunpack.c.l.b16 %v92
  %v663 = vunpack.c.l.b16 %v93
  %v664 = vunpack.c.l.b16 %v94
  %v665 = vunpack.c.l.b16 %v95
  %v666 = vunpack.c.l.b16 %v96
  %v667 = vunpack.c.l.b16 %v97
  %v668 = vunpack.c.l.b16 %v98
  %v669 = vunpack.c.l.b16 %v99
  %v670 = vunpack.c.l.b16 %v100
  %v671 = vunpack.c.l.b16 %v101
  %v672 = vunpack.c.l.b16 %v102
  %v673 = vunpack.c.l.b16 %v103
  %v674 = vunpack.c.l.b16 %v104
  %v675 = vunpack.c.l.b16 %v105
  %v676 = vunpack.c.l.b16 %v106
  %v677 = vunpack.c.l.b16 %v107
  %v678 = vunpack.c.l.b16 %v108
  %v679 = vunpack.c.l.b16 %v109
  %v680 = vunpack.c.l.b16 %v110
  %v681 = vunpack.c.l.b16 %v111
  %v682 = vunpack.c.l.b16 %v112
  %v683 = vunpack.c.l.b16 %v113
  %v684 = vunpack.c.l.b16 %v114
  %v685 = vunpack.c.l.b16 %v115
  %v686 = vunpack.c.l.b16 %v116
  %v687 = vunpack.c.l.b16 %v117
  %v688 = vunpack.c.l.b16 %v118
  %v689 = vunpack.c.l.b16 %v119
  %v690 = vunpack.c.l.b16 %v120
  %v691 = vunpack.c.l.b16 %v121
  %v692 = vunpack.c.l.b16 %v122
  %v693 = vunpack.c.l.b16 %v123
  %v694 = vunpack.c.l.b16 %v124
  %v695 = vunpack.c.l.b16 %v125
  %v696 = vunpack.c.l.b16 %v126
  %v697 = vunpack.c.l.b16 %v127
  %v698 = vunpack.c.l.b16 %v128
  %v699 = vunpack.c.l.b16 %v129
  %v700 = vunpack.c.l.b16 %v130
  %v701 = vunpack.c.l.b16 %v131
  %v702 = vunpack.c.l.b16 %v132
  %v703 = vunpack.c.l.b16 %v133
  %v704 = vunpack.c.l.b16 %v134
  %v705 = vunpack.c.l.b16 %v135
  %v706 = vunpack.c.l.b16 %v136
  %v707 = vunpack.c.l.b16 %v137
  %v708 = vunpack.c.l.b16 %v138
  %v709 = vunpack.c.l.b16 %v139
  %v710 = vunpack.c.l.b16 %v140
  %v711 = vunpack.c.l.b16 %v141
  %v712 = vunpack.c.l.b16 %v142
  %v713 = vunpack.c.l.b16 %v143
  %v714 = vunpack.c.l.b16 %v144
  %v715 = vunpack.c.l.b16 %v145
  %v716 = vunpack.c.l.b16 %v146
  %v717 = vunpack.c.l.b16 %v147
  %v718 = vunpack.c.l.b16 %v148
  %v719 = vunpack.c.l.b16 %v149
  %v720 = vunpack.c.l.b16 %v150
  %v721 = vunpack.c.l.b16 %v151
  %v722 = vunpack.c.l.b16 %v152
  %v723 = vunpack.c.l.b16 %v153
  %v724 = vunpack.c.l.b16 %v154
  %v725 = vunpack.c.l.b16 %v155
  %v726 = vunpack.c.l.b16 %v156
  %v727 = vunpack.c.l.b16 %v157
  %v728 = vunpack.c.l.b16 %v158
  %v729 = vunpack.c.l.b16 %v159
  %v730 = vunpack.c.l.b16 %v160
  %v731 = vunpack.c.l.b16 %v161
  %v732 = vunpack.c.l.b16 %v162
  %v733 = vunpack.c.l.b16 %v163
  %v734 = vunpack.c.l.b16 %v164
  %v735 = vunpack.c.l.b16 %v165
  %v736 = vunpack.c.l.b16 %v166
  %v737 = vunpack.c.l.b16 %v167
  %v738 = vunpack.c.l.b16 %v168
  %v739 = vunpack.c.l.b16 %v169
  %v740 = vunpack.c.l.b16 %v170
  %v741 = vunpack.c.l.b16 %v171
  %v742 = vunpack.c.l.b16 %v172
  %v743 = vunpack.c.l.b16 %v173
  %v744 = vunpack.c.l.b16 %v174
  %v745 = vunpack.c.l.b16 %v175
  %v746 = vunpack.c.l.b16 %v176
  %v747 = vunpack.c.l.b16 %v177
  %v748 = vunpack.c.l.b16 %v178
  %v749 = vunpack.c.l.b16 %v179
  %v750 = vunpack.c.l.b16 %v180
  %v751 = vunpack.c.l.b16 %v181
  %v752 = vunpack.c.l.b16 %v182
  %v753 = vunpack.c.l.b16 %v183
  %v754 = vunpack.c.l.b16 %v184
  %v755 = vunpack.c.l.b16 %v185
  %v756 = vunpack.c.l.b16 %v186
  %v757 = vunpack.c.l.b16 %v187
  %v758 = vunpack.c.l.b16 %v188
  %v759 = vunpack.c.l.b16 %v189
  %v760 = vunpack.c.l.b16 %v190
  %v761 = vunpack.c.l.b16 %v191
  %v762 = vunpack.c.l.b16 %v192
  %v763 = vunpack.c.l.b16 %v193
  %v764 = vunpack.c.l.b16 %v194
  %v765 = vunpack.c.l.b16 %v195
  %v766 = vunpack.c.l.b16 %v196
  %v767 = vunpack.c.l.b16 %v197
  %v768 = vunpack.c.l.b16 %v198
  %v769 = vunpack.c.l.b16 %v199
  %v770 = vunpack.c.l.b16 %v200
  %v771 = vunpack.c.l.b16 %v201
  %v772 = vunpack.c.l.b16 %v202
  %v773 = vunpack.c.l.b16 %v203
  %v774 = vunpack.c.l.b16 %v204
  %v775 = vunpack.c.l.b16 %v205
  %v776 = vunpack.c.l.b16 %v206
  %v777 = vunpack.c.l.b16 %v207
  %v778 = vunpack.c.l.b16 %v208
  %v779 = vunpack.c.l.b16 %v209
  %v780 = vunpack.c.l.b16 %v210
  %v781 = vunpack.c.l.b16 %v211
  %v782 = vunpack.c.l.b16 %v212
  %v783 = vunpack.c.l.b16 %v213
  %v784 = vunpack.c.l.b16 %v214
  %v785 = vunpack.c.l.b16 %v215
  %v786 = vunpack.c.l.b16 %v216
  %v787 = vunpack.c.l.b16 %v217
  %v788 = vunpack.c.l.b16 %v218
  %v789 = vunpack.c.l.b16 %v219
  %v790 = vunpack.c.l.b16 %v220
  %v791 = vunpack.c.l.b16 %v221
  %v792 = vunpack.c.l.b16 %v222
  %v793 = vunpack.c.l.b16 %v223
  %v794 = vunpack.c.l.b16 %v224
  %v795 = vunpack.c.l.b16 %v225
  %v796 = vunpack.c.l.b16 %v226
  %v797 = vunpack.c.l.b16 %v227
  %v798 = vunpack.c.l.b16 %v228
  %v799 = vunpack.c.l.b16 %v229
  %v800 = vunpack.c.l.b16 %v230
  %v801 = vunpack.c.l.b16 %v231
  %v802 = vunpack.c.l.b16 %v232
  %v803 = vunpack.c.l.b16 %v233
  %v804 = vunpack.c.l.b16 %v234
  %v805 = vunpack.c.l.b16 %v235
  %v806 = vunpack.c.l.b16 %v236
  %v807 = vunpack.c.l.b16 %v237
  %v808 = vunpack.c.l.b16 %v238
  %v809 = vunpack.c.l.b16 %v239
  %v810 = vunpack.c.l.b16 %v240
  %v811 = vunpack.c.l.b16 %v241
  %v812 = vunpack.c.l.b16 %v242
  %v813 = vunpack.c.l.b16 %v243
  %v814 = vunpack.c.l.b16 %v244
  %v815 = vunpack.c.l.b16 %v245
  %v816 = vunpack.c.l.b16 %v246
  %v817 = vunpack.c.l.b16 %v247
  %v818 = vunpack.c.l.b16 %v248
  %v819 = vunpack.c.l.b16 %v249
  %v820 = vunpack.c.l.b16 %v250
  %v821 = vunpack.c.l.b16 %v251
  %v822 = vunpack.c.l.b16 %v252
  %v823 = vunpack.c.l.b16 %v253
  %v824 = vunpack.c.l.b16 %v254
  %v825 = vunpack.c.l.b16 %v255
  %v826 = vunpack.c.l.b16 %v256
  %v827 = vunpack.c.l.b16 %v257
  %v828 = vunpack.c.l.b16 %v258
  %v829 = vunpack.c.l.b16 %v259
  %v830 = vunpack.c.l.b16 %v260
  %v831 = vunpack.c.l.b16 %v261
  %v832 = vunpack.c.l.b16 %v262
  %v833 = vunpack.c.l.b16 %v263
  %v834 = vunpack.c.l.b16 %v264
  %v835 = vunpack.c.l.b16 %v265
  %v836 = vunpack.c.l.b16 %v266
  %v837 = vunpack.c.l.b16 %v267
  %v838 = vunpack.c.l.b16 %v268
  %v839 = vunpack.c.l.b16 %v269
  %v840 = vunpack.c.l.b16 %v270
  %v841 = vunpack.c.l.b16 %v271
  %v842 = vunpack.c.l.b16 %v272
  %v843 = vunpack.c.l.b16 %v273
  %v844 = vunpack.c.l.b16 %v274
  %v845 = vunpack.c.l.b16 %v275
  %v846 = vunpack.c.l.b16 %v276
  %v847 = vunpack.c.l.b16 %v277
  %v848 = vunpack.c.l.b16 %v278
  %v849 = vunpack.c.l.b16 %v279
  %v850 = vpack.c.b16 %v595, %v594
  %v851 = vpack.c.b16 %v597, %v596
  %v852 = vpack.c.b16 %v599, %v598
  %v853 = vpack.c.b16 %v601, %v600
  %v854 = vpack.c.b16 %v603, %v602
  %v855 = vpack.c.b16 %v605, %v604
  %v856 = vpack.c.b16 %v607, %v606
  %v857 = vpack.c.b16 %v609, %v608
  %v858 = vpack.c.b16 %v611, %v610
  %v859 = vpack.c.b16 %v613, %v612
  %v860 = vpack.c.b16 %v615, %v614
  %v861 = vpack.c.b16 %v617, %v616
  %v862 = vpack.c.b16 %v619, %v618
  %v863 = vpack.c.b16 %v621, %v620
  %v864 = vpack.c.b16 %v623, %v622
  %v865 = vpack.c.b16 %v625, %v624
  %v866 = vpack.c.b16 %v627, %v626
  %v867 = vpack.c.b16 %v629, %v628
  %v868 = vpack.c.b16 %v631, %v630
  %v869 = vpack.c.b16 %v633, %v632
  %v870 = vpack.c.b16 %v635, %v634
  %v871 = vpack.c.b16 %v637, %v636
  %v872 = vpack.c.b16 %v639, %v638
  %v873 = vpack.c.b16 %v641, %v640
  %v874 = vpack.c.b16 %v643, %v642
  %v875 = vpack.c.b16 %v645, %v644
  %v876 = vpack.c.b16 %v647, %v646
  %v877 = vpack.c.b16 %v649, %v648
  %v878 = vpack.c.b16 %v651, %v650
  %v879 = vpack.c.b16 %v653, %v652
  %v880 = vpack.c.b16 %v655, %v654
  %v881 = vpack.c.b16 %v657, %v656
  %v882 = vpack.c.b16 %v659, %v658
  %v883 = vpack.c.b16 %v661, %v660
  %v884 = vpack.c.b16 %v663, %v662
  %v885 = vpack.c.b16 %v665, %v664
  %v886 = vpack.c.b16 %v667, %v666
  %v887 = vpack.c.b16 %v669, %v668
  %v888 = vpack.c.b16 %v671, %v670
  %v889 = vpack.c.b16 %v673, %v672
  %v890 = vpack.c.b16 %v675, %v674
  %v891 = vpack.c.b16 %v677, %v676
  %v892 = vpack.c.b16 %v679, %v678
  %v893 = vpack.c.b16 %v681, %v680
  %v894 = vpack.c.b16 %v683, %v682
  %v895 = vpack.c.b16 %v685, %v684
  %v896 = vpack.c.b16 %v687, %v686
  %v897 = vpack.c.b16 %v689, %v688
  %v898 = vpack.c.b16 %v691, %v690
  %v899 = vpack.c.b16 %v693, %v692
  %v900 = vpack.c.b16 %v695, %v694
  %v901 = vpack.c.b16 %v697, %v696
  %v902 = vpack.c.b16 %v699, %v698
  %v903 = vpack.c.b16 %v701, %v700
  %v904 = vpack.c.b16 %v703, %v702
  %v905 = vpack.c.b16 %v705, %v704
  %v906 = vpack.c.b16 %v707, %v706
  %v907 = vpack.c.b16 %v709, %v708
  %v908 = vpack.c.b16 %v711, %v710
  %v909 = vpack.c.b16 %v713, %v712
  %v910 = vpack.c.b16 %v715, %v714
  %v911 = vpack.c.b16 %v717, %v716
  %v912 = vpack.c.b16 %v719, %v718
  %v913 = vpack.c.b16 %v721, %v720
  %v914 = vpack.c.b16 %v723, %v722
  %v915 = vpack.c.b16 %v725, %v724
  %v916 = vpack.c.b16 %v727, %v726
  %v917 = vpack.c.b16 %v729, %v728
  %v918 = vpack.c.b16 %v731, %v730
  %v919 = vpack.c.b16 %v733, %v732
  %v920 = vpack.c.b16 %v735, %v734
  %v921 = vpack.c.b16 %v737, %v736
  %v922 = vpack.c.b16 %v739, %v738
  %v923 = vpack.c.b16 %v741, %v740
  %v924 = vpack.c.b16 %v743, %v742
  %v925 = vpack.c.b16 %v745, %v744
  %v926 = vpack.c.b16 %v747, %v746
  %v927 = vpack.c.b16 %v749, %v748
  %v928 = vpack.c.b16 %v751, %v750
  %v929 = vpack.c.b16 %v753, %v752
  %v930 = vpack.c.b16 %v755, %v754
  %v931 = vpack.c.b16 %v757, %v756
  %v932 = vpack.c.b16 %v759, %v758
  %v933 = vpack.c.b16 %v761, %v760
  %v934 = vpack.c.b16 %v763, %v762
  %v935 = vpack.c.b16 %v765, %v764
  %v936 = vpack.c.b16 %v767, %v766
  %v937 = vpack.c.b16 %v769, %v768
  %v938 = vpack.c.b16 %v771, %v770
  %v939 = vpack.c.b16 %v773, %v772
  %v940 = vpack.c.b16 %v775, %v774
  %v941 = vpack.c.b16 %v777, %v776
  %v942 = vpack.c.b16 %v779, %v778
  %v943 = vpack.c.b16 %v781, %v780
  %v944 = vpack.c.b16 %v783, %v782
  %v945 = vpack.c.b16 %v785, %v784
  %v946 = vpack.c.b16 %v787, %v786
  %v947 = vpack.c.b16 %v789, %v788
  %v948 = vpack.c.b16 %v791, %v790
  %v949 = vpack.c.b16 %v793, %v792
  %v950 = vpack.c.b16 %v795, %v794
  %v951 = vpack.c.b16 %v797, %v796
  %v952 = vpack.c.b16 %v799, %v798
  %v953 = vpack.c.b16 %v801, %v800
  %v954 = vpack.c.b16 %v803, %v802
  %v955 = vpack.c.b16 %v805, %v804
  %v956 = vpack.c.b16 %v807, %v806
  %v957 = vpack.c.b16 %v809, %v808
  %v958 = vpack.c.b16 %v811, %v810
  %v959 = vpack.c.b16 %v813, %v812
  %v960 = vpack.c.b16 %v815, %v814
  %v961 = vpack.c.b16 %v817, %v816
  %v962 = vpack.c.b16 %v819, %v818
  %v963 = vpack.c.b16 %v821, %v820
  %v964 = vpack.c.b16 %v823, %v822
  %v965 = vpack.c.b16 %v825, %v824
  %v966 = vpack.c.b16 %v827, %v826
  %v967 = vpack.c.b16 %v829, %v828
  %v968 = vpack.c.b16 %v831, %v830
  %v969 = vpack.c.b16 %v833, %v832
  %v970 = vpack.c.b16 %v835, %v834
  %v971 = vpack.c.b16 %v837, %v836
  %v972 = vpack.c.b16 %v839, %v838
  %v973 = vpack.c.b16 %v841, %v840
  %v974 = vpack.c.b16 %v843, %v842
  %v975 = vpack.c.b16 %v845, %v844
  %v976 = vpack.c.b16 %v847, %v846
  %v977 = vpack.c.b16 %v849, %v848
  %1106 = vmatprep.subr.bf16.mxu0 0
  %1107 = vmatpush1.bf16.msra.mxu0 %v857
  %1108 = vmatprep.subr.bf16.mxu0 0
  %1109 = vmatpush1.bf16.msra.mxu0 %v856
  %1110 = vmatprep.subr.bf16.mxu0 0
  %1111 = vmatpush1.bf16.msra.mxu0 %v855
  %1112 = vmatprep.subr.bf16.mxu0 0
  %1113 = vmatpush1.bf16.msra.mxu0 %v854
  %1114 = vmatprep.subr.bf16.mxu0 0
  %1115 = vmatpush1.bf16.msra.mxu0 %v853
  %1116 = vmatprep.subr.bf16.mxu0 0
  %1117 = vmatpush1.bf16.msra.mxu0 %v852
  %1118 = vmatprep.subr.bf16.mxu0 0
  %1119 = vmatpush1.bf16.msra.mxu0 %v851
  %1120 = vmatprep.subr.bf16.mxu0 0
  %1121 = vmatpush1.bf16.msra.mxu0 %v850
  %1122 = vmatprep.subr.bf16.mxu0 0
  %1123 = vmatpush2.bf16.msra.mxu0 %v865
  %1124 = vmatprep.subr.bf16.mxu0 0
  %1125 = vmatpush2.bf16.msra.mxu0 %v864
  %1126 = vmatprep.subr.bf16.mxu0 0
  %1127 = vmatpush2.bf16.msra.mxu0 %v863
  %1128 = vmatprep.subr.bf16.mxu0 0
  %1129 = vmatpush2.bf16.msra.mxu0 %v862
  %1130 = vmatprep.subr.bf16.mxu0 0
  %1131 = vmatpush2.bf16.msra.mxu0 %v861
  %1132 = vmatprep.subr.bf16.mxu0 0
  %1133 = vmatpush2.bf16.msra.mxu0 %v860
  %1134 = vmatprep.subr.bf16.mxu0 0
  %1135 = vmatpush2.bf16.msra.mxu0 %v859
  %1136 = vmatprep.subr.bf16.mxu0 0
  %1137 = vmatpush2.bf16.msra.mxu0 %v858
  %1138 = vmatprep.mubr.bf16.mxu0 %v307
  %1139 = vmatmul.mubr.bf16.gmra.mxu0 %v306
  %v1140 = vpop.f32.mrf.mxu0
  %v1141 = vadd.f32 %v281, %v1140
  %v1142 = vpop.f32.mrf.mxu0
  %v1143 = vpop.f32.mrf.mxu0
  %v1144 = vpop.f32.mrf.mxu0
  %1145 = vdwg.mxu0
  %1146 = vmatprep.subr.bf16.mxu0 0
  %1147 = vmatpush1.bf16.msra.mxu0 %v873
  %1148 = vmatprep.subr.bf16.mxu0 0
  %1149 = vmatpush1.bf16.msra.mxu0 %v872
  %1150 = vmatprep.subr.bf16.mxu0 0
  %1151 = vmatpush1.bf16.msra.mxu0 %v871
  %1152 = vmatprep.subr.bf16.mxu0 0
  %1153 = vmatpush1.bf16.msra.mxu0 %v870
  %1154 = vmatprep.subr.bf16.mxu0 0
  %1155 = vmatpush1.bf16.msra.mxu0 %v869
  %1156 = vmatprep.subr.bf16.mxu0 0
  %1157 = vmatpush1.bf16.msra.mxu0 %v868
  %1158 = vmatprep.subr.bf16.mxu0 0
  %1159 = vmatpush1.bf16.msra.mxu0 %v867
  %1160 = vmatprep.subr.bf16.mxu0 0
  %1161 = vmatpush1.bf16.msra.mxu0 %v866
  %1162 = vmatprep.subr.bf16.mxu0 0
  %1163 = vmatpush2.bf16.msra.mxu0 %v881
  %1164 = vmatprep.subr.bf16.mxu0 0
  %1165 = vmatpush2.bf16.msra.mxu0 %v880
  %1166 = vmatprep.subr.bf16.mxu0 0
  %1167 = vmatpush2.bf16.msra.mxu0 %v879
  %1168 = vmatprep.subr.bf16.mxu0 0
  %1169 = vmatpush2.bf16.msra.mxu0 %v878
  %1170 = vmatprep.subr.bf16.mxu0 0
  %1171 = vmatpush2.bf16.msra.mxu0 %v877
  %1172 = vmatprep.subr.bf16.mxu0 0
  %1173 = vmatpush2.bf16.msra.mxu0 %v876
  %1174 = vmatprep.subr.bf16.mxu0 0
  %1175 = vmatpush2.bf16.msra.mxu0 %v875
  %1176 = vmatprep.subr.bf16.mxu0 0
  %1177 = vmatpush2.bf16.msra.mxu0 %v874
  %1178 = vmatprep.mubr.bf16.mxu0 %v309
  %1179 = vmatmul.mubr.bf16.gmra.mxu0 %v308
  %v1180 = vpop.f32.mrf.mxu0
  %v1181 = vadd.f32 %v1141, %v1180
  %v1182 = vpop.f32.mrf.mxu0
  %v1183 = vpop.f32.mrf.mxu0
  %v1184 = vpop.f32.mrf.mxu0
  %1185 = vdwg.mxu0
  %1186 = vmatprep.subr.bf16.mxu0 0
  %1187 = vmatpush1.bf16.msra.mxu0 %v889
  %1188 = vmatprep.subr.bf16.mxu0 0
  %1189 = vmatpush1.bf16.msra.mxu0 %v888
  %1190 = vmatprep.subr.bf16.mxu0 0
  %1191 = vmatpush1.bf16.msra.mxu0 %v887
  %1192 = vmatprep.subr.bf16.mxu0 0
  %1193 = vmatpush1.bf16.msra.mxu0 %v886
  %1194 = vmatprep.subr.bf16.mxu0 0
  %1195 = vmatpush1.bf16.msra.mxu0 %v885
  %1196 = vmatprep.subr.bf16.mxu0 0
  %1197 = vmatpush1.bf16.msra.mxu0 %v884
  %1198 = vmatprep.subr.bf16.mxu0 0
  %1199 = vmatpush1.bf16.msra.mxu0 %v883
  %1200 = vmatprep.subr.bf16.mxu0 0
  %1201 = vmatpush1.bf16.msra.mxu0 %v882
  %1202 = vmatprep.subr.bf16.mxu0 0
  %1203 = vmatpush2.bf16.msra.mxu0 %v897
  %1204 = vmatprep.subr.bf16.mxu0 0
  %1205 = vmatpush2.bf16.msra.mxu0 %v896
  %1206 = vmatprep.subr.bf16.mxu0 0
  %1207 = vmatpush2.bf16.msra.mxu0 %v895
  %1208 = vmatprep.subr.bf16.mxu0 0
  %1209 = vmatpush2.bf16.msra.mxu0 %v894
  %1210 = vmatprep.subr.bf16.mxu0 0
  %1211 = vmatpush2.bf16.msra.mxu0 %v893
  %1212 = vmatprep.subr.bf16.mxu0 0
  %1213 = vmatpush2.bf16.msra.mxu0 %v892
  %1214 = vmatprep.subr.bf16.mxu0 0
  %1215 = vmatpush2.bf16.msra.mxu0 %v891
  %1216 = vmatprep.subr.bf16.mxu0 0
  %1217 = vmatpush2.bf16.msra.mxu0 %v890
  %1218 = vmatprep.mubr.bf16.mxu0 %v311
  %1219 = vmatmul.mubr.bf16.gmra.mxu0 %v310
  %v1220 = vpop.f32.mrf.mxu0
  %v1221 = vadd.f32 %v1181, %v1220
  %v1222 = vpop.f32.mrf.mxu0
  %v1223 = vpop.f32.mrf.mxu0
  %v1224 = vpop.f32.mrf.mxu0
  %1225 = vdwg.mxu0
  %1226 = vmatprep.subr.bf16.mxu0 0
  %1227 = vmatpush1.bf16.msra.mxu0 %v905
  %1228 = vmatprep.subr.bf16.mxu0 0
  %1229 = vmatpush1.bf16.msra.mxu0 %v904
  %1230 = vmatprep.subr.bf16.mxu0 0
  %1231 = vmatpush1.bf16.msra.mxu0 %v903
  %1232 = vmatprep.subr.bf16.mxu0 0
  %1233 = vmatpush1.bf16.msra.mxu0 %v902
  %1234 = vmatprep.subr.bf16.mxu0 0
  %1235 = vmatpush1.bf16.msra.mxu0 %v901
  %1236 = vmatprep.subr.bf16.mxu0 0
  %1237 = vmatpush1.bf16.msra.mxu0 %v900
  %1238 = vmatprep.subr.bf16.mxu0 0
  %1239 = vmatpush1.bf16.msra.mxu0 %v899
  %1240 = vmatprep.subr.bf16.mxu0 0
  %1241 = vmatpush1.bf16.msra.mxu0 %v898
  %1242 = vmatprep.subr.bf16.mxu0 0
  %1243 = vmatpush2.bf16.msra.mxu0 %v913
  %1244 = vmatprep.subr.bf16.mxu0 0
  %1245 = vmatpush2.bf16.msra.mxu0 %v912
  %1246 = vmatprep.subr.bf16.mxu0 0
  %1247 = vmatpush2.bf16.msra.mxu0 %v911
  %1248 = vmatprep.subr.bf16.mxu0 0
  %1249 = vmatpush2.bf16.msra.mxu0 %v910
  %1250 = vmatprep.subr.bf16.mxu0 0
  %1251 = vmatpush2.bf16.msra.mxu0 %v909
  %1252 = vmatprep.subr.bf16.mxu0 0
  %1253 = vmatpush2.bf16.msra.mxu0 %v908
  %1254 = vmatprep.subr.bf16.mxu0 0
  %1255 = vmatpush2.bf16.msra.mxu0 %v907
  %1256 = vmatprep.subr.bf16.mxu0 0
  %1257 = vmatpush2.bf16.msra.mxu0 %v906
  %1258 = vmatprep.mubr.bf16.mxu0 %v313
  %1259 = vmatmul.mubr.bf16.gmra.mxu0 %v312
  %v1260 = vpop.f32.mrf.mxu0
  %v1261 = vadd.f32 %v1221, %v1260
  %v1262 = vpop.f32.mrf.mxu0
  %v1263 = vpop.f32.mrf.mxu0
  %v1264 = vpop.f32.mrf.mxu0
  %1265 = vdwg.mxu0
  %1266 = vmatprep.subr.bf16.mxu0 0
  %1267 = vmatpush1.bf16.msra.mxu0 %v921
  %1268 = vmatprep.subr.bf16.mxu0 0
  %1269 = vmatpush1.bf16.msra.mxu0 %v920
  %1270 = vmatprep.subr.bf16.mxu0 0
  %1271 = vmatpush1.bf16.msra.mxu0 %v919
  %1272 = vmatprep.subr.bf16.mxu0 0
  %1273 = vmatpush1.bf16.msra.mxu0 %v918
  %1274 = vmatprep.subr.bf16.mxu0 0
  %1275 = vmatpush1.bf16.msra.mxu0 %v917
  %1276 = vmatprep.subr.bf16.mxu0 0
  %1277 = vmatpush1.bf16.msra.mxu0 %v916
  %1278 = vmatprep.subr.bf16.mxu0 0
  %1279 = vmatpush1.bf16.msra.mxu0 %v915
  %1280 = vmatprep.subr.bf16.mxu0 0
  %1281 = vmatpush1.bf16.msra.mxu0 %v914
  %1282 = vmatprep.subr.bf16.mxu0 0
  %1283 = vmatpush2.bf16.msra.mxu0 %v929
  %1284 = vmatprep.subr.bf16.mxu0 0
  %1285 = vmatpush2.bf16.msra.mxu0 %v928
  %1286 = vmatprep.subr.bf16.mxu0 0
  %1287 = vmatpush2.bf16.msra.mxu0 %v927
  %1288 = vmatprep.subr.bf16.mxu0 0
  %1289 = vmatpush2.bf16.msra.mxu0 %v926
  %1290 = vmatprep.subr.bf16.mxu0 0
  %1291 = vmatpush2.bf16.msra.mxu0 %v925
  %1292 = vmatprep.subr.bf16.mxu0 0
  %1293 = vmatpush2.bf16.msra.mxu0 %v924
  %1294 = vmatprep.subr.bf16.mxu0 0
  %1295 = vmatpush2.bf16.msra.mxu0 %v923
  %1296 = vmatprep.subr.bf16.mxu0 0
  %1297 = vmatpush2.bf16.msra.mxu0 %v922
  %1298 = vmatprep.mubr.bf16.mxu0 %v315
  %1299 = vmatmul.mubr.bf16.gmra.mxu0 %v314
  %v1300 = vpop.f32.mrf.mxu0
  %v1301 = vadd.f32 %v1261, %v1300
  %v1302 = vpop.f32.mrf.mxu0
  %v1303 = vpop.f32.mrf.mxu0
  %v1304 = vpop.f32.mrf.mxu0
  %1305 = vdwg.mxu0
  %1306 = vmatprep.subr.bf16.mxu0 0
  %1307 = vmatpush1.bf16.msra.mxu0 %v937
  %1308 = vmatprep.subr.bf16.mxu0 0
  %1309 = vmatpush1.bf16.msra.mxu0 %v936
  %1310 = vmatprep.subr.bf16.mxu0 0
  %1311 = vmatpush1.bf16.msra.mxu0 %v935
  %1312 = vmatprep.subr.bf16.mxu0 0
  %1313 = vmatpush1.bf16.msra.mxu0 %v934
  %1314 = vmatprep.subr.bf16.mxu0 0
  %1315 = vmatpush1.bf16.msra.mxu0 %v933
  %1316 = vmatprep.subr.bf16.mxu0 0
  %1317 = vmatpush1.bf16.msra.mxu0 %v932
  %1318 = vmatprep.subr.bf16.mxu0 0
  %1319 = vmatpush1.bf16.msra.mxu0 %v931
  %1320 = vmatprep.subr.bf16.mxu0 0
  %1321 = vmatpush1.bf16.msra.mxu0 %v930
  %1322 = vmatprep.subr.bf16.mxu0 0
  %1323 = vmatpush2.bf16.msra.mxu0 %v945
  %1324 = vmatprep.subr.bf16.mxu0 0
  %1325 = vmatpush2.bf16.msra.mxu0 %v944
  %1326 = vmatprep.subr.bf16.mxu0 0
  %1327 = vmatpush2.bf16.msra.mxu0 %v943
  %1328 = vmatprep.subr.bf16.mxu0 0
  %1329 = vmatpush2.bf16.msra.mxu0 %v942
  %1330 = vmatprep.subr.bf16.mxu0 0
  %1331 = vmatpush2.bf16.msra.mxu0 %v941
  %1332 = vmatprep.subr.bf16.mxu0 0
  %1333 = vmatpush2.bf16.msra.mxu0 %v940
  %1334 = vmatprep.subr.bf16.mxu0 0
  %1335 = vmatpush2.bf16.msra.mxu0 %v939
  %1336 = vmatprep.subr.bf16.mxu0 0
  %1337 = vmatpush2.bf16.msra.mxu0 %v938
  %1338 = vmatprep.mubr.bf16.mxu0 %v317
  %1339 = vmatmul.mubr.bf16.gmra.mxu0 %v316
  %v1340 = vpop.f32.mrf.mxu0
  %v1341 = vadd.f32 %v1301, %v1340
  %v1342 = vpop.f32.mrf.mxu0
  %v1343 = vpop.f32.mrf.mxu0
  %v1344 = vpop.f32.mrf.mxu0
  %1345 = vdwg.mxu0
  %1346 = vmatprep.subr.bf16.mxu0 0
  %1347 = vmatpush1.bf16.msra.mxu0 %v953
  %1348 = vmatprep.subr.bf16.mxu0 0
  %1349 = vmatpush1.bf16.msra.mxu0 %v952
  %1350 = vmatprep.subr.bf16.mxu0 0
  %1351 = vmatpush1.bf16.msra.mxu0 %v951
  %1352 = vmatprep.subr.bf16.mxu0 0
  %1353 = vmatpush1.bf16.msra.mxu0 %v950
  %1354 = vmatprep.subr.bf16.mxu0 0
  %1355 = vmatpush1.bf16.msra.mxu0 %v949
  %1356 = vmatprep.subr.bf16.mxu0 0
  %1357 = vmatpush1.bf16.msra.mxu0 %v948
  %1358 = vmatprep.subr.bf16.mxu0 0
  %1359 = vmatpush1.bf16.msra.mxu0 %v947
  %1360 = vmatprep.subr.bf16.mxu0 0
  %1361 = vmatpush1.bf16.msra.mxu0 %v946
  %1362 = vmatprep.subr.bf16.mxu0 0
  %1363 = vmatpush2.bf16.msra.mxu0 %v961
  %1364 = vmatprep.subr.bf16.mxu0 0
  %1365 = vmatpush2.bf16.msra.mxu0 %v960
  %1366 = vmatprep.subr.bf16.mxu0 0
  %1367 = vmatpush2.bf16.msra.mxu0 %v959
  %1368 = vmatprep.subr.bf16.mxu0 0
  %1369 = vmatpush2.bf16.msra.mxu0 %v958
  %1370 = vmatprep.subr.bf16.mxu0 0
  %1371 = vmatpush2.bf16.msra.mxu0 %v957
  %1372 = vmatprep.subr.bf16.mxu0 0
  %1373 = vmatpush2.bf16.msra.mxu0 %v956
  %1374 = vmatprep.subr.bf16.mxu0 0
  %1375 = vmatpush2.bf16.msra.mxu0 %v955
  %1376 = vmatprep.subr.bf16.mxu0 0
  %1377 = vmatpush2.bf16.msra.mxu0 %v954
  %1378 = vmatprep.mubr.bf16.mxu0 %v319
  %1379 = vmatmul.mubr.bf16.gmra.mxu0 %v318
  %v1380 = vpop.f32.mrf.mxu0
  %v1381 = vadd.f32 %v1341, %v1380
  %v1382 = vpop.f32.mrf.mxu0
  %v1383 = vpop.f32.mrf.mxu0
  %v1384 = vpop.f32.mrf.mxu0
  %1385 = vdwg.mxu0
  %1386 = vmatprep.subr.bf16.mxu0 0
  %1387 = vmatpush1.bf16.msra.mxu0 %v969
  %1388 = vmatprep.subr.bf16.mxu0 0
  %1389 = vmatpush1.bf16.msra.mxu0 %v968
  %1390 = vmatprep.subr.bf16.mxu0 0
  %1391 = vmatpush1.bf16.msra.mxu0 %v967
  %1392 = vmatprep.subr.bf16.mxu0 0
  %1393 = vmatpush1.bf16.msra.mxu0 %v966
  %1394 = vmatprep.subr.bf16.mxu0 0
  %1395 = vmatpush1.bf16.msra.mxu0 %v965
  %1396 = vmatprep.subr.bf16.mxu0 0
  %1397 = vmatpush1.bf16.msra.mxu0 %v964
  %1398 = vmatprep.subr.bf16.mxu0 0
  %1399 = vmatpush1.bf16.msra.mxu0 %v963
  %1400 = vmatprep.subr.bf16.mxu0 0
  %1401 = vmatpush1.bf16.msra.mxu0 %v962
  %1402 = vmatprep.subr.bf16.mxu0 0
  %1403 = vmatpush2.bf16.msra.mxu0 %v977
  %1404 = vmatprep.subr.bf16.mxu0 0
  %1405 = vmatpush2.bf16.msra.mxu0 %v976
  %1406 = vmatprep.subr.bf16.mxu0 0
  %1407 = vmatpush2.bf16.msra.mxu0 %v975
  %1408 = vmatprep.subr.bf16.mxu0 0
  %1409 = vmatpush2.bf16.msra.mxu0 %v974
  %1410 = vmatprep.subr.bf16.mxu0 0
  %1411 = vmatpush2.bf16.msra.mxu0 %v973
  %1412 = vmatprep.subr.bf16.mxu0 0
  %1413 = vmatpush2.bf16.msra.mxu0 %v972
  %1414 = vmatprep.subr.bf16.mxu0 0
  %1415 = vmatpush2.bf16.msra.mxu0 %v971
  %1416 = vmatprep.subr.bf16.mxu0 0
  %1417 = vmatpush2.bf16.msra.mxu0 %v970
  %1418 = vmatprep.mubr.bf16.mxu0 %v321
  %1419 = vmatmul.mubr.bf16.gmra.mxu0 %v320
  %v1420 = vpop.f32.mrf.mxu0
  %v1421 = vadd.f32 %v1381, %v1420
  %v1422 = vpop.f32.mrf.mxu0
  %v1423 = vpop.f32.mrf.mxu0
  %v1424 = vpop.f32.mrf.mxu0
  %1425 = vdwg.mxu0
  %v1426 = vxor.u32 %v1421, 2147483648
  %v1427 = vmul.f32 %v1426, 1.442695
  %v1428 = vpow.pop %v1427
  %v1429 = vadd.f32 %v1428, 1.0
  %v1430 = vrcp.pop %v1429
  %v1431 = vmul.f32 1.0, %v1430
  %vm1432 = vcmask 7168
  %1433 = vst.msk [vmem:[%s3] sm:$0xff] %vm1432, %v1431
  // Predicated region
  $region14: #{discriminator_forward.15} parent=0 // pred_check
    _
  $region15: #{discriminator_forward.15} parent=0 // pred_check_branch
    %1435 = sbr.rel (0) target = $region17
  $region16: #{discriminator_forward.15} parent=0 // pred_region
    _
  $region17: #{discriminator_forward.15} parent=0 // pred_fallthru
    _
  // Predicated region
  $region18: #{discriminator_forward.15} parent=0 // pred_check
    _
  $region19: #{discriminator_forward.15} parent=0 // pred_check_branch
    %1437 = sbr.rel (0) target = $region21
  $region20: #{discriminator_forward.15} parent=0 // pred_region
    _
  $region21: #{discriminator_forward.15} parent=0 // pred_fallthru
    _

// kernel: discriminator_forward.14
$region0: #{discriminator_forward.14}
  #allocation0 [shape = 'u32[]', space=smem, size = 0x4, offset = 0x4, fixed_abs, tag = 'smem constant byte address 0x4 - core index']
  #allocation1 [shape = 'u32[144,128]{1,0:T(1,128)}', space=vmem, size = 0x12000, scoped, tag = 'internal scratch']
  %s0 = inlined_call_operand.vmem [shape: f32[8,4096], index: 0, kind: input, shape index: {}]
  %s1 = inlined_call_operand.vmem [shape: f32[8,4096], index: 1, kind: input, shape index: {}]
  %s2 = inlined_call_operand.vmem [shape: bf16[4096,512], index: 2, kind: input, shape index: {}]
  %s3 = inlined_call_operand.vmem [shape: f32[1,512], index: 3, kind: input, shape index: {}]
  %s4 = inlined_call_operand.vmem [shape: f32[1,512], index: 4, kind: input, shape index: {}]
  %s5 = inlined_call_operand.vmem [shape: f32[8,512], index: 5, kind: output, shape index: {}]
  %s6 = sld [smem:[#allocation0]]
  $region30: #{discriminator_forward.14} parent=0
    _
  %s8 = ssub.s32 1, %s6
  %s9 = scalar_select 0, %s8, %s6
  // Predicated region
  $region2: #{discriminator_forward.14} parent=0 // pred_check
    _
  $region3: #{discriminator_forward.14} parent=0 // pred_check_branch
    %11 = sbr.rel (0) target = $region5
  $region4: #{discriminator_forward.14} parent=0 // pred_region
    _
  $region5: #{discriminator_forward.14} parent=0 // pred_fallthru
    _
  // Predicated region
  $region6: #{discriminator_forward.14} parent=0 // pred_check
    _
  $region7: #{discriminator_forward.14} parent=0 // pred_check_branch
    %13 = sbr.rel (0) target = $region9
  $region8: #{discriminator_forward.14} parent=0 // pred_region
    _
  $region9: #{discriminator_forward.14} parent=0 // pred_fallthru
    _
  // Predicated region
  $region10: #{discriminator_forward.14} parent=0 // pred_check
    _
  $region11: #{discriminator_forward.14} parent=0 // pred_check_branch
    %15 = sbr.rel (0) target = $region13
  $region12: #{discriminator_forward.14} parent=0 // pred_region
    _
  $region13: #{discriminator_forward.14} parent=0 // pred_fallthru
    _
  // Predicated region
  $region14: #{discriminator_forward.14} parent=0 // pred_check
    _
  $region15: #{discriminator_forward.14} parent=0 // pred_check_branch
    %17 = sbr.rel (0) target = $region17
  $region16: #{discriminator_forward.14} parent=0 // pred_region
    _
  $region17: #{discriminator_forward.14} parent=0 // pred_fallthru
    _
  // Predicated region
  $region18: #{discriminator_forward.14} parent=0 // pred_check
    _
  $region19: #{discriminator_forward.14} parent=0 // pred_check_branch
    %19 = sbr.rel (0) target = $region21
  $region20: #{discriminator_forward.14} parent=0 // pred_region
    _
  $region21: #{discriminator_forward.14} parent=0 // pred_fallthru
    _
  %v20 = vld [vmem:[%s0] sm:$0xff]
  %v21 = vld [vmem:[%s0 + $0x8] sm:$0xff]
  %v22 = vld [vmem:[%s0 + $0x10] sm:$0xff]
  %v23 = vld [vmem:[%s0 + $0x18] sm:$0xff]
  %v24 = vld [vmem:[%s0 + $0x20] sm:$0xff]
  %v25 = vld [vmem:[%s0 + $0x28] sm:$0xff]
  %v26 = vld [vmem:[%s0 + $0x30] sm:$0xff]
  %v27 = vld [vmem:[%s0 + $0x38] sm:$0xff]
  %v28 = vld [vmem:[%s0 + $0x40] sm:$0xff]
  %v29 = vld [vmem:[%s0 + $0x48] sm:$0xff]
  %v30 = vld [vmem:[%s0 + $0x50] sm:$0xff]
  %v31 = vld [vmem:[%s0 + $0x58] sm:$0xff]
  %v32 = vld [vmem:[%s0 + $0x60] sm:$0xff]
  %v33 = vld [vmem:[%s0 + $0x68] sm:$0xff]
  %v34 = vld [vmem:[%s0 + $0x70] sm:$0xff]
  %v35 = vld [vmem:[%s0 + $0x78] sm:$0xff]
  %v36 = vld [vmem:[%s0 + $0x80] sm:$0xff]
  %v37 = vld [vmem:[%s0 + $0x88] sm:$0xff]
  %v38 = vld [vmem:[%s0 + $0x90] sm:$0xff]
  %v39 = vld [vmem:[%s0 + $0x98] sm:$0xff]
  %v40 = vld [vmem:[%s0 + $0xa0] sm:$0xff]
  %v41 = vld [vmem:[%s0 + $0xa8] sm:$0xff]
  %v42 = vld [vmem:[%s0 + $0xb0] sm:$0xff]
  %v43 = vld [vmem:[%s0 + $0xb8] sm:$0xff]
  %v44 = vld [vmem:[%s0 + $0xc0] sm:$0xff]
  %v45 = vld [vmem:[%s0 + $0xc8] sm:$0xff]
  %v46 = vld [vmem:[%s0 + $0xd0] sm:$0xff]
  %v47 = vld [vmem:[%s0 + $0xd8] sm:$0xff]
  %v48 = vld [vmem:[%s0 + $0xe0] sm:$0xff]
  %v49 = vld [vmem:[%s0 + $0xe8] sm:$0xff]
  %v50 = vld [vmem:[%s0 + $0xf0] sm:$0xff]
  %v51 = vld [vmem:[%s0 + $0xf8] sm:$0xff]
  %v52 = vld [vmem:[%s1] sm:$0xff]
  %v53 = vld [vmem:[%s1 + $0x8] sm:$0xff]
  %v54 = vld [vmem:[%s1 + $0x10] sm:$0xff]
  %v55 = vld [vmem:[%s1 + $0x18] sm:$0xff]
  %v56 = vld [vmem:[%s1 + $0x20] sm:$0xff]
  %v57 = vld [vmem:[%s1 + $0x28] sm:$0xff]
  %v58 = vld [vmem:[%s1 + $0x30] sm:$0xff]
  %v59 = vld [vmem:[%s1 + $0x38] sm:$0xff]
  %v60 = vld [vmem:[%s1 + $0x40] sm:$0xff]
  %v61 = vld [vmem:[%s1 + $0x48] sm:$0xff]
  %v62 = vld [vmem:[%s1 + $0x50] sm:$0xff]
  %v63 = vld [vmem:[%s1 + $0x58] sm:$0xff]
  %v64 = vld [vmem:[%s1 + $0x60] sm:$0xff]
  %v65 = vld [vmem:[%s1 + $0x68] sm:$0xff]
  %v66 = vld [vmem:[%s1 + $0x70] sm:$0xff]
  %v67 = vld [vmem:[%s1 + $0x78] sm:$0xff]
  %v68 = vld [vmem:[%s1 + $0x80] sm:$0xff]
  %v69 = vld [vmem:[%s1 + $0x88] sm:$0xff]
  %v70 = vld [vmem:[%s1 + $0x90] sm:$0xff]
  %v71 = vld [vmem:[%s1 + $0x98] sm:$0xff]
  %v72 = vld [vmem:[%s1 + $0xa0] sm:$0xff]
  %v73 = vld [vmem:[%s1 + $0xa8] sm:$0xff]
  %v74 = vld [vmem:[%s1 + $0xb0] sm:$0xff]
  %v75 = vld [vmem:[%s1 + $0xb8] sm:$0xff]
  %v76 = vld [vmem:[%s1 + $0xc0] sm:$0xff]
  %v77 = vld [vmem:[%s1 + $0xc8] sm:$0xff]
  %v78 = vld [vmem:[%s1 + $0xd0] sm:$0xff]
  %v79 = vld [vmem:[%s1 + $0xd8] sm:$0xff]
  %v80 = vld [vmem:[%s1 + $0xe0] sm:$0xff]
  %v81 = vld [vmem:[%s1 + $0xe8] sm:$0xff]
  %v82 = vld [vmem:[%s1 + $0xf0] sm:$0xff]
  %v83 = vld [vmem:[%s1 + $0xf8] sm:$0xff]
  %v84 = vsub.f32 %v20, %v52
  %v85 = vsub.f32 %v21, %v53
  %v86 = vsub.f32 %v22, %v54
  %v87 = vsub.f32 %v23, %v55
  %v88 = vsub.f32 %v24, %v56
  %v89 = vsub.f32 %v25, %v57
  %v90 = vsub.f32 %v26, %v58
  %v91 = vsub.f32 %v27, %v59
  %v92 = vsub.f32 %v28, %v60
  %v93 = vsub.f32 %v29, %v61
  %v94 = vsub.f32 %v30, %v62
  %v95 = vsub.f32 %v31, %v63
  %v96 = vsub.f32 %v32, %v64
  %v97 = vsub.f32 %v33, %v65
  %v98 = vsub.f32 %v34, %v66
  %v99 = vsub.f32 %v35, %v67
  %v100 = vsub.f32 %v36, %v68
  %v101 = vsub.f32 %v37, %v69
  %v102 = vsub.f32 %v38, %v70
  %v103 = vsub.f32 %v39, %v71
  %v104 = vsub.f32 %v40, %v72
  %v105 = vsub.f32 %v41, %v73
  %v106 = vsub.f32 %v42, %v74
  %v107 = vsub.f32 %v43, %v75
  %v108 = vsub.f32 %v44, %v76
  %v109 = vsub.f32 %v45, %v77
  %v110 = vsub.f32 %v46, %v78
  %v111 = vsub.f32 %v47, %v79
  %v112 = vsub.f32 %v48, %v80
  %v113 = vsub.f32 %v49, %v81
  %v114 = vsub.f32 %v50, %v82
  %v115 = vsub.f32 %v51, %v83
  %v116 = vand.u32 2147483647, %v84
  %v117 = vand.u32 2147483647, %v85
  %v118 = vand.u32 2147483647, %v86
  %v119 = vand.u32 2147483647, %v87
  %v120 = vand.u32 2147483647, %v88
  %v121 = vand.u32 2147483647, %v89
  %v122 = vand.u32 2147483647, %v90
  %v123 = vand.u32 2147483647, %v91
  %v124 = vand.u32 2147483647, %v92
  %v125 = vand.u32 2147483647, %v93
  %v126 = vand.u32 2147483647, %v94
  %v127 = vand.u32 2147483647, %v95
  %v128 = vand.u32 2147483647, %v96
  %v129 = vand.u32 2147483647, %v97
  %v130 = vand.u32 2147483647, %v98
  %v131 = vand.u32 2147483647, %v99
  %v132 = vand.u32 2147483647, %v100
  %v133 = vand.u32 2147483647, %v101
  %v134 = vand.u32 2147483647, %v102
  %v135 = vand.u32 2147483647, %v103
  %v136 = vand.u32 2147483647, %v104
  %v137 = vand.u32 2147483647, %v105
  %v138 = vand.u32 2147483647, %v106
  %v139 = vand.u32 2147483647, %v107
  %v140 = vand.u32 2147483647, %v108
  %v141 = vand.u32 2147483647, %v109
  %v142 = vand.u32 2147483647, %v110
  %v143 = vand.u32 2147483647, %v111
  %v144 = vand.u32 2147483647, %v112
  %v145 = vand.u32 2147483647, %v113
  %v146 = vand.u32 2147483647, %v114
  %v147 = vand.u32 2147483647, %v115
  %v148 = vpack.c.bf16 %v116, %v116
  %v149 = vpack.c.bf16 %v117, %v117
  %v150 = vpack.c.bf16 %v118, %v118
  %v151 = vpack.c.bf16 %v119, %v119
  %v152 = vpack.c.bf16 %v120, %v120
  %v153 = vpack.c.bf16 %v121, %v121
  %v154 = vpack.c.bf16 %v122, %v122
  %v155 = vpack.c.bf16 %v123, %v123
  %v156 = vpack.c.bf16 %v124, %v124
  %v157 = vpack.c.bf16 %v125, %v125
  %v158 = vpack.c.bf16 %v126, %v126
  %v159 = vpack.c.bf16 %v127, %v127
  %v160 = vpack.c.bf16 %v128, %v128
  %v161 = vpack.c.bf16 %v129, %v129
  %v162 = vpack.c.bf16 %v130, %v130
  %v163 = vpack.c.bf16 %v131, %v131
  %v164 = vpack.c.bf16 %v132, %v132
  %v165 = vpack.c.bf16 %v133, %v133
  %v166 = vpack.c.bf16 %v134, %v134
  %v167 = vpack.c.bf16 %v135, %v135
  %v168 = vpack.c.bf16 %v136, %v136
  %v169 = vpack.c.bf16 %v137, %v137
  %v170 = vpack.c.bf16 %v138, %v138
  %v171 = vpack.c.bf16 %v139, %v139
  %v172 = vpack.c.bf16 %v140, %v140
  %v173 = vpack.c.bf16 %v141, %v141
  %v174 = vpack.c.bf16 %v142, %v142
  %v175 = vpack.c.bf16 %v143, %v143
  %v176 = vpack.c.bf16 %v144, %v144
  %v177 = vpack.c.bf16 %v145, %v145
  %v178 = vpack.c.bf16 %v146, %v146
  %v179 = vpack.c.bf16 %v147, %v147
  %v180 = vld [vmem:[%s2] sm:$0xff]
  %v181 = vld [vmem:[%s2 + $0x8] sm:$0xff]
  %v182 = vld [vmem:[%s2 + $0x10] sm:$0xff]
  %v183 = vld [vmem:[%s2 + $0x18] sm:$0xff]
  %v184 = vld [vmem:[%s2 + $0x20] sm:$0xff]
  %v185 = vld [vmem:[%s2 + $0x28] sm:$0xff]
  %v186 = vld [vmem:[%s2 + $0x30] sm:$0xff]
  %v187 = vld [vmem:[%s2 + $0x38] sm:$0xff]
  %v188 = vld [vmem:[%s2 + $0x40] sm:$0xff]
  %v189 = vld [vmem:[%s2 + $0x48] sm:$0xff]
  %v190 = vld [vmem:[%s2 + $0x50] sm:$0xff]
  %v191 = vld [vmem:[%s2 + $0x58] sm:$0xff]
  %v192 = vld [vmem:[%s2 + $0x60] sm:$0xff]
  %v193 = vld [vmem:[%s2 + $0x68] sm:$0xff]
  %v194 = vld [vmem:[%s2 + $0x70] sm:$0xff]
  %v195 = vld [vmem:[%s2 + $0x78] sm:$0xff]
  %v196 = vld [vmem:[%s2 + $0x80] sm:$0xff]
  %v197 = vld [vmem:[%s2 + $0x88] sm:$0xff]
  %v198 = vld [vmem:[%s2 + $0x90] sm:$0xff]
  %v199 = vld [vmem:[%s2 + $0x98] sm:$0xff]
  %v200 = vld [vmem:[%s2 + $0xa0] sm:$0xff]
  %v201 = vld [vmem:[%s2 + $0xa8] sm:$0xff]
  %v202 = vld [vmem:[%s2 + $0xb0] sm:$0xff]
  %v203 = vld [vmem:[%s2 + $0xb8] sm:$0xff]
  %v204 = vld [vmem:[%s2 + $0xc0] sm:$0xff]
  %v205 = vld [vmem:[%s2 + $0xc8] sm:$0xff]
  %v206 = vld [vmem:[%s2 + $0xd0] sm:$0xff]
  %v207 = vld [vmem:[%s2 + $0xd8] sm:$0xff]
  %v208 = vld [vmem:[%s2 + $0xe0] sm:$0xff]
  %v209 = vld [vmem:[%s2 + $0xe8] sm:$0xff]
  %v210 = vld [vmem:[%s2 + $0xf0] sm:$0xff]
  %v211 = vld [vmem:[%s2 + $0xf8] sm:$0xff]
  %v212 = vld [vmem:[%s2 + $0x100] sm:$0xff]
  %v213 = vld [vmem:[%s2 + $0x108] sm:$0xff]
  %v214 = vld [vmem:[%s2 + $0x110] sm:$0xff]
  %v215 = vld [vmem:[%s2 + $0x118] sm:$0xff]
  %v216 = vld [vmem:[%s2 + $0x120] sm:$0xff]
  %v217 = vld [vmem:[%s2 + $0x128] sm:$0xff]
  %v218 = vld [vmem:[%s2 + $0x130] sm:$0xff]
  %v219 = vld [vmem:[%s2 + $0x138] sm:$0xff]
  %v220 = vld [vmem:[%s2 + $0x140] sm:$0xff]
  %v221 = vld [vmem:[%s2 + $0x148] sm:$0xff]
  %v222 = vld [vmem:[%s2 + $0x150] sm:$0xff]
  %v223 = vld [vmem:[%s2 + $0x158] sm:$0xff]
  %v224 = vld [vmem:[%s2 + $0x160] sm:$0xff]
  %v225 = vld [vmem:[%s2 + $0x168] sm:$0xff]
  %v226 = vld [vmem:[%s2 + $0x170] sm:$0xff]
  %v227 = vld [vmem:[%s2 + $0x178] sm:$0xff]
  %v228 = vld [vmem:[%s2 + $0x180] sm:$0xff]
  %v229 = vld [vmem:[%s2 + $0x188] sm:$0xff]
  %v230 = vld [vmem:[%s2 + $0x190] sm:$0xff]
  %v231 = vld [vmem:[%s2 + $0x198] sm:$0xff]
  %v232 = vld [vmem:[%s2 + $0x1a0] sm:$0xff]
  %v233 = vld [vmem:[%s2 + $0x1a8] sm:$0xff]
  %v234 = vld [vmem:[%s2 + $0x1b0] sm:$0xff]
  %v235 = vld [vmem:[%s2 + $0x1b8] sm:$0xff]
  %v236 = vld [vmem:[%s2 + $0x1c0] sm:$0xff]
  %v237 = vld [vmem:[%s2 + $0x1c8] sm:$0xff]
  %v238 = vld [vmem:[%s2 + $0x1d0] sm:$0xff]
  %v239 = vld [vmem:[%s2 + $0x1d8] sm:$0xff]
  %v240 = vld [vmem:[%s2 + $0x1e0] sm:$0xff]
  %v241 = vld [vmem:[%s2 + $0x1e8] sm:$0xff]
  %v242 = vld [vmem:[%s2 + $0x1f0] sm:$0xff]
  %v243 = vld [vmem:[%s2 + $0x1f8] sm:$0xff]
  %v244 = vld [vmem:[%s2 + $0x200] sm:$0xff]
  %v245 = vld [vmem:[%s2 + $0x208] sm:$0xff]
  %v246 = vld [vmem:[%s2 + $0x210] sm:$0xff]
  %v247 = vld [vmem:[%s2 + $0x218] sm:$0xff]
  %v248 = vld [vmem:[%s2 + $0x220] sm:$0xff]
  %v249 = vld [vmem:[%s2 + $0x228] sm:$0xff]
  %v250 = vld [vmem:[%s2 + $0x230] sm:$0xff]
  %v251 = vld [vmem:[%s2 + $0x238] sm:$0xff]
  %v252 = vld [vmem:[%s2 + $0x240] sm:$0xff]
  %v253 = vld [vmem:[%s2 + $0x248] sm:$0xff]
  %v254 = vld [vmem:[%s2 + $0x250] sm:$0xff]
  %v255 = vld [vmem:[%s2 + $0x258] sm:$0xff]
  %v256 = vld [vmem:[%s2 + $0x260] sm:$0xff]
  %v257 = vld [vmem:[%s2 + $0x268] sm:$0xff]
  %v258 = vld [vmem:[%s2 + $0x270] sm:$0xff]
  %v259 = vld [vmem:[%s2 + $0x278] sm:$0xff]
  %v260 = vld [vmem:[%s2 + $0x280] sm:$0xff]
  %v261 = vld [vmem:[%s2 + $0x288] sm:$0xff]
  %v262 = vld [vmem:[%s2 + $0x290] sm:$0xff]
  %v263 = vld [vmem:[%s2 + $0x298] sm:$0xff]
  %v264 = vld [vmem:[%s2 + $0x2a0] sm:$0xff]
  %v265 = vld [vmem:[%s2 + $0x2a8] sm:$0xff]
  %v266 = vld [vmem:[%s2 + $0x2b0] sm:$0xff]
  %v267 = vld [vmem:[%s2 + $0x2b8] sm:$0xff]
  %v268 = vld [vmem:[%s2 + $0x2c0] sm:$0xff]
  %v269 = vld [vmem:[%s2 + $0x2c8] sm:$0xff]
  %v270 = vld [vmem:[%s2 + $0x2d0] sm:$0xff]
  %v271 = vld [vmem:[%s2 + $0x2d8] sm:$0xff]
  %v272 = vld [vmem:[%s2 + $0x2e0] sm:$0xff]
  %v273 = vld [vmem:[%s2 + $0x2e8] sm:$0xff]
  %v274 = vld [vmem:[%s2 + $0x2f0] sm:$0xff]
  %v275 = vld [vmem:[%s2 + $0x2f8] sm:$0xff]
  %v276 = vld [vmem:[%s2 + $0x300] sm:$0xff]
  %v277 = vld [vmem:[%s2 + $0x308] sm:$0xff]
  %v278 = vld [vmem:[%s2 + $0x310] sm:$0xff]
  %v279 = vld [vmem:[%s2 + $0x318] sm:$0xff]
  %v280 = vld [vmem:[%s2 + $0x320] sm:$0xff]
  %v281 = vld [vmem:[%s2 + $0x328] sm:$0xff]
  %v282 = vld [vmem:[%s2 + $0x330] sm:$0xff]
  %v283 = vld [vmem:[%s2 + $0x338] sm:$0xff]
  %v284 = vld [vmem:[%s2 + $0x340] sm:$0xff]
  %v285 = vld [vmem:[%s2 + $0x348] sm:$0xff]
  %v286 = vld [vmem:[%s2 + $0x350] sm:$0xff]
  %v287 = vld [vmem:[%s2 + $0x358] sm:$0xff]
  %v288 = vld [vmem:[%s2 + $0x360] sm:$0xff]
  %v289 = vld [vmem:[%s2 + $0x368] sm:$0xff]
  %v290 = vld [vmem:[%s2 + $0x370] sm:$0xff]
  %v291 = vld [vmem:[%s2 + $0x378] sm:$0xff]
  %v292 = vld [vmem:[%s2 + $0x380] sm:$0xff]
  %v293 = vld [vmem:[%s2 + $0x388] sm:$0xff]
  %v294 = vld [vmem:[%s2 + $0x390] sm:$0xff]
  %v295 = vld [vmem:[%s2 + $0x398] sm:$0xff]
  %v296 = vld [vmem:[%s2 + $0x3a0] sm:$0xff]
  %v297 = vld [vmem:[%s2 + $0x3a8] sm:$0xff]
  %v298 = vld [vmem:[%s2 + $0x3b0] sm:$0xff]
  %v299 = vld [vmem:[%s2 + $0x3b8] sm:$0xff]
  %v300 = vld [vmem:[%s2 + $0x3c0] sm:$0xff]
  %v301 = vld [vmem:[%s2 + $0x3c8] sm:$0xff]
  %v302 = vld [vmem:[%s2 + $0x3d0] sm:$0xff]
  %v303 = vld [vmem:[%s2 + $0x3d8] sm:$0xff]
  %v304 = vld [vmem:[%s2 + $0x3e0] sm:$0xff]
  %v305 = vld [vmem:[%s2 + $0x3e8] sm:$0xff]
  %v306 = vld [vmem:[%s2 + $0x3f0] sm:$0xff]
  %v307 = vld [vmem:[%s2 + $0x3f8] sm:$0xff]
  %v308 = vld [vmem:[%s2 + $0x400] sm:$0xff]
  %v309 = vld [vmem:[%s2 + $0x408] sm:$0xff]
  %v310 = vld [vmem:[%s2 + $0x410] sm:$0xff]
  %v311 = vld [vmem:[%s2 + $0x418] sm:$0xff]
  %v312 = vld [vmem:[%s2 + $0x420] sm:$0xff]
  %v313 = vld [vmem:[%s2 + $0x428] sm:$0xff]
  %v314 = vld [vmem:[%s2 + $0x430] sm:$0xff]
  %v315 = vld [vmem:[%s2 + $0x438] sm:$0xff]
  %v316 = vld [vmem:[%s2 + $0x440] sm:$0xff]
  %v317 = vld [vmem:[%s2 + $0x448] sm:$0xff]
  %v318 = vld [vmem:[%s2 + $0x450] sm:$0xff]
  %v319 = vld [vmem:[%s2 + $0x458] sm:$0xff]
  %v320 = vld [vmem:[%s2 + $0x460] sm:$0xff]
  %v321 = vld [vmem:[%s2 + $0x468] sm:$0xff]
  %v322 = vld [vmem:[%s2 + $0x470] sm:$0xff]
  %v323 = vld [vmem:[%s2 + $0x478] sm:$0xff]
  %v324 = vld [vmem:[%s2 + $0x480] sm:$0xff]
  %v325 = vld [vmem:[%s2 + $0x488] sm:$0xff]
  %v326 = vld [vmem:[%s2 + $0x490] sm:$0xff]
  %v327 = vld [vmem:[%s2 + $0x498] sm:$0xff]
  %v328 = vld [vmem:[%s2 + $0x4a0] sm:$0xff]
  %v329 = vld [vmem:[%s2 + $0x4a8] sm:$0xff]
  %v330 = vld [vmem:[%s2 + $0x4b0] sm:$0xff]
  %v331 = vld [vmem:[%s2 + $0x4b8] sm:$0xff]
  %v332 = vld [vmem:[%s2 + $0x4c0] sm:$0xff]
  %v333 = vld [vmem:[%s2 + $0x4c8] sm:$0xff]
  %v334 = vld [vmem:[%s2 + $0x4d0] sm:$0xff]
  %v335 = vld [vmem:[%s2 + $0x4d8] sm:$0xff]
  %v336 = vld [vmem:[%s2 + $0x4e0] sm:$0xff]
  %v337 = vld [vmem:[%s2 + $0x4e8] sm:$0xff]
  %v338 = vld [vmem:[%s2 + $0x4f0] sm:$0xff]
  %v339 = vld [vmem:[%s2 + $0x4f8] sm:$0xff]
  %v340 = vld [vmem:[%s2 + $0x500] sm:$0xff]
  %v341 = vld [vmem:[%s2 + $0x508] sm:$0xff]
  %v342 = vld [vmem:[%s2 + $0x510] sm:$0xff]
  %v343 = vld [vmem:[%s2 + $0x518] sm:$0xff]
  %v344 = vld [vmem:[%s2 + $0x520] sm:$0xff]
  %v345 = vld [vmem:[%s2 + $0x528] sm:$0xff]
  %v346 = vld [vmem:[%s2 + $0x530] sm:$0xff]
  %v347 = vld [vmem:[%s2 + $0x538] sm:$0xff]
  %v348 = vld [vmem:[%s2 + $0x540] sm:$0xff]
  %v349 = vld [vmem:[%s2 + $0x548] sm:$0xff]
  %v350 = vld [vmem:[%s2 + $0x550] sm:$0xff]
  %v351 = vld [vmem:[%s2 + $0x558] sm:$0xff]
  %v352 = vld [vmem:[%s2 + $0x560] sm:$0xff]
  %v353 = vld [vmem:[%s2 + $0x568] sm:$0xff]
  %v354 = vld [vmem:[%s2 + $0x570] sm:$0xff]
  %v355 = vld [vmem:[%s2 + $0x578] sm:$0xff]
  %v356 = vld [vmem:[%s2 + $0x580] sm:$0xff]
  %v357 = vld [vmem:[%s2 + $0x588] sm:$0xff]
  %v358 = vld [vmem:[%s2 + $0x590] sm:$0xff]
  %v359 = vld [vmem:[%s2 + $0x598] sm:$0xff]
  %v360 = vld [vmem:[%s2 + $0x5a0] sm:$0xff]
  %v361 = vld [vmem:[%s2 + $0x5a8] sm:$0xff]
  %v362 = vld [vmem:[%s2 + $0x5b0] sm:$0xff]
  %v363 = vld [vmem:[%s2 + $0x5b8] sm:$0xff]
  %v364 = vld [vmem:[%s2 + $0x5c0] sm:$0xff]
  %v365 = vld [vmem:[%s2 + $0x5c8] sm:$0xff]
  %v366 = vld [vmem:[%s2 + $0x5d0] sm:$0xff]
  %v367 = vld [vmem:[%s2 + $0x5d8] sm:$0xff]
  %v368 = vld [vmem:[%s2 + $0x5e0] sm:$0xff]
  %v369 = vld [vmem:[%s2 + $0x5e8] sm:$0xff]
  %v370 = vld [vmem:[%s2 + $0x5f0] sm:$0xff]
  %v371 = vld [vmem:[%s2 + $0x5f8] sm:$0xff]
  %v372 = vld [vmem:[%s2 + $0x600] sm:$0xff]
  %v373 = vld [vmem:[%s2 + $0x608] sm:$0xff]
  %v374 = vld [vmem:[%s2 + $0x610] sm:$0xff]
  %v375 = vld [vmem:[%s2 + $0x618] sm:$0xff]
  %v376 = vld [vmem:[%s2 + $0x620] sm:$0xff]
  %v377 = vld [vmem:[%s2 + $0x628] sm:$0xff]
  %v378 = vld [vmem:[%s2 + $0x630] sm:$0xff]
  %v379 = vld [vmem:[%s2 + $0x638] sm:$0xff]
  %v380 = vld [vmem:[%s2 + $0x640] sm:$0xff]
  %v381 = vld [vmem:[%s2 + $0x648] sm:$0xff]
  %v382 = vld [vmem:[%s2 + $0x650] sm:$0xff]
  %v383 = vld [vmem:[%s2 + $0x658] sm:$0xff]
  %v384 = vld [vmem:[%s2 + $0x660] sm:$0xff]
  %v385 = vld [vmem:[%s2 + $0x668] sm:$0xff]
  %v386 = vld [vmem:[%s2 + $0x670] sm:$0xff]
  %v387 = vld [vmem:[%s2 + $0x678] sm:$0xff]
  %v388 = vld [vmem:[%s2 + $0x680] sm:$0xff]
  %v389 = vld [vmem:[%s2 + $0x688] sm:$0xff]
  %v390 = vld [vmem:[%s2 + $0x690] sm:$0xff]
  %v391 = vld [vmem:[%s2 + $0x698] sm:$0xff]
  %v392 = vld [vmem:[%s2 + $0x6a0] sm:$0xff]
  %v393 = vld [vmem:[%s2 + $0x6a8] sm:$0xff]
  %v394 = vld [vmem:[%s2 + $0x6b0] sm:$0xff]
  %v395 = vld [vmem:[%s2 + $0x6b8] sm:$0xff]
  %v396 = vld [vmem:[%s2 + $0x6c0] sm:$0xff]
  %v397 = vld [vmem:[%s2 + $0x6c8] sm:$0xff]
  %v398 = vld [vmem:[%s2 + $0x6d0] sm:$0xff]
  %v399 = vld [vmem:[%s2 + $0x6d8] sm:$0xff]
  %v400 = vld [vmem:[%s2 + $0x6e0] sm:$0xff]
  %v401 = vld [vmem:[%s2 + $0x6e8] sm:$0xff]
  %v402 = vld [vmem:[%s2 + $0x6f0] sm:$0xff]
  %v403 = vld [vmem:[%s2 + $0x6f8] sm:$0xff]
  %v404 = vld [vmem:[%s2 + $0x700] sm:$0xff]
  %v405 = vld [vmem:[%s2 + $0x708] sm:$0xff]
  %v406 = vld [vmem:[%s2 + $0x710] sm:$0xff]
  %v407 = vld [vmem:[%s2 + $0x718] sm:$0xff]
  %v408 = vld [vmem:[%s2 + $0x720] sm:$0xff]
  %v409 = vld [vmem:[%s2 + $0x728] sm:$0xff]
  %v410 = vld [vmem:[%s2 + $0x730] sm:$0xff]
  %v411 = vld [vmem:[%s2 + $0x738] sm:$0xff]
  %v412 = vld [vmem:[%s2 + $0x740] sm:$0xff]
  %v413 = vld [vmem:[%s2 + $0x748] sm:$0xff]
  %v414 = vld [vmem:[%s2 + $0x750] sm:$0xff]
  %v415 = vld [vmem:[%s2 + $0x758] sm:$0xff]
  %v416 = vld [vmem:[%s2 + $0x760] sm:$0xff]
  %v417 = vld [vmem:[%s2 + $0x768] sm:$0xff]
  %v418 = vld [vmem:[%s2 + $0x770] sm:$0xff]
  %v419 = vld [vmem:[%s2 + $0x778] sm:$0xff]
  %v420 = vld [vmem:[%s2 + $0x780] sm:$0xff]
  %v421 = vld [vmem:[%s2 + $0x788] sm:$0xff]
  %v422 = vld [vmem:[%s2 + $0x790] sm:$0xff]
  %v423 = vld [vmem:[%s2 + $0x798] sm:$0xff]
  %v424 = vld [vmem:[%s2 + $0x7a0] sm:$0xff]
  %v425 = vld [vmem:[%s2 + $0x7a8] sm:$0xff]
  %v426 = vld [vmem:[%s2 + $0x7b0] sm:$0xff]
  %v427 = vld [vmem:[%s2 + $0x7b8] sm:$0xff]
  %v428 = vld [vmem:[%s2 + $0x7c0] sm:$0xff]
  %v429 = vld [vmem:[%s2 + $0x7c8] sm:$0xff]
  %v430 = vld [vmem:[%s2 + $0x7d0] sm:$0xff]
  %v431 = vld [vmem:[%s2 + $0x7d8] sm:$0xff]
  %v432 = vld [vmem:[%s2 + $0x7e0] sm:$0xff]
  %v433 = vld [vmem:[%s2 + $0x7e8] sm:$0xff]
  %v434 = vld [vmem:[%s2 + $0x7f0] sm:$0xff]
  %v435 = vld [vmem:[%s2 + $0x7f8] sm:$0xff]
  %v436 = vld [vmem:[%s2 + $0x800] sm:$0xff]
  %v437 = vld [vmem:[%s2 + $0x808] sm:$0xff]
  %v438 = vld [vmem:[%s2 + $0x810] sm:$0xff]
  %v439 = vld [vmem:[%s2 + $0x818] sm:$0xff]
  %v440 = vld [vmem:[%s2 + $0x820] sm:$0xff]
  %v441 = vld [vmem:[%s2 + $0x828] sm:$0xff]
  %v442 = vld [vmem:[%s2 + $0x830] sm:$0xff]
  %v443 = vld [vmem:[%s2 + $0x838] sm:$0xff]
  %v444 = vld [vmem:[%s2 + $0x840] sm:$0xff]
  %v445 = vld [vmem:[%s2 + $0x848] sm:$0xff]
  %v446 = vld [vmem:[%s2 + $0x850] sm:$0xff]
  %v447 = vld [vmem:[%s2 + $0x858] sm:$0xff]
  %v448 = vld [vmem:[%s2 + $0x860] sm:$0xff]
  %v449 = vld [vmem:[%s2 + $0x868] sm:$0xff]
  %v450 = vld [vmem:[%s2 + $0x870] sm:$0xff]
  %v451 = vld [vmem:[%s2 + $0x878] sm:$0xff]
  %v452 = vld [vmem:[%s2 + $0x880] sm:$0xff]
  %v453 = vld [vmem:[%s2 + $0x888] sm:$0xff]
  %v454 = vld [vmem:[%s2 + $0x890] sm:$0xff]
  %v455 = vld [vmem:[%s2 + $0x898] sm:$0xff]
  %v456 = vld [vmem:[%s2 + $0x8a0] sm:$0xff]
  %v457 = vld [vmem:[%s2 + $0x8a8] sm:$0xff]
  %v458 = vld [vmem:[%s2 + $0x8b0] sm:$0xff]
  %v459 = vld [vmem:[%s2 + $0x8b8] sm:$0xff]
  %v460 = vld [vmem:[%s2 + $0x8c0] sm:$0xff]
  %v461 = vld [vmem:[%s2 + $0x8c8] sm:$0xff]
  %v462 = vld [vmem:[%s2 + $0x8d0] sm:$0xff]
  %v463 = vld [vmem:[%s2 + $0x8d8] sm:$0xff]
  %v464 = vld [vmem:[%s2 + $0x8e0] sm:$0xff]
  %v465 = vld [vmem:[%s2 + $0x8e8] sm:$0xff]
  %v466 = vld [vmem:[%s2 + $0x8f0] sm:$0xff]
  %v467 = vld [vmem:[%s2 + $0x8f8] sm:$0xff]
  %v468 = vld [vmem:[%s2 + $0x900] sm:$0xff]
  %v469 = vld [vmem:[%s2 + $0x908] sm:$0xff]
  %v470 = vld [vmem:[%s2 + $0x910] sm:$0xff]
  %v471 = vld [vmem:[%s2 + $0x918] sm:$0xff]
  %v472 = vld [vmem:[%s2 + $0x920] sm:$0xff]
  %v473 = vld [vmem:[%s2 + $0x928] sm:$0xff]
  %v474 = vld [vmem:[%s2 + $0x930] sm:$0xff]
  %v475 = vld [vmem:[%s2 + $0x938] sm:$0xff]
  %v476 = vld [vmem:[%s2 + $0x940] sm:$0xff]
  %v477 = vld [vmem:[%s2 + $0x948] sm:$0xff]
  %v478 = vld [vmem:[%s2 + $0x950] sm:$0xff]
  %v479 = vld [vmem:[%s2 + $0x958] sm:$0xff]
  %v480 = vld [vmem:[%s2 + $0x960] sm:$0xff]
  %v481 = vld [vmem:[%s2 + $0x968] sm:$0xff]
  %v482 = vld [vmem:[%s2 + $0x970] sm:$0xff]
  %v483 = vld [vmem:[%s2 + $0x978] sm:$0xff]
  %v484 = vld [vmem:[%s2 + $0x980] sm:$0xff]
  %v485 = vld [vmem:[%s2 + $0x988] sm:$0xff]
  %v486 = vld [vmem:[%s2 + $0x990] sm:$0xff]
  %v487 = vld [vmem:[%s2 + $0x998] sm:$0xff]
  %v488 = vld [vmem:[%s2 + $0x9a0] sm:$0xff]
  %v489 = vld [vmem:[%s2 + $0x9a8] sm:$0xff]
  %v490 = vld [vmem:[%s2 + $0x9b0] sm:$0xff]
  %v491 = vld [vmem:[%s2 + $0x9b8] sm:$0xff]
  %v492 = vld [vmem:[%s2 + $0x9c0] sm:$0xff]
  %v493 = vld [vmem:[%s2 + $0x9c8] sm:$0xff]
  %v494 = vld [vmem:[%s2 + $0x9d0] sm:$0xff]
  %v495 = vld [vmem:[%s2 + $0x9d8] sm:$0xff]
  %v496 = vld [vmem:[%s2 + $0x9e0] sm:$0xff]
  %v497 = vld [vmem:[%s2 + $0x9e8] sm:$0xff]
  %v498 = vld [vmem:[%s2 + $0x9f0] sm:$0xff]
  %v499 = vld [vmem:[%s2 + $0x9f8] sm:$0xff]
  %v500 = vld [vmem:[%s2 + $0xa00] sm:$0xff]
  %v501 = vld [vmem:[%s2 + $0xa08] sm:$0xff]
  %v502 = vld [vmem:[%s2 + $0xa10] sm:$0xff]
  %v503 = vld [vmem:[%s2 + $0xa18] sm:$0xff]
  %v504 = vld [vmem:[%s2 + $0xa20] sm:$0xff]
  %v505 = vld [vmem:[%s2 + $0xa28] sm:$0xff]
  %v506 = vld [vmem:[%s2 + $0xa30] sm:$0xff]
  %v507 = vld [vmem:[%s2 + $0xa38] sm:$0xff]
  %v508 = vld [vmem:[%s2 + $0xa40] sm:$0xff]
  %v509 = vld [vmem:[%s2 + $0xa48] sm:$0xff]
  %v510 = vld [vmem:[%s2 + $0xa50] sm:$0xff]
  %v511 = vld [vmem:[%s2 + $0xa58] sm:$0xff]
  %v512 = vld [vmem:[%s2 + $0xa60] sm:$0xff]
  %v513 = vld [vmem:[%s2 + $0xa68] sm:$0xff]
  %v514 = vld [vmem:[%s2 + $0xa70] sm:$0xff]
  %v515 = vld [vmem:[%s2 + $0xa78] sm:$0xff]
  %v516 = vld [vmem:[%s2 + $0xa80] sm:$0xff]
  %v517 = vld [vmem:[%s2 + $0xa88] sm:$0xff]
  %v518 = vld [vmem:[%s2 + $0xa90] sm:$0xff]
  %v519 = vld [vmem:[%s2 + $0xa98] sm:$0xff]
  %v520 = vld [vmem:[%s2 + $0xaa0] sm:$0xff]
  %v521 = vld [vmem:[%s2 + $0xaa8] sm:$0xff]
  %v522 = vld [vmem:[%s2 + $0xab0] sm:$0xff]
  %v523 = vld [vmem:[%s2 + $0xab8] sm:$0xff]
  %v524 = vld [vmem:[%s2 + $0xac0] sm:$0xff]
  %v525 = vld [vmem:[%s2 + $0xac8] sm:$0xff]
  %v526 = vld [vmem:[%s2 + $0xad0] sm:$0xff]
  %v527 = vld [vmem:[%s2 + $0xad8] sm:$0xff]
  %v528 = vld [vmem:[%s2 + $0xae0] sm:$0xff]
  %v529 = vld [vmem:[%s2 + $0xae8] sm:$0xff]
  %v530 = vld [vmem:[%s2 + $0xaf0] sm:$0xff]
  %v531 = vld [vmem:[%s2 + $0xaf8] sm:$0xff]
  %v532 = vld [vmem:[%s2 + $0xb00] sm:$0xff]
  %v533 = vld [vmem:[%s2 + $0xb08] sm:$0xff]
  %v534 = vld [vmem:[%s2 + $0xb10] sm:$0xff]
  %v535 = vld [vmem:[%s2 + $0xb18] sm:$0xff]
  %v536 = vld [vmem:[%s2 + $0xb20] sm:$0xff]
  %v537 = vld [vmem:[%s2 + $0xb28] sm:$0xff]
  %v538 = vld [vmem:[%s2 + $0xb30] sm:$0xff]
  %v539 = vld [vmem:[%s2 + $0xb38] sm:$0xff]
  %v540 = vld [vmem:[%s2 + $0xb40] sm:$0xff]
  %v541 = vld [vmem:[%s2 + $0xb48] sm:$0xff]
  %v542 = vld [vmem:[%s2 + $0xb50] sm:$0xff]
  %v543 = vld [vmem:[%s2 + $0xb58] sm:$0xff]
  %v544 = vld [vmem:[%s2 + $0xb60] sm:$0xff]
  %v545 = vld [vmem:[%s2 + $0xb68] sm:$0xff]
  %v546 = vld [vmem:[%s2 + $0xb70] sm:$0xff]
  %v547 = vld [vmem:[%s2 + $0xb78] sm:$0xff]
  %v548 = vld [vmem:[%s2 + $0xb80] sm:$0xff]
  %v549 = vld [vmem:[%s2 + $0xb88] sm:$0xff]
  %v550 = vld [vmem:[%s2 + $0xb90] sm:$0xff]
  %v551 = vld [vmem:[%s2 + $0xb98] sm:$0xff]
  %v552 = vld [vmem:[%s2 + $0xba0] sm:$0xff]
  %v553 = vld [vmem:[%s2 + $0xba8] sm:$0xff]
  %v554 = vld [vmem:[%s2 + $0xbb0] sm:$0xff]
  %v555 = vld [vmem:[%s2 + $0xbb8] sm:$0xff]
  %v556 = vld [vmem:[%s2 + $0xbc0] sm:$0xff]
  %v557 = vld [vmem:[%s2 + $0xbc8] sm:$0xff]
  %v558 = vld [vmem:[%s2 + $0xbd0] sm:$0xff]
  %v559 = vld [vmem:[%s2 + $0xbd8] sm:$0xff]
  %v560 = vld [vmem:[%s2 + $0xbe0] sm:$0xff]
  %v561 = vld [vmem:[%s2 + $0xbe8] sm:$0xff]
  %v562 = vld [vmem:[%s2 + $0xbf0] sm:$0xff]
  %v563 = vld [vmem:[%s2 + $0xbf8] sm:$0xff]
  %v564 = vld [vmem:[%s2 + $0xc00] sm:$0xff]
  %v565 = vld [vmem:[%s2 + $0xc08] sm:$0xff]
  %v566 = vld [vmem:[%s2 + $0xc10] sm:$0xff]
  %v567 = vld [vmem:[%s2 + $0xc18] sm:$0xff]
  %v568 = vld [vmem:[%s2 + $0xc20] sm:$0xff]
  %v569 = vld [vmem:[%s2 + $0xc28] sm:$0xff]
  %v570 = vld [vmem:[%s2 + $0xc30] sm:$0xff]
  %v571 = vld [vmem:[%s2 + $0xc38] sm:$0xff]
  %v572 = vld [vmem:[%s2 + $0xc40] sm:$0xff]
  %v573 = vld [vmem:[%s2 + $0xc48] sm:$0xff]
  %v574 = vld [vmem:[%s2 + $0xc50] sm:$0xff]
  %v575 = vld [vmem:[%s2 + $0xc58] sm:$0xff]
  %v576 = vld [vmem:[%s2 + $0xc60] sm:$0xff]
  %v577 = vld [vmem:[%s2 + $0xc68] sm:$0xff]
  %v578 = vld [vmem:[%s2 + $0xc70] sm:$0xff]
  %v579 = vld [vmem:[%s2 + $0xc78] sm:$0xff]
  %v580 = vld [vmem:[%s2 + $0xc80] sm:$0xff]
  %v581 = vld [vmem:[%s2 + $0xc88] sm:$0xff]
  %v582 = vld [vmem:[%s2 + $0xc90] sm:$0xff]
  %v583 = vld [vmem:[%s2 + $0xc98] sm:$0xff]
  %v584 = vld [vmem:[%s2 + $0xca0] sm:$0xff]
  %v585 = vld [vmem:[%s2 + $0xca8] sm:$0xff]
  %v586 = vld [vmem:[%s2 + $0xcb0] sm:$0xff]
  %v587 = vld [vmem:[%s2 + $0xcb8] sm:$0xff]
  %v588 = vld [vmem:[%s2 + $0xcc0] sm:$0xff]
  %v589 = vld [vmem:[%s2 + $0xcc8] sm:$0xff]
  %v590 = vld [vmem:[%s2 + $0xcd0] sm:$0xff]
  %v591 = vld [vmem:[%s2 + $0xcd8] sm:$0xff]
  %v592 = vld [vmem:[%s2 + $0xce0] sm:$0xff]
  %v593 = vld [vmem:[%s2 + $0xce8] sm:$0xff]
  %v594 = vld [vmem:[%s2 + $0xcf0] sm:$0xff]
  %v595 = vld [vmem:[%s2 + $0xcf8] sm:$0xff]
  %v596 = vld [vmem:[%s2 + $0xd00] sm:$0xff]
  %v597 = vld [vmem:[%s2 + $0xd08] sm:$0xff]
  %v598 = vld [vmem:[%s2 + $0xd10] sm:$0xff]
  %v599 = vld [vmem:[%s2 + $0xd18] sm:$0xff]
  %v600 = vld [vmem:[%s2 + $0xd20] sm:$0xff]
  %v601 = vld [vmem:[%s2 + $0xd28] sm:$0xff]
  %v602 = vld [vmem:[%s2 + $0xd30] sm:$0xff]
  %v603 = vld [vmem:[%s2 + $0xd38] sm:$0xff]
  %v604 = vld [vmem:[%s2 + $0xd40] sm:$0xff]
  %v605 = vld [vmem:[%s2 + $0xd48] sm:$0xff]
  %v606 = vld [vmem:[%s2 + $0xd50] sm:$0xff]
  %v607 = vld [vmem:[%s2 + $0xd58] sm:$0xff]
  %v608 = vld [vmem:[%s2 + $0xd60] sm:$0xff]
  %v609 = vld [vmem:[%s2 + $0xd68] sm:$0xff]
  %v610 = vld [vmem:[%s2 + $0xd70] sm:$0xff]
  %v611 = vld [vmem:[%s2 + $0xd78] sm:$0xff]
  %v612 = vld [vmem:[%s2 + $0xd80] sm:$0xff]
  %v613 = vld [vmem:[%s2 + $0xd88] sm:$0xff]
  %v614 = vld [vmem:[%s2 + $0xd90] sm:$0xff]
  %v615 = vld [vmem:[%s2 + $0xd98] sm:$0xff]
  %v616 = vld [vmem:[%s2 + $0xda0] sm:$0xff]
  %v617 = vld [vmem:[%s2 + $0xda8] sm:$0xff]
  %v618 = vld [vmem:[%s2 + $0xdb0] sm:$0xff]
  %v619 = vld [vmem:[%s2 + $0xdb8] sm:$0xff]
  %v620 = vld [vmem:[%s2 + $0xdc0] sm:$0xff]
  %v621 = vld [vmem:[%s2 + $0xdc8] sm:$0xff]
  %v622 = vld [vmem:[%s2 + $0xdd0] sm:$0xff]
  %v623 = vld [vmem:[%s2 + $0xdd8] sm:$0xff]
  %v624 = vld [vmem:[%s2 + $0xde0] sm:$0xff]
  %v625 = vld [vmem:[%s2 + $0xde8] sm:$0xff]
  %v626 = vld [vmem:[%s2 + $0xdf0] sm:$0xff]
  %v627 = vld [vmem:[%s2 + $0xdf8] sm:$0xff]
  %v628 = vld [vmem:[%s2 + $0xe00] sm:$0xff]
  %v629 = vld [vmem:[%s2 + $0xe08] sm:$0xff]
  %v630 = vld [vmem:[%s2 + $0xe10] sm:$0xff]
  %v631 = vld [vmem:[%s2 + $0xe18] sm:$0xff]
  %v632 = vld [vmem:[%s2 + $0xe20] sm:$0xff]
  %v633 = vld [vmem:[%s2 + $0xe28] sm:$0xff]
  %v634 = vld [vmem:[%s2 + $0xe30] sm:$0xff]
  %v635 = vld [vmem:[%s2 + $0xe38] sm:$0xff]
  %v636 = vld [vmem:[%s2 + $0xe40] sm:$0xff]
  %v637 = vld [vmem:[%s2 + $0xe48] sm:$0xff]
  %v638 = vld [vmem:[%s2 + $0xe50] sm:$0xff]
  %v639 = vld [vmem:[%s2 + $0xe58] sm:$0xff]
  %v640 = vld [vmem:[%s2 + $0xe60] sm:$0xff]
  %v641 = vld [vmem:[%s2 + $0xe68] sm:$0xff]
  %v642 = vld [vmem:[%s2 + $0xe70] sm:$0xff]
  %v643 = vld [vmem:[%s2 + $0xe78] sm:$0xff]
  %v644 = vld [vmem:[%s2 + $0xe80] sm:$0xff]
  %v645 = vld [vmem:[%s2 + $0xe88] sm:$0xff]
  %v646 = vld [vmem:[%s2 + $0xe90] sm:$0xff]
  %v647 = vld [vmem:[%s2 + $0xe98] sm:$0xff]
  %v648 = vld [vmem:[%s2 + $0xea0] sm:$0xff]
  %v649 = vld [vmem:[%s2 + $0xea8] sm:$0xff]
  %v650 = vld [vmem:[%s2 + $0xeb0] sm:$0xff]
  %v651 = vld [vmem:[%s2 + $0xeb8] sm:$0xff]
  %v652 = vld [vmem:[%s2 + $0xec0] sm:$0xff]
  %v653 = vld [vmem:[%s2 + $0xec8] sm:$0xff]
  %v654 = vld [vmem:[%s2 + $0xed0] sm:$0xff]
  %v655 = vld [vmem:[%s2 + $0xed8] sm:$0xff]
  %v656 = vld [vmem:[%s2 + $0xee0] sm:$0xff]
  %v657 = vld [vmem:[%s2 + $0xee8] sm:$0xff]
  %v658 = vld [vmem:[%s2 + $0xef0] sm:$0xff]
  %v659 = vld [vmem:[%s2 + $0xef8] sm:$0xff]
  %v660 = vld [vmem:[%s2 + $0xf00] sm:$0xff]
  %v661 = vld [vmem:[%s2 + $0xf08] sm:$0xff]
  %v662 = vld [vmem:[%s2 + $0xf10] sm:$0xff]
  %v663 = vld [vmem:[%s2 + $0xf18] sm:$0xff]
  %v664 = vld [vmem:[%s2 + $0xf20] sm:$0xff]
  %v665 = vld [vmem:[%s2 + $0xf28] sm:$0xff]
  %v666 = vld [vmem:[%s2 + $0xf30] sm:$0xff]
  %v667 = vld [vmem:[%s2 + $0xf38] sm:$0xff]
  %v668 = vld [vmem:[%s2 + $0xf40] sm:$0xff]
  %v669 = vld [vmem:[%s2 + $0xf48] sm:$0xff]
  %v670 = vld [vmem:[%s2 + $0xf50] sm:$0xff]
  %v671 = vld [vmem:[%s2 + $0xf58] sm:$0xff]
  %v672 = vld [vmem:[%s2 + $0xf60] sm:$0xff]
  %v673 = vld [vmem:[%s2 + $0xf68] sm:$0xff]
  %v674 = vld [vmem:[%s2 + $0xf70] sm:$0xff]
  %v675 = vld [vmem:[%s2 + $0xf78] sm:$0xff]
  %v676 = vld [vmem:[%s2 + $0xf80] sm:$0xff]
  %v677 = vld [vmem:[%s2 + $0xf88] sm:$0xff]
  %v678 = vld [vmem:[%s2 + $0xf90] sm:$0xff]
  %v679 = vld [vmem:[%s2 + $0xf98] sm:$0xff]
  %v680 = vld [vmem:[%s2 + $0xfa0] sm:$0xff]
  %v681 = vld [vmem:[%s2 + $0xfa8] sm:$0xff]
  %v682 = vld [vmem:[%s2 + $0xfb0] sm:$0xff]
  %v683 = vld [vmem:[%s2 + $0xfb8] sm:$0xff]
  %v684 = vld [vmem:[%s2 + $0xfc0] sm:$0xff]
  %v685 = vld [vmem:[%s2 + $0xfc8] sm:$0xff]
  %v686 = vld [vmem:[%s2 + $0xfd0] sm:$0xff]
  %v687 = vld [vmem:[%s2 + $0xfd8] sm:$0xff]
  %v688 = vld [vmem:[%s2 + $0xfe0] sm:$0xff]
  %v689 = vld [vmem:[%s2 + $0xfe8] sm:$0xff]
  %v690 = vld [vmem:[%s2 + $0xff0] sm:$0xff]
  %v691 = vld [vmem:[%s2 + $0xff8] sm:$0xff]
  %v692 = vld [vmem:[%s2 + $0x1000] sm:$0xff]
  %v693 = vld [vmem:[%s2 + $0x1008] sm:$0xff]
  %v694 = vld [vmem:[%s2 + $0x1010] sm:$0xff]
  %v695 = vld [vmem:[%s2 + $0x1018] sm:$0xff]
  %v696 = vld [vmem:[%s2 + $0x1020] sm:$0xff]
  %v697 = vld [vmem:[%s2 + $0x1028] sm:$0xff]
  %v698 = vld [vmem:[%s2 + $0x1030] sm:$0xff]
  %v699 = vld [vmem:[%s2 + $0x1038] sm:$0xff]
  %v700 = vld [vmem:[%s2 + $0x1040] sm:$0xff]
  %v701 = vld [vmem:[%s2 + $0x1048] sm:$0xff]
  %v702 = vld [vmem:[%s2 + $0x1050] sm:$0xff]
  %v703 = vld [vmem:[%s2 + $0x1058] sm:$0xff]
  %v704 = vld [vmem:[%s2 + $0x1060] sm:$0xff]
  %v705 = vld [vmem:[%s2 + $0x1068] sm:$0xff]
  %v706 = vld [vmem:[%s2 + $0x1070] sm:$0xff]
  %v707 = vld [vmem:[%s2 + $0x1078] sm:$0xff]
  %v708 = vld [vmem:[%s2 + $0x1080] sm:$0xff]
  %v709 = vld [vmem:[%s2 + $0x1088] sm:$0xff]
  %v710 = vld [vmem:[%s2 + $0x1090] sm:$0xff]
  %v711 = vld [vmem:[%s2 + $0x1098] sm:$0xff]
  %v712 = vld [vmem:[%s2 + $0x10a0] sm:$0xff]
  %v713 = vld [vmem:[%s2 + $0x10a8] sm:$0xff]
  %v714 = vld [vmem:[%s2 + $0x10b0] sm:$0xff]
  %v715 = vld [vmem:[%s2 + $0x10b8] sm:$0xff]
  %v716 = vld [vmem:[%s2 + $0x10c0] sm:$0xff]
  %v717 = vld [vmem:[%s2 + $0x10c8] sm:$0xff]
  %v718 = vld [vmem:[%s2 + $0x10d0] sm:$0xff]
  %v719 = vld [vmem:[%s2 + $0x10d8] sm:$0xff]
  %v720 = vld [vmem:[%s2 + $0x10e0] sm:$0xff]
  %v721 = vld [vmem:[%s2 + $0x10e8] sm:$0xff]
  %v722 = vld [vmem:[%s2 + $0x10f0] sm:$0xff]
  %v723 = vld [vmem:[%s2 + $0x10f8] sm:$0xff]
  %v724 = vld [vmem:[%s2 + $0x1100] sm:$0xff]
  %v725 = vld [vmem:[%s2 + $0x1108] sm:$0xff]
  %v726 = vld [vmem:[%s2 + $0x1110] sm:$0xff]
  %v727 = vld [vmem:[%s2 + $0x1118] sm:$0xff]
  %v728 = vld [vmem:[%s2 + $0x1120] sm:$0xff]
  %v729 = vld [vmem:[%s2 + $0x1128] sm:$0xff]
  %v730 = vld [vmem:[%s2 + $0x1130] sm:$0xff]
  %v731 = vld [vmem:[%s2 + $0x1138] sm:$0xff]
  %v732 = vld [vmem:[%s2 + $0x1140] sm:$0xff]
  %v733 = vld [vmem:[%s2 + $0x1148] sm:$0xff]
  %v734 = vld [vmem:[%s2 + $0x1150] sm:$0xff]
  %v735 = vld [vmem:[%s2 + $0x1158] sm:$0xff]
  %v736 = vld [vmem:[%s2 + $0x1160] sm:$0xff]
  %v737 = vld [vmem:[%s2 + $0x1168] sm:$0xff]
  %v738 = vld [vmem:[%s2 + $0x1170] sm:$0xff]
  %v739 = vld [vmem:[%s2 + $0x1178] sm:$0xff]
  %v740 = vld [vmem:[%s2 + $0x1180] sm:$0xff]
  %v741 = vld [vmem:[%s2 + $0x1188] sm:$0xff]
  %v742 = vld [vmem:[%s2 + $0x1190] sm:$0xff]
  %v743 = vld [vmem:[%s2 + $0x1198] sm:$0xff]
  %v744 = vld [vmem:[%s2 + $0x11a0] sm:$0xff]
  %v745 = vld [vmem:[%s2 + $0x11a8] sm:$0xff]
  %v746 = vld [vmem:[%s2 + $0x11b0] sm:$0xff]
  %v747 = vld [vmem:[%s2 + $0x11b8] sm:$0xff]
  %v748 = vld [vmem:[%s2 + $0x11c0] sm:$0xff]
  %v749 = vld [vmem:[%s2 + $0x11c8] sm:$0xff]
  %v750 = vld [vmem:[%s2 + $0x11d0] sm:$0xff]
  %v751 = vld [vmem:[%s2 + $0x11d8] sm:$0xff]
  %v752 = vld [vmem:[%s2 + $0x11e0] sm:$0xff]
  %v753 = vld [vmem:[%s2 + $0x11e8] sm:$0xff]
  %v754 = vld [vmem:[%s2 + $0x11f0] sm:$0xff]
  %v755 = vld [vmem:[%s2 + $0x11f8] sm:$0xff]
  %v756 = vld [vmem:[%s2 + $0x1200] sm:$0xff]
  %v757 = vld [vmem:[%s2 + $0x1208] sm:$0xff]
  %v758 = vld [vmem:[%s2 + $0x1210] sm:$0xff]
  %v759 = vld [vmem:[%s2 + $0x1218] sm:$0xff]
  %v760 = vld [vmem:[%s2 + $0x1220] sm:$0xff]
  %v761 = vld [vmem:[%s2 + $0x1228] sm:$0xff]
  %v762 = vld [vmem:[%s2 + $0x1230] sm:$0xff]
  %v763 = vld [vmem:[%s2 + $0x1238] sm:$0xff]
  %v764 = vld [vmem:[%s2 + $0x1240] sm:$0xff]
  %v765 = vld [vmem:[%s2 + $0x1248] sm:$0xff]
  %v766 = vld [vmem:[%s2 + $0x1250] sm:$0xff]
  %v767 = vld [vmem:[%s2 + $0x1258] sm:$0xff]
  %v768 = vld [vmem:[%s2 + $0x1260] sm:$0xff]
  %v769 = vld [vmem:[%s2 + $0x1268] sm:$0xff]
  %v770 = vld [vmem:[%s2 + $0x1270] sm:$0xff]
  %v771 = vld [vmem:[%s2 + $0x1278] sm:$0xff]
  %v772 = vld [vmem:[%s2 + $0x1280] sm:$0xff]
  %v773 = vld [vmem:[%s2 + $0x1288] sm:$0xff]
  %v774 = vld [vmem:[%s2 + $0x1290] sm:$0xff]
  %v775 = vld [vmem:[%s2 + $0x1298] sm:$0xff]
  %v776 = vld [vmem:[%s2 + $0x12a0] sm:$0xff]
  %v777 = vld [vmem:[%s2 + $0x12a8] sm:$0xff]
  %v778 = vld [vmem:[%s2 + $0x12b0] sm:$0xff]
  %v779 = vld [vmem:[%s2 + $0x12b8] sm:$0xff]
  %v780 = vld [vmem:[%s2 + $0x12c0] sm:$0xff]
  %v781 = vld [vmem:[%s2 + $0x12c8] sm:$0xff]
  %v782 = vld [vmem:[%s2 + $0x12d0] sm:$0xff]
  %v783 = vld [vmem:[%s2 + $0x12d8] sm:$0xff]
  %v784 = vld [vmem:[%s2 + $0x12e0] sm:$0xff]
  %v785 = vld [vmem:[%s2 + $0x12e8] sm:$0xff]
  %v786 = vld [vmem:[%s2 + $0x12f0] sm:$0xff]
  %v787 = vld [vmem:[%s2 + $0x12f8] sm:$0xff]
  %v788 = vld [vmem:[%s2 + $0x1300] sm:$0xff]
  %v789 = vld [vmem:[%s2 + $0x1308] sm:$0xff]
  %v790 = vld [vmem:[%s2 + $0x1310] sm:$0xff]
  %v791 = vld [vmem:[%s2 + $0x1318] sm:$0xff]
  %v792 = vld [vmem:[%s2 + $0x1320] sm:$0xff]
  %v793 = vld [vmem:[%s2 + $0x1328] sm:$0xff]
  %v794 = vld [vmem:[%s2 + $0x1330] sm:$0xff]
  %v795 = vld [vmem:[%s2 + $0x1338] sm:$0xff]
  %v796 = vld [vmem:[%s2 + $0x1340] sm:$0xff]
  %v797 = vld [vmem:[%s2 + $0x1348] sm:$0xff]
  %v798 = vld [vmem:[%s2 + $0x1350] sm:$0xff]
  %v799 = vld [vmem:[%s2 + $0x1358] sm:$0xff]
  %v800 = vld [vmem:[%s2 + $0x1360] sm:$0xff]
  %v801 = vld [vmem:[%s2 + $0x1368] sm:$0xff]
  %v802 = vld [vmem:[%s2 + $0x1370] sm:$0xff]
  %v803 = vld [vmem:[%s2 + $0x1378] sm:$0xff]
  %v804 = vld [vmem:[%s2 + $0x1380] sm:$0xff]
  %v805 = vld [vmem:[%s2 + $0x1388] sm:$0xff]
  %v806 = vld [vmem:[%s2 + $0x1390] sm:$0xff]
  %v807 = vld [vmem:[%s2 + $0x1398] sm:$0xff]
  %v808 = vld [vmem:[%s2 + $0x13a0] sm:$0xff]
  %v809 = vld [vmem:[%s2 + $0x13a8] sm:$0xff]
  %v810 = vld [vmem:[%s2 + $0x13b0] sm:$0xff]
  %v811 = vld [vmem:[%s2 + $0x13b8] sm:$0xff]
  %v812 = vld [vmem:[%s2 + $0x13c0] sm:$0xff]
  %v813 = vld [vmem:[%s2 + $0x13c8] sm:$0xff]
  %v814 = vld [vmem:[%s2 + $0x13d0] sm:$0xff]
  %v815 = vld [vmem:[%s2 + $0x13d8] sm:$0xff]
  %v816 = vld [vmem:[%s2 + $0x13e0] sm:$0xff]
  %v817 = vld [vmem:[%s2 + $0x13e8] sm:$0xff]
  %v818 = vld [vmem:[%s2 + $0x13f0] sm:$0xff]
  %v819 = vld [vmem:[%s2 + $0x13f8] sm:$0xff]
  %v820 = vld [vmem:[%s2 + $0x1400] sm:$0xff]
  %v821 = vld [vmem:[%s2 + $0x1408] sm:$0xff]
  %v822 = vld [vmem:[%s2 + $0x1410] sm:$0xff]
  %v823 = vld [vmem:[%s2 + $0x1418] sm:$0xff]
  %v824 = vld [vmem:[%s2 + $0x1420] sm:$0xff]
  %v825 = vld [vmem:[%s2 + $0x1428] sm:$0xff]
  %v826 = vld [vmem:[%s2 + $0x1430] sm:$0xff]
  %v827 = vld [vmem:[%s2 + $0x1438] sm:$0xff]
  %v828 = vld [vmem:[%s2 + $0x1440] sm:$0xff]
  %v829 = vld [vmem:[%s2 + $0x1448] sm:$0xff]
  %v830 = vld [vmem:[%s2 + $0x1450] sm:$0xff]
  %v831 = vld [vmem:[%s2 + $0x1458] sm:$0xff]
  %v832 = vld [vmem:[%s2 + $0x1460] sm:$0xff]
  %v833 = vld [vmem:[%s2 + $0x1468] sm:$0xff]
  %v834 = vld [vmem:[%s2 + $0x1470] sm:$0xff]
  %v835 = vld [vmem:[%s2 + $0x1478] sm:$0xff]
  %v836 = vld [vmem:[%s2 + $0x1480] sm:$0xff]
  %v837 = vld [vmem:[%s2 + $0x1488] sm:$0xff]
  %v838 = vld [vmem:[%s2 + $0x1490] sm:$0xff]
  %v839 = vld [vmem:[%s2 + $0x1498] sm:$0xff]
  %v840 = vld [vmem:[%s2 + $0x14a0] sm:$0xff]
  %v841 = vld [vmem:[%s2 + $0x14a8] sm:$0xff]
  %v842 = vld [vmem:[%s2 + $0x14b0] sm:$0xff]
  %v843 = vld [vmem:[%s2 + $0x14b8] sm:$0xff]
  %v844 = vld [vmem:[%s2 + $0x14c0] sm:$0xff]
  %v845 = vld [vmem:[%s2 + $0x14c8] sm:$0xff]
  %v846 = vld [vmem:[%s2 + $0x14d0] sm:$0xff]
  %v847 = vld [vmem:[%s2 + $0x14d8] sm:$0xff]
  %v848 = vld [vmem:[%s2 + $0x14e0] sm:$0xff]
  %v849 = vld [vmem:[%s2 + $0x14e8] sm:$0xff]
  %v850 = vld [vmem:[%s2 + $0x14f0] sm:$0xff]
  %v851 = vld [vmem:[%s2 + $0x14f8] sm:$0xff]
  %v852 = vld [vmem:[%s2 + $0x1500] sm:$0xff]
  %v853 = vld [vmem:[%s2 + $0x1508] sm:$0xff]
  %v854 = vld [vmem:[%s2 + $0x1510] sm:$0xff]
  %v855 = vld [vmem:[%s2 + $0x1518] sm:$0xff]
  %v856 = vld [vmem:[%s2 + $0x1520] sm:$0xff]
  %v857 = vld [vmem:[%s2 + $0x1528] sm:$0xff]
  %v858 = vld [vmem:[%s2 + $0x1530] sm:$0xff]
  %v859 = vld [vmem:[%s2 + $0x1538] sm:$0xff]
  %v860 = vld [vmem:[%s2 + $0x1540] sm:$0xff]
  %v861 = vld [vmem:[%s2 + $0x1548] sm:$0xff]
  %v862 = vld [vmem:[%s2 + $0x1550] sm:$0xff]
  %v863 = vld [vmem:[%s2 + $0x1558] sm:$0xff]
  %v864 = vld [vmem:[%s2 + $0x1560] sm:$0xff]
  %v865 = vld [vmem:[%s2 + $0x1568] sm:$0xff]
  %v866 = vld [vmem:[%s2 + $0x1570] sm:$0xff]
  %v867 = vld [vmem:[%s2 + $0x1578] sm:$0xff]
  %v868 = vld [vmem:[%s2 + $0x1580] sm:$0xff]
  %v869 = vld [vmem:[%s2 + $0x1588] sm:$0xff]
  %v870 = vld [vmem:[%s2 + $0x1590] sm:$0xff]
  %v871 = vld [vmem:[%s2 + $0x1598] sm:$0xff]
  %v872 = vld [vmem:[%s2 + $0x15a0] sm:$0xff]
  %v873 = vld [vmem:[%s2 + $0x15a8] sm:$0xff]
  %v874 = vld [vmem:[%s2 + $0x15b0] sm:$0xff]
  %v875 = vld [vmem:[%s2 + $0x15b8] sm:$0xff]
  %v876 = vld [vmem:[%s2 + $0x15c0] sm:$0xff]
  %v877 = vld [vmem:[%s2 + $0x15c8] sm:$0xff]
  %v878 = vld [vmem:[%s2 + $0x15d0] sm:$0xff]
  %v879 = vld [vmem:[%s2 + $0x15d8] sm:$0xff]
  %v880 = vld [vmem:[%s2 + $0x15e0] sm:$0xff]
  %v881 = vld [vmem:[%s2 + $0x15e8] sm:$0xff]
  %v882 = vld [vmem:[%s2 + $0x15f0] sm:$0xff]
  %v883 = vld [vmem:[%s2 + $0x15f8] sm:$0xff]
  %v884 = vld [vmem:[%s2 + $0x1600] sm:$0xff]
  %v885 = vld [vmem:[%s2 + $0x1608] sm:$0xff]
  %v886 = vld [vmem:[%s2 + $0x1610] sm:$0xff]
  %v887 = vld [vmem:[%s2 + $0x1618] sm:$0xff]
  %v888 = vld [vmem:[%s2 + $0x1620] sm:$0xff]
  %v889 = vld [vmem:[%s2 + $0x1628] sm:$0xff]
  %v890 = vld [vmem:[%s2 + $0x1630] sm:$0xff]
  %v891 = vld [vmem:[%s2 + $0x1638] sm:$0xff]
  %v892 = vld [vmem:[%s2 + $0x1640] sm:$0xff]
  %v893 = vld [vmem:[%s2 + $0x1648] sm:$0xff]
  %v894 = vld [vmem:[%s2 + $0x1650] sm:$0xff]
  %v895 = vld [vmem:[%s2 + $0x1658] sm:$0xff]
  %v896 = vld [vmem:[%s2 + $0x1660] sm:$0xff]
  %v897 = vld [vmem:[%s2 + $0x1668] sm:$0xff]
  %v898 = vld [vmem:[%s2 + $0x1670] sm:$0xff]
  %v899 = vld [vmem:[%s2 + $0x1678] sm:$0xff]
  %v900 = vld [vmem:[%s2 + $0x1680] sm:$0xff]
  %v901 = vld [vmem:[%s2 + $0x1688] sm:$0xff]
  %v902 = vld [vmem:[%s2 + $0x1690] sm:$0xff]
  %v903 = vld [vmem:[%s2 + $0x1698] sm:$0xff]
  %v904 = vld [vmem:[%s2 + $0x16a0] sm:$0xff]
  %v905 = vld [vmem:[%s2 + $0x16a8] sm:$0xff]
  %v906 = vld [vmem:[%s2 + $0x16b0] sm:$0xff]
  %v907 = vld [vmem:[%s2 + $0x16b8] sm:$0xff]
  %v908 = vld [vmem:[%s2 + $0x16c0] sm:$0xff]
  %v909 = vld [vmem:[%s2 + $0x16c8] sm:$0xff]
  %v910 = vld [vmem:[%s2 + $0x16d0] sm:$0xff]
  %v911 = vld [vmem:[%s2 + $0x16d8] sm:$0xff]
  %v912 = vld [vmem:[%s2 + $0x16e0] sm:$0xff]
  %v913 = vld [vmem:[%s2 + $0x16e8] sm:$0xff]
  %v914 = vld [vmem:[%s2 + $0x16f0] sm:$0xff]
  %v915 = vld [vmem:[%s2 + $0x16f8] sm:$0xff]
  %v916 = vld [vmem:[%s2 + $0x1700] sm:$0xff]
  %v917 = vld [vmem:[%s2 + $0x1708] sm:$0xff]
  %v918 = vld [vmem:[%s2 + $0x1710] sm:$0xff]
  %v919 = vld [vmem:[%s2 + $0x1718] sm:$0xff]
  %v920 = vld [vmem:[%s2 + $0x1720] sm:$0xff]
  %v921 = vld [vmem:[%s2 + $0x1728] sm:$0xff]
  %v922 = vld [vmem:[%s2 + $0x1730] sm:$0xff]
  %v923 = vld [vmem:[%s2 + $0x1738] sm:$0xff]
  %v924 = vld [vmem:[%s2 + $0x1740] sm:$0xff]
  %v925 = vld [vmem:[%s2 + $0x1748] sm:$0xff]
  %v926 = vld [vmem:[%s2 + $0x1750] sm:$0xff]
  %v927 = vld [vmem:[%s2 + $0x1758] sm:$0xff]
  %v928 = vld [vmem:[%s2 + $0x1760] sm:$0xff]
  %v929 = vld [vmem:[%s2 + $0x1768] sm:$0xff]
  %v930 = vld [vmem:[%s2 + $0x1770] sm:$0xff]
  %v931 = vld [vmem:[%s2 + $0x1778] sm:$0xff]
  %v932 = vld [vmem:[%s2 + $0x1780] sm:$0xff]
  %v933 = vld [vmem:[%s2 + $0x1788] sm:$0xff]
  %v934 = vld [vmem:[%s2 + $0x1790] sm:$0xff]
  %v935 = vld [vmem:[%s2 + $0x1798] sm:$0xff]
  %v936 = vld [vmem:[%s2 + $0x17a0] sm:$0xff]
  %v937 = vld [vmem:[%s2 + $0x17a8] sm:$0xff]
  %v938 = vld [vmem:[%s2 + $0x17b0] sm:$0xff]
  %v939 = vld [vmem:[%s2 + $0x17b8] sm:$0xff]
  %v940 = vld [vmem:[%s2 + $0x17c0] sm:$0xff]
  %v941 = vld [vmem:[%s2 + $0x17c8] sm:$0xff]
  %v942 = vld [vmem:[%s2 + $0x17d0] sm:$0xff]
  %v943 = vld [vmem:[%s2 + $0x17d8] sm:$0xff]
  %v944 = vld [vmem:[%s2 + $0x17e0] sm:$0xff]
  %v945 = vld [vmem:[%s2 + $0x17e8] sm:$0xff]
  %v946 = vld [vmem:[%s2 + $0x17f0] sm:$0xff]
  %v947 = vld [vmem:[%s2 + $0x17f8] sm:$0xff]
  %v948 = vld [vmem:[%s2 + $0x1800] sm:$0xff]
  %v949 = vld [vmem:[%s2 + $0x1808] sm:$0xff]
  %v950 = vld [vmem:[%s2 + $0x1810] sm:$0xff]
  %v951 = vld [vmem:[%s2 + $0x1818] sm:$0xff]
  %v952 = vld [vmem:[%s2 + $0x1820] sm:$0xff]
  %v953 = vld [vmem:[%s2 + $0x1828] sm:$0xff]
  %v954 = vld [vmem:[%s2 + $0x1830] sm:$0xff]
  %v955 = vld [vmem:[%s2 + $0x1838] sm:$0xff]
  %v956 = vld [vmem:[%s2 + $0x1840] sm:$0xff]
  %v957 = vld [vmem:[%s2 + $0x1848] sm:$0xff]
  %v958 = vld [vmem:[%s2 + $0x1850] sm:$0xff]
  %v959 = vld [vmem:[%s2 + $0x1858] sm:$0xff]
  %v960 = vld [vmem:[%s2 + $0x1860] sm:$0xff]
  %v961 = vld [vmem:[%s2 + $0x1868] sm:$0xff]
  %v962 = vld [vmem:[%s2 + $0x1870] sm:$0xff]
  %v963 = vld [vmem:[%s2 + $0x1878] sm:$0xff]
  %v964 = vld [vmem:[%s2 + $0x1880] sm:$0xff]
  %v965 = vld [vmem:[%s2 + $0x1888] sm:$0xff]
  %v966 = vld [vmem:[%s2 + $0x1890] sm:$0xff]
  %v967 = vld [vmem:[%s2 + $0x1898] sm:$0xff]
  %v968 = vld [vmem:[%s2 + $0x18a0] sm:$0xff]
  %v969 = vld [vmem:[%s2 + $0x18a8] sm:$0xff]
  %v970 = vld [vmem:[%s2 + $0x18b0] sm:$0xff]
  %v971 = vld [vmem:[%s2 + $0x18b8] sm:$0xff]
  %v972 = vld [vmem:[%s2 + $0x18c0] sm:$0xff]
  %v973 = vld [vmem:[%s2 + $0x18c8] sm:$0xff]
  %v974 = vld [vmem:[%s2 + $0x18d0] sm:$0xff]
  %v975 = vld [vmem:[%s2 + $0x18d8] sm:$0xff]
  %v976 = vld [vmem:[%s2 + $0x18e0] sm:$0xff]
  %v977 = vld [vmem:[%s2 + $0x18e8] sm:$0xff]
  %v978 = vld [vmem:[%s2 + $0x18f0] sm:$0xff]
  %v979 = vld [vmem:[%s2 + $0x18f8] sm:$0xff]
  %v980 = vld [vmem:[%s2 + $0x1900] sm:$0xff]
  %v981 = vld [vmem:[%s2 + $0x1908] sm:$0xff]
  %v982 = vld [vmem:[%s2 + $0x1910] sm:$0xff]
  %v983 = vld [vmem:[%s2 + $0x1918] sm:$0xff]
  %v984 = vld [vmem:[%s2 + $0x1920] sm:$0xff]
  %v985 = vld [vmem:[%s2 + $0x1928] sm:$0xff]
  %v986 = vld [vmem:[%s2 + $0x1930] sm:$0xff]
  %v987 = vld [vmem:[%s2 + $0x1938] sm:$0xff]
  %v988 = vld [vmem:[%s2 + $0x1940] sm:$0xff]
  %v989 = vld [vmem:[%s2 + $0x1948] sm:$0xff]
  %v990 = vld [vmem:[%s2 + $0x1950] sm:$0xff]
  %v991 = vld [vmem:[%s2 + $0x1958] sm:$0xff]
  %v992 = vld [vmem:[%s2 + $0x1960] sm:$0xff]
  %v993 = vld [vmem:[%s2 + $0x1968] sm:$0xff]
  %v994 = vld [vmem:[%s2 + $0x1970] sm:$0xff]
  %v995 = vld [vmem:[%s2 + $0x1978] sm:$0xff]
  %v996 = vld [vmem:[%s2 + $0x1980] sm:$0xff]
  %v997 = vld [vmem:[%s2 + $0x1988] sm:$0xff]
  %v998 = vld [vmem:[%s2 + $0x1990] sm:$0xff]
  %v999 = vld [vmem:[%s2 + $0x1998] sm:$0xff]
  %v1000 = vld [vmem:[%s2 + $0x19a0] sm:$0xff]
  %v1001 = vld [vmem:[%s2 + $0x19a8] sm:$0xff]
  %v1002 = vld [vmem:[%s2 + $0x19b0] sm:$0xff]
  %v1003 = vld [vmem:[%s2 + $0x19b8] sm:$0xff]
  %v1004 = vld [vmem:[%s2 + $0x19c0] sm:$0xff]
  %v1005 = vld [vmem:[%s2 + $0x19c8] sm:$0xff]
  %v1006 = vld [vmem:[%s2 + $0x19d0] sm:$0xff]
  %v1007 = vld [vmem:[%s2 + $0x19d8] sm:$0xff]
  %v1008 = vld [vmem:[%s2 + $0x19e0] sm:$0xff]
  %v1009 = vld [vmem:[%s2 + $0x19e8] sm:$0xff]
  %v1010 = vld [vmem:[%s2 + $0x19f0] sm:$0xff]
  %v1011 = vld [vmem:[%s2 + $0x19f8] sm:$0xff]
  %v1012 = vld [vmem:[%s2 + $0x1a00] sm:$0xff]
  %v1013 = vld [vmem:[%s2 + $0x1a08] sm:$0xff]
  %v1014 = vld [vmem:[%s2 + $0x1a10] sm:$0xff]
  %v1015 = vld [vmem:[%s2 + $0x1a18] sm:$0xff]
  %v1016 = vld [vmem:[%s2 + $0x1a20] sm:$0xff]
  %v1017 = vld [vmem:[%s2 + $0x1a28] sm:$0xff]
  %v1018 = vld [vmem:[%s2 + $0x1a30] sm:$0xff]
  %v1019 = vld [vmem:[%s2 + $0x1a38] sm:$0xff]
  %v1020 = vld [vmem:[%s2 + $0x1a40] sm:$0xff]
  %v1021 = vld [vmem:[%s2 + $0x1a48] sm:$0xff]
  %v1022 = vld [vmem:[%s2 + $0x1a50] sm:$0xff]
  %v1023 = vld [vmem:[%s2 + $0x1a58] sm:$0xff]
  %v1024 = vld [vmem:[%s2 + $0x1a60] sm:$0xff]
  %v1025 = vld [vmem:[%s2 + $0x1a68] sm:$0xff]
  %v1026 = vld [vmem:[%s2 + $0x1a70] sm:$0xff]
  %v1027 = vld [vmem:[%s2 + $0x1a78] sm:$0xff]
  %v1028 = vld [vmem:[%s2 + $0x1a80] sm:$0xff]
  %v1029 = vld [vmem:[%s2 + $0x1a88] sm:$0xff]
  %v1030 = vld [vmem:[%s2 + $0x1a90] sm:$0xff]
  %v1031 = vld [vmem:[%s2 + $0x1a98] sm:$0xff]
  %v1032 = vld [vmem:[%s2 + $0x1aa0] sm:$0xff]
  %v1033 = vld [vmem:[%s2 + $0x1aa8] sm:$0xff]
  %v1034 = vld [vmem:[%s2 + $0x1ab0] sm:$0xff]
  %v1035 = vld [vmem:[%s2 + $0x1ab8] sm:$0xff]
  %v1036 = vld [vmem:[%s2 + $0x1ac0] sm:$0xff]
  %v1037 = vld [vmem:[%s2 + $0x1ac8] sm:$0xff]
  %v1038 = vld [vmem:[%s2 + $0x1ad0] sm:$0xff]
  %v1039 = vld [vmem:[%s2 + $0x1ad8] sm:$0xff]
  %v1040 = vld [vmem:[%s2 + $0x1ae0] sm:$0xff]
  %v1041 = vld [vmem:[%s2 + $0x1ae8] sm:$0xff]
  %v1042 = vld [vmem:[%s2 + $0x1af0] sm:$0xff]
  %v1043 = vld [vmem:[%s2 + $0x1af8] sm:$0xff]
  %v1044 = vld [vmem:[%s2 + $0x1b00] sm:$0xff]
  %v1045 = vld [vmem:[%s2 + $0x1b08] sm:$0xff]
  %v1046 = vld [vmem:[%s2 + $0x1b10] sm:$0xff]
  %v1047 = vld [vmem:[%s2 + $0x1b18] sm:$0xff]
  %v1048 = vld [vmem:[%s2 + $0x1b20] sm:$0xff]
  %v1049 = vld [vmem:[%s2 + $0x1b28] sm:$0xff]
  %v1050 = vld [vmem:[%s2 + $0x1b30] sm:$0xff]
  %v1051 = vld [vmem:[%s2 + $0x1b38] sm:$0xff]
  %v1052 = vld [vmem:[%s2 + $0x1b40] sm:$0xff]
  %v1053 = vld [vmem:[%s2 + $0x1b48] sm:$0xff]
  %v1054 = vld [vmem:[%s2 + $0x1b50] sm:$0xff]
  %v1055 = vld [vmem:[%s2 + $0x1b58] sm:$0xff]
  %v1056 = vld [vmem:[%s2 + $0x1b60] sm:$0xff]
  %v1057 = vld [vmem:[%s2 + $0x1b68] sm:$0xff]
  %v1058 = vld [vmem:[%s2 + $0x1b70] sm:$0xff]
  %v1059 = vld [vmem:[%s2 + $0x1b78] sm:$0xff]
  %v1060 = vld [vmem:[%s2 + $0x1b80] sm:$0xff]
  %v1061 = vld [vmem:[%s2 + $0x1b88] sm:$0xff]
  %v1062 = vld [vmem:[%s2 + $0x1b90] sm:$0xff]
  %v1063 = vld [vmem:[%s2 + $0x1b98] sm:$0xff]
  %v1064 = vld [vmem:[%s2 + $0x1ba0] sm:$0xff]
  %v1065 = vld [vmem:[%s2 + $0x1ba8] sm:$0xff]
  %v1066 = vld [vmem:[%s2 + $0x1bb0] sm:$0xff]
  %v1067 = vld [vmem:[%s2 + $0x1bb8] sm:$0xff]
  %v1068 = vld [vmem:[%s2 + $0x1bc0] sm:$0xff]
  %v1069 = vld [vmem:[%s2 + $0x1bc8] sm:$0xff]
  %v1070 = vld [vmem:[%s2 + $0x1bd0] sm:$0xff]
  %v1071 = vld [vmem:[%s2 + $0x1bd8] sm:$0xff]
  %v1072 = vld [vmem:[%s2 + $0x1be0] sm:$0xff]
  %v1073 = vld [vmem:[%s2 + $0x1be8] sm:$0xff]
  %v1074 = vld [vmem:[%s2 + $0x1bf0] sm:$0xff]
  %v1075 = vld [vmem:[%s2 + $0x1bf8] sm:$0xff]
  %v1076 = vld [vmem:[%s2 + $0x1c00] sm:$0xff]
  %v1077 = vld [vmem:[%s2 + $0x1c08] sm:$0xff]
  %v1078 = vld [vmem:[%s2 + $0x1c10] sm:$0xff]
  %v1079 = vld [vmem:[%s2 + $0x1c18] sm:$0xff]
  %v1080 = vld [vmem:[%s2 + $0x1c20] sm:$0xff]
  %v1081 = vld [vmem:[%s2 + $0x1c28] sm:$0xff]
  %v1082 = vld [vmem:[%s2 + $0x1c30] sm:$0xff]
  %v1083 = vld [vmem:[%s2 + $0x1c38] sm:$0xff]
  %v1084 = vld [vmem:[%s2 + $0x1c40] sm:$0xff]
  %v1085 = vld [vmem:[%s2 + $0x1c48] sm:$0xff]
  %v1086 = vld [vmem:[%s2 + $0x1c50] sm:$0xff]
  %v1087 = vld [vmem:[%s2 + $0x1c58] sm:$0xff]
  %v1088 = vld [vmem:[%s2 + $0x1c60] sm:$0xff]
  %v1089 = vld [vmem:[%s2 + $0x1c68] sm:$0xff]
  %v1090 = vld [vmem:[%s2 + $0x1c70] sm:$0xff]
  %v1091 = vld [vmem:[%s2 + $0x1c78] sm:$0xff]
  %v1092 = vld [vmem:[%s2 + $0x1c80] sm:$0xff]
  %v1093 = vld [vmem:[%s2 + $0x1c88] sm:$0xff]
  %v1094 = vld [vmem:[%s2 + $0x1c90] sm:$0xff]
  %v1095 = vld [vmem:[%s2 + $0x1c98] sm:$0xff]
  %v1096 = vld [vmem:[%s2 + $0x1ca0] sm:$0xff]
  %v1097 = vld [vmem:[%s2 + $0x1ca8] sm:$0xff]
  %v1098 = vld [vmem:[%s2 + $0x1cb0] sm:$0xff]
  %v1099 = vld [vmem:[%s2 + $0x1cb8] sm:$0xff]
  %v1100 = vld [vmem:[%s2 + $0x1cc0] sm:$0xff]
  %v1101 = vld [vmem:[%s2 + $0x1cc8] sm:$0xff]
  %v1102 = vld [vmem:[%s2 + $0x1cd0] sm:$0xff]
  %v1103 = vld [vmem:[%s2 + $0x1cd8] sm:$0xff]
  %v1104 = vld [vmem:[%s2 + $0x1ce0] sm:$0xff]
  %v1105 = vld [vmem:[%s2 + $0x1ce8] sm:$0xff]
  %v1106 = vld [vmem:[%s2 + $0x1cf0] sm:$0xff]
  %v1107 = vld [vmem:[%s2 + $0x1cf8] sm:$0xff]
  %v1108 = vld [vmem:[%s2 + $0x1d00] sm:$0xff]
  %v1109 = vld [vmem:[%s2 + $0x1d08] sm:$0xff]
  %v1110 = vld [vmem:[%s2 + $0x1d10] sm:$0xff]
  %v1111 = vld [vmem:[%s2 + $0x1d18] sm:$0xff]
  %v1112 = vld [vmem:[%s2 + $0x1d20] sm:$0xff]
  %v1113 = vld [vmem:[%s2 + $0x1d28] sm:$0xff]
  %v1114 = vld [vmem:[%s2 + $0x1d30] sm:$0xff]
  %v1115 = vld [vmem:[%s2 + $0x1d38] sm:$0xff]
  %v1116 = vld [vmem:[%s2 + $0x1d40] sm:$0xff]
  %v1117 = vld [vmem:[%s2 + $0x1d48] sm:$0xff]
  %v1118 = vld [vmem:[%s2 + $0x1d50] sm:$0xff]
  %v1119 = vld [vmem:[%s2 + $0x1d58] sm:$0xff]
  %v1120 = vld [vmem:[%s2 + $0x1d60] sm:$0xff]
  %v1121 = vld [vmem:[%s2 + $0x1d68] sm:$0xff]
  %v1122 = vld [vmem:[%s2 + $0x1d70] sm:$0xff]
  %v1123 = vld [vmem:[%s2 + $0x1d78] sm:$0xff]
  %v1124 = vld [vmem:[%s2 + $0x1d80] sm:$0xff]
  %v1125 = vld [vmem:[%s2 + $0x1d88] sm:$0xff]
  %v1126 = vld [vmem:[%s2 + $0x1d90] sm:$0xff]
  %v1127 = vld [vmem:[%s2 + $0x1d98] sm:$0xff]
  %v1128 = vld [vmem:[%s2 + $0x1da0] sm:$0xff]
  %v1129 = vld [vmem:[%s2 + $0x1da8] sm:$0xff]
  %v1130 = vld [vmem:[%s2 + $0x1db0] sm:$0xff]
  %v1131 = vld [vmem:[%s2 + $0x1db8] sm:$0xff]
  %v1132 = vld [vmem:[%s2 + $0x1dc0] sm:$0xff]
  %v1133 = vld [vmem:[%s2 + $0x1dc8] sm:$0xff]
  %v1134 = vld [vmem:[%s2 + $0x1dd0] sm:$0xff]
  %v1135 = vld [vmem:[%s2 + $0x1dd8] sm:$0xff]
  %v1136 = vld [vmem:[%s2 + $0x1de0] sm:$0xff]
  %v1137 = vld [vmem:[%s2 + $0x1de8] sm:$0xff]
  %v1138 = vld [vmem:[%s2 + $0x1df0] sm:$0xff]
  %v1139 = vld [vmem:[%s2 + $0x1df8] sm:$0xff]
  %v1140 = vld [vmem:[%s2 + $0x1e00] sm:$0xff]
  %v1141 = vld [vmem:[%s2 + $0x1e08] sm:$0xff]
  %v1142 = vld [vmem:[%s2 + $0x1e10] sm:$0xff]
  %v1143 = vld [vmem:[%s2 + $0x1e18] sm:$0xff]
  %v1144 = vld [vmem:[%s2 + $0x1e20] sm:$0xff]
  %v1145 = vld [vmem:[%s2 + $0x1e28] sm:$0xff]
  %v1146 = vld [vmem:[%s2 + $0x1e30] sm:$0xff]
  %v1147 = vld [vmem:[%s2 + $0x1e38] sm:$0xff]
  %v1148 = vld [vmem:[%s2 + $0x1e40] sm:$0xff]
  %v1149 = vld [vmem:[%s2 + $0x1e48] sm:$0xff]
  %v1150 = vld [vmem:[%s2 + $0x1e50] sm:$0xff]
  %v1151 = vld [vmem:[%s2 + $0x1e58] sm:$0xff]
  %v1152 = vld [vmem:[%s2 + $0x1e60] sm:$0xff]
  %v1153 = vld [vmem:[%s2 + $0x1e68] sm:$0xff]
  %v1154 = vld [vmem:[%s2 + $0x1e70] sm:$0xff]
  %v1155 = vld [vmem:[%s2 + $0x1e78] sm:$0xff]
  %v1156 = vld [vmem:[%s2 + $0x1e80] sm:$0xff]
  %v1157 = vld [vmem:[%s2 + $0x1e88] sm:$0xff]
  %v1158 = vld [vmem:[%s2 + $0x1e90] sm:$0xff]
  %v1159 = vld [vmem:[%s2 + $0x1e98] sm:$0xff]
  %v1160 = vld [vmem:[%s2 + $0x1ea0] sm:$0xff]
  %v1161 = vld [vmem:[%s2 + $0x1ea8] sm:$0xff]
  %v1162 = vld [vmem:[%s2 + $0x1eb0] sm:$0xff]
  %v1163 = vld [vmem:[%s2 + $0x1eb8] sm:$0xff]
  %v1164 = vld [vmem:[%s2 + $0x1ec0] sm:$0xff]
  %v1165 = vld [vmem:[%s2 + $0x1ec8] sm:$0xff]
  %v1166 = vld [vmem:[%s2 + $0x1ed0] sm:$0xff]
  %v1167 = vld [vmem:[%s2 + $0x1ed8] sm:$0xff]
  %v1168 = vld [vmem:[%s2 + $0x1ee0] sm:$0xff]
  %v1169 = vld [vmem:[%s2 + $0x1ee8] sm:$0xff]
  %v1170 = vld [vmem:[%s2 + $0x1ef0] sm:$0xff]
  %v1171 = vld [vmem:[%s2 + $0x1ef8] sm:$0xff]
  %v1172 = vld [vmem:[%s2 + $0x1f00] sm:$0xff]
  %v1173 = vld [vmem:[%s2 + $0x1f08] sm:$0xff]
  %v1174 = vld [vmem:[%s2 + $0x1f10] sm:$0xff]
  %v1175 = vld [vmem:[%s2 + $0x1f18] sm:$0xff]
  %v1176 = vld [vmem:[%s2 + $0x1f20] sm:$0xff]
  %v1177 = vld [vmem:[%s2 + $0x1f28] sm:$0xff]
  %v1178 = vld [vmem:[%s2 + $0x1f30] sm:$0xff]
  %v1179 = vld [vmem:[%s2 + $0x1f38] sm:$0xff]
  %v1180 = vld [vmem:[%s2 + $0x1f40] sm:$0xff]
  %v1181 = vld [vmem:[%s2 + $0x1f48] sm:$0xff]
  %v1182 = vld [vmem:[%s2 + $0x1f50] sm:$0xff]
  %v1183 = vld [vmem:[%s2 + $0x1f58] sm:$0xff]
  %v1184 = vld [vmem:[%s2 + $0x1f60] sm:$0xff]
  %v1185 = vld [vmem:[%s2 + $0x1f68] sm:$0xff]
  %v1186 = vld [vmem:[%s2 + $0x1f70] sm:$0xff]
  %v1187 = vld [vmem:[%s2 + $0x1f78] sm:$0xff]
  %v1188 = vld [vmem:[%s2 + $0x1f80] sm:$0xff]
  %v1189 = vld [vmem:[%s2 + $0x1f88] sm:$0xff]
  %v1190 = vld [vmem:[%s2 + $0x1f90] sm:$0xff]
  %v1191 = vld [vmem:[%s2 + $0x1f98] sm:$0xff]
  %v1192 = vld [vmem:[%s2 + $0x1fa0] sm:$0xff]
  %v1193 = vld [vmem:[%s2 + $0x1fa8] sm:$0xff]
  %v1194 = vld [vmem:[%s2 + $0x1fb0] sm:$0xff]
  %v1195 = vld [vmem:[%s2 + $0x1fb8] sm:$0xff]
  %v1196 = vld [vmem:[%s2 + $0x1fc0] sm:$0xff]
  %v1197 = vld [vmem:[%s2 + $0x1fc8] sm:$0xff]
  %v1198 = vld [vmem:[%s2 + $0x1fd0] sm:$0xff]
  %v1199 = vld [vmem:[%s2 + $0x1fd8] sm:$0xff]
  %v1200 = vld [vmem:[%s2 + $0x1fe0] sm:$0xff]
  %v1201 = vld [vmem:[%s2 + $0x1fe8] sm:$0xff]
  %v1202 = vld [vmem:[%s2 + $0x1ff0] sm:$0xff]
  %v1203 = vld [vmem:[%s2 + $0x1ff8] sm:$0xff]
  %v2228 = vunpack.c.l.b16 %v180
  %v2229 = vunpack.c.h.b16 %v180
  %v2230 = vunpack.c.l.b16 %v181
  %v2231 = vunpack.c.h.b16 %v181
  %v2232 = vunpack.c.l.b16 %v182
  %v2233 = vunpack.c.h.b16 %v182
  %v2234 = vunpack.c.l.b16 %v183
  %v2235 = vunpack.c.h.b16 %v183
  %v2236 = vunpack.c.l.b16 %v184
  %v2237 = vunpack.c.h.b16 %v184
  %v2238 = vunpack.c.l.b16 %v185
  %v2239 = vunpack.c.h.b16 %v185
  %v2240 = vunpack.c.l.b16 %v186
  %v2241 = vunpack.c.h.b16 %v186
  %v2242 = vunpack.c.l.b16 %v187
  %v2243 = vunpack.c.h.b16 %v187
  %v2244 = vunpack.c.l.b16 %v188
  %v2245 = vunpack.c.h.b16 %v188
  %v2246 = vunpack.c.l.b16 %v189
  %v2247 = vunpack.c.h.b16 %v189
  %v2248 = vunpack.c.l.b16 %v190
  %v2249 = vunpack.c.h.b16 %v190
  %v2250 = vunpack.c.l.b16 %v191
  %v2251 = vunpack.c.h.b16 %v191
  %v2252 = vunpack.c.l.b16 %v192
  %v2253 = vunpack.c.h.b16 %v192
  %v2254 = vunpack.c.l.b16 %v193
  %v2255 = vunpack.c.h.b16 %v193
  %v2256 = vunpack.c.l.b16 %v194
  %v2257 = vunpack.c.h.b16 %v194
  %v2258 = vunpack.c.l.b16 %v195
  %v2259 = vunpack.c.h.b16 %v195
  %v2260 = vunpack.c.l.b16 %v196
  %v2261 = vunpack.c.h.b16 %v196
  %v2262 = vunpack.c.l.b16 %v197
  %v2263 = vunpack.c.h.b16 %v197
  %v2264 = vunpack.c.l.b16 %v198
  %v2265 = vunpack.c.h.b16 %v198
  %v2266 = vunpack.c.l.b16 %v199
  %v2267 = vunpack.c.h.b16 %v199
  %v2268 = vunpack.c.l.b16 %v200
  %v2269 = vunpack.c.h.b16 %v200
  %v2270 = vunpack.c.l.b16 %v201
  %v2271 = vunpack.c.h.b16 %v201
  %v2272 = vunpack.c.l.b16 %v202
  %v2273 = vunpack.c.h.b16 %v202
  %v2274 = vunpack.c.l.b16 %v203
  %v2275 = vunpack.c.h.b16 %v203
  %v2276 = vunpack.c.l.b16 %v204
  %v2277 = vunpack.c.h.b16 %v204
  %v2278 = vunpack.c.l.b16 %v205
  %v2279 = vunpack.c.h.b16 %v205
  %v2280 = vunpack.c.l.b16 %v206
  %v2281 = vunpack.c.h.b16 %v206
  %v2282 = vunpack.c.l.b16 %v207
  %v2283 = vunpack.c.h.b16 %v207
  %v2284 = vunpack.c.l.b16 %v208
  %v2285 = vunpack.c.h.b16 %v208
  %v2286 = vunpack.c.l.b16 %v209
  %v2287 = vunpack.c.h.b16 %v209
  %v2288 = vunpack.c.l.b16 %v210
  %v2289 = vunpack.c.h.b16 %v210
  %v2290 = vunpack.c.l.b16 %v211
  %v2291 = vunpack.c.h.b16 %v211
  %v2292 = vunpack.c.l.b16 %v212
  %v2293 = vunpack.c.h.b16 %v212
  %v2294 = vunpack.c.l.b16 %v213
  %v2295 = vunpack.c.h.b16 %v213
  %v2296 = vunpack.c.l.b16 %v214
  %v2297 = vunpack.c.h.b16 %v214
  %v2298 = vunpack.c.l.b16 %v215
  %v2299 = vunpack.c.h.b16 %v215
  %v2300 = vunpack.c.l.b16 %v216
  %v2301 = vunpack.c.h.b16 %v216
  %v2302 = vunpack.c.l.b16 %v217
  %v2303 = vunpack.c.h.b16 %v217
  %v2304 = vunpack.c.l.b16 %v218
  %v2305 = vunpack.c.h.b16 %v218
  %v2306 = vunpack.c.l.b16 %v219
  %v2307 = vunpack.c.h.b16 %v219
  %v2308 = vunpack.c.l.b16 %v220
  %v2309 = vunpack.c.h.b16 %v220
  %v2310 = vunpack.c.l.b16 %v221
  %v2311 = vunpack.c.h.b16 %v221
  %v2312 = vunpack.c.l.b16 %v222
  %v2313 = vunpack.c.h.b16 %v222
  %v2314 = vunpack.c.l.b16 %v223
  %v2315 = vunpack.c.h.b16 %v223
  %v2316 = vunpack.c.l.b16 %v224
  %v2317 = vunpack.c.h.b16 %v224
  %v2318 = vunpack.c.l.b16 %v225
  %v2319 = vunpack.c.h.b16 %v225
  %v2320 = vunpack.c.l.b16 %v226
  %v2321 = vunpack.c.h.b16 %v226
  %v2322 = vunpack.c.l.b16 %v227
  %v2323 = vunpack.c.h.b16 %v227
  %v2324 = vunpack.c.l.b16 %v228
  %v2325 = vunpack.c.h.b16 %v228
  %v2326 = vunpack.c.l.b16 %v229
  %v2327 = vunpack.c.h.b16 %v229
  %v2328 = vunpack.c.l.b16 %v230
  %v2329 = vunpack.c.h.b16 %v230
  %v2330 = vunpack.c.l.b16 %v231
  %v2331 = vunpack.c.h.b16 %v231
  %v2332 = vunpack.c.l.b16 %v232
  %v2333 = vunpack.c.h.b16 %v232
  %v2334 = vunpack.c.l.b16 %v233
  %v2335 = vunpack.c.h.b16 %v233
  %v2336 = vunpack.c.l.b16 %v234
  %v2337 = vunpack.c.h.b16 %v234
  %v2338 = vunpack.c.l.b16 %v235
  %v2339 = vunpack.c.h.b16 %v235
  %v2340 = vunpack.c.l.b16 %v236
  %v2341 = vunpack.c.h.b16 %v236
  %v2342 = vunpack.c.l.b16 %v237
  %v2343 = vunpack.c.h.b16 %v237
  %v2344 = vunpack.c.l.b16 %v238
  %v2345 = vunpack.c.h.b16 %v238
  %v2346 = vunpack.c.l.b16 %v239
  %v2347 = vunpack.c.h.b16 %v239
  %v2348 = vunpack.c.l.b16 %v240
  %v2349 = vunpack.c.h.b16 %v240
  %v2350 = vunpack.c.l.b16 %v241
  %v2351 = vunpack.c.h.b16 %v241
  %v2352 = vunpack.c.l.b16 %v242
  %v2353 = vunpack.c.h.b16 %v242
  %v2354 = vunpack.c.l.b16 %v243
  %v2355 = vunpack.c.h.b16 %v243
  %v2356 = vunpack.c.l.b16 %v244
  %v2357 = vunpack.c.h.b16 %v244
  %v2358 = vunpack.c.l.b16 %v245
  %v2359 = vunpack.c.h.b16 %v245
  %v2360 = vunpack.c.l.b16 %v246
  %v2361 = vunpack.c.h.b16 %v246
  %v2362 = vunpack.c.l.b16 %v247
  %v2363 = vunpack.c.h.b16 %v247
  %v2364 = vunpack.c.l.b16 %v248
  %v2365 = vunpack.c.h.b16 %v248
  %v2366 = vunpack.c.l.b16 %v249
  %v2367 = vunpack.c.h.b16 %v249
  %v2368 = vunpack.c.l.b16 %v250
  %v2369 = vunpack.c.h.b16 %v250
  %v2370 = vunpack.c.l.b16 %v251
  %v2371 = vunpack.c.h.b16 %v251
  %v2372 = vunpack.c.l.b16 %v252
  %v2373 = vunpack.c.h.b16 %v252
  %v2374 = vunpack.c.l.b16 %v253
  %v2375 = vunpack.c.h.b16 %v253
  %v2376 = vunpack.c.l.b16 %v254
  %v2377 = vunpack.c.h.b16 %v254
  %v2378 = vunpack.c.l.b16 %v255
  %v2379 = vunpack.c.h.b16 %v255
  %v2380 = vunpack.c.l.b16 %v256
  %v2381 = vunpack.c.h.b16 %v256
  %v2382 = vunpack.c.l.b16 %v257
  %v2383 = vunpack.c.h.b16 %v257
  %v2384 = vunpack.c.l.b16 %v258
  %v2385 = vunpack.c.h.b16 %v258
  %v2386 = vunpack.c.l.b16 %v259
  %v2387 = vunpack.c.h.b16 %v259
  %v2388 = vunpack.c.l.b16 %v260
  %v2389 = vunpack.c.h.b16 %v260
  %v2390 = vunpack.c.l.b16 %v261
  %v2391 = vunpack.c.h.b16 %v261
  %v2392 = vunpack.c.l.b16 %v262
  %v2393 = vunpack.c.h.b16 %v262
  %v2394 = vunpack.c.l.b16 %v263
  %v2395 = vunpack.c.h.b16 %v263
  %v2396 = vunpack.c.l.b16 %v264
  %v2397 = vunpack.c.h.b16 %v264
  %v2398 = vunpack.c.l.b16 %v265
  %v2399 = vunpack.c.h.b16 %v265
  %v2400 = vunpack.c.l.b16 %v266
  %v2401 = vunpack.c.h.b16 %v266
  %v2402 = vunpack.c.l.b16 %v267
  %v2403 = vunpack.c.h.b16 %v267
  %v2404 = vunpack.c.l.b16 %v268
  %v2405 = vunpack.c.h.b16 %v268
  %v2406 = vunpack.c.l.b16 %v269
  %v2407 = vunpack.c.h.b16 %v269
  %v2408 = vunpack.c.l.b16 %v270
  %v2409 = vunpack.c.h.b16 %v270
  %v2410 = vunpack.c.l.b16 %v271
  %v2411 = vunpack.c.h.b16 %v271
  %v2412 = vunpack.c.l.b16 %v272
  %v2413 = vunpack.c.h.b16 %v272
  %v2414 = vunpack.c.l.b16 %v273
  %v2415 = vunpack.c.h.b16 %v273
  %v2416 = vunpack.c.l.b16 %v274
  %v2417 = vunpack.c.h.b16 %v274
  %v2418 = vunpack.c.l.b16 %v275
  %v2419 = vunpack.c.h.b16 %v275
  %v2420 = vunpack.c.l.b16 %v276
  %v2421 = vunpack.c.h.b16 %v276
  %v2422 = vunpack.c.l.b16 %v277
  %v2423 = vunpack.c.h.b16 %v277
  %v2424 = vunpack.c.l.b16 %v278
  %v2425 = vunpack.c.h.b16 %v278
  %v2426 = vunpack.c.l.b16 %v279
  %v2427 = vunpack.c.h.b16 %v279
  %v2428 = vunpack.c.l.b16 %v280
  %v2429 = vunpack.c.h.b16 %v280
  %v2430 = vunpack.c.l.b16 %v281
  %v2431 = vunpack.c.h.b16 %v281
  %v2432 = vunpack.c.l.b16 %v282
  %v2433 = vunpack.c.h.b16 %v282
  %v2434 = vunpack.c.l.b16 %v283
  %v2435 = vunpack.c.h.b16 %v283
  %v2436 = vunpack.c.l.b16 %v284
  %v2437 = vunpack.c.h.b16 %v284
  %v2438 = vunpack.c.l.b16 %v285
  %v2439 = vunpack.c.h.b16 %v285
  %v2440 = vunpack.c.l.b16 %v286
  %v2441 = vunpack.c.h.b16 %v286
  %v2442 = vunpack.c.l.b16 %v287
  %v2443 = vunpack.c.h.b16 %v287
  %v2444 = vunpack.c.l.b16 %v288
  %v2445 = vunpack.c.h.b16 %v288
  %v2446 = vunpack.c.l.b16 %v289
  %v2447 = vunpack.c.h.b16 %v289
  %v2448 = vunpack.c.l.b16 %v290
  %v2449 = vunpack.c.h.b16 %v290
  %v2450 = vunpack.c.l.b16 %v291
  %v2451 = vunpack.c.h.b16 %v291
  %v2452 = vunpack.c.l.b16 %v292
  %v2453 = vunpack.c.h.b16 %v292
  %v2454 = vunpack.c.l.b16 %v293
  %v2455 = vunpack.c.h.b16 %v293
  %v2456 = vunpack.c.l.b16 %v294
  %v2457 = vunpack.c.h.b16 %v294
  %v2458 = vunpack.c.l.b16 %v295
  %v2459 = vunpack.c.h.b16 %v295
  %v2460 = vunpack.c.l.b16 %v296
  %v2461 = vunpack.c.h.b16 %v296
  %v2462 = vunpack.c.l.b16 %v297
  %v2463 = vunpack.c.h.b16 %v297
  %v2464 = vunpack.c.l.b16 %v298
  %v2465 = vunpack.c.h.b16 %v298
  %v2466 = vunpack.c.l.b16 %v299
  %v2467 = vunpack.c.h.b16 %v299
  %v2468 = vunpack.c.l.b16 %v300
  %v2469 = vunpack.c.h.b16 %v300
  %v2470 = vunpack.c.l.b16 %v301
  %v2471 = vunpack.c.h.b16 %v301
  %v2472 = vunpack.c.l.b16 %v302
  %v2473 = vunpack.c.h.b16 %v302
  %v2474 = vunpack.c.l.b16 %v303
  %v2475 = vunpack.c.h.b16 %v303
  %v2476 = vunpack.c.l.b16 %v304
  %v2477 = vunpack.c.h.b16 %v304
  %v2478 = vunpack.c.l.b16 %v305
  %v2479 = vunpack.c.h.b16 %v305
  %v2480 = vunpack.c.l.b16 %v306
  %v2481 = vunpack.c.h.b16 %v306
  %v2482 = vunpack.c.l.b16 %v307
  %v2483 = vunpack.c.h.b16 %v307
  %v2484 = vunpack.c.l.b16 %v308
  %v2485 = vunpack.c.h.b16 %v308
  %v2486 = vunpack.c.l.b16 %v309
  %v2487 = vunpack.c.h.b16 %v309
  %v2488 = vunpack.c.l.b16 %v310
  %v2489 = vunpack.c.h.b16 %v310
  %v2490 = vunpack.c.l.b16 %v311
  %v2491 = vunpack.c.h.b16 %v311
  %v2492 = vunpack.c.l.b16 %v312
  %v2493 = vunpack.c.h.b16 %v312
  %v2494 = vunpack.c.l.b16 %v313
  %v2495 = vunpack.c.h.b16 %v313
  %v2496 = vunpack.c.l.b16 %v314
  %v2497 = vunpack.c.h.b16 %v314
  %v2498 = vunpack.c.l.b16 %v315
  %v2499 = vunpack.c.h.b16 %v315
  %v2500 = vunpack.c.l.b16 %v316
  %v2501 = vunpack.c.h.b16 %v316
  %v2502 = vunpack.c.l.b16 %v317
  %v2503 = vunpack.c.h.b16 %v317
  %v2504 = vunpack.c.l.b16 %v318
  %v2505 = vunpack.c.h.b16 %v318
  %v2506 = vunpack.c.l.b16 %v319
  %v2507 = vunpack.c.h.b16 %v319
  %v2508 = vunpack.c.l.b16 %v320
  %v2509 = vunpack.c.h.b16 %v320
  %v2510 = vunpack.c.l.b16 %v321
  %v2511 = vunpack.c.h.b16 %v321
  %v2512 = vunpack.c.l.b16 %v322
  %v2513 = vunpack.c.h.b16 %v322
  %v2514 = vunpack.c.l.b16 %v323
  %v2515 = vunpack.c.h.b16 %v323
  %v2516 = vunpack.c.l.b16 %v324
  %v2517 = vunpack.c.h.b16 %v324
  %v2518 = vunpack.c.l.b16 %v325
  %v2519 = vunpack.c.h.b16 %v325
  %v2520 = vunpack.c.l.b16 %v326
  %v2521 = vunpack.c.h.b16 %v326
  %v2522 = vunpack.c.l.b16 %v327
  %v2523 = vunpack.c.h.b16 %v327
  %v2524 = vunpack.c.l.b16 %v328
  %v2525 = vunpack.c.h.b16 %v328
  %v2526 = vunpack.c.l.b16 %v329
  %v2527 = vunpack.c.h.b16 %v329
  %v2528 = vunpack.c.l.b16 %v330
  %v2529 = vunpack.c.h.b16 %v330
  %v2530 = vunpack.c.l.b16 %v331
  %v2531 = vunpack.c.h.b16 %v331
  %v2532 = vunpack.c.l.b16 %v332
  %v2533 = vunpack.c.h.b16 %v332
  %v2534 = vunpack.c.l.b16 %v333
  %v2535 = vunpack.c.h.b16 %v333
  %v2536 = vunpack.c.l.b16 %v334
  %v2537 = vunpack.c.h.b16 %v334
  %v2538 = vunpack.c.l.b16 %v335
  %v2539 = vunpack.c.h.b16 %v335
  %v2540 = vunpack.c.l.b16 %v336
  %v2541 = vunpack.c.h.b16 %v336
  %v2542 = vunpack.c.l.b16 %v337
  %v2543 = vunpack.c.h.b16 %v337
  %v2544 = vunpack.c.l.b16 %v338
  %v2545 = vunpack.c.h.b16 %v338
  %v2546 = vunpack.c.l.b16 %v339
  %v2547 = vunpack.c.h.b16 %v339
  %v2548 = vunpack.c.l.b16 %v340
  %v2549 = vunpack.c.h.b16 %v340
  %v2550 = vunpack.c.l.b16 %v341
  %v2551 = vunpack.c.h.b16 %v341
  %v2552 = vunpack.c.l.b16 %v342
  %v2553 = vunpack.c.h.b16 %v342
  %v2554 = vunpack.c.l.b16 %v343
  %v2555 = vunpack.c.h.b16 %v343
  %v2556 = vunpack.c.l.b16 %v344
  %v2557 = vunpack.c.h.b16 %v344
  %v2558 = vunpack.c.l.b16 %v345
  %v2559 = vunpack.c.h.b16 %v345
  %v2560 = vunpack.c.l.b16 %v346
  %v2561 = vunpack.c.h.b16 %v346
  %v2562 = vunpack.c.l.b16 %v347
  %v2563 = vunpack.c.h.b16 %v347
  %v2564 = vunpack.c.l.b16 %v348
  %v2565 = vunpack.c.h.b16 %v348
  %v2566 = vunpack.c.l.b16 %v349
  %v2567 = vunpack.c.h.b16 %v349
  %v2568 = vunpack.c.l.b16 %v350
  %v2569 = vunpack.c.h.b16 %v350
  %v2570 = vunpack.c.l.b16 %v351
  %v2571 = vunpack.c.h.b16 %v351
  %v2572 = vunpack.c.l.b16 %v352
  %v2573 = vunpack.c.h.b16 %v352
  %v2574 = vunpack.c.l.b16 %v353
  %v2575 = vunpack.c.h.b16 %v353
  %v2576 = vunpack.c.l.b16 %v354
  %v2577 = vunpack.c.h.b16 %v354
  %v2578 = vunpack.c.l.b16 %v355
  %v2579 = vunpack.c.h.b16 %v355
  %v2580 = vunpack.c.l.b16 %v356
  %v2581 = vunpack.c.h.b16 %v356
  %v2582 = vunpack.c.l.b16 %v357
  %v2583 = vunpack.c.h.b16 %v357
  %v2584 = vunpack.c.l.b16 %v358
  %v2585 = vunpack.c.h.b16 %v358
  %v2586 = vunpack.c.l.b16 %v359
  %v2587 = vunpack.c.h.b16 %v359
  %v2588 = vunpack.c.l.b16 %v360
  %v2589 = vunpack.c.h.b16 %v360
  %v2590 = vunpack.c.l.b16 %v361
  %v2591 = vunpack.c.h.b16 %v361
  %v2592 = vunpack.c.l.b16 %v362
  %v2593 = vunpack.c.h.b16 %v362
  %v2594 = vunpack.c.l.b16 %v363
  %v2595 = vunpack.c.h.b16 %v363
  %v2596 = vunpack.c.l.b16 %v364
  %v2597 = vunpack.c.h.b16 %v364
  %v2598 = vunpack.c.l.b16 %v365
  %v2599 = vunpack.c.h.b16 %v365
  %v2600 = vunpack.c.l.b16 %v366
  %v2601 = vunpack.c.h.b16 %v366
  %v2602 = vunpack.c.l.b16 %v367
  %v2603 = vunpack.c.h.b16 %v367
  %v2604 = vunpack.c.l.b16 %v368
  %v2605 = vunpack.c.h.b16 %v368
  %v2606 = vunpack.c.l.b16 %v369
  %v2607 = vunpack.c.h.b16 %v369
  %v2608 = vunpack.c.l.b16 %v370
  %v2609 = vunpack.c.h.b16 %v370
  %v2610 = vunpack.c.l.b16 %v371
  %v2611 = vunpack.c.h.b16 %v371
  %v2612 = vunpack.c.l.b16 %v372
  %v2613 = vunpack.c.h.b16 %v372
  %v2614 = vunpack.c.l.b16 %v373
  %v2615 = vunpack.c.h.b16 %v373
  %v2616 = vunpack.c.l.b16 %v374
  %v2617 = vunpack.c.h.b16 %v374
  %v2618 = vunpack.c.l.b16 %v375
  %v2619 = vunpack.c.h.b16 %v375
  %v2620 = vunpack.c.l.b16 %v376
  %v2621 = vunpack.c.h.b16 %v376
  %v2622 = vunpack.c.l.b16 %v377
  %v2623 = vunpack.c.h.b16 %v377
  %v2624 = vunpack.c.l.b16 %v378
  %v2625 = vunpack.c.h.b16 %v378
  %v2626 = vunpack.c.l.b16 %v379
  %v2627 = vunpack.c.h.b16 %v379
  %v2628 = vunpack.c.l.b16 %v380
  %v2629 = vunpack.c.h.b16 %v380
  %v2630 = vunpack.c.l.b16 %v381
  %v2631 = vunpack.c.h.b16 %v381
  %v2632 = vunpack.c.l.b16 %v382
  %v2633 = vunpack.c.h.b16 %v382
  %v2634 = vunpack.c.l.b16 %v383
  %v2635 = vunpack.c.h.b16 %v383
  %v2636 = vunpack.c.l.b16 %v384
  %v2637 = vunpack.c.h.b16 %v384
  %v2638 = vunpack.c.l.b16 %v385
  %v2639 = vunpack.c.h.b16 %v385
  %v2640 = vunpack.c.l.b16 %v386
  %v2641 = vunpack.c.h.b16 %v386
  %v2642 = vunpack.c.l.b16 %v387
  %v2643 = vunpack.c.h.b16 %v387
  %v2644 = vunpack.c.l.b16 %v388
  %v2645 = vunpack.c.h.b16 %v388
  %v2646 = vunpack.c.l.b16 %v389
  %v2647 = vunpack.c.h.b16 %v389
  %v2648 = vunpack.c.l.b16 %v390
  %v2649 = vunpack.c.h.b16 %v390
  %v2650 = vunpack.c.l.b16 %v391
  %v2651 = vunpack.c.h.b16 %v391
  %v2652 = vunpack.c.l.b16 %v392
  %v2653 = vunpack.c.h.b16 %v392
  %v2654 = vunpack.c.l.b16 %v393
  %v2655 = vunpack.c.h.b16 %v393
  %v2656 = vunpack.c.l.b16 %v394
  %v2657 = vunpack.c.h.b16 %v394
  %v2658 = vunpack.c.l.b16 %v395
  %v2659 = vunpack.c.h.b16 %v395
  %v2660 = vunpack.c.l.b16 %v396
  %v2661 = vunpack.c.h.b16 %v396
  %v2662 = vunpack.c.l.b16 %v397
  %v2663 = vunpack.c.h.b16 %v397
  %v2664 = vunpack.c.l.b16 %v398
  %v2665 = vunpack.c.h.b16 %v398
  %v2666 = vunpack.c.l.b16 %v399
  %v2667 = vunpack.c.h.b16 %v399
  %v2668 = vunpack.c.l.b16 %v400
  %v2669 = vunpack.c.h.b16 %v400
  %v2670 = vunpack.c.l.b16 %v401
  %v2671 = vunpack.c.h.b16 %v401
  %v2672 = vunpack.c.l.b16 %v402
  %v2673 = vunpack.c.h.b16 %v402
  %v2674 = vunpack.c.l.b16 %v403
  %v2675 = vunpack.c.h.b16 %v403
  %v2676 = vunpack.c.l.b16 %v404
  %v2677 = vunpack.c.h.b16 %v404
  %v2678 = vunpack.c.l.b16 %v405
  %v2679 = vunpack.c.h.b16 %v405
  %v2680 = vunpack.c.l.b16 %v406
  %v2681 = vunpack.c.h.b16 %v406
  %v2682 = vunpack.c.l.b16 %v407
  %v2683 = vunpack.c.h.b16 %v407
  %v2684 = vunpack.c.l.b16 %v408
  %v2685 = vunpack.c.h.b16 %v408
  %v2686 = vunpack.c.l.b16 %v409
  %v2687 = vunpack.c.h.b16 %v409
  %v2688 = vunpack.c.l.b16 %v410
  %v2689 = vunpack.c.h.b16 %v410
  %v2690 = vunpack.c.l.b16 %v411
  %v2691 = vunpack.c.h.b16 %v411
  %v2692 = vunpack.c.l.b16 %v412
  %v2693 = vunpack.c.h.b16 %v412
  %v2694 = vunpack.c.l.b16 %v413
  %v2695 = vunpack.c.h.b16 %v413
  %v2696 = vunpack.c.l.b16 %v414
  %v2697 = vunpack.c.h.b16 %v414
  %v2698 = vunpack.c.l.b16 %v415
  %v2699 = vunpack.c.h.b16 %v415
  %v2700 = vunpack.c.l.b16 %v416
  %v2701 = vunpack.c.h.b16 %v416
  %v2702 = vunpack.c.l.b16 %v417
  %v2703 = vunpack.c.h.b16 %v417
  %v2704 = vunpack.c.l.b16 %v418
  %v2705 = vunpack.c.h.b16 %v418
  %v2706 = vunpack.c.l.b16 %v419
  %v2707 = vunpack.c.h.b16 %v419
  %v2708 = vunpack.c.l.b16 %v420
  %v2709 = vunpack.c.h.b16 %v420
  %v2710 = vunpack.c.l.b16 %v421
  %v2711 = vunpack.c.h.b16 %v421
  %v2712 = vunpack.c.l.b16 %v422
  %v2713 = vunpack.c.h.b16 %v422
  %v2714 = vunpack.c.l.b16 %v423
  %v2715 = vunpack.c.h.b16 %v423
  %v2716 = vunpack.c.l.b16 %v424
  %v2717 = vunpack.c.h.b16 %v424
  %v2718 = vunpack.c.l.b16 %v425
  %v2719 = vunpack.c.h.b16 %v425
  %v2720 = vunpack.c.l.b16 %v426
  %v2721 = vunpack.c.h.b16 %v426
  %v2722 = vunpack.c.l.b16 %v427
  %v2723 = vunpack.c.h.b16 %v427
  %v2724 = vunpack.c.l.b16 %v428
  %v2725 = vunpack.c.h.b16 %v428
  %v2726 = vunpack.c.l.b16 %v429
  %v2727 = vunpack.c.h.b16 %v429
  %v2728 = vunpack.c.l.b16 %v430
  %v2729 = vunpack.c.h.b16 %v430
  %v2730 = vunpack.c.l.b16 %v431
  %v2731 = vunpack.c.h.b16 %v431
  %v2732 = vunpack.c.l.b16 %v432
  %v2733 = vunpack.c.h.b16 %v432
  %v2734 = vunpack.c.l.b16 %v433
  %v2735 = vunpack.c.h.b16 %v433
  %v2736 = vunpack.c.l.b16 %v434
  %v2737 = vunpack.c.h.b16 %v434
  %v2738 = vunpack.c.l.b16 %v435
  %v2739 = vunpack.c.h.b16 %v435
  %v2740 = vunpack.c.l.b16 %v436
  %v2741 = vunpack.c.h.b16 %v436
  %v2742 = vunpack.c.l.b16 %v437
  %v2743 = vunpack.c.h.b16 %v437
  %v2744 = vunpack.c.l.b16 %v438
  %v2745 = vunpack.c.h.b16 %v438
  %v2746 = vunpack.c.l.b16 %v439
  %v2747 = vunpack.c.h.b16 %v439
  %v2748 = vunpack.c.l.b16 %v440
  %v2749 = vunpack.c.h.b16 %v440
  %v2750 = vunpack.c.l.b16 %v441
  %v2751 = vunpack.c.h.b16 %v441
  %v2752 = vunpack.c.l.b16 %v442
  %v2753 = vunpack.c.h.b16 %v442
  %v2754 = vunpack.c.l.b16 %v443
  %v2755 = vunpack.c.h.b16 %v443
  %v2756 = vunpack.c.l.b16 %v444
  %v2757 = vunpack.c.h.b16 %v444
  %v2758 = vunpack.c.l.b16 %v445
  %v2759 = vunpack.c.h.b16 %v445
  %v2760 = vunpack.c.l.b16 %v446
  %v2761 = vunpack.c.h.b16 %v446
  %v2762 = vunpack.c.l.b16 %v447
  %v2763 = vunpack.c.h.b16 %v447
  %v2764 = vunpack.c.l.b16 %v448
  %v2765 = vunpack.c.h.b16 %v448
  %v2766 = vunpack.c.l.b16 %v449
  %v2767 = vunpack.c.h.b16 %v449
  %v2768 = vunpack.c.l.b16 %v450
  %v2769 = vunpack.c.h.b16 %v450
  %v2770 = vunpack.c.l.b16 %v451
  %v2771 = vunpack.c.h.b16 %v451
  %v2772 = vunpack.c.l.b16 %v452
  %v2773 = vunpack.c.h.b16 %v452
  %v2774 = vunpack.c.l.b16 %v453
  %v2775 = vunpack.c.h.b16 %v453
  %v2776 = vunpack.c.l.b16 %v454
  %v2777 = vunpack.c.h.b16 %v454
  %v2778 = vunpack.c.l.b16 %v455
  %v2779 = vunpack.c.h.b16 %v455
  %v2780 = vunpack.c.l.b16 %v456
  %v2781 = vunpack.c.h.b16 %v456
  %v2782 = vunpack.c.l.b16 %v457
  %v2783 = vunpack.c.h.b16 %v457
  %v2784 = vunpack.c.l.b16 %v458
  %v2785 = vunpack.c.h.b16 %v458
  %v2786 = vunpack.c.l.b16 %v459
  %v2787 = vunpack.c.h.b16 %v459
  %v2788 = vunpack.c.l.b16 %v460
  %v2789 = vunpack.c.h.b16 %v460
  %v2790 = vunpack.c.l.b16 %v461
  %v2791 = vunpack.c.h.b16 %v461
  %v2792 = vunpack.c.l.b16 %v462
  %v2793 = vunpack.c.h.b16 %v462
  %v2794 = vunpack.c.l.b16 %v463
  %v2795 = vunpack.c.h.b16 %v463
  %v2796 = vunpack.c.l.b16 %v464
  %v2797 = vunpack.c.h.b16 %v464
  %v2798 = vunpack.c.l.b16 %v465
  %v2799 = vunpack.c.h.b16 %v465
  %v2800 = vunpack.c.l.b16 %v466
  %v2801 = vunpack.c.h.b16 %v466
  %v2802 = vunpack.c.l.b16 %v467
  %v2803 = vunpack.c.h.b16 %v467
  %v2804 = vunpack.c.l.b16 %v468
  %v2805 = vunpack.c.h.b16 %v468
  %v2806 = vunpack.c.l.b16 %v469
  %v2807 = vunpack.c.h.b16 %v469
  %v2808 = vunpack.c.l.b16 %v470
  %v2809 = vunpack.c.h.b16 %v470
  %v2810 = vunpack.c.l.b16 %v471
  %v2811 = vunpack.c.h.b16 %v471
  %v2812 = vunpack.c.l.b16 %v472
  %v2813 = vunpack.c.h.b16 %v472
  %v2814 = vunpack.c.l.b16 %v473
  %v2815 = vunpack.c.h.b16 %v473
  %v2816 = vunpack.c.l.b16 %v474
  %v2817 = vunpack.c.h.b16 %v474
  %v2818 = vunpack.c.l.b16 %v475
  %v2819 = vunpack.c.h.b16 %v475
  %v2820 = vunpack.c.l.b16 %v476
  %v2821 = vunpack.c.h.b16 %v476
  %v2822 = vunpack.c.l.b16 %v477
  %v2823 = vunpack.c.h.b16 %v477
  %v2824 = vunpack.c.l.b16 %v478
  %v2825 = vunpack.c.h.b16 %v478
  %v2826 = vunpack.c.l.b16 %v479
  %v2827 = vunpack.c.h.b16 %v479
  %v2828 = vunpack.c.l.b16 %v480
  %v2829 = vunpack.c.h.b16 %v480
  %v2830 = vunpack.c.l.b16 %v481
  %v2831 = vunpack.c.h.b16 %v481
  %v2832 = vunpack.c.l.b16 %v482
  %v2833 = vunpack.c.h.b16 %v482
  %v2834 = vunpack.c.l.b16 %v483
  %v2835 = vunpack.c.h.b16 %v483
  %v2836 = vunpack.c.l.b16 %v484
  %v2837 = vunpack.c.h.b16 %v484
  %v2838 = vunpack.c.l.b16 %v485
  %v2839 = vunpack.c.h.b16 %v485
  %v2840 = vunpack.c.l.b16 %v486
  %v2841 = vunpack.c.h.b16 %v486
  %v2842 = vunpack.c.l.b16 %v487
  %v2843 = vunpack.c.h.b16 %v487
  %v2844 = vunpack.c.l.b16 %v488
  %v2845 = vunpack.c.h.b16 %v488
  %v2846 = vunpack.c.l.b16 %v489
  %v2847 = vunpack.c.h.b16 %v489
  %v2848 = vunpack.c.l.b16 %v490
  %v2849 = vunpack.c.h.b16 %v490
  %v2850 = vunpack.c.l.b16 %v491
  %v2851 = vunpack.c.h.b16 %v491
  %v2852 = vunpack.c.l.b16 %v492
  %v2853 = vunpack.c.h.b16 %v492
  %v2854 = vunpack.c.l.b16 %v493
  %v2855 = vunpack.c.h.b16 %v493
  %v2856 = vunpack.c.l.b16 %v494
  %v2857 = vunpack.c.h.b16 %v494
  %v2858 = vunpack.c.l.b16 %v495
  %v2859 = vunpack.c.h.b16 %v495
  %v2860 = vunpack.c.l.b16 %v496
  %v2861 = vunpack.c.h.b16 %v496
  %v2862 = vunpack.c.l.b16 %v497
  %v2863 = vunpack.c.h.b16 %v497
  %v2864 = vunpack.c.l.b16 %v498
  %v2865 = vunpack.c.h.b16 %v498
  %v2866 = vunpack.c.l.b16 %v499
  %v2867 = vunpack.c.h.b16 %v499
  %v2868 = vunpack.c.l.b16 %v500
  %v2869 = vunpack.c.h.b16 %v500
  %v2870 = vunpack.c.l.b16 %v501
  %v2871 = vunpack.c.h.b16 %v501
  %v2872 = vunpack.c.l.b16 %v502
  %v2873 = vunpack.c.h.b16 %v502
  %v2874 = vunpack.c.l.b16 %v503
  %v2875 = vunpack.c.h.b16 %v503
  %v2876 = vunpack.c.l.b16 %v504
  %v2877 = vunpack.c.h.b16 %v504
  %v2878 = vunpack.c.l.b16 %v505
  %v2879 = vunpack.c.h.b16 %v505
  %v2880 = vunpack.c.l.b16 %v506
  %v2881 = vunpack.c.h.b16 %v506
  %v2882 = vunpack.c.l.b16 %v507
  %v2883 = vunpack.c.h.b16 %v507
  %v2884 = vunpack.c.l.b16 %v508
  %v2885 = vunpack.c.h.b16 %v508
  %v2886 = vunpack.c.l.b16 %v509
  %v2887 = vunpack.c.h.b16 %v509
  %v2888 = vunpack.c.l.b16 %v510
  %v2889 = vunpack.c.h.b16 %v510
  %v2890 = vunpack.c.l.b16 %v511
  %v2891 = vunpack.c.h.b16 %v511
  %v2892 = vunpack.c.l.b16 %v512
  %v2893 = vunpack.c.h.b16 %v512
  %v2894 = vunpack.c.l.b16 %v513
  %v2895 = vunpack.c.h.b16 %v513
  %v2896 = vunpack.c.l.b16 %v514
  %v2897 = vunpack.c.h.b16 %v514
  %v2898 = vunpack.c.l.b16 %v515
  %v2899 = vunpack.c.h.b16 %v515
  %v2900 = vunpack.c.l.b16 %v516
  %v2901 = vunpack.c.h.b16 %v516
  %v2902 = vunpack.c.l.b16 %v517
  %v2903 = vunpack.c.h.b16 %v517
  %v2904 = vunpack.c.l.b16 %v518
  %v2905 = vunpack.c.h.b16 %v518
  %v2906 = vunpack.c.l.b16 %v519
  %v2907 = vunpack.c.h.b16 %v519
  %v2908 = vunpack.c.l.b16 %v520
  %v2909 = vunpack.c.h.b16 %v520
  %v2910 = vunpack.c.l.b16 %v521
  %v2911 = vunpack.c.h.b16 %v521
  %v2912 = vunpack.c.l.b16 %v522
  %v2913 = vunpack.c.h.b16 %v522
  %v2914 = vunpack.c.l.b16 %v523
  %v2915 = vunpack.c.h.b16 %v523
  %v2916 = vunpack.c.l.b16 %v524
  %v2917 = vunpack.c.h.b16 %v524
  %v2918 = vunpack.c.l.b16 %v525
  %v2919 = vunpack.c.h.b16 %v525
  %v2920 = vunpack.c.l.b16 %v526
  %v2921 = vunpack.c.h.b16 %v526
  %v2922 = vunpack.c.l.b16 %v527
  %v2923 = vunpack.c.h.b16 %v527
  %v2924 = vunpack.c.l.b16 %v528
  %v2925 = vunpack.c.h.b16 %v528
  %v2926 = vunpack.c.l.b16 %v529
  %v2927 = vunpack.c.h.b16 %v529
  %v2928 = vunpack.c.l.b16 %v530
  %v2929 = vunpack.c.h.b16 %v530
  %v2930 = vunpack.c.l.b16 %v531
  %v2931 = vunpack.c.h.b16 %v531
  %v2932 = vunpack.c.l.b16 %v532
  %v2933 = vunpack.c.h.b16 %v532
  %v2934 = vunpack.c.l.b16 %v533
  %v2935 = vunpack.c.h.b16 %v533
  %v2936 = vunpack.c.l.b16 %v534
  %v2937 = vunpack.c.h.b16 %v534
  %v2938 = vunpack.c.l.b16 %v535
  %v2939 = vunpack.c.h.b16 %v535
  %v2940 = vunpack.c.l.b16 %v536
  %v2941 = vunpack.c.h.b16 %v536
  %v2942 = vunpack.c.l.b16 %v537
  %v2943 = vunpack.c.h.b16 %v537
  %v2944 = vunpack.c.l.b16 %v538
  %v2945 = vunpack.c.h.b16 %v538
  %v2946 = vunpack.c.l.b16 %v539
  %v2947 = vunpack.c.h.b16 %v539
  %v2948 = vunpack.c.l.b16 %v540
  %v2949 = vunpack.c.h.b16 %v540
  %v2950 = vunpack.c.l.b16 %v541
  %v2951 = vunpack.c.h.b16 %v541
  %v2952 = vunpack.c.l.b16 %v542
  %v2953 = vunpack.c.h.b16 %v542
  %v2954 = vunpack.c.l.b16 %v543
  %v2955 = vunpack.c.h.b16 %v543
  %v2956 = vunpack.c.l.b16 %v544
  %v2957 = vunpack.c.h.b16 %v544
  %v2958 = vunpack.c.l.b16 %v545
  %v2959 = vunpack.c.h.b16 %v545
  %v2960 = vunpack.c.l.b16 %v546
  %v2961 = vunpack.c.h.b16 %v546
  %v2962 = vunpack.c.l.b16 %v547
  %v2963 = vunpack.c.h.b16 %v547
  %v2964 = vunpack.c.l.b16 %v548
  %v2965 = vunpack.c.h.b16 %v548
  %v2966 = vunpack.c.l.b16 %v549
  %v2967 = vunpack.c.h.b16 %v549
  %v2968 = vunpack.c.l.b16 %v550
  %v2969 = vunpack.c.h.b16 %v550
  %v2970 = vunpack.c.l.b16 %v551
  %v2971 = vunpack.c.h.b16 %v551
  %v2972 = vunpack.c.l.b16 %v552
  %v2973 = vunpack.c.h.b16 %v552
  %v2974 = vunpack.c.l.b16 %v553
  %v2975 = vunpack.c.h.b16 %v553
  %v2976 = vunpack.c.l.b16 %v554
  %v2977 = vunpack.c.h.b16 %v554
  %v2978 = vunpack.c.l.b16 %v555
  %v2979 = vunpack.c.h.b16 %v555
  %v2980 = vunpack.c.l.b16 %v556
  %v2981 = vunpack.c.h.b16 %v556
  %v2982 = vunpack.c.l.b16 %v557
  %v2983 = vunpack.c.h.b16 %v557
  %v2984 = vunpack.c.l.b16 %v558
  %v2985 = vunpack.c.h.b16 %v558
  %v2986 = vunpack.c.l.b16 %v559
  %v2987 = vunpack.c.h.b16 %v559
  %v2988 = vunpack.c.l.b16 %v560
  %v2989 = vunpack.c.h.b16 %v560
  %v2990 = vunpack.c.l.b16 %v561
  %v2991 = vunpack.c.h.b16 %v561
  %v2992 = vunpack.c.l.b16 %v562
  %v2993 = vunpack.c.h.b16 %v562
  %v2994 = vunpack.c.l.b16 %v563
  %v2995 = vunpack.c.h.b16 %v563
  %v2996 = vunpack.c.l.b16 %v564
  %v2997 = vunpack.c.h.b16 %v564
  %v2998 = vunpack.c.l.b16 %v565
  %v2999 = vunpack.c.h.b16 %v565
  %v3000 = vunpack.c.l.b16 %v566
  %v3001 = vunpack.c.h.b16 %v566
  %v3002 = vunpack.c.l.b16 %v567
  %v3003 = vunpack.c.h.b16 %v567
  %v3004 = vunpack.c.l.b16 %v568
  %v3005 = vunpack.c.h.b16 %v568
  %v3006 = vunpack.c.l.b16 %v569
  %v3007 = vunpack.c.h.b16 %v569
  %v3008 = vunpack.c.l.b16 %v570
  %v3009 = vunpack.c.h.b16 %v570
  %v3010 = vunpack.c.l.b16 %v571
  %v3011 = vunpack.c.h.b16 %v571
  %v3012 = vunpack.c.l.b16 %v572
  %v3013 = vunpack.c.h.b16 %v572
  %v3014 = vunpack.c.l.b16 %v573
  %v3015 = vunpack.c.h.b16 %v573
  %v3016 = vunpack.c.l.b16 %v574
  %v3017 = vunpack.c.h.b16 %v574
  %v3018 = vunpack.c.l.b16 %v575
  %v3019 = vunpack.c.h.b16 %v575
  %v3020 = vunpack.c.l.b16 %v576
  %v3021 = vunpack.c.h.b16 %v576
  %v3022 = vunpack.c.l.b16 %v577
  %v3023 = vunpack.c.h.b16 %v577
  %v3024 = vunpack.c.l.b16 %v578
  %v3025 = vunpack.c.h.b16 %v578
  %v3026 = vunpack.c.l.b16 %v579
  %v3027 = vunpack.c.h.b16 %v579
  %v3028 = vunpack.c.l.b16 %v580
  %v3029 = vunpack.c.h.b16 %v580
  %v3030 = vunpack.c.l.b16 %v581
  %v3031 = vunpack.c.h.b16 %v581
  %v3032 = vunpack.c.l.b16 %v582
  %v3033 = vunpack.c.h.b16 %v582
  %v3034 = vunpack.c.l.b16 %v583
  %v3035 = vunpack.c.h.b16 %v583
  %v3036 = vunpack.c.l.b16 %v584
  %v3037 = vunpack.c.h.b16 %v584
  %v3038 = vunpack.c.l.b16 %v585
  %v3039 = vunpack.c.h.b16 %v585
  %v3040 = vunpack.c.l.b16 %v586
  %v3041 = vunpack.c.h.b16 %v586
  %v3042 = vunpack.c.l.b16 %v587
  %v3043 = vunpack.c.h.b16 %v587
  %v3044 = vunpack.c.l.b16 %v588
  %v3045 = vunpack.c.h.b16 %v588
  %v3046 = vunpack.c.l.b16 %v589
  %v3047 = vunpack.c.h.b16 %v589
  %v3048 = vunpack.c.l.b16 %v590
  %v3049 = vunpack.c.h.b16 %v590
  %v3050 = vunpack.c.l.b16 %v591
  %v3051 = vunpack.c.h.b16 %v591
  %v3052 = vunpack.c.l.b16 %v592
  %v3053 = vunpack.c.h.b16 %v592
  %v3054 = vunpack.c.l.b16 %v593
  %v3055 = vunpack.c.h.b16 %v593
  %v3056 = vunpack.c.l.b16 %v594
  %v3057 = vunpack.c.h.b16 %v594
  %v3058 = vunpack.c.l.b16 %v595
  %v3059 = vunpack.c.h.b16 %v595
  %v3060 = vunpack.c.l.b16 %v596
  %v3061 = vunpack.c.h.b16 %v596
  %v3062 = vunpack.c.l.b16 %v597
  %v3063 = vunpack.c.h.b16 %v597
  %v3064 = vunpack.c.l.b16 %v598
  %v3065 = vunpack.c.h.b16 %v598
  %v3066 = vunpack.c.l.b16 %v599
  %v3067 = vunpack.c.h.b16 %v599
  %v3068 = vunpack.c.l.b16 %v600
  %v3069 = vunpack.c.h.b16 %v600
  %v3070 = vunpack.c.l.b16 %v601
  %v3071 = vunpack.c.h.b16 %v601
  %v3072 = vunpack.c.l.b16 %v602
  %v3073 = vunpack.c.h.b16 %v602
  %v3074 = vunpack.c.l.b16 %v603
  %v3075 = vunpack.c.h.b16 %v603
  %v3076 = vunpack.c.l.b16 %v604
  %v3077 = vunpack.c.h.b16 %v604
  %v3078 = vunpack.c.l.b16 %v605
  %v3079 = vunpack.c.h.b16 %v605
  %v3080 = vunpack.c.l.b16 %v606
  %v3081 = vunpack.c.h.b16 %v606
  %v3082 = vunpack.c.l.b16 %v607
  %v3083 = vunpack.c.h.b16 %v607
  %v3084 = vunpack.c.l.b16 %v608
  %v3085 = vunpack.c.h.b16 %v608
  %v3086 = vunpack.c.l.b16 %v609
  %v3087 = vunpack.c.h.b16 %v609
  %v3088 = vunpack.c.l.b16 %v610
  %v3089 = vunpack.c.h.b16 %v610
  %v3090 = vunpack.c.l.b16 %v611
  %v3091 = vunpack.c.h.b16 %v611
  %v3092 = vunpack.c.l.b16 %v612
  %v3093 = vunpack.c.h.b16 %v612
  %v3094 = vunpack.c.l.b16 %v613
  %v3095 = vunpack.c.h.b16 %v613
  %v3096 = vunpack.c.l.b16 %v614
  %v3097 = vunpack.c.h.b16 %v614
  %v3098 = vunpack.c.l.b16 %v615
  %v3099 = vunpack.c.h.b16 %v615
  %v3100 = vunpack.c.l.b16 %v616
  %v3101 = vunpack.c.h.b16 %v616
  %v3102 = vunpack.c.l.b16 %v617
  %v3103 = vunpack.c.h.b16 %v617
  %v3104 = vunpack.c.l.b16 %v618
  %v3105 = vunpack.c.h.b16 %v618
  %v3106 = vunpack.c.l.b16 %v619
  %v3107 = vunpack.c.h.b16 %v619
  %v3108 = vunpack.c.l.b16 %v620
  %v3109 = vunpack.c.h.b16 %v620
  %v3110 = vunpack.c.l.b16 %v621
  %v3111 = vunpack.c.h.b16 %v621
  %v3112 = vunpack.c.l.b16 %v622
  %v3113 = vunpack.c.h.b16 %v622
  %v3114 = vunpack.c.l.b16 %v623
  %v3115 = vunpack.c.h.b16 %v623
  %v3116 = vunpack.c.l.b16 %v624
  %v3117 = vunpack.c.h.b16 %v624
  %v3118 = vunpack.c.l.b16 %v625
  %v3119 = vunpack.c.h.b16 %v625
  %v3120 = vunpack.c.l.b16 %v626
  %v3121 = vunpack.c.h.b16 %v626
  %v3122 = vunpack.c.l.b16 %v627
  %v3123 = vunpack.c.h.b16 %v627
  %v3124 = vunpack.c.l.b16 %v628
  %v3125 = vunpack.c.h.b16 %v628
  %v3126 = vunpack.c.l.b16 %v629
  %v3127 = vunpack.c.h.b16 %v629
  %v3128 = vunpack.c.l.b16 %v630
  %v3129 = vunpack.c.h.b16 %v630
  %v3130 = vunpack.c.l.b16 %v631
  %v3131 = vunpack.c.h.b16 %v631
  %v3132 = vunpack.c.l.b16 %v632
  %v3133 = vunpack.c.h.b16 %v632
  %v3134 = vunpack.c.l.b16 %v633
  %v3135 = vunpack.c.h.b16 %v633
  %v3136 = vunpack.c.l.b16 %v634
  %v3137 = vunpack.c.h.b16 %v634
  %v3138 = vunpack.c.l.b16 %v635
  %v3139 = vunpack.c.h.b16 %v635
  %v3140 = vunpack.c.l.b16 %v636
  %v3141 = vunpack.c.h.b16 %v636
  %v3142 = vunpack.c.l.b16 %v637
  %v3143 = vunpack.c.h.b16 %v637
  %v3144 = vunpack.c.l.b16 %v638
  %v3145 = vunpack.c.h.b16 %v638
  %v3146 = vunpack.c.l.b16 %v639
  %v3147 = vunpack.c.h.b16 %v639
  %v3148 = vunpack.c.l.b16 %v640
  %v3149 = vunpack.c.h.b16 %v640
  %v3150 = vunpack.c.l.b16 %v641
  %v3151 = vunpack.c.h.b16 %v641
  %v3152 = vunpack.c.l.b16 %v642
  %v3153 = vunpack.c.h.b16 %v642
  %v3154 = vunpack.c.l.b16 %v643
  %v3155 = vunpack.c.h.b16 %v643
  %v3156 = vunpack.c.l.b16 %v644
  %v3157 = vunpack.c.h.b16 %v644
  %v3158 = vunpack.c.l.b16 %v645
  %v3159 = vunpack.c.h.b16 %v645
  %v3160 = vunpack.c.l.b16 %v646
  %v3161 = vunpack.c.h.b16 %v646
  %v3162 = vunpack.c.l.b16 %v647
  %v3163 = vunpack.c.h.b16 %v647
  %v3164 = vunpack.c.l.b16 %v648
  %v3165 = vunpack.c.h.b16 %v648
  %v3166 = vunpack.c.l.b16 %v649
  %v3167 = vunpack.c.h.b16 %v649
  %v3168 = vunpack.c.l.b16 %v650
  %v3169 = vunpack.c.h.b16 %v650
  %v3170 = vunpack.c.l.b16 %v651
  %v3171 = vunpack.c.h.b16 %v651
  %v3172 = vunpack.c.l.b16 %v652
  %v3173 = vunpack.c.h.b16 %v652
  %v3174 = vunpack.c.l.b16 %v653
  %v3175 = vunpack.c.h.b16 %v653
  %v3176 = vunpack.c.l.b16 %v654
  %v3177 = vunpack.c.h.b16 %v654
  %v3178 = vunpack.c.l.b16 %v655
  %v3179 = vunpack.c.h.b16 %v655
  %v3180 = vunpack.c.l.b16 %v656
  %v3181 = vunpack.c.h.b16 %v656
  %v3182 = vunpack.c.l.b16 %v657
  %v3183 = vunpack.c.h.b16 %v657
  %v3184 = vunpack.c.l.b16 %v658
  %v3185 = vunpack.c.h.b16 %v658
  %v3186 = vunpack.c.l.b16 %v659
  %v3187 = vunpack.c.h.b16 %v659
  %v3188 = vunpack.c.l.b16 %v660
  %v3189 = vunpack.c.h.b16 %v660
  %v3190 = vunpack.c.l.b16 %v661
  %v3191 = vunpack.c.h.b16 %v661
  %v3192 = vunpack.c.l.b16 %v662
  %v3193 = vunpack.c.h.b16 %v662
  %v3194 = vunpack.c.l.b16 %v663
  %v3195 = vunpack.c.h.b16 %v663
  %v3196 = vunpack.c.l.b16 %v664
  %v3197 = vunpack.c.h.b16 %v664
  %v3198 = vunpack.c.l.b16 %v665
  %v3199 = vunpack.c.h.b16 %v665
  %v3200 = vunpack.c.l.b16 %v666
  %v3201 = vunpack.c.h.b16 %v666
  %v3202 = vunpack.c.l.b16 %v667
  %v3203 = vunpack.c.h.b16 %v667
  %v3204 = vunpack.c.l.b16 %v668
  %v3205 = vunpack.c.h.b16 %v668
  %v3206 = vunpack.c.l.b16 %v669
  %v3207 = vunpack.c.h.b16 %v669
  %v3208 = vunpack.c.l.b16 %v670
  %v3209 = vunpack.c.h.b16 %v670
  %v3210 = vunpack.c.l.b16 %v671
  %v3211 = vunpack.c.h.b16 %v671
  %v3212 = vunpack.c.l.b16 %v672
  %v3213 = vunpack.c.h.b16 %v672
  %v3214 = vunpack.c.l.b16 %v673
  %v3215 = vunpack.c.h.b16 %v673
  %v3216 = vunpack.c.l.b16 %v674
  %v3217 = vunpack.c.h.b16 %v674
  %v3218 = vunpack.c.l.b16 %v675
  %v3219 = vunpack.c.h.b16 %v675
  %v3220 = vunpack.c.l.b16 %v676
  %v3221 = vunpack.c.h.b16 %v676
  %v3222 = vunpack.c.l.b16 %v677
  %v3223 = vunpack.c.h.b16 %v677
  %v3224 = vunpack.c.l.b16 %v678
  %v3225 = vunpack.c.h.b16 %v678
  %v3226 = vunpack.c.l.b16 %v679
  %v3227 = vunpack.c.h.b16 %v679
  %v3228 = vunpack.c.l.b16 %v680
  %v3229 = vunpack.c.h.b16 %v680
  %v3230 = vunpack.c.l.b16 %v681
  %v3231 = vunpack.c.h.b16 %v681
  %v3232 = vunpack.c.l.b16 %v682
  %v3233 = vunpack.c.h.b16 %v682
  %v3234 = vunpack.c.l.b16 %v683
  %v3235 = vunpack.c.h.b16 %v683
  %v3236 = vunpack.c.l.b16 %v684
  %v3237 = vunpack.c.h.b16 %v684
  %v3238 = vunpack.c.l.b16 %v685
  %v3239 = vunpack.c.h.b16 %v685
  %v3240 = vunpack.c.l.b16 %v686
  %v3241 = vunpack.c.h.b16 %v686
  %v3242 = vunpack.c.l.b16 %v687
  %v3243 = vunpack.c.h.b16 %v687
  %v3244 = vunpack.c.l.b16 %v688
  %v3245 = vunpack.c.h.b16 %v688
  %v3246 = vunpack.c.l.b16 %v689
  %v3247 = vunpack.c.h.b16 %v689
  %v3248 = vunpack.c.l.b16 %v690
  %v3249 = vunpack.c.h.b16 %v690
  %v3250 = vunpack.c.l.b16 %v691
  %v3251 = vunpack.c.h.b16 %v691
  %v3252 = vunpack.c.l.b16 %v692
  %v3253 = vunpack.c.h.b16 %v692
  %v3254 = vunpack.c.l.b16 %v693
  %v3255 = vunpack.c.h.b16 %v693
  %v3256 = vunpack.c.l.b16 %v694
  %v3257 = vunpack.c.h.b16 %v694
  %v3258 = vunpack.c.l.b16 %v695
  %v3259 = vunpack.c.h.b16 %v695
  %v3260 = vunpack.c.l.b16 %v696
  %v3261 = vunpack.c.h.b16 %v696
  %v3262 = vunpack.c.l.b16 %v697
  %v3263 = vunpack.c.h.b16 %v697
  %v3264 = vunpack.c.l.b16 %v698
  %v3265 = vunpack.c.h.b16 %v698
  %v3266 = vunpack.c.l.b16 %v699
  %v3267 = vunpack.c.h.b16 %v699
  %v3268 = vunpack.c.l.b16 %v700
  %v3269 = vunpack.c.h.b16 %v700
  %v3270 = vunpack.c.l.b16 %v701
  %v3271 = vunpack.c.h.b16 %v701
  %v3272 = vunpack.c.l.b16 %v702
  %v3273 = vunpack.c.h.b16 %v702
  %v3274 = vunpack.c.l.b16 %v703
  %v3275 = vunpack.c.h.b16 %v703
  %v3276 = vunpack.c.l.b16 %v704
  %v3277 = vunpack.c.h.b16 %v704
  %v3278 = vunpack.c.l.b16 %v705
  %v3279 = vunpack.c.h.b16 %v705
  %v3280 = vunpack.c.l.b16 %v706
  %v3281 = vunpack.c.h.b16 %v706
  %v3282 = vunpack.c.l.b16 %v707
  %v3283 = vunpack.c.h.b16 %v707
  %v3284 = vunpack.c.l.b16 %v708
  %v3285 = vunpack.c.h.b16 %v708
  %v3286 = vunpack.c.l.b16 %v709
  %v3287 = vunpack.c.h.b16 %v709
  %v3288 = vunpack.c.l.b16 %v710
  %v3289 = vunpack.c.h.b16 %v710
  %v3290 = vunpack.c.l.b16 %v711
  %v3291 = vunpack.c.h.b16 %v711
  %v3292 = vunpack.c.l.b16 %v712
  %v3293 = vunpack.c.h.b16 %v712
  %v3294 = vunpack.c.l.b16 %v713
  %v3295 = vunpack.c.h.b16 %v713
  %v3296 = vunpack.c.l.b16 %v714
  %v3297 = vunpack.c.h.b16 %v714
  %v3298 = vunpack.c.l.b16 %v715
  %v3299 = vunpack.c.h.b16 %v715
  %v3300 = vunpack.c.l.b16 %v716
  %v3301 = vunpack.c.h.b16 %v716
  %v3302 = vunpack.c.l.b16 %v717
  %v3303 = vunpack.c.h.b16 %v717
  %v3304 = vunpack.c.l.b16 %v718
  %v3305 = vunpack.c.h.b16 %v718
  %v3306 = vunpack.c.l.b16 %v719
  %v3307 = vunpack.c.h.b16 %v719
  %v3308 = vunpack.c.l.b16 %v720
  %v3309 = vunpack.c.h.b16 %v720
  %v3310 = vunpack.c.l.b16 %v721
  %v3311 = vunpack.c.h.b16 %v721
  %v3312 = vunpack.c.l.b16 %v722
  %v3313 = vunpack.c.h.b16 %v722
  %v3314 = vunpack.c.l.b16 %v723
  %v3315 = vunpack.c.h.b16 %v723
  %v3316 = vunpack.c.l.b16 %v724
  %v3317 = vunpack.c.h.b16 %v724
  %v3318 = vunpack.c.l.b16 %v725
  %v3319 = vunpack.c.h.b16 %v725
  %v3320 = vunpack.c.l.b16 %v726
  %v3321 = vunpack.c.h.b16 %v726
  %v3322 = vunpack.c.l.b16 %v727
  %v3323 = vunpack.c.h.b16 %v727
  %v3324 = vunpack.c.l.b16 %v728
  %v3325 = vunpack.c.h.b16 %v728
  %v3326 = vunpack.c.l.b16 %v729
  %v3327 = vunpack.c.h.b16 %v729
  %v3328 = vunpack.c.l.b16 %v730
  %v3329 = vunpack.c.h.b16 %v730
  %v3330 = vunpack.c.l.b16 %v731
  %v3331 = vunpack.c.h.b16 %v731
  %v3332 = vunpack.c.l.b16 %v732
  %v3333 = vunpack.c.h.b16 %v732
  %v3334 = vunpack.c.l.b16 %v733
  %v3335 = vunpack.c.h.b16 %v733
  %v3336 = vunpack.c.l.b16 %v734
  %v3337 = vunpack.c.h.b16 %v734
  %v3338 = vunpack.c.l.b16 %v735
  %v3339 = vunpack.c.h.b16 %v735
  %v3340 = vunpack.c.l.b16 %v736
  %v3341 = vunpack.c.h.b16 %v736
  %v3342 = vunpack.c.l.b16 %v737
  %v3343 = vunpack.c.h.b16 %v737
  %v3344 = vunpack.c.l.b16 %v738
  %v3345 = vunpack.c.h.b16 %v738
  %v3346 = vunpack.c.l.b16 %v739
  %v3347 = vunpack.c.h.b16 %v739
  %v3348 = vunpack.c.l.b16 %v740
  %v3349 = vunpack.c.h.b16 %v740
  %v3350 = vunpack.c.l.b16 %v741
  %v3351 = vunpack.c.h.b16 %v741
  %v3352 = vunpack.c.l.b16 %v742
  %v3353 = vunpack.c.h.b16 %v742
  %v3354 = vunpack.c.l.b16 %v743
  %v3355 = vunpack.c.h.b16 %v743
  %v3356 = vunpack.c.l.b16 %v744
  %v3357 = vunpack.c.h.b16 %v744
  %v3358 = vunpack.c.l.b16 %v745
  %v3359 = vunpack.c.h.b16 %v745
  %v3360 = vunpack.c.l.b16 %v746
  %v3361 = vunpack.c.h.b16 %v746
  %v3362 = vunpack.c.l.b16 %v747
  %v3363 = vunpack.c.h.b16 %v747
  %v3364 = vunpack.c.l.b16 %v748
  %v3365 = vunpack.c.h.b16 %v748
  %v3366 = vunpack.c.l.b16 %v749
  %v3367 = vunpack.c.h.b16 %v749
  %v3368 = vunpack.c.l.b16 %v750
  %v3369 = vunpack.c.h.b16 %v750
  %v3370 = vunpack.c.l.b16 %v751
  %v3371 = vunpack.c.h.b16 %v751
  %v3372 = vunpack.c.l.b16 %v752
  %v3373 = vunpack.c.h.b16 %v752
  %v3374 = vunpack.c.l.b16 %v753
  %v3375 = vunpack.c.h.b16 %v753
  %v3376 = vunpack.c.l.b16 %v754
  %v3377 = vunpack.c.h.b16 %v754
  %v3378 = vunpack.c.l.b16 %v755
  %v3379 = vunpack.c.h.b16 %v755
  %v3380 = vunpack.c.l.b16 %v756
  %v3381 = vunpack.c.h.b16 %v756
  %v3382 = vunpack.c.l.b16 %v757
  %v3383 = vunpack.c.h.b16 %v757
  %v3384 = vunpack.c.l.b16 %v758
  %v3385 = vunpack.c.h.b16 %v758
  %v3386 = vunpack.c.l.b16 %v759
  %v3387 = vunpack.c.h.b16 %v759
  %v3388 = vunpack.c.l.b16 %v760
  %v3389 = vunpack.c.h.b16 %v760
  %v3390 = vunpack.c.l.b16 %v761
  %v3391 = vunpack.c.h.b16 %v761
  %v3392 = vunpack.c.l.b16 %v762
  %v3393 = vunpack.c.h.b16 %v762
  %v3394 = vunpack.c.l.b16 %v763
  %v3395 = vunpack.c.h.b16 %v763
  %v3396 = vunpack.c.l.b16 %v764
  %v3397 = vunpack.c.h.b16 %v764
  %v3398 = vunpack.c.l.b16 %v765
  %v3399 = vunpack.c.h.b16 %v765
  %v3400 = vunpack.c.l.b16 %v766
  %v3401 = vunpack.c.h.b16 %v766
  %v3402 = vunpack.c.l.b16 %v767
  %v3403 = vunpack.c.h.b16 %v767
  %v3404 = vunpack.c.l.b16 %v768
  %v3405 = vunpack.c.h.b16 %v768
  %v3406 = vunpack.c.l.b16 %v769
  %v3407 = vunpack.c.h.b16 %v769
  %v3408 = vunpack.c.l.b16 %v770
  %v3409 = vunpack.c.h.b16 %v770
  %v3410 = vunpack.c.l.b16 %v771
  %v3411 = vunpack.c.h.b16 %v771
  %v3412 = vunpack.c.l.b16 %v772
  %v3413 = vunpack.c.h.b16 %v772
  %v3414 = vunpack.c.l.b16 %v773
  %v3415 = vunpack.c.h.b16 %v773
  %v3416 = vunpack.c.l.b16 %v774
  %v3417 = vunpack.c.h.b16 %v774
  %v3418 = vunpack.c.l.b16 %v775
  %v3419 = vunpack.c.h.b16 %v775
  %v3420 = vunpack.c.l.b16 %v776
  %v3421 = vunpack.c.h.b16 %v776
  %v3422 = vunpack.c.l.b16 %v777
  %v3423 = vunpack.c.h.b16 %v777
  %v3424 = vunpack.c.l.b16 %v778
  %v3425 = vunpack.c.h.b16 %v778
  %v3426 = vunpack.c.l.b16 %v779
  %v3427 = vunpack.c.h.b16 %v779
  %v3428 = vunpack.c.l.b16 %v780
  %v3429 = vunpack.c.h.b16 %v780
  %v3430 = vunpack.c.l.b16 %v781
  %v3431 = vunpack.c.h.b16 %v781
  %v3432 = vunpack.c.l.b16 %v782
  %v3433 = vunpack.c.h.b16 %v782
  %v3434 = vunpack.c.l.b16 %v783
  %v3435 = vunpack.c.h.b16 %v783
  %v3436 = vunpack.c.l.b16 %v784
  %v3437 = vunpack.c.h.b16 %v784
  %v3438 = vunpack.c.l.b16 %v785
  %v3439 = vunpack.c.h.b16 %v785
  %v3440 = vunpack.c.l.b16 %v786
  %v3441 = vunpack.c.h.b16 %v786
  %v3442 = vunpack.c.l.b16 %v787
  %v3443 = vunpack.c.h.b16 %v787
  %v3444 = vunpack.c.l.b16 %v788
  %v3445 = vunpack.c.h.b16 %v788
  %v3446 = vunpack.c.l.b16 %v789
  %v3447 = vunpack.c.h.b16 %v789
  %v3448 = vunpack.c.l.b16 %v790
  %v3449 = vunpack.c.h.b16 %v790
  %v3450 = vunpack.c.l.b16 %v791
  %v3451 = vunpack.c.h.b16 %v791
  %v3452 = vunpack.c.l.b16 %v792
  %v3453 = vunpack.c.h.b16 %v792
  %v3454 = vunpack.c.l.b16 %v793
  %v3455 = vunpack.c.h.b16 %v793
  %v3456 = vunpack.c.l.b16 %v794
  %v3457 = vunpack.c.h.b16 %v794
  %v3458 = vunpack.c.l.b16 %v795
  %v3459 = vunpack.c.h.b16 %v795
  %v3460 = vunpack.c.l.b16 %v796
  %v3461 = vunpack.c.h.b16 %v796
  %v3462 = vunpack.c.l.b16 %v797
  %v3463 = vunpack.c.h.b16 %v797
  %v3464 = vunpack.c.l.b16 %v798
  %v3465 = vunpack.c.h.b16 %v798
  %v3466 = vunpack.c.l.b16 %v799
  %v3467 = vunpack.c.h.b16 %v799
  %v3468 = vunpack.c.l.b16 %v800
  %v3469 = vunpack.c.h.b16 %v800
  %v3470 = vunpack.c.l.b16 %v801
  %v3471 = vunpack.c.h.b16 %v801
  %v3472 = vunpack.c.l.b16 %v802
  %v3473 = vunpack.c.h.b16 %v802
  %v3474 = vunpack.c.l.b16 %v803
  %v3475 = vunpack.c.h.b16 %v803
  %v3476 = vunpack.c.l.b16 %v804
  %v3477 = vunpack.c.h.b16 %v804
  %v3478 = vunpack.c.l.b16 %v805
  %v3479 = vunpack.c.h.b16 %v805
  %v3480 = vunpack.c.l.b16 %v806
  %v3481 = vunpack.c.h.b16 %v806
  %v3482 = vunpack.c.l.b16 %v807
  %v3483 = vunpack.c.h.b16 %v807
  %v3484 = vunpack.c.l.b16 %v808
  %v3485 = vunpack.c.h.b16 %v808
  %v3486 = vunpack.c.l.b16 %v809
  %v3487 = vunpack.c.h.b16 %v809
  %v3488 = vunpack.c.l.b16 %v810
  %v3489 = vunpack.c.h.b16 %v810
  %v3490 = vunpack.c.l.b16 %v811
  %v3491 = vunpack.c.h.b16 %v811
  %v3492 = vunpack.c.l.b16 %v812
  %v3493 = vunpack.c.h.b16 %v812
  %v3494 = vunpack.c.l.b16 %v813
  %v3495 = vunpack.c.h.b16 %v813
  %v3496 = vunpack.c.l.b16 %v814
  %v3497 = vunpack.c.h.b16 %v814
  %v3498 = vunpack.c.l.b16 %v815
  %v3499 = vunpack.c.h.b16 %v815
  %v3500 = vunpack.c.l.b16 %v816
  %v3501 = vunpack.c.h.b16 %v816
  %v3502 = vunpack.c.l.b16 %v817
  %v3503 = vunpack.c.h.b16 %v817
  %v3504 = vunpack.c.l.b16 %v818
  %v3505 = vunpack.c.h.b16 %v818
  %v3506 = vunpack.c.l.b16 %v819
  %v3507 = vunpack.c.h.b16 %v819
  %v3508 = vunpack.c.l.b16 %v820
  %v3509 = vunpack.c.h.b16 %v820
  %v3510 = vunpack.c.l.b16 %v821
  %v3511 = vunpack.c.h.b16 %v821
  %v3512 = vunpack.c.l.b16 %v822
  %v3513 = vunpack.c.h.b16 %v822
  %v3514 = vunpack.c.l.b16 %v823
  %v3515 = vunpack.c.h.b16 %v823
  %v3516 = vunpack.c.l.b16 %v824
  %v3517 = vunpack.c.h.b16 %v824
  %v3518 = vunpack.c.l.b16 %v825
  %v3519 = vunpack.c.h.b16 %v825
  %v3520 = vunpack.c.l.b16 %v826
  %v3521 = vunpack.c.h.b16 %v826
  %v3522 = vunpack.c.l.b16 %v827
  %v3523 = vunpack.c.h.b16 %v827
  %v3524 = vunpack.c.l.b16 %v828
  %v3525 = vunpack.c.h.b16 %v828
  %v3526 = vunpack.c.l.b16 %v829
  %v3527 = vunpack.c.h.b16 %v829
  %v3528 = vunpack.c.l.b16 %v830
  %v3529 = vunpack.c.h.b16 %v830
  %v3530 = vunpack.c.l.b16 %v831
  %v3531 = vunpack.c.h.b16 %v831
  %v3532 = vunpack.c.l.b16 %v832
  %v3533 = vunpack.c.h.b16 %v832
  %v3534 = vunpack.c.l.b16 %v833
  %v3535 = vunpack.c.h.b16 %v833
  %v3536 = vunpack.c.l.b16 %v834
  %v3537 = vunpack.c.h.b16 %v834
  %v3538 = vunpack.c.l.b16 %v835
  %v3539 = vunpack.c.h.b16 %v835
  %v3540 = vunpack.c.l.b16 %v836
  %v3541 = vunpack.c.h.b16 %v836
  %v3542 = vunpack.c.l.b16 %v837
  %v3543 = vunpack.c.h.b16 %v837
  %v3544 = vunpack.c.l.b16 %v838
  %v3545 = vunpack.c.h.b16 %v838
  %v3546 = vunpack.c.l.b16 %v839
  %v3547 = vunpack.c.h.b16 %v839
  %v3548 = vunpack.c.l.b16 %v840
  %v3549 = vunpack.c.h.b16 %v840
  %v3550 = vunpack.c.l.b16 %v841
  %v3551 = vunpack.c.h.b16 %v841
  %v3552 = vunpack.c.l.b16 %v842
  %v3553 = vunpack.c.h.b16 %v842
  %v3554 = vunpack.c.l.b16 %v843
  %v3555 = vunpack.c.h.b16 %v843
  %v3556 = vunpack.c.l.b16 %v844
  %v3557 = vunpack.c.h.b16 %v844
  %v3558 = vunpack.c.l.b16 %v845
  %v3559 = vunpack.c.h.b16 %v845
  %v3560 = vunpack.c.l.b16 %v846
  %v3561 = vunpack.c.h.b16 %v846
  %v3562 = vunpack.c.l.b16 %v847
  %v3563 = vunpack.c.h.b16 %v847
  %v3564 = vunpack.c.l.b16 %v848
  %v3565 = vunpack.c.h.b16 %v848
  %v3566 = vunpack.c.l.b16 %v849
  %v3567 = vunpack.c.h.b16 %v849
  %v3568 = vunpack.c.l.b16 %v850
  %v3569 = vunpack.c.h.b16 %v850
  %v3570 = vunpack.c.l.b16 %v851
  %v3571 = vunpack.c.h.b16 %v851
  %v3572 = vunpack.c.l.b16 %v852
  %v3573 = vunpack.c.h.b16 %v852
  %v3574 = vunpack.c.l.b16 %v853
  %v3575 = vunpack.c.h.b16 %v853
  %v3576 = vunpack.c.l.b16 %v854
  %v3577 = vunpack.c.h.b16 %v854
  %v3578 = vunpack.c.l.b16 %v855
  %v3579 = vunpack.c.h.b16 %v855
  %v3580 = vunpack.c.l.b16 %v856
  %v3581 = vunpack.c.h.b16 %v856
  %v3582 = vunpack.c.l.b16 %v857
  %v3583 = vunpack.c.h.b16 %v857
  %v3584 = vunpack.c.l.b16 %v858
  %v3585 = vunpack.c.h.b16 %v858
  %v3586 = vunpack.c.l.b16 %v859
  %v3587 = vunpack.c.h.b16 %v859
  %v3588 = vunpack.c.l.b16 %v860
  %v3589 = vunpack.c.h.b16 %v860
  %v3590 = vunpack.c.l.b16 %v861
  %v3591 = vunpack.c.h.b16 %v861
  %v3592 = vunpack.c.l.b16 %v862
  %v3593 = vunpack.c.h.b16 %v862
  %v3594 = vunpack.c.l.b16 %v863
  %v3595 = vunpack.c.h.b16 %v863
  %v3596 = vunpack.c.l.b16 %v864
  %v3597 = vunpack.c.h.b16 %v864
  %v3598 = vunpack.c.l.b16 %v865
  %v3599 = vunpack.c.h.b16 %v865
  %v3600 = vunpack.c.l.b16 %v866
  %v3601 = vunpack.c.h.b16 %v866
  %v3602 = vunpack.c.l.b16 %v867
  %v3603 = vunpack.c.h.b16 %v867
  %v3604 = vunpack.c.l.b16 %v868
  %v3605 = vunpack.c.h.b16 %v868
  %v3606 = vunpack.c.l.b16 %v869
  %v3607 = vunpack.c.h.b16 %v869
  %v3608 = vunpack.c.l.b16 %v870
  %v3609 = vunpack.c.h.b16 %v870
  %v3610 = vunpack.c.l.b16 %v871
  %v3611 = vunpack.c.h.b16 %v871
  %v3612 = vunpack.c.l.b16 %v872
  %v3613 = vunpack.c.h.b16 %v872
  %v3614 = vunpack.c.l.b16 %v873
  %v3615 = vunpack.c.h.b16 %v873
  %v3616 = vunpack.c.l.b16 %v874
  %v3617 = vunpack.c.h.b16 %v874
  %v3618 = vunpack.c.l.b16 %v875
  %v3619 = vunpack.c.h.b16 %v875
  %v3620 = vunpack.c.l.b16 %v876
  %v3621 = vunpack.c.h.b16 %v876
  %v3622 = vunpack.c.l.b16 %v877
  %v3623 = vunpack.c.h.b16 %v877
  %v3624 = vunpack.c.l.b16 %v878
  %v3625 = vunpack.c.h.b16 %v878
  %v3626 = vunpack.c.l.b16 %v879
  %v3627 = vunpack.c.h.b16 %v879
  %v3628 = vunpack.c.l.b16 %v880
  %v3629 = vunpack.c.h.b16 %v880
  %v3630 = vunpack.c.l.b16 %v881
  %v3631 = vunpack.c.h.b16 %v881
  %v3632 = vunpack.c.l.b16 %v882
  %v3633 = vunpack.c.h.b16 %v882
  %v3634 = vunpack.c.l.b16 %v883
  %v3635 = vunpack.c.h.b16 %v883
  %v3636 = vunpack.c.l.b16 %v884
  %v3637 = vunpack.c.h.b16 %v884
  %v3638 = vunpack.c.l.b16 %v885
  %v3639 = vunpack.c.h.b16 %v885
  %v3640 = vunpack.c.l.b16 %v886
  %v3641 = vunpack.c.h.b16 %v886
  %v3642 = vunpack.c.l.b16 %v887
  %v3643 = vunpack.c.h.b16 %v887
  %v3644 = vunpack.c.l.b16 %v888
  %v3645 = vunpack.c.h.b16 %v888
  %v3646 = vunpack.c.l.b16 %v889
  %v3647 = vunpack.c.h.b16 %v889
  %v3648 = vunpack.c.l.b16 %v890
  %v3649 = vunpack.c.h.b16 %v890
  %v3650 = vunpack.c.l.b16 %v891
  %v3651 = vunpack.c.h.b16 %v891
  %v3652 = vunpack.c.l.b16 %v892
  %v3653 = vunpack.c.h.b16 %v892
  %v3654 = vunpack.c.l.b16 %v893
  %v3655 = vunpack.c.h.b16 %v893
  %v3656 = vunpack.c.l.b16 %v894
  %v3657 = vunpack.c.h.b16 %v894
  %v3658 = vunpack.c.l.b16 %v895
  %v3659 = vunpack.c.h.b16 %v895
  %v3660 = vunpack.c.l.b16 %v896
  %v3661 = vunpack.c.h.b16 %v896
  %v3662 = vunpack.c.l.b16 %v897
  %v3663 = vunpack.c.h.b16 %v897
  %v3664 = vunpack.c.l.b16 %v898
  %v3665 = vunpack.c.h.b16 %v898
  %v3666 = vunpack.c.l.b16 %v899
  %v3667 = vunpack.c.h.b16 %v899
  %v3668 = vunpack.c.l.b16 %v900
  %v3669 = vunpack.c.h.b16 %v900
  %v3670 = vunpack.c.l.b16 %v901
  %v3671 = vunpack.c.h.b16 %v901
  %v3672 = vunpack.c.l.b16 %v902
  %v3673 = vunpack.c.h.b16 %v902
  %v3674 = vunpack.c.l.b16 %v903
  %v3675 = vunpack.c.h.b16 %v903
  %v3676 = vunpack.c.l.b16 %v904
  %v3677 = vunpack.c.h.b16 %v904
  %v3678 = vunpack.c.l.b16 %v905
  %v3679 = vunpack.c.h.b16 %v905
  %v3680 = vunpack.c.l.b16 %v906
  %v3681 = vunpack.c.h.b16 %v906
  %v3682 = vunpack.c.l.b16 %v907
  %v3683 = vunpack.c.h.b16 %v907
  %v3684 = vunpack.c.l.b16 %v908
  %v3685 = vunpack.c.h.b16 %v908
  %v3686 = vunpack.c.l.b16 %v909
  %v3687 = vunpack.c.h.b16 %v909
  %v3688 = vunpack.c.l.b16 %v910
  %v3689 = vunpack.c.h.b16 %v910
  %v3690 = vunpack.c.l.b16 %v911
  %v3691 = vunpack.c.h.b16 %v911
  %v3692 = vunpack.c.l.b16 %v912
  %v3693 = vunpack.c.h.b16 %v912
  %v3694 = vunpack.c.l.b16 %v913
  %v3695 = vunpack.c.h.b16 %v913
  %v3696 = vunpack.c.l.b16 %v914
  %v3697 = vunpack.c.h.b16 %v914
  %v3698 = vunpack.c.l.b16 %v915
  %v3699 = vunpack.c.h.b16 %v915
  %v3700 = vunpack.c.l.b16 %v916
  %v3701 = vunpack.c.h.b16 %v916
  %v3702 = vunpack.c.l.b16 %v917
  %v3703 = vunpack.c.h.b16 %v917
  %v3704 = vunpack.c.l.b16 %v918
  %v3705 = vunpack.c.h.b16 %v918
  %v3706 = vunpack.c.l.b16 %v919
  %v3707 = vunpack.c.h.b16 %v919
  %v3708 = vunpack.c.l.b16 %v920
  %v3709 = vunpack.c.h.b16 %v920
  %v3710 = vunpack.c.l.b16 %v921
  %v3711 = vunpack.c.h.b16 %v921
  %v3712 = vunpack.c.l.b16 %v922
  %v3713 = vunpack.c.h.b16 %v922
  %v3714 = vunpack.c.l.b16 %v923
  %v3715 = vunpack.c.h.b16 %v923
  %v3716 = vunpack.c.l.b16 %v924
  %v3717 = vunpack.c.h.b16 %v924
  %v3718 = vunpack.c.l.b16 %v925
  %v3719 = vunpack.c.h.b16 %v925
  %v3720 = vunpack.c.l.b16 %v926
  %v3721 = vunpack.c.h.b16 %v926
  %v3722 = vunpack.c.l.b16 %v927
  %v3723 = vunpack.c.h.b16 %v927
  %v3724 = vunpack.c.l.b16 %v928
  %v3725 = vunpack.c.h.b16 %v928
  %v3726 = vunpack.c.l.b16 %v929
  %v3727 = vunpack.c.h.b16 %v929
  %v3728 = vunpack.c.l.b16 %v930
  %v3729 = vunpack.c.h.b16 %v930
  %v3730 = vunpack.c.l.b16 %v931
  %v3731 = vunpack.c.h.b16 %v931
  %v3732 = vunpack.c.l.b16 %v932
  %v3733 = vunpack.c.h.b16 %v932
  %v3734 = vunpack.c.l.b16 %v933
  %v3735 = vunpack.c.h.b16 %v933
  %v3736 = vunpack.c.l.b16 %v934
  %v3737 = vunpack.c.h.b16 %v934
  %v3738 = vunpack.c.l.b16 %v935
  %v3739 = vunpack.c.h.b16 %v935
  %v3740 = vunpack.c.l.b16 %v936
  %v3741 = vunpack.c.h.b16 %v936
  %v3742 = vunpack.c.l.b16 %v937
  %v3743 = vunpack.c.h.b16 %v937
  %v3744 = vunpack.c.l.b16 %v938
  %v3745 = vunpack.c.h.b16 %v938
  %v3746 = vunpack.c.l.b16 %v939
  %v3747 = vunpack.c.h.b16 %v939
  %v3748 = vunpack.c.l.b16 %v940
  %v3749 = vunpack.c.h.b16 %v940
  %v3750 = vunpack.c.l.b16 %v941
  %v3751 = vunpack.c.h.b16 %v941
  %v3752 = vunpack.c.l.b16 %v942
  %v3753 = vunpack.c.h.b16 %v942
  %v3754 = vunpack.c.l.b16 %v943
  %v3755 = vunpack.c.h.b16 %v943
  %v3756 = vunpack.c.l.b16 %v944
  %v3757 = vunpack.c.h.b16 %v944
  %v3758 = vunpack.c.l.b16 %v945
  %v3759 = vunpack.c.h.b16 %v945
  %v3760 = vunpack.c.l.b16 %v946
  %v3761 = vunpack.c.h.b16 %v946
  %v3762 = vunpack.c.l.b16 %v947
  %v3763 = vunpack.c.h.b16 %v947
  %v3764 = vunpack.c.l.b16 %v948
  %v3765 = vunpack.c.h.b16 %v948
  %v3766 = vunpack.c.l.b16 %v949
  %v3767 = vunpack.c.h.b16 %v949
  %v3768 = vunpack.c.l.b16 %v950
  %v3769 = vunpack.c.h.b16 %v950
  %v3770 = vunpack.c.l.b16 %v951
  %v3771 = vunpack.c.h.b16 %v951
  %v3772 = vunpack.c.l.b16 %v952
  %v3773 = vunpack.c.h.b16 %v952
  %v3774 = vunpack.c.l.b16 %v953
  %v3775 = vunpack.c.h.b16 %v953
  %v3776 = vunpack.c.l.b16 %v954
  %v3777 = vunpack.c.h.b16 %v954
  %v3778 = vunpack.c.l.b16 %v955
  %v3779 = vunpack.c.h.b16 %v955
  %v3780 = vunpack.c.l.b16 %v956
  %v3781 = vunpack.c.h.b16 %v956
  %v3782 = vunpack.c.l.b16 %v957
  %v3783 = vunpack.c.h.b16 %v957
  %v3784 = vunpack.c.l.b16 %v958
  %v3785 = vunpack.c.h.b16 %v958
  %v3786 = vunpack.c.l.b16 %v959
  %v3787 = vunpack.c.h.b16 %v959
  %v3788 = vunpack.c.l.b16 %v960
  %v3789 = vunpack.c.h.b16 %v960
  %v3790 = vunpack.c.l.b16 %v961
  %v3791 = vunpack.c.h.b16 %v961
  %v3792 = vunpack.c.l.b16 %v962
  %v3793 = vunpack.c.h.b16 %v962
  %v3794 = vunpack.c.l.b16 %v963
  %v3795 = vunpack.c.h.b16 %v963
  %v3796 = vunpack.c.l.b16 %v964
  %v3797 = vunpack.c.h.b16 %v964
  %v3798 = vunpack.c.l.b16 %v965
  %v3799 = vunpack.c.h.b16 %v965
  %v3800 = vunpack.c.l.b16 %v966
  %v3801 = vunpack.c.h.b16 %v966
  %v3802 = vunpack.c.l.b16 %v967
  %v3803 = vunpack.c.h.b16 %v967
  %v3804 = vunpack.c.l.b16 %v968
  %v3805 = vunpack.c.h.b16 %v968
  %v3806 = vunpack.c.l.b16 %v969
  %v3807 = vunpack.c.h.b16 %v969
  %v3808 = vunpack.c.l.b16 %v970
  %v3809 = vunpack.c.h.b16 %v970
  %v3810 = vunpack.c.l.b16 %v971
  %v3811 = vunpack.c.h.b16 %v971
  %v3812 = vunpack.c.l.b16 %v972
  %v3813 = vunpack.c.h.b16 %v972
  %v3814 = vunpack.c.l.b16 %v973
  %v3815 = vunpack.c.h.b16 %v973
  %v3816 = vunpack.c.l.b16 %v974
  %v3817 = vunpack.c.h.b16 %v974
  %v3818 = vunpack.c.l.b16 %v975
  %v3819 = vunpack.c.h.b16 %v975
  %v3820 = vunpack.c.l.b16 %v976
  %v3821 = vunpack.c.h.b16 %v976
  %v3822 = vunpack.c.l.b16 %v977
  %v3823 = vunpack.c.h.b16 %v977
  %v3824 = vunpack.c.l.b16 %v978
  %v3825 = vunpack.c.h.b16 %v978
  %v3826 = vunpack.c.l.b16 %v979
  %v3827 = vunpack.c.h.b16 %v979
  %v3828 = vunpack.c.l.b16 %v980
  %v3829 = vunpack.c.h.b16 %v980
  %v3830 = vunpack.c.l.b16 %v981
  %v3831 = vunpack.c.h.b16 %v981
  %v3832 = vunpack.c.l.b16 %v982
  %v3833 = vunpack.c.h.b16 %v982
  %v3834 = vunpack.c.l.b16 %v983
  %v3835 = vunpack.c.h.b16 %v983
  %v3836 = vunpack.c.l.b16 %v984
  %v3837 = vunpack.c.h.b16 %v984
  %v3838 = vunpack.c.l.b16 %v985
  %v3839 = vunpack.c.h.b16 %v985
  %v3840 = vunpack.c.l.b16 %v986
  %v3841 = vunpack.c.h.b16 %v986
  %v3842 = vunpack.c.l.b16 %v987
  %v3843 = vunpack.c.h.b16 %v987
  %v3844 = vunpack.c.l.b16 %v988
  %v3845 = vunpack.c.h.b16 %v988
  %v3846 = vunpack.c.l.b16 %v989
  %v3847 = vunpack.c.h.b16 %v989
  %v3848 = vunpack.c.l.b16 %v990
  %v3849 = vunpack.c.h.b16 %v990
  %v3850 = vunpack.c.l.b16 %v991
  %v3851 = vunpack.c.h.b16 %v991
  %v3852 = vunpack.c.l.b16 %v992
  %v3853 = vunpack.c.h.b16 %v992
  %v3854 = vunpack.c.l.b16 %v993
  %v3855 = vunpack.c.h.b16 %v993
  %v3856 = vunpack.c.l.b16 %v994
  %v3857 = vunpack.c.h.b16 %v994
  %v3858 = vunpack.c.l.b16 %v995
  %v3859 = vunpack.c.h.b16 %v995
  %v3860 = vunpack.c.l.b16 %v996
  %v3861 = vunpack.c.h.b16 %v996
  %v3862 = vunpack.c.l.b16 %v997
  %v3863 = vunpack.c.h.b16 %v997
  %v3864 = vunpack.c.l.b16 %v998
  %v3865 = vunpack.c.h.b16 %v998
  %v3866 = vunpack.c.l.b16 %v999
  %v3867 = vunpack.c.h.b16 %v999
  %v3868 = vunpack.c.l.b16 %v1000
  %v3869 = vunpack.c.h.b16 %v1000
  %v3870 = vunpack.c.l.b16 %v1001
  %v3871 = vunpack.c.h.b16 %v1001
  %v3872 = vunpack.c.l.b16 %v1002
  %v3873 = vunpack.c.h.b16 %v1002
  %v3874 = vunpack.c.l.b16 %v1003
  %v3875 = vunpack.c.h.b16 %v1003
  %v3876 = vunpack.c.l.b16 %v1004
  %v3877 = vunpack.c.h.b16 %v1004
  %v3878 = vunpack.c.l.b16 %v1005
  %v3879 = vunpack.c.h.b16 %v1005
  %v3880 = vunpack.c.l.b16 %v1006
  %v3881 = vunpack.c.h.b16 %v1006
  %v3882 = vunpack.c.l.b16 %v1007
  %v3883 = vunpack.c.h.b16 %v1007
  %v3884 = vunpack.c.l.b16 %v1008
  %v3885 = vunpack.c.h.b16 %v1008
  %v3886 = vunpack.c.l.b16 %v1009
  %v3887 = vunpack.c.h.b16 %v1009
  %v3888 = vunpack.c.l.b16 %v1010
  %v3889 = vunpack.c.h.b16 %v1010
  %v3890 = vunpack.c.l.b16 %v1011
  %v3891 = vunpack.c.h.b16 %v1011
  %v3892 = vunpack.c.l.b16 %v1012
  %v3893 = vunpack.c.h.b16 %v1012
  %v3894 = vunpack.c.l.b16 %v1013
  %v3895 = vunpack.c.h.b16 %v1013
  %v3896 = vunpack.c.l.b16 %v1014
  %v3897 = vunpack.c.h.b16 %v1014
  %v3898 = vunpack.c.l.b16 %v1015
  %v3899 = vunpack.c.h.b16 %v1015
  %v3900 = vunpack.c.l.b16 %v1016
  %v3901 = vunpack.c.h.b16 %v1016
  %v3902 = vunpack.c.l.b16 %v1017
  %v3903 = vunpack.c.h.b16 %v1017
  %v3904 = vunpack.c.l.b16 %v1018
  %v3905 = vunpack.c.h.b16 %v1018
  %v3906 = vunpack.c.l.b16 %v1019
  %v3907 = vunpack.c.h.b16 %v1019
  %v3908 = vunpack.c.l.b16 %v1020
  %v3909 = vunpack.c.h.b16 %v1020
  %v3910 = vunpack.c.l.b16 %v1021
  %v3911 = vunpack.c.h.b16 %v1021
  %v3912 = vunpack.c.l.b16 %v1022
  %v3913 = vunpack.c.h.b16 %v1022
  %v3914 = vunpack.c.l.b16 %v1023
  %v3915 = vunpack.c.h.b16 %v1023
  %v3916 = vunpack.c.l.b16 %v1024
  %v3917 = vunpack.c.h.b16 %v1024
  %v3918 = vunpack.c.l.b16 %v1025
  %v3919 = vunpack.c.h.b16 %v1025
  %v3920 = vunpack.c.l.b16 %v1026
  %v3921 = vunpack.c.h.b16 %v1026
  %v3922 = vunpack.c.l.b16 %v1027
  %v3923 = vunpack.c.h.b16 %v1027
  %v3924 = vunpack.c.l.b16 %v1028
  %v3925 = vunpack.c.h.b16 %v1028
  %v3926 = vunpack.c.l.b16 %v1029
  %v3927 = vunpack.c.h.b16 %v1029
  %v3928 = vunpack.c.l.b16 %v1030
  %v3929 = vunpack.c.h.b16 %v1030
  %v3930 = vunpack.c.l.b16 %v1031
  %v3931 = vunpack.c.h.b16 %v1031
  %v3932 = vunpack.c.l.b16 %v1032
  %v3933 = vunpack.c.h.b16 %v1032
  %v3934 = vunpack.c.l.b16 %v1033
  %v3935 = vunpack.c.h.b16 %v1033
  %v3936 = vunpack.c.l.b16 %v1034
  %v3937 = vunpack.c.h.b16 %v1034
  %v3938 = vunpack.c.l.b16 %v1035
  %v3939 = vunpack.c.h.b16 %v1035
  %v3940 = vunpack.c.l.b16 %v1036
  %v3941 = vunpack.c.h.b16 %v1036
  %v3942 = vunpack.c.l.b16 %v1037
  %v3943 = vunpack.c.h.b16 %v1037
  %v3944 = vunpack.c.l.b16 %v1038
  %v3945 = vunpack.c.h.b16 %v1038
  %v3946 = vunpack.c.l.b16 %v1039
  %v3947 = vunpack.c.h.b16 %v1039
  %v3948 = vunpack.c.l.b16 %v1040
  %v3949 = vunpack.c.h.b16 %v1040
  %v3950 = vunpack.c.l.b16 %v1041
  %v3951 = vunpack.c.h.b16 %v1041
  %v3952 = vunpack.c.l.b16 %v1042
  %v3953 = vunpack.c.h.b16 %v1042
  %v3954 = vunpack.c.l.b16 %v1043
  %v3955 = vunpack.c.h.b16 %v1043
  %v3956 = vunpack.c.l.b16 %v1044
  %v3957 = vunpack.c.h.b16 %v1044
  %v3958 = vunpack.c.l.b16 %v1045
  %v3959 = vunpack.c.h.b16 %v1045
  %v3960 = vunpack.c.l.b16 %v1046
  %v3961 = vunpack.c.h.b16 %v1046
  %v3962 = vunpack.c.l.b16 %v1047
  %v3963 = vunpack.c.h.b16 %v1047
  %v3964 = vunpack.c.l.b16 %v1048
  %v3965 = vunpack.c.h.b16 %v1048
  %v3966 = vunpack.c.l.b16 %v1049
  %v3967 = vunpack.c.h.b16 %v1049
  %v3968 = vunpack.c.l.b16 %v1050
  %v3969 = vunpack.c.h.b16 %v1050
  %v3970 = vunpack.c.l.b16 %v1051
  %v3971 = vunpack.c.h.b16 %v1051
  %v3972 = vunpack.c.l.b16 %v1052
  %v3973 = vunpack.c.h.b16 %v1052
  %v3974 = vunpack.c.l.b16 %v1053
  %v3975 = vunpack.c.h.b16 %v1053
  %v3976 = vunpack.c.l.b16 %v1054
  %v3977 = vunpack.c.h.b16 %v1054
  %v3978 = vunpack.c.l.b16 %v1055
  %v3979 = vunpack.c.h.b16 %v1055
  %v3980 = vunpack.c.l.b16 %v1056
  %v3981 = vunpack.c.h.b16 %v1056
  %v3982 = vunpack.c.l.b16 %v1057
  %v3983 = vunpack.c.h.b16 %v1057
  %v3984 = vunpack.c.l.b16 %v1058
  %v3985 = vunpack.c.h.b16 %v1058
  %v3986 = vunpack.c.l.b16 %v1059
  %v3987 = vunpack.c.h.b16 %v1059
  %v3988 = vunpack.c.l.b16 %v1060
  %v3989 = vunpack.c.h.b16 %v1060
  %v3990 = vunpack.c.l.b16 %v1061
  %v3991 = vunpack.c.h.b16 %v1061
  %v3992 = vunpack.c.l.b16 %v1062
  %v3993 = vunpack.c.h.b16 %v1062
  %v3994 = vunpack.c.l.b16 %v1063
  %v3995 = vunpack.c.h.b16 %v1063
  %v3996 = vunpack.c.l.b16 %v1064
  %v3997 = vunpack.c.h.b16 %v1064
  %v3998 = vunpack.c.l.b16 %v1065
  %v3999 = vunpack.c.h.b16 %v1065
  %v4000 = vunpack.c.l.b16 %v1066
  %v4001 = vunpack.c.h.b16 %v1066
  %v4002 = vunpack.c.l.b16 %v1067
  %v4003 = vunpack.c.h.b16 %v1067
  %v4004 = vunpack.c.l.b16 %v1068
  %v4005 = vunpack.c.h.b16 %v1068
  %v4006 = vunpack.c.l.b16 %v1069
  %v4007 = vunpack.c.h.b16 %v1069
  %v4008 = vunpack.c.l.b16 %v1070
  %v4009 = vunpack.c.h.b16 %v1070
  %v4010 = vunpack.c.l.b16 %v1071
  %v4011 = vunpack.c.h.b16 %v1071
  %v4012 = vunpack.c.l.b16 %v1072
  %v4013 = vunpack.c.h.b16 %v1072
  %v4014 = vunpack.c.l.b16 %v1073
  %v4015 = vunpack.c.h.b16 %v1073
  %v4016 = vunpack.c.l.b16 %v1074
  %v4017 = vunpack.c.h.b16 %v1074
  %v4018 = vunpack.c.l.b16 %v1075
  %v4019 = vunpack.c.h.b16 %v1075
  %v4020 = vunpack.c.l.b16 %v1076
  %v4021 = vunpack.c.h.b16 %v1076
  %v4022 = vunpack.c.l.b16 %v1077
  %v4023 = vunpack.c.h.b16 %v1077
  %v4024 = vunpack.c.l.b16 %v1078
  %v4025 = vunpack.c.h.b16 %v1078
  %v4026 = vunpack.c.l.b16 %v1079
  %v4027 = vunpack.c.h.b16 %v1079
  %v4028 = vunpack.c.l.b16 %v1080
  %v4029 = vunpack.c.h.b16 %v1080
  %v4030 = vunpack.c.l.b16 %v1081
  %v4031 = vunpack.c.h.b16 %v1081
  %v4032 = vunpack.c.l.b16 %v1082
  %v4033 = vunpack.c.h.b16 %v1082
  %v4034 = vunpack.c.l.b16 %v1083
  %v4035 = vunpack.c.h.b16 %v1083
  %v4036 = vunpack.c.l.b16 %v1084
  %v4037 = vunpack.c.h.b16 %v1084
  %v4038 = vunpack.c.l.b16 %v1085
  %v4039 = vunpack.c.h.b16 %v1085
  %v4040 = vunpack.c.l.b16 %v1086
  %v4041 = vunpack.c.h.b16 %v1086
  %v4042 = vunpack.c.l.b16 %v1087
  %v4043 = vunpack.c.h.b16 %v1087
  %v4044 = vunpack.c.l.b16 %v1088
  %v4045 = vunpack.c.h.b16 %v1088
  %v4046 = vunpack.c.l.b16 %v1089
  %v4047 = vunpack.c.h.b16 %v1089
  %v4048 = vunpack.c.l.b16 %v1090
  %v4049 = vunpack.c.h.b16 %v1090
  %v4050 = vunpack.c.l.b16 %v1091
  %v4051 = vunpack.c.h.b16 %v1091
  %v4052 = vunpack.c.l.b16 %v1092
  %v4053 = vunpack.c.h.b16 %v1092
  %v4054 = vunpack.c.l.b16 %v1093
  %v4055 = vunpack.c.h.b16 %v1093
  %v4056 = vunpack.c.l.b16 %v1094
  %v4057 = vunpack.c.h.b16 %v1094
  %v4058 = vunpack.c.l.b16 %v1095
  %v4059 = vunpack.c.h.b16 %v1095
  %v4060 = vunpack.c.l.b16 %v1096
  %v4061 = vunpack.c.h.b16 %v1096
  %v4062 = vunpack.c.l.b16 %v1097
  %v4063 = vunpack.c.h.b16 %v1097
  %v4064 = vunpack.c.l.b16 %v1098
  %v4065 = vunpack.c.h.b16 %v1098
  %v4066 = vunpack.c.l.b16 %v1099
  %v4067 = vunpack.c.h.b16 %v1099
  %v4068 = vunpack.c.l.b16 %v1100
  %v4069 = vunpack.c.h.b16 %v1100
  %v4070 = vunpack.c.l.b16 %v1101
  %v4071 = vunpack.c.h.b16 %v1101
  %v4072 = vunpack.c.l.b16 %v1102
  %v4073 = vunpack.c.h.b16 %v1102
  %v4074 = vunpack.c.l.b16 %v1103
  %v4075 = vunpack.c.h.b16 %v1103
  %v4076 = vunpack.c.l.b16 %v1104
  %v4077 = vunpack.c.h.b16 %v1104
  %v4078 = vunpack.c.l.b16 %v1105
  %v4079 = vunpack.c.h.b16 %v1105
  %v4080 = vunpack.c.l.b16 %v1106
  %v4081 = vunpack.c.h.b16 %v1106
  %v4082 = vunpack.c.l.b16 %v1107
  %v4083 = vunpack.c.h.b16 %v1107
  %v4084 = vunpack.c.l.b16 %v1108
  %v4085 = vunpack.c.h.b16 %v1108
  %v4086 = vunpack.c.l.b16 %v1109
  %v4087 = vunpack.c.h.b16 %v1109
  %v4088 = vunpack.c.l.b16 %v1110
  %v4089 = vunpack.c.h.b16 %v1110
  %v4090 = vunpack.c.l.b16 %v1111
  %v4091 = vunpack.c.h.b16 %v1111
  %v4092 = vunpack.c.l.b16 %v1112
  %v4093 = vunpack.c.h.b16 %v1112
  %v4094 = vunpack.c.l.b16 %v1113
  %v4095 = vunpack.c.h.b16 %v1113
  %v4096 = vunpack.c.l.b16 %v1114
  %v4097 = vunpack.c.h.b16 %v1114
  %v4098 = vunpack.c.l.b16 %v1115
  %v4099 = vunpack.c.h.b16 %v1115
  %v4100 = vunpack.c.l.b16 %v1116
  %v4101 = vunpack.c.h.b16 %v1116
  %v4102 = vunpack.c.l.b16 %v1117
  %v4103 = vunpack.c.h.b16 %v1117
  %v4104 = vunpack.c.l.b16 %v1118
  %v4105 = vunpack.c.h.b16 %v1118
  %v4106 = vunpack.c.l.b16 %v1119
  %v4107 = vunpack.c.h.b16 %v1119
  %v4108 = vunpack.c.l.b16 %v1120
  %v4109 = vunpack.c.h.b16 %v1120
  %v4110 = vunpack.c.l.b16 %v1121
  %v4111 = vunpack.c.h.b16 %v1121
  %v4112 = vunpack.c.l.b16 %v1122
  %v4113 = vunpack.c.h.b16 %v1122
  %v4114 = vunpack.c.l.b16 %v1123
  %v4115 = vunpack.c.h.b16 %v1123
  %v4116 = vunpack.c.l.b16 %v1124
  %v4117 = vunpack.c.h.b16 %v1124
  %v4118 = vunpack.c.l.b16 %v1125
  %v4119 = vunpack.c.h.b16 %v1125
  %v4120 = vunpack.c.l.b16 %v1126
  %v4121 = vunpack.c.h.b16 %v1126
  %v4122 = vunpack.c.l.b16 %v1127
  %v4123 = vunpack.c.h.b16 %v1127
  %v4124 = vunpack.c.l.b16 %v1128
  %v4125 = vunpack.c.h.b16 %v1128
  %v4126 = vunpack.c.l.b16 %v1129
  %v4127 = vunpack.c.h.b16 %v1129
  %v4128 = vunpack.c.l.b16 %v1130
  %v4129 = vunpack.c.h.b16 %v1130
  %v4130 = vunpack.c.l.b16 %v1131
  %v4131 = vunpack.c.h.b16 %v1131
  %v4132 = vunpack.c.l.b16 %v1132
  %v4133 = vunpack.c.h.b16 %v1132
  %v4134 = vunpack.c.l.b16 %v1133
  %v4135 = vunpack.c.h.b16 %v1133
  %v4136 = vunpack.c.l.b16 %v1134
  %v4137 = vunpack.c.h.b16 %v1134
  %v4138 = vunpack.c.l.b16 %v1135
  %v4139 = vunpack.c.h.b16 %v1135
  %v4140 = vunpack.c.l.b16 %v1136
  %v4141 = vunpack.c.h.b16 %v1136
  %v4142 = vunpack.c.l.b16 %v1137
  %v4143 = vunpack.c.h.b16 %v1137
  %v4144 = vunpack.c.l.b16 %v1138
  %v4145 = vunpack.c.h.b16 %v1138
  %v4146 = vunpack.c.l.b16 %v1139
  %v4147 = vunpack.c.h.b16 %v1139
  %v4148 = vunpack.c.l.b16 %v1140
  %v4149 = vunpack.c.h.b16 %v1140
  %v4150 = vunpack.c.l.b16 %v1141
  %v4151 = vunpack.c.h.b16 %v1141
  %v4152 = vunpack.c.l.b16 %v1142
  %v4153 = vunpack.c.h.b16 %v1142
  %v4154 = vunpack.c.l.b16 %v1143
  %v4155 = vunpack.c.h.b16 %v1143
  %v4156 = vunpack.c.l.b16 %v1144
  %v4157 = vunpack.c.h.b16 %v1144
  %v4158 = vunpack.c.l.b16 %v1145
  %v4159 = vunpack.c.h.b16 %v1145
  %v4160 = vunpack.c.l.b16 %v1146
  %v4161 = vunpack.c.h.b16 %v1146
  %v4162 = vunpack.c.l.b16 %v1147
  %v4163 = vunpack.c.h.b16 %v1147
  %v4164 = vunpack.c.l.b16 %v1148
  %v4165 = vunpack.c.h.b16 %v1148
  %v4166 = vunpack.c.l.b16 %v1149
  %v4167 = vunpack.c.h.b16 %v1149
  %v4168 = vunpack.c.l.b16 %v1150
  %v4169 = vunpack.c.h.b16 %v1150
  %v4170 = vunpack.c.l.b16 %v1151
  %v4171 = vunpack.c.h.b16 %v1151
  %v4172 = vunpack.c.l.b16 %v1152
  %v4173 = vunpack.c.h.b16 %v1152
  %v4174 = vunpack.c.l.b16 %v1153
  %v4175 = vunpack.c.h.b16 %v1153
  %v4176 = vunpack.c.l.b16 %v1154
  %v4177 = vunpack.c.h.b16 %v1154
  %v4178 = vunpack.c.l.b16 %v1155
  %v4179 = vunpack.c.h.b16 %v1155
  %v4180 = vunpack.c.l.b16 %v1156
  %v4181 = vunpack.c.h.b16 %v1156
  %v4182 = vunpack.c.l.b16 %v1157
  %v4183 = vunpack.c.h.b16 %v1157
  %v4184 = vunpack.c.l.b16 %v1158
  %v4185 = vunpack.c.h.b16 %v1158
  %v4186 = vunpack.c.l.b16 %v1159
  %v4187 = vunpack.c.h.b16 %v1159
  %v4188 = vunpack.c.l.b16 %v1160
  %v4189 = vunpack.c.h.b16 %v1160
  %v4190 = vunpack.c.l.b16 %v1161
  %v4191 = vunpack.c.h.b16 %v1161
  %v4192 = vunpack.c.l.b16 %v1162
  %v4193 = vunpack.c.h.b16 %v1162
  %v4194 = vunpack.c.l.b16 %v1163
  %v4195 = vunpack.c.h.b16 %v1163
  %v4196 = vunpack.c.l.b16 %v1164
  %v4197 = vunpack.c.h.b16 %v1164
  %v4198 = vunpack.c.l.b16 %v1165
  %v4199 = vunpack.c.h.b16 %v1165
  %v4200 = vunpack.c.l.b16 %v1166
  %v4201 = vunpack.c.h.b16 %v1166
  %v4202 = vunpack.c.l.b16 %v1167
  %v4203 = vunpack.c.h.b16 %v1167
  %v4204 = vunpack.c.l.b16 %v1168
  %v4205 = vunpack.c.h.b16 %v1168
  %v4206 = vunpack.c.l.b16 %v1169
  %v4207 = vunpack.c.h.b16 %v1169
  %v4208 = vunpack.c.l.b16 %v1170
  %v4209 = vunpack.c.h.b16 %v1170
  %v4210 = vunpack.c.l.b16 %v1171
  %v4211 = vunpack.c.h.b16 %v1171
  %v4212 = vunpack.c.l.b16 %v1172
  %v4213 = vunpack.c.h.b16 %v1172
  %v4214 = vunpack.c.l.b16 %v1173
  %v4215 = vunpack.c.h.b16 %v1173
  %v4216 = vunpack.c.l.b16 %v1174
  %v4217 = vunpack.c.h.b16 %v1174
  %v4218 = vunpack.c.l.b16 %v1175
  %v4219 = vunpack.c.h.b16 %v1175
  %v4220 = vunpack.c.l.b16 %v1176
  %v4221 = vunpack.c.h.b16 %v1176
  %v4222 = vunpack.c.l.b16 %v1177
  %v4223 = vunpack.c.h.b16 %v1177
  %v4224 = vunpack.c.l.b16 %v1178
  %v4225 = vunpack.c.h.b16 %v1178
  %v4226 = vunpack.c.l.b16 %v1179
  %v4227 = vunpack.c.h.b16 %v1179
  %v4228 = vunpack.c.l.b16 %v1180
  %v4229 = vunpack.c.h.b16 %v1180
  %v4230 = vunpack.c.l.b16 %v1181
  %v4231 = vunpack.c.h.b16 %v1181
  %v4232 = vunpack.c.l.b16 %v1182
  %v4233 = vunpack.c.h.b16 %v1182
  %v4234 = vunpack.c.l.b16 %v1183
  %v4235 = vunpack.c.h.b16 %v1183
  %v4236 = vunpack.c.l.b16 %v1184
  %v4237 = vunpack.c.h.b16 %v1184
  %v4238 = vunpack.c.l.b16 %v1185
  %v4239 = vunpack.c.h.b16 %v1185
  %v4240 = vunpack.c.l.b16 %v1186
  %v4241 = vunpack.c.h.b16 %v1186
  %v4242 = vunpack.c.l.b16 %v1187
  %v4243 = vunpack.c.h.b16 %v1187
  %v4244 = vunpack.c.l.b16 %v1188
  %v4245 = vunpack.c.h.b16 %v1188
  %v4246 = vunpack.c.l.b16 %v1189
  %v4247 = vunpack.c.h.b16 %v1189
  %v4248 = vunpack.c.l.b16 %v1190
  %v4249 = vunpack.c.h.b16 %v1190
  %v4250 = vunpack.c.l.b16 %v1191
  %v4251 = vunpack.c.h.b16 %v1191
  %v4252 = vunpack.c.l.b16 %v1192
  %v4253 = vunpack.c.h.b16 %v1192
  %v4254 = vunpack.c.l.b16 %v1193
  %v4255 = vunpack.c.h.b16 %v1193
  %v4256 = vunpack.c.l.b16 %v1194
  %v4257 = vunpack.c.h.b16 %v1194
  %v4258 = vunpack.c.l.b16 %v1195
  %v4259 = vunpack.c.h.b16 %v1195
  %v4260 = vunpack.c.l.b16 %v1196
  %v4261 = vunpack.c.h.b16 %v1196
  %v4262 = vunpack.c.l.b16 %v1197
  %v4263 = vunpack.c.h.b16 %v1197
  %v4264 = vunpack.c.l.b16 %v1198
  %v4265 = vunpack.c.h.b16 %v1198
  %v4266 = vunpack.c.l.b16 %v1199
  %v4267 = vunpack.c.h.b16 %v1199
  %v4268 = vunpack.c.l.b16 %v1200
  %v4269 = vunpack.c.h.b16 %v1200
  %v4270 = vunpack.c.l.b16 %v1201
  %v4271 = vunpack.c.h.b16 %v1201
  %v4272 = vunpack.c.l.b16 %v1202
  %v4273 = vunpack.c.h.b16 %v1202
  %v4274 = vunpack.c.l.b16 %v1203
  %v4275 = vunpack.c.h.b16 %v1203
  %v4276 = vpack.c.b16 %v2232, %v2228
  %v4277 = vpack.c.b16 %v2233, %v2229
  %v4278 = vpack.c.b16 %v2234, %v2230
  %v4279 = vpack.c.b16 %v2235, %v2231
  %v4280 = vpack.c.b16 %v2240, %v2236
  %v4281 = vpack.c.b16 %v2241, %v2237
  %v4282 = vpack.c.b16 %v2242, %v2238
  %v4283 = vpack.c.b16 %v2243, %v2239
  %v4284 = vpack.c.b16 %v2248, %v2244
  %v4285 = vpack.c.b16 %v2249, %v2245
  %v4286 = vpack.c.b16 %v2250, %v2246
  %v4287 = vpack.c.b16 %v2251, %v2247
  %v4288 = vpack.c.b16 %v2256, %v2252
  %v4289 = vpack.c.b16 %v2257, %v2253
  %v4290 = vpack.c.b16 %v2258, %v2254
  %v4291 = vpack.c.b16 %v2259, %v2255
  %v4292 = vpack.c.b16 %v2264, %v2260
  %v4293 = vpack.c.b16 %v2265, %v2261
  %v4294 = vpack.c.b16 %v2266, %v2262
  %v4295 = vpack.c.b16 %v2267, %v2263
  %v4296 = vpack.c.b16 %v2272, %v2268
  %v4297 = vpack.c.b16 %v2273, %v2269
  %v4298 = vpack.c.b16 %v2274, %v2270
  %v4299 = vpack.c.b16 %v2275, %v2271
  %v4300 = vpack.c.b16 %v2280, %v2276
  %v4301 = vpack.c.b16 %v2281, %v2277
  %v4302 = vpack.c.b16 %v2282, %v2278
  %v4303 = vpack.c.b16 %v2283, %v2279
  %v4304 = vpack.c.b16 %v2288, %v2284
  %v4305 = vpack.c.b16 %v2289, %v2285
  %v4306 = vpack.c.b16 %v2290, %v2286
  %v4307 = vpack.c.b16 %v2291, %v2287
  %v4308 = vpack.c.b16 %v2296, %v2292
  %v4309 = vpack.c.b16 %v2297, %v2293
  %v4310 = vpack.c.b16 %v2298, %v2294
  %v4311 = vpack.c.b16 %v2299, %v2295
  %v4312 = vpack.c.b16 %v2304, %v2300
  %v4313 = vpack.c.b16 %v2305, %v2301
  %v4314 = vpack.c.b16 %v2306, %v2302
  %v4315 = vpack.c.b16 %v2307, %v2303
  %v4316 = vpack.c.b16 %v2312, %v2308
  %v4317 = vpack.c.b16 %v2313, %v2309
  %v4318 = vpack.c.b16 %v2314, %v2310
  %v4319 = vpack.c.b16 %v2315, %v2311
  %v4320 = vpack.c.b16 %v2320, %v2316
  %v4321 = vpack.c.b16 %v2321, %v2317
  %v4322 = vpack.c.b16 %v2322, %v2318
  %v4323 = vpack.c.b16 %v2323, %v2319
  %v4324 = vpack.c.b16 %v2328, %v2324
  %v4325 = vpack.c.b16 %v2329, %v2325
  %v4326 = vpack.c.b16 %v2330, %v2326
  %v4327 = vpack.c.b16 %v2331, %v2327
  %v4328 = vpack.c.b16 %v2336, %v2332
  %v4329 = vpack.c.b16 %v2337, %v2333
  %v4330 = vpack.c.b16 %v2338, %v2334
  %v4331 = vpack.c.b16 %v2339, %v2335
  %v4332 = vpack.c.b16 %v2344, %v2340
  %v4333 = vpack.c.b16 %v2345, %v2341
  %v4334 = vpack.c.b16 %v2346, %v2342
  %v4335 = vpack.c.b16 %v2347, %v2343
  %v4336 = vpack.c.b16 %v2352, %v2348
  %v4337 = vpack.c.b16 %v2353, %v2349
  %v4338 = vpack.c.b16 %v2354, %v2350
  %v4339 = vpack.c.b16 %v2355, %v2351
  %v4340 = vpack.c.b16 %v2360, %v2356
  %v4341 = vpack.c.b16 %v2361, %v2357
  %v4342 = vpack.c.b16 %v2362, %v2358
  %v4343 = vpack.c.b16 %v2363, %v2359
  %v4344 = vpack.c.b16 %v2368, %v2364
  %v4345 = vpack.c.b16 %v2369, %v2365
  %v4346 = vpack.c.b16 %v2370, %v2366
  %v4347 = vpack.c.b16 %v2371, %v2367
  %v4348 = vpack.c.b16 %v2376, %v2372
  %v4349 = vpack.c.b16 %v2377, %v2373
  %v4350 = vpack.c.b16 %v2378, %v2374
  %v4351 = vpack.c.b16 %v2379, %v2375
  %v4352 = vpack.c.b16 %v2384, %v2380
  %v4353 = vpack.c.b16 %v2385, %v2381
  %v4354 = vpack.c.b16 %v2386, %v2382
  %v4355 = vpack.c.b16 %v2387, %v2383
  %v4356 = vpack.c.b16 %v2392, %v2388
  %v4357 = vpack.c.b16 %v2393, %v2389
  %v4358 = vpack.c.b16 %v2394, %v2390
  %v4359 = vpack.c.b16 %v2395, %v2391
  %v4360 = vpack.c.b16 %v2400, %v2396
  %v4361 = vpack.c.b16 %v2401, %v2397
  %v4362 = vpack.c.b16 %v2402, %v2398
  %v4363 = vpack.c.b16 %v2403, %v2399
  %v4364 = vpack.c.b16 %v2408, %v2404
  %v4365 = vpack.c.b16 %v2409, %v2405
  %v4366 = vpack.c.b16 %v2410, %v2406
  %v4367 = vpack.c.b16 %v2411, %v2407
  %v4368 = vpack.c.b16 %v2416, %v2412
  %v4369 = vpack.c.b16 %v2417, %v2413
  %v4370 = vpack.c.b16 %v2418, %v2414
  %v4371 = vpack.c.b16 %v2419, %v2415
  %v4372 = vpack.c.b16 %v2424, %v2420
  %v4373 = vpack.c.b16 %v2425, %v2421
  %v4374 = vpack.c.b16 %v2426, %v2422
  %v4375 = vpack.c.b16 %v2427, %v2423
  %v4376 = vpack.c.b16 %v2432, %v2428
  %v4377 = vpack.c.b16 %v2433, %v2429
  %v4378 = vpack.c.b16 %v2434, %v2430
  %v4379 = vpack.c.b16 %v2435, %v2431
  %v4380 = vpack.c.b16 %v2440, %v2436
  %v4381 = vpack.c.b16 %v2441, %v2437
  %v4382 = vpack.c.b16 %v2442, %v2438
  %v4383 = vpack.c.b16 %v2443, %v2439
  %v4384 = vpack.c.b16 %v2448, %v2444
  %v4385 = vpack.c.b16 %v2449, %v2445
  %v4386 = vpack.c.b16 %v2450, %v2446
  %v4387 = vpack.c.b16 %v2451, %v2447
  %v4388 = vpack.c.b16 %v2456, %v2452
  %v4389 = vpack.c.b16 %v2457, %v2453
  %v4390 = vpack.c.b16 %v2458, %v2454
  %v4391 = vpack.c.b16 %v2459, %v2455
  %v4392 = vpack.c.b16 %v2464, %v2460
  %v4393 = vpack.c.b16 %v2465, %v2461
  %v4394 = vpack.c.b16 %v2466, %v2462
  %v4395 = vpack.c.b16 %v2467, %v2463
  %v4396 = vpack.c.b16 %v2472, %v2468
  %v4397 = vpack.c.b16 %v2473, %v2469
  %v4398 = vpack.c.b16 %v2474, %v2470
  %v4399 = vpack.c.b16 %v2475, %v2471
  %v4400 = vpack.c.b16 %v2480, %v2476
  %v4401 = vpack.c.b16 %v2481, %v2477
  %v4402 = vpack.c.b16 %v2482, %v2478
  %v4403 = vpack.c.b16 %v2483, %v2479
  %v4404 = vpack.c.b16 %v2488, %v2484
  %v4405 = vpack.c.b16 %v2489, %v2485
  %v4406 = vpack.c.b16 %v2490, %v2486
  %v4407 = vpack.c.b16 %v2491, %v2487
  %v4408 = vpack.c.b16 %v2496, %v2492
  %v4409 = vpack.c.b16 %v2497, %v2493
  %v4410 = vpack.c.b16 %v2498, %v2494
  %v4411 = vpack.c.b16 %v2499, %v2495
  %v4412 = vpack.c.b16 %v2504, %v2500
  %v4413 = vpack.c.b16 %v2505, %v2501
  %v4414 = vpack.c.b16 %v2506, %v2502
  %v4415 = vpack.c.b16 %v2507, %v2503
  %v4416 = vpack.c.b16 %v2512, %v2508
  %v4417 = vpack.c.b16 %v2513, %v2509
  %v4418 = vpack.c.b16 %v2514, %v2510
  %v4419 = vpack.c.b16 %v2515, %v2511
  %v4420 = vpack.c.b16 %v2520, %v2516
  %v4421 = vpack.c.b16 %v2521, %v2517
  %v4422 = vpack.c.b16 %v2522, %v2518
  %v4423 = vpack.c.b16 %v2523, %v2519
  %v4424 = vpack.c.b16 %v2528, %v2524
  %v4425 = vpack.c.b16 %v2529, %v2525
  %v4426 = vpack.c.b16 %v2530, %v2526
  %v4427 = vpack.c.b16 %v2531, %v2527
  %v4428 = vpack.c.b16 %v2536, %v2532
  %v4429 = vpack.c.b16 %v2537, %v2533
  %v4430 = vpack.c.b16 %v2538, %v2534
  %v4431 = vpack.c.b16 %v2539, %v2535
  %v4432 = vpack.c.b16 %v2544, %v2540
  %v4433 = vpack.c.b16 %v2545, %v2541
  %v4434 = vpack.c.b16 %v2546, %v2542
  %v4435 = vpack.c.b16 %v2547, %v2543
  %v4436 = vpack.c.b16 %v2552, %v2548
  %v4437 = vpack.c.b16 %v2553, %v2549
  %v4438 = vpack.c.b16 %v2554, %v2550
  %v4439 = vpack.c.b16 %v2555, %v2551
  %v4440 = vpack.c.b16 %v2560, %v2556
  %v4441 = vpack.c.b16 %v2561, %v2557
  %v4442 = vpack.c.b16 %v2562, %v2558
  %v4443 = vpack.c.b16 %v2563, %v2559
  %v4444 = vpack.c.b16 %v2568, %v2564
  %v4445 = vpack.c.b16 %v2569, %v2565
  %v4446 = vpack.c.b16 %v2570, %v2566
  %v4447 = vpack.c.b16 %v2571, %v2567
  %v4448 = vpack.c.b16 %v2576, %v2572
  %v4449 = vpack.c.b16 %v2577, %v2573
  %v4450 = vpack.c.b16 %v2578, %v2574
  %v4451 = vpack.c.b16 %v2579, %v2575
  %v4452 = vpack.c.b16 %v2584, %v2580
  %v4453 = vpack.c.b16 %v2585, %v2581
  %v4454 = vpack.c.b16 %v2586, %v2582
  %v4455 = vpack.c.b16 %v2587, %v2583
  %v4456 = vpack.c.b16 %v2592, %v2588
  %v4457 = vpack.c.b16 %v2593, %v2589
  %v4458 = vpack.c.b16 %v2594, %v2590
  %v4459 = vpack.c.b16 %v2595, %v2591
  %v4460 = vpack.c.b16 %v2600, %v2596
  %v4461 = vpack.c.b16 %v2601, %v2597
  %v4462 = vpack.c.b16 %v2602, %v2598
  %v4463 = vpack.c.b16 %v2603, %v2599
  %v4464 = vpack.c.b16 %v2608, %v2604
  %v4465 = vpack.c.b16 %v2609, %v2605
  %v4466 = vpack.c.b16 %v2610, %v2606
  %v4467 = vpack.c.b16 %v2611, %v2607
  %v4468 = vpack.c.b16 %v2616, %v2612
  %v4469 = vpack.c.b16 %v2617, %v2613
  %v4470 = vpack.c.b16 %v2618, %v2614
  %v4471 = vpack.c.b16 %v2619, %v2615
  %v4472 = vpack.c.b16 %v2624, %v2620
  %v4473 = vpack.c.b16 %v2625, %v2621
  %v4474 = vpack.c.b16 %v2626, %v2622
  %v4475 = vpack.c.b16 %v2627, %v2623
  %v4476 = vpack.c.b16 %v2632, %v2628
  %v4477 = vpack.c.b16 %v2633, %v2629
  %v4478 = vpack.c.b16 %v2634, %v2630
  %v4479 = vpack.c.b16 %v2635, %v2631
  %v4480 = vpack.c.b16 %v2640, %v2636
  %v4481 = vpack.c.b16 %v2641, %v2637
  %v4482 = vpack.c.b16 %v2642, %v2638
  %v4483 = vpack.c.b16 %v2643, %v2639
  %v4484 = vpack.c.b16 %v2648, %v2644
  %v4485 = vpack.c.b16 %v2649, %v2645
  %v4486 = vpack.c.b16 %v2650, %v2646
  %v4487 = vpack.c.b16 %v2651, %v2647
  %v4488 = vpack.c.b16 %v2656, %v2652
  %v4489 = vpack.c.b16 %v2657, %v2653
  %v4490 = vpack.c.b16 %v2658, %v2654
  %v4491 = vpack.c.b16 %v2659, %v2655
  %v4492 = vpack.c.b16 %v2664, %v2660
  %v4493 = vpack.c.b16 %v2665, %v2661
  %v4494 = vpack.c.b16 %v2666, %v2662
  %v4495 = vpack.c.b16 %v2667, %v2663
  %v4496 = vpack.c.b16 %v2672, %v2668
  %v4497 = vpack.c.b16 %v2673, %v2669
  %v4498 = vpack.c.b16 %v2674, %v2670
  %v4499 = vpack.c.b16 %v2675, %v2671
  %v4500 = vpack.c.b16 %v2680, %v2676
  %v4501 = vpack.c.b16 %v2681, %v2677
  %v4502 = vpack.c.b16 %v2682, %v2678
  %v4503 = vpack.c.b16 %v2683, %v2679
  %v4504 = vpack.c.b16 %v2688, %v2684
  %v4505 = vpack.c.b16 %v2689, %v2685
  %v4506 = vpack.c.b16 %v2690, %v2686
  %v4507 = vpack.c.b16 %v2691, %v2687
  %v4508 = vpack.c.b16 %v2696, %v2692
  %v4509 = vpack.c.b16 %v2697, %v2693
  %v4510 = vpack.c.b16 %v2698, %v2694
  %v4511 = vpack.c.b16 %v2699, %v2695
  %v4512 = vpack.c.b16 %v2704, %v2700
  %v4513 = vpack.c.b16 %v2705, %v2701
  %v4514 = vpack.c.b16 %v2706, %v2702
  %v4515 = vpack.c.b16 %v2707, %v2703
  %v4516 = vpack.c.b16 %v2712, %v2708
  %v4517 = vpack.c.b16 %v2713, %v2709
  %v4518 = vpack.c.b16 %v2714, %v2710
  %v4519 = vpack.c.b16 %v2715, %v2711
  %v4520 = vpack.c.b16 %v2720, %v2716
  %v4521 = vpack.c.b16 %v2721, %v2717
  %v4522 = vpack.c.b16 %v2722, %v2718
  %v4523 = vpack.c.b16 %v2723, %v2719
  %v4524 = vpack.c.b16 %v2728, %v2724
  %v4525 = vpack.c.b16 %v2729, %v2725
  %v4526 = vpack.c.b16 %v2730, %v2726
  %v4527 = vpack.c.b16 %v2731, %v2727
  %v4528 = vpack.c.b16 %v2736, %v2732
  %v4529 = vpack.c.b16 %v2737, %v2733
  %v4530 = vpack.c.b16 %v2738, %v2734
  %v4531 = vpack.c.b16 %v2739, %v2735
  %v4532 = vpack.c.b16 %v2744, %v2740
  %v4533 = vpack.c.b16 %v2745, %v2741
  %v4534 = vpack.c.b16 %v2746, %v2742
  %v4535 = vpack.c.b16 %v2747, %v2743
  %v4536 = vpack.c.b16 %v2752, %v2748
  %v4537 = vpack.c.b16 %v2753, %v2749
  %v4538 = vpack.c.b16 %v2754, %v2750
  %v4539 = vpack.c.b16 %v2755, %v2751
  %v4540 = vpack.c.b16 %v2760, %v2756
  %v4541 = vpack.c.b16 %v2761, %v2757
  %v4542 = vpack.c.b16 %v2762, %v2758
  %v4543 = vpack.c.b16 %v2763, %v2759
  %v4544 = vpack.c.b16 %v2768, %v2764
  %v4545 = vpack.c.b16 %v2769, %v2765
  %v4546 = vpack.c.b16 %v2770, %v2766
  %v4547 = vpack.c.b16 %v2771, %v2767
  %v4548 = vpack.c.b16 %v2776, %v2772
  %v4549 = vpack.c.b16 %v2777, %v2773
  %v4550 = vpack.c.b16 %v2778, %v2774
  %v4551 = vpack.c.b16 %v2779, %v2775
  %v4552 = vpack.c.b16 %v2784, %v2780
  %v4553 = vpack.c.b16 %v2785, %v2781
  %v4554 = vpack.c.b16 %v2786, %v2782
  %v4555 = vpack.c.b16 %v2787, %v2783
  %v4556 = vpack.c.b16 %v2792, %v2788
  %v4557 = vpack.c.b16 %v2793, %v2789
  %v4558 = vpack.c.b16 %v2794, %v2790
  %v4559 = vpack.c.b16 %v2795, %v2791
  %v4560 = vpack.c.b16 %v2800, %v2796
  %v4561 = vpack.c.b16 %v2801, %v2797
  %v4562 = vpack.c.b16 %v2802, %v2798
  %v4563 = vpack.c.b16 %v2803, %v2799
  %v4564 = vpack.c.b16 %v2808, %v2804
  %v4565 = vpack.c.b16 %v2809, %v2805
  %v4566 = vpack.c.b16 %v2810, %v2806
  %v4567 = vpack.c.b16 %v2811, %v2807
  %v4568 = vpack.c.b16 %v2816, %v2812
  %v4569 = vpack.c.b16 %v2817, %v2813
  %v4570 = vpack.c.b16 %v2818, %v2814
  %v4571 = vpack.c.b16 %v2819, %v2815
  %v4572 = vpack.c.b16 %v2824, %v2820
  %v4573 = vpack.c.b16 %v2825, %v2821
  %v4574 = vpack.c.b16 %v2826, %v2822
  %v4575 = vpack.c.b16 %v2827, %v2823
  %v4576 = vpack.c.b16 %v2832, %v2828
  %v4577 = vpack.c.b16 %v2833, %v2829
  %v4578 = vpack.c.b16 %v2834, %v2830
  %v4579 = vpack.c.b16 %v2835, %v2831
  %v4580 = vpack.c.b16 %v2840, %v2836
  %v4581 = vpack.c.b16 %v2841, %v2837
  %v4582 = vpack.c.b16 %v2842, %v2838
  %v4583 = vpack.c.b16 %v2843, %v2839
  %v4584 = vpack.c.b16 %v2848, %v2844
  %v4585 = vpack.c.b16 %v2849, %v2845
  %v4586 = vpack.c.b16 %v2850, %v2846
  %v4587 = vpack.c.b16 %v2851, %v2847
  %v4588 = vpack.c.b16 %v2856, %v2852
  %v4589 = vpack.c.b16 %v2857, %v2853
  %v4590 = vpack.c.b16 %v2858, %v2854
  %v4591 = vpack.c.b16 %v2859, %v2855
  %v4592 = vpack.c.b16 %v2864, %v2860
  %v4593 = vpack.c.b16 %v2865, %v2861
  %v4594 = vpack.c.b16 %v2866, %v2862
  %v4595 = vpack.c.b16 %v2867, %v2863
  %v4596 = vpack.c.b16 %v2872, %v2868
  %v4597 = vpack.c.b16 %v2873, %v2869
  %v4598 = vpack.c.b16 %v2874, %v2870
  %v4599 = vpack.c.b16 %v2875, %v2871
  %v4600 = vpack.c.b16 %v2880, %v2876
  %v4601 = vpack.c.b16 %v2881, %v2877
  %v4602 = vpack.c.b16 %v2882, %v2878
  %v4603 = vpack.c.b16 %v2883, %v2879
  %v4604 = vpack.c.b16 %v2888, %v2884
  %v4605 = vpack.c.b16 %v2889, %v2885
  %v4606 = vpack.c.b16 %v2890, %v2886
  %v4607 = vpack.c.b16 %v2891, %v2887
  %v4608 = vpack.c.b16 %v2896, %v2892
  %v4609 = vpack.c.b16 %v2897, %v2893
  %v4610 = vpack.c.b16 %v2898, %v2894
  %v4611 = vpack.c.b16 %v2899, %v2895
  %v4612 = vpack.c.b16 %v2904, %v2900
  %v4613 = vpack.c.b16 %v2905, %v2901
  %v4614 = vpack.c.b16 %v2906, %v2902
  %v4615 = vpack.c.b16 %v2907, %v2903
  %v4616 = vpack.c.b16 %v2912, %v2908
  %v4617 = vpack.c.b16 %v2913, %v2909
  %v4618 = vpack.c.b16 %v2914, %v2910
  %v4619 = vpack.c.b16 %v2915, %v2911
  %v4620 = vpack.c.b16 %v2920, %v2916
  %v4621 = vpack.c.b16 %v2921, %v2917
  %v4622 = vpack.c.b16 %v2922, %v2918
  %v4623 = vpack.c.b16 %v2923, %v2919
  %v4624 = vpack.c.b16 %v2928, %v2924
  %v4625 = vpack.c.b16 %v2929, %v2925
  %v4626 = vpack.c.b16 %v2930, %v2926
  %v4627 = vpack.c.b16 %v2931, %v2927
  %v4628 = vpack.c.b16 %v2936, %v2932
  %v4629 = vpack.c.b16 %v2937, %v2933
  %v4630 = vpack.c.b16 %v2938, %v2934
  %v4631 = vpack.c.b16 %v2939, %v2935
  %v4632 = vpack.c.b16 %v2944, %v2940
  %v4633 = vpack.c.b16 %v2945, %v2941
  %v4634 = vpack.c.b16 %v2946, %v2942
  %v4635 = vpack.c.b16 %v2947, %v2943
  %v4636 = vpack.c.b16 %v2952, %v2948
  %v4637 = vpack.c.b16 %v2953, %v2949
  %v4638 = vpack.c.b16 %v2954, %v2950
  %v4639 = vpack.c.b16 %v2955, %v2951
  %v4640 = vpack.c.b16 %v2960, %v2956
  %v4641 = vpack.c.b16 %v2961, %v2957
  %v4642 = vpack.c.b16 %v2962, %v2958
  %v4643 = vpack.c.b16 %v2963, %v2959
  %v4644 = vpack.c.b16 %v2968, %v2964
  %v4645 = vpack.c.b16 %v2969, %v2965
  %v4646 = vpack.c.b16 %v2970, %v2966
  %v4647 = vpack.c.b16 %v2971, %v2967
  %v4648 = vpack.c.b16 %v2976, %v2972
  %v4649 = vpack.c.b16 %v2977, %v2973
  %v4650 = vpack.c.b16 %v2978, %v2974
  %v4651 = vpack.c.b16 %v2979, %v2975
  %v4652 = vpack.c.b16 %v2984, %v2980
  %v4653 = vpack.c.b16 %v2985, %v2981
  %v4654 = vpack.c.b16 %v2986, %v2982
  %v4655 = vpack.c.b16 %v2987, %v2983
  %v4656 = vpack.c.b16 %v2992, %v2988
  %v4657 = vpack.c.b16 %v2993, %v2989
  %v4658 = vpack.c.b16 %v2994, %v2990
  %v4659 = vpack.c.b16 %v2995, %v2991
  %v4660 = vpack.c.b16 %v3000, %v2996
  %v4661 = vpack.c.b16 %v3001, %v2997
  %v4662 = vpack.c.b16 %v3002, %v2998
  %v4663 = vpack.c.b16 %v3003, %v2999
  %v4664 = vpack.c.b16 %v3008, %v3004
  %v4665 = vpack.c.b16 %v3009, %v3005
  %v4666 = vpack.c.b16 %v3010, %v3006
  %v4667 = vpack.c.b16 %v3011, %v3007
  %v4668 = vpack.c.b16 %v3016, %v3012
  %v4669 = vpack.c.b16 %v3017, %v3013
  %v4670 = vpack.c.b16 %v3018, %v3014
  %v4671 = vpack.c.b16 %v3019, %v3015
  %v4672 = vpack.c.b16 %v3024, %v3020
  %v4673 = vpack.c.b16 %v3025, %v3021
  %v4674 = vpack.c.b16 %v3026, %v3022
  %v4675 = vpack.c.b16 %v3027, %v3023
  %v4676 = vpack.c.b16 %v3032, %v3028
  %v4677 = vpack.c.b16 %v3033, %v3029
  %v4678 = vpack.c.b16 %v3034, %v3030
  %v4679 = vpack.c.b16 %v3035, %v3031
  %v4680 = vpack.c.b16 %v3040, %v3036
  %v4681 = vpack.c.b16 %v3041, %v3037
  %v4682 = vpack.c.b16 %v3042, %v3038
  %v4683 = vpack.c.b16 %v3043, %v3039
  %v4684 = vpack.c.b16 %v3048, %v3044
  %v4685 = vpack.c.b16 %v3049, %v3045
  %v4686 = vpack.c.b16 %v3050, %v3046
  %v4687 = vpack.c.b16 %v3051, %v3047
  %v4688 = vpack.c.b16 %v3056, %v3052
  %v4689 = vpack.c.b16 %v3057, %v3053
  %v4690 = vpack.c.b16 %v3058, %v3054
  %v4691 = vpack.c.b16 %v3059, %v3055
  %v4692 = vpack.c.b16 %v3064, %v3060
  %v4693 = vpack.c.b16 %v3065, %v3061
  %v4694 = vpack.c.b16 %v3066, %v3062
  %v4695 = vpack.c.b16 %v3067, %v3063
  %v4696 = vpack.c.b16 %v3072, %v3068
  %v4697 = vpack.c.b16 %v3073, %v3069
  %v4698 = vpack.c.b16 %v3074, %v3070
  %v4699 = vpack.c.b16 %v3075, %v3071
  %v4700 = vpack.c.b16 %v3080, %v3076
  %v4701 = vpack.c.b16 %v3081, %v3077
  %v4702 = vpack.c.b16 %v3082, %v3078
  %v4703 = vpack.c.b16 %v3083, %v3079
  %v4704 = vpack.c.b16 %v3088, %v3084
  %v4705 = vpack.c.b16 %v3089, %v3085
  %v4706 = vpack.c.b16 %v3090, %v3086
  %v4707 = vpack.c.b16 %v3091, %v3087
  %v4708 = vpack.c.b16 %v3096, %v3092
  %v4709 = vpack.c.b16 %v3097, %v3093
  %v4710 = vpack.c.b16 %v3098, %v3094
  %v4711 = vpack.c.b16 %v3099, %v3095
  %v4712 = vpack.c.b16 %v3104, %v3100
  %v4713 = vpack.c.b16 %v3105, %v3101
  %v4714 = vpack.c.b16 %v3106, %v3102
  %v4715 = vpack.c.b16 %v3107, %v3103
  %v4716 = vpack.c.b16 %v3112, %v3108
  %v4717 = vpack.c.b16 %v3113, %v3109
  %v4718 = vpack.c.b16 %v3114, %v3110
  %v4719 = vpack.c.b16 %v3115, %v3111
  %v4720 = vpack.c.b16 %v3120, %v3116
  %v4721 = vpack.c.b16 %v3121, %v3117
  %v4722 = vpack.c.b16 %v3122, %v3118
  %v4723 = vpack.c.b16 %v3123, %v3119
  %v4724 = vpack.c.b16 %v3128, %v3124
  %v4725 = vpack.c.b16 %v3129, %v3125
  %v4726 = vpack.c.b16 %v3130, %v3126
  %v4727 = vpack.c.b16 %v3131, %v3127
  %v4728 = vpack.c.b16 %v3136, %v3132
  %v4729 = vpack.c.b16 %v3137, %v3133
  %v4730 = vpack.c.b16 %v3138, %v3134
  %v4731 = vpack.c.b16 %v3139, %v3135
  %v4732 = vpack.c.b16 %v3144, %v3140
  %v4733 = vpack.c.b16 %v3145, %v3141
  %v4734 = vpack.c.b16 %v3146, %v3142
  %v4735 = vpack.c.b16 %v3147, %v3143
  %v4736 = vpack.c.b16 %v3152, %v3148
  %v4737 = vpack.c.b16 %v3153, %v3149
  %v4738 = vpack.c.b16 %v3154, %v3150
  %v4739 = vpack.c.b16 %v3155, %v3151
  %v4740 = vpack.c.b16 %v3160, %v3156
  %v4741 = vpack.c.b16 %v3161, %v3157
  %v4742 = vpack.c.b16 %v3162, %v3158
  %v4743 = vpack.c.b16 %v3163, %v3159
  %v4744 = vpack.c.b16 %v3168, %v3164
  %v4745 = vpack.c.b16 %v3169, %v3165
  %v4746 = vpack.c.b16 %v3170, %v3166
  %v4747 = vpack.c.b16 %v3171, %v3167
  %v4748 = vpack.c.b16 %v3176, %v3172
  %v4749 = vpack.c.b16 %v3177, %v3173
  %v4750 = vpack.c.b16 %v3178, %v3174
  %v4751 = vpack.c.b16 %v3179, %v3175
  %v4752 = vpack.c.b16 %v3184, %v3180
  %v4753 = vpack.c.b16 %v3185, %v3181
  %v4754 = vpack.c.b16 %v3186, %v3182
  %v4755 = vpack.c.b16 %v3187, %v3183
  %v4756 = vpack.c.b16 %v3192, %v3188
  %v4757 = vpack.c.b16 %v3193, %v3189
  %v4758 = vpack.c.b16 %v3194, %v3190
  %v4759 = vpack.c.b16 %v3195, %v3191
  %v4760 = vpack.c.b16 %v3200, %v3196
  %v4761 = vpack.c.b16 %v3201, %v3197
  %v4762 = vpack.c.b16 %v3202, %v3198
  %v4763 = vpack.c.b16 %v3203, %v3199
  %v4764 = vpack.c.b16 %v3208, %v3204
  %v4765 = vpack.c.b16 %v3209, %v3205
  %v4766 = vpack.c.b16 %v3210, %v3206
  %v4767 = vpack.c.b16 %v3211, %v3207
  %v4768 = vpack.c.b16 %v3216, %v3212
  %v4769 = vpack.c.b16 %v3217, %v3213
  %v4770 = vpack.c.b16 %v3218, %v3214
  %v4771 = vpack.c.b16 %v3219, %v3215
  %v4772 = vpack.c.b16 %v3224, %v3220
  %v4773 = vpack.c.b16 %v3225, %v3221
  %v4774 = vpack.c.b16 %v3226, %v3222
  %v4775 = vpack.c.b16 %v3227, %v3223
  %v4776 = vpack.c.b16 %v3232, %v3228
  %v4777 = vpack.c.b16 %v3233, %v3229
  %v4778 = vpack.c.b16 %v3234, %v3230
  %v4779 = vpack.c.b16 %v3235, %v3231
  %v4780 = vpack.c.b16 %v3240, %v3236
  %v4781 = vpack.c.b16 %v3241, %v3237
  %v4782 = vpack.c.b16 %v3242, %v3238
  %v4783 = vpack.c.b16 %v3243, %v3239
  %v4784 = vpack.c.b16 %v3248, %v3244
  %v4785 = vpack.c.b16 %v3249, %v3245
  %v4786 = vpack.c.b16 %v3250, %v3246
  %v4787 = vpack.c.b16 %v3251, %v3247
  %v4788 = vpack.c.b16 %v3256, %v3252
  %v4789 = vpack.c.b16 %v3257, %v3253
  %v4790 = vpack.c.b16 %v3258, %v3254
  %v4791 = vpack.c.b16 %v3259, %v3255
  %v4792 = vpack.c.b16 %v3264, %v3260
  %v4793 = vpack.c.b16 %v3265, %v3261
  %v4794 = vpack.c.b16 %v3266, %v3262
  %v4795 = vpack.c.b16 %v3267, %v3263
  %v4796 = vpack.c.b16 %v3272, %v3268
  %v4797 = vpack.c.b16 %v3273, %v3269
  %v4798 = vpack.c.b16 %v3274, %v3270
  %v4799 = vpack.c.b16 %v3275, %v3271
  %v4800 = vpack.c.b16 %v3280, %v3276
  %v4801 = vpack.c.b16 %v3281, %v3277
  %v4802 = vpack.c.b16 %v3282, %v3278
  %v4803 = vpack.c.b16 %v3283, %v3279
  %v4804 = vpack.c.b16 %v3288, %v3284
  %v4805 = vpack.c.b16 %v3289, %v3285
  %v4806 = vpack.c.b16 %v3290, %v3286
  %v4807 = vpack.c.b16 %v3291, %v3287
  %v4808 = vpack.c.b16 %v3296, %v3292
  %v4809 = vpack.c.b16 %v3297, %v3293
  %v4810 = vpack.c.b16 %v3298, %v3294
  %v4811 = vpack.c.b16 %v3299, %v3295
  %v4812 = vpack.c.b16 %v3304, %v3300
  %v4813 = vpack.c.b16 %v3305, %v3301
  %v4814 = vpack.c.b16 %v3306, %v3302
  %v4815 = vpack.c.b16 %v3307, %v3303
  %v4816 = vpack.c.b16 %v3312, %v3308
  %v4817 = vpack.c.b16 %v3313, %v3309
  %v4818 = vpack.c.b16 %v3314, %v3310
  %v4819 = vpack.c.b16 %v3315, %v3311
  %v4820 = vpack.c.b16 %v3320, %v3316
  %v4821 = vpack.c.b16 %v3321, %v3317
  %v4822 = vpack.c.b16 %v3322, %v3318
  %v4823 = vpack.c.b16 %v3323, %v3319
  %v4824 = vpack.c.b16 %v3328, %v3324
  %v4825 = vpack.c.b16 %v3329, %v3325
  %v4826 = vpack.c.b16 %v3330, %v3326
  %v4827 = vpack.c.b16 %v3331, %v3327
  %v4828 = vpack.c.b16 %v3336, %v3332
  %v4829 = vpack.c.b16 %v3337, %v3333
  %v4830 = vpack.c.b16 %v3338, %v3334
  %v4831 = vpack.c.b16 %v3339, %v3335
  %v4832 = vpack.c.b16 %v3344, %v3340
  %v4833 = vpack.c.b16 %v3345, %v3341
  %v4834 = vpack.c.b16 %v3346, %v3342
  %v4835 = vpack.c.b16 %v3347, %v3343
  %v4836 = vpack.c.b16 %v3352, %v3348
  %v4837 = vpack.c.b16 %v3353, %v3349
  %v4838 = vpack.c.b16 %v3354, %v3350
  %v4839 = vpack.c.b16 %v3355, %v3351
  %v4840 = vpack.c.b16 %v3360, %v3356
  %v4841 = vpack.c.b16 %v3361, %v3357
  %v4842 = vpack.c.b16 %v3362, %v3358
  %v4843 = vpack.c.b16 %v3363, %v3359
  %v4844 = vpack.c.b16 %v3368, %v3364
  %v4845 = vpack.c.b16 %v3369, %v3365
  %v4846 = vpack.c.b16 %v3370, %v3366
  %v4847 = vpack.c.b16 %v3371, %v3367
  %v4848 = vpack.c.b16 %v3376, %v3372
  %v4849 = vpack.c.b16 %v3377, %v3373
  %v4850 = vpack.c.b16 %v3378, %v3374
  %v4851 = vpack.c.b16 %v3379, %v3375
  %v4852 = vpack.c.b16 %v3384, %v3380
  %v4853 = vpack.c.b16 %v3385, %v3381
  %v4854 = vpack.c.b16 %v3386, %v3382
  %v4855 = vpack.c.b16 %v3387, %v3383
  %v4856 = vpack.c.b16 %v3392, %v3388
  %v4857 = vpack.c.b16 %v3393, %v3389
  %v4858 = vpack.c.b16 %v3394, %v3390
  %v4859 = vpack.c.b16 %v3395, %v3391
  %v4860 = vpack.c.b16 %v3400, %v3396
  %v4861 = vpack.c.b16 %v3401, %v3397
  %v4862 = vpack.c.b16 %v3402, %v3398
  %v4863 = vpack.c.b16 %v3403, %v3399
  %v4864 = vpack.c.b16 %v3408, %v3404
  %v4865 = vpack.c.b16 %v3409, %v3405
  %v4866 = vpack.c.b16 %v3410, %v3406
  %v4867 = vpack.c.b16 %v3411, %v3407
  %v4868 = vpack.c.b16 %v3416, %v3412
  %v4869 = vpack.c.b16 %v3417, %v3413
  %v4870 = vpack.c.b16 %v3418, %v3414
  %v4871 = vpack.c.b16 %v3419, %v3415
  %v4872 = vpack.c.b16 %v3424, %v3420
  %v4873 = vpack.c.b16 %v3425, %v3421
  %v4874 = vpack.c.b16 %v3426, %v3422
  %v4875 = vpack.c.b16 %v3427, %v3423
  %v4876 = vpack.c.b16 %v3432, %v3428
  %v4877 = vpack.c.b16 %v3433, %v3429
  %v4878 = vpack.c.b16 %v3434, %v3430
  %v4879 = vpack.c.b16 %v3435, %v3431
  %v4880 = vpack.c.b16 %v3440, %v3436
  %v4881 = vpack.c.b16 %v3441, %v3437
  %v4882 = vpack.c.b16 %v3442, %v3438
  %v4883 = vpack.c.b16 %v3443, %v3439
  %v4884 = vpack.c.b16 %v3448, %v3444
  %v4885 = vpack.c.b16 %v3449, %v3445
  %v4886 = vpack.c.b16 %v3450, %v3446
  %v4887 = vpack.c.b16 %v3451, %v3447
  %v4888 = vpack.c.b16 %v3456, %v3452
  %v4889 = vpack.c.b16 %v3457, %v3453
  %v4890 = vpack.c.b16 %v3458, %v3454
  %v4891 = vpack.c.b16 %v3459, %v3455
  %v4892 = vpack.c.b16 %v3464, %v3460
  %v4893 = vpack.c.b16 %v3465, %v3461
  %v4894 = vpack.c.b16 %v3466, %v3462
  %v4895 = vpack.c.b16 %v3467, %v3463
  %v4896 = vpack.c.b16 %v3472, %v3468
  %v4897 = vpack.c.b16 %v3473, %v3469
  %v4898 = vpack.c.b16 %v3474, %v3470
  %v4899 = vpack.c.b16 %v3475, %v3471
  %v4900 = vpack.c.b16 %v3480, %v3476
  %v4901 = vpack.c.b16 %v3481, %v3477
  %v4902 = vpack.c.b16 %v3482, %v3478
  %v4903 = vpack.c.b16 %v3483, %v3479
  %v4904 = vpack.c.b16 %v3488, %v3484
  %v4905 = vpack.c.b16 %v3489, %v3485
  %v4906 = vpack.c.b16 %v3490, %v3486
  %v4907 = vpack.c.b16 %v3491, %v3487
  %v4908 = vpack.c.b16 %v3496, %v3492
  %v4909 = vpack.c.b16 %v3497, %v3493
  %v4910 = vpack.c.b16 %v3498, %v3494
  %v4911 = vpack.c.b16 %v3499, %v3495
  %v4912 = vpack.c.b16 %v3504, %v3500
  %v4913 = vpack.c.b16 %v3505, %v3501
  %v4914 = vpack.c.b16 %v3506, %v3502
  %v4915 = vpack.c.b16 %v3507, %v3503
  %v4916 = vpack.c.b16 %v3512, %v3508
  %v4917 = vpack.c.b16 %v3513, %v3509
  %v4918 = vpack.c.b16 %v3514, %v3510
  %v4919 = vpack.c.b16 %v3515, %v3511
  %v4920 = vpack.c.b16 %v3520, %v3516
  %v4921 = vpack.c.b16 %v3521, %v3517
  %v4922 = vpack.c.b16 %v3522, %v3518
  %v4923 = vpack.c.b16 %v3523, %v3519
  %v4924 = vpack.c.b16 %v3528, %v3524
  %v4925 = vpack.c.b16 %v3529, %v3525
  %v4926 = vpack.c.b16 %v3530, %v3526
  %v4927 = vpack.c.b16 %v3531, %v3527
  %v4928 = vpack.c.b16 %v3536, %v3532
  %v4929 = vpack.c.b16 %v3537, %v3533
  %v4930 = vpack.c.b16 %v3538, %v3534
  %v4931 = vpack.c.b16 %v3539, %v3535
  %v4932 = vpack.c.b16 %v3544, %v3540
  %v4933 = vpack.c.b16 %v3545, %v3541
  %v4934 = vpack.c.b16 %v3546, %v3542
  %v4935 = vpack.c.b16 %v3547, %v3543
  %v4936 = vpack.c.b16 %v3552, %v3548
  %v4937 = vpack.c.b16 %v3553, %v3549
  %v4938 = vpack.c.b16 %v3554, %v3550
  %v4939 = vpack.c.b16 %v3555, %v3551
  %v4940 = vpack.c.b16 %v3560, %v3556
  %v4941 = vpack.c.b16 %v3561, %v3557
  %v4942 = vpack.c.b16 %v3562, %v3558
  %v4943 = vpack.c.b16 %v3563, %v3559
  %v4944 = vpack.c.b16 %v3568, %v3564
  %v4945 = vpack.c.b16 %v3569, %v3565
  %v4946 = vpack.c.b16 %v3570, %v3566
  %v4947 = vpack.c.b16 %v3571, %v3567
  %v4948 = vpack.c.b16 %v3576, %v3572
  %v4949 = vpack.c.b16 %v3577, %v3573
  %v4950 = vpack.c.b16 %v3578, %v3574
  %v4951 = vpack.c.b16 %v3579, %v3575
  %v4952 = vpack.c.b16 %v3584, %v3580
  %v4953 = vpack.c.b16 %v3585, %v3581
  %v4954 = vpack.c.b16 %v3586, %v3582
  %v4955 = vpack.c.b16 %v3587, %v3583
  %v4956 = vpack.c.b16 %v3592, %v3588
  %v4957 = vpack.c.b16 %v3593, %v3589
  %v4958 = vpack.c.b16 %v3594, %v3590
  %v4959 = vpack.c.b16 %v3595, %v3591
  %v4960 = vpack.c.b16 %v3600, %v3596
  %v4961 = vpack.c.b16 %v3601, %v3597
  %v4962 = vpack.c.b16 %v3602, %v3598
  %v4963 = vpack.c.b16 %v3603, %v3599
  %v4964 = vpack.c.b16 %v3608, %v3604
  %v4965 = vpack.c.b16 %v3609, %v3605
  %v4966 = vpack.c.b16 %v3610, %v3606
  %v4967 = vpack.c.b16 %v3611, %v3607
  %v4968 = vpack.c.b16 %v3616, %v3612
  %v4969 = vpack.c.b16 %v3617, %v3613
  %v4970 = vpack.c.b16 %v3618, %v3614
  %v4971 = vpack.c.b16 %v3619, %v3615
  %v4972 = vpack.c.b16 %v3624, %v3620
  %v4973 = vpack.c.b16 %v3625, %v3621
  %v4974 = vpack.c.b16 %v3626, %v3622
  %v4975 = vpack.c.b16 %v3627, %v3623
  %v4976 = vpack.c.b16 %v3632, %v3628
  %v4977 = vpack.c.b16 %v3633, %v3629
  %v4978 = vpack.c.b16 %v3634, %v3630
  %v4979 = vpack.c.b16 %v3635, %v3631
  %v4980 = vpack.c.b16 %v3640, %v3636
  %v4981 = vpack.c.b16 %v3641, %v3637
  %v4982 = vpack.c.b16 %v3642, %v3638
  %v4983 = vpack.c.b16 %v3643, %v3639
  %v4984 = vpack.c.b16 %v3648, %v3644
  %v4985 = vpack.c.b16 %v3649, %v3645
  %v4986 = vpack.c.b16 %v3650, %v3646
  %v4987 = vpack.c.b16 %v3651, %v3647
  %v4988 = vpack.c.b16 %v3656, %v3652
  %v4989 = vpack.c.b16 %v3657, %v3653
  %v4990 = vpack.c.b16 %v3658, %v3654
  %v4991 = vpack.c.b16 %v3659, %v3655
  %v4992 = vpack.c.b16 %v3664, %v3660
  %v4993 = vpack.c.b16 %v3665, %v3661
  %v4994 = vpack.c.b16 %v3666, %v3662
  %v4995 = vpack.c.b16 %v3667, %v3663
  %v4996 = vpack.c.b16 %v3672, %v3668
  %v4997 = vpack.c.b16 %v3673, %v3669
  %v4998 = vpack.c.b16 %v3674, %v3670
  %v4999 = vpack.c.b16 %v3675, %v3671
  %v5000 = vpack.c.b16 %v3680, %v3676
  %v5001 = vpack.c.b16 %v3681, %v3677
  %v5002 = vpack.c.b16 %v3682, %v3678
  %v5003 = vpack.c.b16 %v3683, %v3679
  %v5004 = vpack.c.b16 %v3688, %v3684
  %v5005 = vpack.c.b16 %v3689, %v3685
  %v5006 = vpack.c.b16 %v3690, %v3686
  %v5007 = vpack.c.b16 %v3691, %v3687
  %v5008 = vpack.c.b16 %v3696, %v3692
  %v5009 = vpack.c.b16 %v3697, %v3693
  %v5010 = vpack.c.b16 %v3698, %v3694
  %v5011 = vpack.c.b16 %v3699, %v3695
  %v5012 = vpack.c.b16 %v3704, %v3700
  %v5013 = vpack.c.b16 %v3705, %v3701
  %v5014 = vpack.c.b16 %v3706, %v3702
  %v5015 = vpack.c.b16 %v3707, %v3703
  %v5016 = vpack.c.b16 %v3712, %v3708
  %v5017 = vpack.c.b16 %v3713, %v3709
  %v5018 = vpack.c.b16 %v3714, %v3710
  %v5019 = vpack.c.b16 %v3715, %v3711
  %v5020 = vpack.c.b16 %v3720, %v3716
  %v5021 = vpack.c.b16 %v3721, %v3717
  %v5022 = vpack.c.b16 %v3722, %v3718
  %v5023 = vpack.c.b16 %v3723, %v3719
  %v5024 = vpack.c.b16 %v3728, %v3724
  %v5025 = vpack.c.b16 %v3729, %v3725
  %v5026 = vpack.c.b16 %v3730, %v3726
  %v5027 = vpack.c.b16 %v3731, %v3727
  %v5028 = vpack.c.b16 %v3736, %v3732
  %v5029 = vpack.c.b16 %v3737, %v3733
  %v5030 = vpack.c.b16 %v3738, %v3734
  %v5031 = vpack.c.b16 %v3739, %v3735
  %v5032 = vpack.c.b16 %v3744, %v3740
  %v5033 = vpack.c.b16 %v3745, %v3741
  %v5034 = vpack.c.b16 %v3746, %v3742
  %v5035 = vpack.c.b16 %v3747, %v3743
  %v5036 = vpack.c.b16 %v3752, %v3748
  %v5037 = vpack.c.b16 %v3753, %v3749
  %v5038 = vpack.c.b16 %v3754, %v3750
  %v5039 = vpack.c.b16 %v3755, %v3751
  %v5040 = vpack.c.b16 %v3760, %v3756
  %v5041 = vpack.c.b16 %v3761, %v3757
  %v5042 = vpack.c.b16 %v3762, %v3758
  %v5043 = vpack.c.b16 %v3763, %v3759
  %v5044 = vpack.c.b16 %v3768, %v3764
  %v5045 = vpack.c.b16 %v3769, %v3765
  %v5046 = vpack.c.b16 %v3770, %v3766
  %v5047 = vpack.c.b16 %v3771, %v3767
  %v5048 = vpack.c.b16 %v3776, %v3772
  %v5049 = vpack.c.b16 %v3777, %v3773
  %v5050 = vpack.c.b16 %v3778, %v3774
  %v5051 = vpack.c.b16 %v3779, %v3775
  %v5052 = vpack.c.b16 %v3784, %v3780
  %v5053 = vpack.c.b16 %v3785, %v3781
  %v5054 = vpack.c.b16 %v3786, %v3782
  %v5055 = vpack.c.b16 %v3787, %v3783
  %v5056 = vpack.c.b16 %v3792, %v3788
  %v5057 = vpack.c.b16 %v3793, %v3789
  %v5058 = vpack.c.b16 %v3794, %v3790
  %v5059 = vpack.c.b16 %v3795, %v3791
  %v5060 = vpack.c.b16 %v3800, %v3796
  %v5061 = vpack.c.b16 %v3801, %v3797
  %v5062 = vpack.c.b16 %v3802, %v3798
  %v5063 = vpack.c.b16 %v3803, %v3799
  %v5064 = vpack.c.b16 %v3808, %v3804
  %v5065 = vpack.c.b16 %v3809, %v3805
  %v5066 = vpack.c.b16 %v3810, %v3806
  %v5067 = vpack.c.b16 %v3811, %v3807
  %v5068 = vpack.c.b16 %v3816, %v3812
  %v5069 = vpack.c.b16 %v3817, %v3813
  %v5070 = vpack.c.b16 %v3818, %v3814
  %v5071 = vpack.c.b16 %v3819, %v3815
  %v5072 = vpack.c.b16 %v3824, %v3820
  %v5073 = vpack.c.b16 %v3825, %v3821
  %v5074 = vpack.c.b16 %v3826, %v3822
  %v5075 = vpack.c.b16 %v3827, %v3823
  %v5076 = vpack.c.b16 %v3832, %v3828
  %v5077 = vpack.c.b16 %v3833, %v3829
  %v5078 = vpack.c.b16 %v3834, %v3830
  %v5079 = vpack.c.b16 %v3835, %v3831
  %v5080 = vpack.c.b16 %v3840, %v3836
  %v5081 = vpack.c.b16 %v3841, %v3837
  %v5082 = vpack.c.b16 %v3842, %v3838
  %v5083 = vpack.c.b16 %v3843, %v3839
  %v5084 = vpack.c.b16 %v3848, %v3844
  %v5085 = vpack.c.b16 %v3849, %v3845
  %v5086 = vpack.c.b16 %v3850, %v3846
  %v5087 = vpack.c.b16 %v3851, %v3847
  %v5088 = vpack.c.b16 %v3856, %v3852
  %v5089 = vpack.c.b16 %v3857, %v3853
  %v5090 = vpack.c.b16 %v3858, %v3854
  %v5091 = vpack.c.b16 %v3859, %v3855
  %v5092 = vpack.c.b16 %v3864, %v3860
  %v5093 = vpack.c.b16 %v3865, %v3861
  %v5094 = vpack.c.b16 %v3866, %v3862
  %v5095 = vpack.c.b16 %v3867, %v3863
  %v5096 = vpack.c.b16 %v3872, %v3868
  %v5097 = vpack.c.b16 %v3873, %v3869
  %v5098 = vpack.c.b16 %v3874, %v3870
  %v5099 = vpack.c.b16 %v3875, %v3871
  %v5100 = vpack.c.b16 %v3880, %v3876
  %v5101 = vpack.c.b16 %v3881, %v3877
  %v5102 = vpack.c.b16 %v3882, %v3878
  %v5103 = vpack.c.b16 %v3883, %v3879
  %v5104 = vpack.c.b16 %v3888, %v3884
  %v5105 = vpack.c.b16 %v3889, %v3885
  %v5106 = vpack.c.b16 %v3890, %v3886
  %v5107 = vpack.c.b16 %v3891, %v3887
  %v5108 = vpack.c.b16 %v3896, %v3892
  %v5109 = vpack.c.b16 %v3897, %v3893
  %v5110 = vpack.c.b16 %v3898, %v3894
  %v5111 = vpack.c.b16 %v3899, %v3895
  %v5112 = vpack.c.b16 %v3904, %v3900
  %v5113 = vpack.c.b16 %v3905, %v3901
  %v5114 = vpack.c.b16 %v3906, %v3902
  %v5115 = vpack.c.b16 %v3907, %v3903
  %v5116 = vpack.c.b16 %v3912, %v3908
  %v5117 = vpack.c.b16 %v3913, %v3909
  %v5118 = vpack.c.b16 %v3914, %v3910
  %v5119 = vpack.c.b16 %v3915, %v3911
  %v5120 = vpack.c.b16 %v3920, %v3916
  %v5121 = vpack.c.b16 %v3921, %v3917
  %v5122 = vpack.c.b16 %v3922, %v3918
  %v5123 = vpack.c.b16 %v3923, %v3919
  %v5124 = vpack.c.b16 %v3928, %v3924
  %v5125 = vpack.c.b16 %v3929, %v3925
  %v5126 = vpack.c.b16 %v3930, %v3926
  %v5127 = vpack.c.b16 %v3931, %v3927
  %v5128 = vpack.c.b16 %v3936, %v3932
  %v5129 = vpack.c.b16 %v3937, %v3933
  %v5130 = vpack.c.b16 %v3938, %v3934
  %v5131 = vpack.c.b16 %v3939, %v3935
  %v5132 = vpack.c.b16 %v3944, %v3940
  %v5133 = vpack.c.b16 %v3945, %v3941
  %v5134 = vpack.c.b16 %v3946, %v3942
  %v5135 = vpack.c.b16 %v3947, %v3943
  %v5136 = vpack.c.b16 %v3952, %v3948
  %v5137 = vpack.c.b16 %v3953, %v3949
  %v5138 = vpack.c.b16 %v3954, %v3950
  %v5139 = vpack.c.b16 %v3955, %v3951
  %v5140 = vpack.c.b16 %v3960, %v3956
  %v5141 = vpack.c.b16 %v3961, %v3957
  %v5142 = vpack.c.b16 %v3962, %v3958
  %v5143 = vpack.c.b16 %v3963, %v3959
  %v5144 = vpack.c.b16 %v3968, %v3964
  %v5145 = vpack.c.b16 %v3969, %v3965
  %v5146 = vpack.c.b16 %v3970, %v3966
  %v5147 = vpack.c.b16 %v3971, %v3967
  %v5148 = vpack.c.b16 %v3976, %v3972
  %v5149 = vpack.c.b16 %v3977, %v3973
  %v5150 = vpack.c.b16 %v3978, %v3974
  %v5151 = vpack.c.b16 %v3979, %v3975
  %v5152 = vpack.c.b16 %v3984, %v3980
  %v5153 = vpack.c.b16 %v3985, %v3981
  %v5154 = vpack.c.b16 %v3986, %v3982
  %v5155 = vpack.c.b16 %v3987, %v3983
  %v5156 = vpack.c.b16 %v3992, %v3988
  %v5157 = vpack.c.b16 %v3993, %v3989
  %v5158 = vpack.c.b16 %v3994, %v3990
  %v5159 = vpack.c.b16 %v3995, %v3991
  %v5160 = vpack.c.b16 %v4000, %v3996
  %v5161 = vpack.c.b16 %v4001, %v3997
  %v5162 = vpack.c.b16 %v4002, %v3998
  %v5163 = vpack.c.b16 %v4003, %v3999
  %v5164 = vpack.c.b16 %v4008, %v4004
  %v5165 = vpack.c.b16 %v4009, %v4005
  %v5166 = vpack.c.b16 %v4010, %v4006
  %v5167 = vpack.c.b16 %v4011, %v4007
  %v5168 = vpack.c.b16 %v4016, %v4012
  %v5169 = vpack.c.b16 %v4017, %v4013
  %v5170 = vpack.c.b16 %v4018, %v4014
  %v5171 = vpack.c.b16 %v4019, %v4015
  %v5172 = vpack.c.b16 %v4024, %v4020
  %v5173 = vpack.c.b16 %v4025, %v4021
  %v5174 = vpack.c.b16 %v4026, %v4022
  %v5175 = vpack.c.b16 %v4027, %v4023
  %v5176 = vpack.c.b16 %v4032, %v4028
  %v5177 = vpack.c.b16 %v4033, %v4029
  %v5178 = vpack.c.b16 %v4034, %v4030
  %v5179 = vpack.c.b16 %v4035, %v4031
  %v5180 = vpack.c.b16 %v4040, %v4036
  %v5181 = vpack.c.b16 %v4041, %v4037
  %v5182 = vpack.c.b16 %v4042, %v4038
  %v5183 = vpack.c.b16 %v4043, %v4039
  %v5184 = vpack.c.b16 %v4048, %v4044
  %v5185 = vpack.c.b16 %v4049, %v4045
  %v5186 = vpack.c.b16 %v4050, %v4046
  %v5187 = vpack.c.b16 %v4051, %v4047
  %v5188 = vpack.c.b16 %v4056, %v4052
  %v5189 = vpack.c.b16 %v4057, %v4053
  %v5190 = vpack.c.b16 %v4058, %v4054
  %v5191 = vpack.c.b16 %v4059, %v4055
  %v5192 = vpack.c.b16 %v4064, %v4060
  %v5193 = vpack.c.b16 %v4065, %v4061
  %v5194 = vpack.c.b16 %v4066, %v4062
  %v5195 = vpack.c.b16 %v4067, %v4063
  %v5196 = vpack.c.b16 %v4072, %v4068
  %v5197 = vpack.c.b16 %v4073, %v4069
  %v5198 = vpack.c.b16 %v4074, %v4070
  %v5199 = vpack.c.b16 %v4075, %v4071
  %v5200 = vpack.c.b16 %v4080, %v4076
  %v5201 = vpack.c.b16 %v4081, %v4077
  %v5202 = vpack.c.b16 %v4082, %v4078
  %v5203 = vpack.c.b16 %v4083, %v4079
  %v5204 = vpack.c.b16 %v4088, %v4084
  %v5205 = vpack.c.b16 %v4089, %v4085
  %v5206 = vpack.c.b16 %v4090, %v4086
  %v5207 = vpack.c.b16 %v4091, %v4087
  %v5208 = vpack.c.b16 %v4096, %v4092
  %v5209 = vpack.c.b16 %v4097, %v4093
  %v5210 = vpack.c.b16 %v4098, %v4094
  %v5211 = vpack.c.b16 %v4099, %v4095
  %v5212 = vpack.c.b16 %v4104, %v4100
  %v5213 = vpack.c.b16 %v4105, %v4101
  %v5214 = vpack.c.b16 %v4106, %v4102
  %v5215 = vpack.c.b16 %v4107, %v4103
  %v5216 = vpack.c.b16 %v4112, %v4108
  %v5217 = vpack.c.b16 %v4113, %v4109
  %v5218 = vpack.c.b16 %v4114, %v4110
  %v5219 = vpack.c.b16 %v4115, %v4111
  %v5220 = vpack.c.b16 %v4120, %v4116
  %v5221 = vpack.c.b16 %v4121, %v4117
  %v5222 = vpack.c.b16 %v4122, %v4118
  %v5223 = vpack.c.b16 %v4123, %v4119
  %v5224 = vpack.c.b16 %v4128, %v4124
  %v5225 = vpack.c.b16 %v4129, %v4125
  %v5226 = vpack.c.b16 %v4130, %v4126
  %v5227 = vpack.c.b16 %v4131, %v4127
  %v5228 = vpack.c.b16 %v4136, %v4132
  %v5229 = vpack.c.b16 %v4137, %v4133
  %v5230 = vpack.c.b16 %v4138, %v4134
  %v5231 = vpack.c.b16 %v4139, %v4135
  %v5232 = vpack.c.b16 %v4144, %v4140
  %v5233 = vpack.c.b16 %v4145, %v4141
  %v5234 = vpack.c.b16 %v4146, %v4142
  %v5235 = vpack.c.b16 %v4147, %v4143
  %v5236 = vpack.c.b16 %v4152, %v4148
  %v5237 = vpack.c.b16 %v4153, %v4149
  %v5238 = vpack.c.b16 %v4154, %v4150
  %v5239 = vpack.c.b16 %v4155, %v4151
  %v5240 = vpack.c.b16 %v4160, %v4156
  %v5241 = vpack.c.b16 %v4161, %v4157
  %v5242 = vpack.c.b16 %v4162, %v4158
  %v5243 = vpack.c.b16 %v4163, %v4159
  %v5244 = vpack.c.b16 %v4168, %v4164
  %v5245 = vpack.c.b16 %v4169, %v4165
  %v5246 = vpack.c.b16 %v4170, %v4166
  %v5247 = vpack.c.b16 %v4171, %v4167
  %v5248 = vpack.c.b16 %v4176, %v4172
  %v5249 = vpack.c.b16 %v4177, %v4173
  %v5250 = vpack.c.b16 %v4178, %v4174
  %v5251 = vpack.c.b16 %v4179, %v4175
  %v5252 = vpack.c.b16 %v4184, %v4180
  %v5253 = vpack.c.b16 %v4185, %v4181
  %v5254 = vpack.c.b16 %v4186, %v4182
  %v5255 = vpack.c.b16 %v4187, %v4183
  %v5256 = vpack.c.b16 %v4192, %v4188
  %v5257 = vpack.c.b16 %v4193, %v4189
  %v5258 = vpack.c.b16 %v4194, %v4190
  %v5259 = vpack.c.b16 %v4195, %v4191
  %v5260 = vpack.c.b16 %v4200, %v4196
  %v5261 = vpack.c.b16 %v4201, %v4197
  %v5262 = vpack.c.b16 %v4202, %v4198
  %v5263 = vpack.c.b16 %v4203, %v4199
  %v5264 = vpack.c.b16 %v4208, %v4204
  %v5265 = vpack.c.b16 %v4209, %v4205
  %v5266 = vpack.c.b16 %v4210, %v4206
  %v5267 = vpack.c.b16 %v4211, %v4207
  %v5268 = vpack.c.b16 %v4216, %v4212
  %v5269 = vpack.c.b16 %v4217, %v4213
  %v5270 = vpack.c.b16 %v4218, %v4214
  %v5271 = vpack.c.b16 %v4219, %v4215
  %v5272 = vpack.c.b16 %v4224, %v4220
  %v5273 = vpack.c.b16 %v4225, %v4221
  %v5274 = vpack.c.b16 %v4226, %v4222
  %v5275 = vpack.c.b16 %v4227, %v4223
  %v5276 = vpack.c.b16 %v4232, %v4228
  %v5277 = vpack.c.b16 %v4233, %v4229
  %v5278 = vpack.c.b16 %v4234, %v4230
  %v5279 = vpack.c.b16 %v4235, %v4231
  %v5280 = vpack.c.b16 %v4240, %v4236
  %v5281 = vpack.c.b16 %v4241, %v4237
  %v5282 = vpack.c.b16 %v4242, %v4238
  %v5283 = vpack.c.b16 %v4243, %v4239
  %v5284 = vpack.c.b16 %v4248, %v4244
  %v5285 = vpack.c.b16 %v4249, %v4245
  %v5286 = vpack.c.b16 %v4250, %v4246
  %v5287 = vpack.c.b16 %v4251, %v4247
  %v5288 = vpack.c.b16 %v4256, %v4252
  %v5289 = vpack.c.b16 %v4257, %v4253
  %v5290 = vpack.c.b16 %v4258, %v4254
  %v5291 = vpack.c.b16 %v4259, %v4255
  %v5292 = vpack.c.b16 %v4264, %v4260
  %v5293 = vpack.c.b16 %v4265, %v4261
  %v5294 = vpack.c.b16 %v4266, %v4262
  %v5295 = vpack.c.b16 %v4267, %v4263
  %v5296 = vpack.c.b16 %v4272, %v4268
  %v5297 = vpack.c.b16 %v4273, %v4269
  %v5298 = vpack.c.b16 %v4274, %v4270
  %v5299 = vpack.c.b16 %v4275, %v4271
  %6324 = vmatprep.subr.bf16.mxu0 %v4305
  %6325 = vmatpush1.bf16.msra.mxu0 %v4304
  %6326 = vmatprep.subr.bf16.mxu0 %v4301
  %6327 = vmatpush1.bf16.msra.mxu0 %v4300
  %6328 = vmatprep.subr.bf16.mxu0 %v4297
  %6329 = vmatpush1.bf16.msra.mxu0 %v4296
  %6330 = vmatprep.subr.bf16.mxu0 %v4293
  %6331 = vmatpush1.bf16.msra.mxu0 %v4292
  %6332 = vmatprep.subr.bf16.mxu0 %v4289
  %6333 = vmatpush1.bf16.msra.mxu0 %v4288
  %6334 = vmatprep.subr.bf16.mxu0 %v4285
  %6335 = vmatpush1.bf16.msra.mxu0 %v4284
  %6336 = vmatprep.subr.bf16.mxu0 %v4281
  %6337 = vmatpush1.bf16.msra.mxu0 %v4280
  %6338 = vmatprep.subr.bf16.mxu0 %v4277
  %6339 = vmatpush1.bf16.msra.mxu0 %v4276
  %6340 = vmatprep.subr.bf16.mxu0 %v4337
  %6341 = vmatpush2.bf16.msra.mxu0 %v4336
  %6342 = vmatprep.subr.bf16.mxu0 %v4333
  %6343 = vmatpush2.bf16.msra.mxu0 %v4332
  %6344 = vmatprep.subr.bf16.mxu0 %v4329
  %6345 = vmatpush2.bf16.msra.mxu0 %v4328
  %6346 = vmatprep.subr.bf16.mxu0 %v4325
  %6347 = vmatpush2.bf16.msra.mxu0 %v4324
  %6348 = vmatprep.subr.bf16.mxu0 %v4321
  %6349 = vmatpush2.bf16.msra.mxu0 %v4320
  %6350 = vmatprep.subr.bf16.mxu0 %v4317
  %6351 = vmatpush2.bf16.msra.mxu0 %v4316
  %6352 = vmatprep.subr.bf16.mxu0 %v4313
  %6353 = vmatpush2.bf16.msra.mxu0 %v4312
  %6354 = vmatprep.subr.bf16.mxu0 %v4309
  %6355 = vmatpush2.bf16.msra.mxu0 %v4308
  %6356 = vmatprep.mubr.bf16.mxu0 %v149
  %6357 = vmatmul.mubr.bf16.gmra.mxu0 %v148
  %v6358 = vpop.f32.mrf.mxu0
  %v6359 = vadd.f32 0.0, %v6358
  %v6360 = vpop.f32.mrf.mxu0
  %v6361 = vadd.f32 0.0, %v6360
  %v6362 = vpop.f32.mrf.mxu0
  %v6363 = vpop.f32.mrf.mxu0
  %6364 = vdwg.mxu0
  %6365 = vmatprep.subr.bf16.mxu0 %v4369
  %6366 = vmatpush1.bf16.msra.mxu0 %v4368
  %6367 = vmatprep.subr.bf16.mxu0 %v4365
  %6368 = vmatpush1.bf16.msra.mxu0 %v4364
  %6369 = vmatprep.subr.bf16.mxu0 %v4361
  %6370 = vmatpush1.bf16.msra.mxu0 %v4360
  %6371 = vmatprep.subr.bf16.mxu0 %v4357
  %6372 = vmatpush1.bf16.msra.mxu0 %v4356
  %6373 = vmatprep.subr.bf16.mxu0 %v4353
  %6374 = vmatpush1.bf16.msra.mxu0 %v4352
  %6375 = vmatprep.subr.bf16.mxu0 %v4349
  %6376 = vmatpush1.bf16.msra.mxu0 %v4348
  %6377 = vmatprep.subr.bf16.mxu0 %v4345
  %6378 = vmatpush1.bf16.msra.mxu0 %v4344
  %6379 = vmatprep.subr.bf16.mxu0 %v4341
  %6380 = vmatpush1.bf16.msra.mxu0 %v4340
  %6381 = vmatprep.subr.bf16.mxu0 %v4401
  %6382 = vmatpush2.bf16.msra.mxu0 %v4400
  %6383 = vmatprep.subr.bf16.mxu0 %v4397
  %6384 = vmatpush2.bf16.msra.mxu0 %v4396
  %6385 = vmatprep.subr.bf16.mxu0 %v4393
  %6386 = vmatpush2.bf16.msra.mxu0 %v4392
  %6387 = vmatprep.subr.bf16.mxu0 %v4389
  %6388 = vmatpush2.bf16.msra.mxu0 %v4388
  %6389 = vmatprep.subr.bf16.mxu0 %v4385
  %6390 = vmatpush2.bf16.msra.mxu0 %v4384
  %6391 = vmatprep.subr.bf16.mxu0 %v4381
  %6392 = vmatpush2.bf16.msra.mxu0 %v4380
  %6393 = vmatprep.subr.bf16.mxu0 %v4377
  %6394 = vmatpush2.bf16.msra.mxu0 %v4376
  %6395 = vmatprep.subr.bf16.mxu0 %v4373
  %6396 = vmatpush2.bf16.msra.mxu0 %v4372
  %6397 = vmatprep.mubr.bf16.mxu0 %v151
  %6398 = vmatmul.mubr.bf16.gmra.mxu0 %v150
  %v6399 = vpop.f32.mrf.mxu0
  %v6400 = vadd.f32 %v6359, %v6399
  %v6401 = vpop.f32.mrf.mxu0
  %v6402 = vadd.f32 %v6361, %v6401
  %v6403 = vpop.f32.mrf.mxu0
  %v6404 = vpop.f32.mrf.mxu0
  %6405 = vdwg.mxu0
  %6406 = vmatprep.subr.bf16.mxu0 %v4433
  %6407 = vmatpush1.bf16.msra.mxu0 %v4432
  %6408 = vmatprep.subr.bf16.mxu0 %v4429
  %6409 = vmatpush1.bf16.msra.mxu0 %v4428
  %6410 = vmatprep.subr.bf16.mxu0 %v4425
  %6411 = vmatpush1.bf16.msra.mxu0 %v4424
  %6412 = vmatprep.subr.bf16.mxu0 %v4421
  %6413 = vmatpush1.bf16.msra.mxu0 %v4420
  %6414 = vmatprep.subr.bf16.mxu0 %v4417
  %6415 = vmatpush1.bf16.msra.mxu0 %v4416
  %6416 = vmatprep.subr.bf16.mxu0 %v4413
  %6417 = vmatpush1.bf16.msra.mxu0 %v4412
  %6418 = vmatprep.subr.bf16.mxu0 %v4409
  %6419 = vmatpush1.bf16.msra.mxu0 %v4408
  %6420 = vmatprep.subr.bf16.mxu0 %v4405
  %6421 = vmatpush1.bf16.msra.mxu0 %v4404
  %6422 = vmatprep.subr.bf16.mxu0 %v4465
  %6423 = vmatpush2.bf16.msra.mxu0 %v4464
  %6424 = vmatprep.subr.bf16.mxu0 %v4461
  %6425 = vmatpush2.bf16.msra.mxu0 %v4460
  %6426 = vmatprep.subr.bf16.mxu0 %v4457
  %6427 = vmatpush2.bf16.msra.mxu0 %v4456
  %6428 = vmatprep.subr.bf16.mxu0 %v4453
  %6429 = vmatpush2.bf16.msra.mxu0 %v4452
  %6430 = vmatprep.subr.bf16.mxu0 %v4449
  %6431 = vmatpush2.bf16.msra.mxu0 %v4448
  %6432 = vmatprep.subr.bf16.mxu0 %v4445
  %6433 = vmatpush2.bf16.msra.mxu0 %v4444
  %6434 = vmatprep.subr.bf16.mxu0 %v4441
  %6435 = vmatpush2.bf16.msra.mxu0 %v4440
  %6436 = vmatprep.subr.bf16.mxu0 %v4437
  %6437 = vmatpush2.bf16.msra.mxu0 %v4436
  %6438 = vmatprep.mubr.bf16.mxu0 %v153
  %6439 = vmatmul.mubr.bf16.gmra.mxu0 %v152
  %v6440 = vpop.f32.mrf.mxu0
  %v6441 = vadd.f32 %v6400, %v6440
  %v6442 = vpop.f32.mrf.mxu0
  %v6443 = vadd.f32 %v6402, %v6442
  %v6444 = vpop.f32.mrf.mxu0
  %v6445 = vpop.f32.mrf.mxu0
  %6446 = vdwg.mxu0
  %6447 = vmatprep.subr.bf16.mxu0 %v4497
  %6448 = vmatpush1.bf16.msra.mxu0 %v4496
  %6449 = vmatprep.subr.bf16.mxu0 %v4493
  %6450 = vmatpush1.bf16.msra.mxu0 %v4492
  %6451 = vmatprep.subr.bf16.mxu0 %v4489
  %6452 = vmatpush1.bf16.msra.mxu0 %v4488
  %6453 = vmatprep.subr.bf16.mxu0 %v4485
  %6454 = vmatpush1.bf16.msra.mxu0 %v4484
  %6455 = vmatprep.subr.bf16.mxu0 %v4481
  %6456 = vmatpush1.bf16.msra.mxu0 %v4480
  %6457 = vmatprep.subr.bf16.mxu0 %v4477
  %6458 = vmatpush1.bf16.msra.mxu0 %v4476
  %6459 = vmatprep.subr.bf16.mxu0 %v4473
  %6460 = vmatpush1.bf16.msra.mxu0 %v4472
  %6461 = vmatprep.subr.bf16.mxu0 %v4469
  %6462 = vmatpush1.bf16.msra.mxu0 %v4468
  %6463 = vmatprep.subr.bf16.mxu0 %v4529
  %6464 = vmatpush2.bf16.msra.mxu0 %v4528
  %6465 = vmatprep.subr.bf16.mxu0 %v4525
  %6466 = vmatpush2.bf16.msra.mxu0 %v4524
  %6467 = vmatprep.subr.bf16.mxu0 %v4521
  %6468 = vmatpush2.bf16.msra.mxu0 %v4520
  %6469 = vmatprep.subr.bf16.mxu0 %v4517
  %6470 = vmatpush2.bf16.msra.mxu0 %v4516
  %6471 = vmatprep.subr.bf16.mxu0 %v4513
  %6472 = vmatpush2.bf16.msra.mxu0 %v4512
  %6473 = vmatprep.subr.bf16.mxu0 %v4509
  %6474 = vmatpush2.bf16.msra.mxu0 %v4508
  %6475 = vmatprep.subr.bf16.mxu0 %v4505
  %6476 = vmatpush2.bf16.msra.mxu0 %v4504
  %6477 = vmatprep.subr.bf16.mxu0 %v4501
  %6478 = vmatpush2.bf16.msra.mxu0 %v4500
  %6479 = vmatprep.mubr.bf16.mxu0 %v155
  %6480 = vmatmul.mubr.bf16.gmra.mxu0 %v154
  %v6481 = vpop.f32.mrf.mxu0
  %v6482 = vadd.f32 %v6441, %v6481
  %v6483 = vpop.f32.mrf.mxu0
  %v6484 = vadd.f32 %v6443, %v6483
  %v6485 = vpop.f32.mrf.mxu0
  %v6486 = vpop.f32.mrf.mxu0
  %6487 = vdwg.mxu0
  %6488 = vmatprep.subr.bf16.mxu0 %v4561
  %6489 = vmatpush1.bf16.msra.mxu0 %v4560
  %6490 = vmatprep.subr.bf16.mxu0 %v4557
  %6491 = vmatpush1.bf16.msra.mxu0 %v4556
  %6492 = vmatprep.subr.bf16.mxu0 %v4553
  %6493 = vmatpush1.bf16.msra.mxu0 %v4552
  %6494 = vmatprep.subr.bf16.mxu0 %v4549
  %6495 = vmatpush1.bf16.msra.mxu0 %v4548
  %6496 = vmatprep.subr.bf16.mxu0 %v4545
  %6497 = vmatpush1.bf16.msra.mxu0 %v4544
  %6498 = vmatprep.subr.bf16.mxu0 %v4541
  %6499 = vmatpush1.bf16.msra.mxu0 %v4540
  %6500 = vmatprep.subr.bf16.mxu0 %v4537
  %6501 = vmatpush1.bf16.msra.mxu0 %v4536
  %6502 = vmatprep.subr.bf16.mxu0 %v4533
  %6503 = vmatpush1.bf16.msra.mxu0 %v4532
  %6504 = vmatprep.subr.bf16.mxu0 %v4593
  %6505 = vmatpush2.bf16.msra.mxu0 %v4592
  %6506 = vmatprep.subr.bf16.mxu0 %v4589
  %6507 = vmatpush2.bf16.msra.mxu0 %v4588
  %6508 = vmatprep.subr.bf16.mxu0 %v4585
  %6509 = vmatpush2.bf16.msra.mxu0 %v4584
  %6510 = vmatprep.subr.bf16.mxu0 %v4581
  %6511 = vmatpush2.bf16.msra.mxu0 %v4580
  %6512 = vmatprep.subr.bf16.mxu0 %v4577
  %6513 = vmatpush2.bf16.msra.mxu0 %v4576
  %6514 = vmatprep.subr.bf16.mxu0 %v4573
  %6515 = vmatpush2.bf16.msra.mxu0 %v4572
  %6516 = vmatprep.subr.bf16.mxu0 %v4569
  %6517 = vmatpush2.bf16.msra.mxu0 %v4568
  %6518 = vmatprep.subr.bf16.mxu0 %v4565
  %6519 = vmatpush2.bf16.msra.mxu0 %v4564
  %6520 = vmatprep.mubr.bf16.mxu0 %v157
  %6521 = vmatmul.mubr.bf16.gmra.mxu0 %v156
  %v6522 = vpop.f32.mrf.mxu0
  %v6523 = vadd.f32 %v6482, %v6522
  %v6524 = vpop.f32.mrf.mxu0
  %v6525 = vadd.f32 %v6484, %v6524
  %v6526 = vpop.f32.mrf.mxu0
  %v6527 = vpop.f32.mrf.mxu0
  %6528 = vdwg.mxu0
  %6529 = vmatprep.subr.bf16.mxu0 %v4625
  %6530 = vmatpush1.bf16.msra.mxu0 %v4624
  %6531 = vmatprep.subr.bf16.mxu0 %v4621
  %6532 = vmatpush1.bf16.msra.mxu0 %v4620
  %6533 = vmatprep.subr.bf16.mxu0 %v4617
  %6534 = vmatpush1.bf16.msra.mxu0 %v4616
  %6535 = vmatprep.subr.bf16.mxu0 %v4613
  %6536 = vmatpush1.bf16.msra.mxu0 %v4612
  %6537 = vmatprep.subr.bf16.mxu0 %v4609
  %6538 = vmatpush1.bf16.msra.mxu0 %v4608
  %6539 = vmatprep.subr.bf16.mxu0 %v4605
  %6540 = vmatpush1.bf16.msra.mxu0 %v4604
  %6541 = vmatprep.subr.bf16.mxu0 %v4601
  %6542 = vmatpush1.bf16.msra.mxu0 %v4600
  %6543 = vmatprep.subr.bf16.mxu0 %v4597
  %6544 = vmatpush1.bf16.msra.mxu0 %v4596
  %6545 = vmatprep.subr.bf16.mxu0 %v4657
  %6546 = vmatpush2.bf16.msra.mxu0 %v4656
  %6547 = vmatprep.subr.bf16.mxu0 %v4653
  %6548 = vmatpush2.bf16.msra.mxu0 %v4652
  %6549 = vmatprep.subr.bf16.mxu0 %v4649
  %6550 = vmatpush2.bf16.msra.mxu0 %v4648
  %6551 = vmatprep.subr.bf16.mxu0 %v4645
  %6552 = vmatpush2.bf16.msra.mxu0 %v4644
  %6553 = vmatprep.subr.bf16.mxu0 %v4641
  %6554 = vmatpush2.bf16.msra.mxu0 %v4640
  %6555 = vmatprep.subr.bf16.mxu0 %v4637
  %6556 = vmatpush2.bf16.msra.mxu0 %v4636
  %6557 = vmatprep.subr.bf16.mxu0 %v4633
  %6558 = vmatpush2.bf16.msra.mxu0 %v4632
  %6559 = vmatprep.subr.bf16.mxu0 %v4629
  %6560 = vmatpush2.bf16.msra.mxu0 %v4628
  %6561 = vmatprep.mubr.bf16.mxu0 %v159
  %6562 = vmatmul.mubr.bf16.gmra.mxu0 %v158
  %v6563 = vpop.f32.mrf.mxu0
  %v6564 = vadd.f32 %v6523, %v6563
  %v6565 = vpop.f32.mrf.mxu0
  %v6566 = vadd.f32 %v6525, %v6565
  %v6567 = vpop.f32.mrf.mxu0
  %v6568 = vpop.f32.mrf.mxu0
  %6569 = vdwg.mxu0
  %6570 = vmatprep.subr.bf16.mxu0 %v4689
  %6571 = vmatpush1.bf16.msra.mxu0 %v4688
  %6572 = vmatprep.subr.bf16.mxu0 %v4685
  %6573 = vmatpush1.bf16.msra.mxu0 %v4684
  %6574 = vmatprep.subr.bf16.mxu0 %v4681
  %6575 = vmatpush1.bf16.msra.mxu0 %v4680
  %6576 = vmatprep.subr.bf16.mxu0 %v4677
  %6577 = vmatpush1.bf16.msra.mxu0 %v4676
  %6578 = vmatprep.subr.bf16.mxu0 %v4673
  %6579 = vmatpush1.bf16.msra.mxu0 %v4672
  %6580 = vmatprep.subr.bf16.mxu0 %v4669
  %6581 = vmatpush1.bf16.msra.mxu0 %v4668
  %6582 = vmatprep.subr.bf16.mxu0 %v4665
  %6583 = vmatpush1.bf16.msra.mxu0 %v4664
  %6584 = vmatprep.subr.bf16.mxu0 %v4661
  %6585 = vmatpush1.bf16.msra.mxu0 %v4660
  %6586 = vmatprep.subr.bf16.mxu0 %v4721
  %6587 = vmatpush2.bf16.msra.mxu0 %v4720
  %6588 = vmatprep.subr.bf16.mxu0 %v4717
  %6589 = vmatpush2.bf16.msra.mxu0 %v4716
  %6590 = vmatprep.subr.bf16.mxu0 %v4713
  %6591 = vmatpush2.bf16.msra.mxu0 %v4712
  %6592 = vmatprep.subr.bf16.mxu0 %v4709
  %6593 = vmatpush2.bf16.msra.mxu0 %v4708
  %6594 = vmatprep.subr.bf16.mxu0 %v4705
  %6595 = vmatpush2.bf16.msra.mxu0 %v4704
  %6596 = vmatprep.subr.bf16.mxu0 %v4701
  %6597 = vmatpush2.bf16.msra.mxu0 %v4700
  %6598 = vmatprep.subr.bf16.mxu0 %v4697
  %6599 = vmatpush2.bf16.msra.mxu0 %v4696
  %6600 = vmatprep.subr.bf16.mxu0 %v4693
  %6601 = vmatpush2.bf16.msra.mxu0 %v4692
  %6602 = vmatprep.mubr.bf16.mxu0 %v161
  %6603 = vmatmul.mubr.bf16.gmra.mxu0 %v160
  %v6604 = vpop.f32.mrf.mxu0
  %v6605 = vadd.f32 %v6564, %v6604
  %v6606 = vpop.f32.mrf.mxu0
  %v6607 = vadd.f32 %v6566, %v6606
  %v6608 = vpop.f32.mrf.mxu0
  %v6609 = vpop.f32.mrf.mxu0
  %6610 = vdwg.mxu0
  %6611 = vmatprep.subr.bf16.mxu0 %v4753
  %6612 = vmatpush1.bf16.msra.mxu0 %v4752
  %6613 = vmatprep.subr.bf16.mxu0 %v4749
  %6614 = vmatpush1.bf16.msra.mxu0 %v4748
  %6615 = vmatprep.subr.bf16.mxu0 %v4745
  %6616 = vmatpush1.bf16.msra.mxu0 %v4744
  %6617 = vmatprep.subr.bf16.mxu0 %v4741
  %6618 = vmatpush1.bf16.msra.mxu0 %v4740
  %6619 = vmatprep.subr.bf16.mxu0 %v4737
  %6620 = vmatpush1.bf16.msra.mxu0 %v4736
  %6621 = vmatprep.subr.bf16.mxu0 %v4733
  %6622 = vmatpush1.bf16.msra.mxu0 %v4732
  %6623 = vmatprep.subr.bf16.mxu0 %v4729
  %6624 = vmatpush1.bf16.msra.mxu0 %v4728
  %6625 = vmatprep.subr.bf16.mxu0 %v4725
  %6626 = vmatpush1.bf16.msra.mxu0 %v4724
  %6627 = vmatprep.subr.bf16.mxu0 %v4785
  %6628 = vmatpush2.bf16.msra.mxu0 %v4784
  %6629 = vmatprep.subr.bf16.mxu0 %v4781
  %6630 = vmatpush2.bf16.msra.mxu0 %v4780
  %6631 = vmatprep.subr.bf16.mxu0 %v4777
  %6632 = vmatpush2.bf16.msra.mxu0 %v4776
  %6633 = vmatprep.subr.bf16.mxu0 %v4773
  %6634 = vmatpush2.bf16.msra.mxu0 %v4772
  %6635 = vmatprep.subr.bf16.mxu0 %v4769
  %6636 = vmatpush2.bf16.msra.mxu0 %v4768
  %6637 = vmatprep.subr.bf16.mxu0 %v4765
  %6638 = vmatpush2.bf16.msra.mxu0 %v4764
  %6639 = vmatprep.subr.bf16.mxu0 %v4761
  %6640 = vmatpush2.bf16.msra.mxu0 %v4760
  %6641 = vmatprep.subr.bf16.mxu0 %v4757
  %6642 = vmatpush2.bf16.msra.mxu0 %v4756
  %6643 = vmatprep.mubr.bf16.mxu0 %v163
  %6644 = vmatmul.mubr.bf16.gmra.mxu0 %v162
  %v6645 = vpop.f32.mrf.mxu0
  %v6646 = vadd.f32 %v6605, %v6645
  %v6647 = vpop.f32.mrf.mxu0
  %v6648 = vadd.f32 %v6607, %v6647
  %v6649 = vpop.f32.mrf.mxu0
  %v6650 = vpop.f32.mrf.mxu0
  %6651 = vdwg.mxu0
  %6652 = vmatprep.subr.bf16.mxu0 %v4817
  %6653 = vmatpush1.bf16.msra.mxu0 %v4816
  %6654 = vmatprep.subr.bf16.mxu0 %v4813
  %6655 = vmatpush1.bf16.msra.mxu0 %v4812
  %6656 = vmatprep.subr.bf16.mxu0 %v4809
  %6657 = vmatpush1.bf16.msra.mxu0 %v4808
  %6658 = vmatprep.subr.bf16.mxu0 %v4805
  %6659 = vmatpush1.bf16.msra.mxu0 %v4804
  %6660 = vmatprep.subr.bf16.mxu0 %v4801
  %6661 = vmatpush1.bf16.msra.mxu0 %v4800
  %6662 = vmatprep.subr.bf16.mxu0 %v4797
  %6663 = vmatpush1.bf16.msra.mxu0 %v4796
  %6664 = vmatprep.subr.bf16.mxu0 %v4793
  %6665 = vmatpush1.bf16.msra.mxu0 %v4792
  %6666 = vmatprep.subr.bf16.mxu0 %v4789
  %6667 = vmatpush1.bf16.msra.mxu0 %v4788
  %6668 = vmatprep.subr.bf16.mxu0 %v4849
  %6669 = vmatpush2.bf16.msra.mxu0 %v4848
  %6670 = vmatprep.subr.bf16.mxu0 %v4845
  %6671 = vmatpush2.bf16.msra.mxu0 %v4844
  %6672 = vmatprep.subr.bf16.mxu0 %v4841
  %6673 = vmatpush2.bf16.msra.mxu0 %v4840
  %6674 = vmatprep.subr.bf16.mxu0 %v4837
  %6675 = vmatpush2.bf16.msra.mxu0 %v4836
  %6676 = vmatprep.subr.bf16.mxu0 %v4833
  %6677 = vmatpush2.bf16.msra.mxu0 %v4832
  %6678 = vmatprep.subr.bf16.mxu0 %v4829
  %6679 = vmatpush2.bf16.msra.mxu0 %v4828
  %6680 = vmatprep.subr.bf16.mxu0 %v4825
  %6681 = vmatpush2.bf16.msra.mxu0 %v4824
  %6682 = vmatprep.subr.bf16.mxu0 %v4821
  %6683 = vmatpush2.bf16.msra.mxu0 %v4820
  %6684 = vmatprep.mubr.bf16.mxu0 %v165
  %6685 = vmatmul.mubr.bf16.gmra.mxu0 %v164
  %v6686 = vpop.f32.mrf.mxu0
  %v6687 = vadd.f32 %v6646, %v6686
  %v6688 = vpop.f32.mrf.mxu0
  %v6689 = vadd.f32 %v6648, %v6688
  %v6690 = vpop.f32.mrf.mxu0
  %v6691 = vpop.f32.mrf.mxu0
  %6692 = vdwg.mxu0
  %6693 = vmatprep.subr.bf16.mxu0 %v4881
  %6694 = vmatpush1.bf16.msra.mxu0 %v4880
  %6695 = vmatprep.subr.bf16.mxu0 %v4877
  %6696 = vmatpush1.bf16.msra.mxu0 %v4876
  %6697 = vmatprep.subr.bf16.mxu0 %v4873
  %6698 = vmatpush1.bf16.msra.mxu0 %v4872
  %6699 = vmatprep.subr.bf16.mxu0 %v4869
  %6700 = vmatpush1.bf16.msra.mxu0 %v4868
  %6701 = vmatprep.subr.bf16.mxu0 %v4865
  %6702 = vmatpush1.bf16.msra.mxu0 %v4864
  %6703 = vmatprep.subr.bf16.mxu0 %v4861
  %6704 = vmatpush1.bf16.msra.mxu0 %v4860
  %6705 = vmatprep.subr.bf16.mxu0 %v4857
  %6706 = vmatpush1.bf16.msra.mxu0 %v4856
  %6707 = vmatprep.subr.bf16.mxu0 %v4853
  %6708 = vmatpush1.bf16.msra.mxu0 %v4852
  %6709 = vmatprep.subr.bf16.mxu0 %v4913
  %6710 = vmatpush2.bf16.msra.mxu0 %v4912
  %6711 = vmatprep.subr.bf16.mxu0 %v4909
  %6712 = vmatpush2.bf16.msra.mxu0 %v4908
  %6713 = vmatprep.subr.bf16.mxu0 %v4905
  %6714 = vmatpush2.bf16.msra.mxu0 %v4904
  %6715 = vmatprep.subr.bf16.mxu0 %v4901
  %6716 = vmatpush2.bf16.msra.mxu0 %v4900
  %6717 = vmatprep.subr.bf16.mxu0 %v4897
  %6718 = vmatpush2.bf16.msra.mxu0 %v4896
  %6719 = vmatprep.subr.bf16.mxu0 %v4893
  %6720 = vmatpush2.bf16.msra.mxu0 %v4892
  %6721 = vmatprep.subr.bf16.mxu0 %v4889
  %6722 = vmatpush2.bf16.msra.mxu0 %v4888
  %6723 = vmatprep.subr.bf16.mxu0 %v4885
  %6724 = vmatpush2.bf16.msra.mxu0 %v4884
  %6725 = vmatprep.mubr.bf16.mxu0 %v167
  %6726 = vmatmul.mubr.bf16.gmra.mxu0 %v166
  %v6727 = vpop.f32.mrf.mxu0
  %v6728 = vadd.f32 %v6687, %v6727
  %v6729 = vpop.f32.mrf.mxu0
  %v6730 = vadd.f32 %v6689, %v6729
  %v6731 = vpop.f32.mrf.mxu0
  %v6732 = vpop.f32.mrf.mxu0
  %6733 = vdwg.mxu0
  %6734 = vmatprep.subr.bf16.mxu0 %v4945
  %6735 = vmatpush1.bf16.msra.mxu0 %v4944
  %6736 = vmatprep.subr.bf16.mxu0 %v4941
  %6737 = vmatpush1.bf16.msra.mxu0 %v4940
  %6738 = vmatprep.subr.bf16.mxu0 %v4937
  %6739 = vmatpush1.bf16.msra.mxu0 %v4936
  %6740 = vmatprep.subr.bf16.mxu0 %v4933
  %6741 = vmatpush1.bf16.msra.mxu0 %v4932
  %6742 = vmatprep.subr.bf16.mxu0 %v4929
  %6743 = vmatpush1.bf16.msra.mxu0 %v4928
  %6744 = vmatprep.subr.bf16.mxu0 %v4925
  %6745 = vmatpush1.bf16.msra.mxu0 %v4924
  %6746 = vmatprep.subr.bf16.mxu0 %v4921
  %6747 = vmatpush1.bf16.msra.mxu0 %v4920
  %6748 = vmatprep.subr.bf16.mxu0 %v4917
  %6749 = vmatpush1.bf16.msra.mxu0 %v4916
  %6750 = vmatprep.subr.bf16.mxu0 %v4977
  %6751 = vmatpush2.bf16.msra.mxu0 %v4976
  %6752 = vmatprep.subr.bf16.mxu0 %v4973
  %6753 = vmatpush2.bf16.msra.mxu0 %v4972
  %6754 = vmatprep.subr.bf16.mxu0 %v4969
  %6755 = vmatpush2.bf16.msra.mxu0 %v4968
  %6756 = vmatprep.subr.bf16.mxu0 %v4965
  %6757 = vmatpush2.bf16.msra.mxu0 %v4964
  %6758 = vmatprep.subr.bf16.mxu0 %v4961
  %6759 = vmatpush2.bf16.msra.mxu0 %v4960
  %6760 = vmatprep.subr.bf16.mxu0 %v4957
  %6761 = vmatpush2.bf16.msra.mxu0 %v4956
  %6762 = vmatprep.subr.bf16.mxu0 %v4953
  %6763 = vmatpush2.bf16.msra.mxu0 %v4952
  %6764 = vmatprep.subr.bf16.mxu0 %v4949
  %6765 = vmatpush2.bf16.msra.mxu0 %v4948
  %6766 = vmatprep.mubr.bf16.mxu0 %v169
  %6767 = vmatmul.mubr.bf16.gmra.mxu0 %v168
  %v6768 = vpop.f32.mrf.mxu0
  %v6769 = vadd.f32 %v6728, %v6768
  %v6770 = vpop.f32.mrf.mxu0
  %v6771 = vadd.f32 %v6730, %v6770
  %v6772 = vpop.f32.mrf.mxu0
  %v6773 = vpop.f32.mrf.mxu0
  %6774 = vdwg.mxu0
  %6775 = vmatprep.subr.bf16.mxu0 %v5009
  %6776 = vmatpush1.bf16.msra.mxu0 %v5008
  %6777 = vmatprep.subr.bf16.mxu0 %v5005
  %6778 = vmatpush1.bf16.msra.mxu0 %v5004
  %6779 = vmatprep.subr.bf16.mxu0 %v5001
  %6780 = vmatpush1.bf16.msra.mxu0 %v5000
  %6781 = vmatprep.subr.bf16.mxu0 %v4997
  %6782 = vmatpush1.bf16.msra.mxu0 %v4996
  %6783 = vmatprep.subr.bf16.mxu0 %v4993
  %6784 = vmatpush1.bf16.msra.mxu0 %v4992
  %6785 = vmatprep.subr.bf16.mxu0 %v4989
  %6786 = vmatpush1.bf16.msra.mxu0 %v4988
  %6787 = vmatprep.subr.bf16.mxu0 %v4985
  %6788 = vmatpush1.bf16.msra.mxu0 %v4984
  %6789 = vmatprep.subr.bf16.mxu0 %v4981
  %6790 = vmatpush1.bf16.msra.mxu0 %v4980
  %6791 = vmatprep.subr.bf16.mxu0 %v5041
  %6792 = vmatpush2.bf16.msra.mxu0 %v5040
  %6793 = vmatprep.subr.bf16.mxu0 %v5037
  %6794 = vmatpush2.bf16.msra.mxu0 %v5036
  %6795 = vmatprep.subr.bf16.mxu0 %v5033
  %6796 = vmatpush2.bf16.msra.mxu0 %v5032
  %6797 = vmatprep.subr.bf16.mxu0 %v5029
  %6798 = vmatpush2.bf16.msra.mxu0 %v5028
  %6799 = vmatprep.subr.bf16.mxu0 %v5025
  %6800 = vmatpush2.bf16.msra.mxu0 %v5024
  %6801 = vmatprep.subr.bf16.mxu0 %v5021
  %6802 = vmatpush2.bf16.msra.mxu0 %v5020
  %6803 = vmatprep.subr.bf16.mxu0 %v5017
  %6804 = vmatpush2.bf16.msra.mxu0 %v5016
  %6805 = vmatprep.subr.bf16.mxu0 %v5013
  %6806 = vmatpush2.bf16.msra.mxu0 %v5012
  %6807 = vmatprep.mubr.bf16.mxu0 %v171
  %6808 = vmatmul.mubr.bf16.gmra.mxu0 %v170
  %v6809 = vpop.f32.mrf.mxu0
  %v6810 = vadd.f32 %v6769, %v6809
  %v6811 = vpop.f32.mrf.mxu0
  %v6812 = vadd.f32 %v6771, %v6811
  %v6813 = vpop.f32.mrf.mxu0
  %v6814 = vpop.f32.mrf.mxu0
  %6815 = vdwg.mxu0
  %6816 = vmatprep.subr.bf16.mxu0 %v5073
  %6817 = vmatpush1.bf16.msra.mxu0 %v5072
  %6818 = vmatprep.subr.bf16.mxu0 %v5069
  %6819 = vmatpush1.bf16.msra.mxu0 %v5068
  %6820 = vmatprep.subr.bf16.mxu0 %v5065
  %6821 = vmatpush1.bf16.msra.mxu0 %v5064
  %6822 = vmatprep.subr.bf16.mxu0 %v5061
  %6823 = vmatpush1.bf16.msra.mxu0 %v5060
  %6824 = vmatprep.subr.bf16.mxu0 %v5057
  %6825 = vmatpush1.bf16.msra.mxu0 %v5056
  %6826 = vmatprep.subr.bf16.mxu0 %v5053
  %6827 = vmatpush1.bf16.msra.mxu0 %v5052
  %6828 = vmatprep.subr.bf16.mxu0 %v5049
  %6829 = vmatpush1.bf16.msra.mxu0 %v5048
  %6830 = vmatprep.subr.bf16.mxu0 %v5045
  %6831 = vmatpush1.bf16.msra.mxu0 %v5044
  %6832 = vmatprep.subr.bf16.mxu0 %v5105
  %6833 = vmatpush2.bf16.msra.mxu0 %v5104
  %6834 = vmatprep.subr.bf16.mxu0 %v5101
  %6835 = vmatpush2.bf16.msra.mxu0 %v5100
  %6836 = vmatprep.subr.bf16.mxu0 %v5097
  %6837 = vmatpush2.bf16.msra.mxu0 %v5096
  %6838 = vmatprep.subr.bf16.mxu0 %v5093
  %6839 = vmatpush2.bf16.msra.mxu0 %v5092
  %6840 = vmatprep.subr.bf16.mxu0 %v5089
  %6841 = vmatpush2.bf16.msra.mxu0 %v5088
  %6842 = vmatprep.subr.bf16.mxu0 %v5085
  %6843 = vmatpush2.bf16.msra.mxu0 %v5084
  %6844 = vmatprep.subr.bf16.mxu0 %v5081
  %6845 = vmatpush2.bf16.msra.mxu0 %v5080
  %6846 = vmatprep.subr.bf16.mxu0 %v5077
  %6847 = vmatpush2.bf16.msra.mxu0 %v5076
  %6848 = vmatprep.mubr.bf16.mxu0 %v173
  %6849 = vmatmul.mubr.bf16.gmra.mxu0 %v172
  %v6850 = vpop.f32.mrf.mxu0
  %v6851 = vadd.f32 %v6810, %v6850
  %v6852 = vpop.f32.mrf.mxu0
  %v6853 = vadd.f32 %v6812, %v6852
  %v6854 = vpop.f32.mrf.mxu0
  %v6855 = vpop.f32.mrf.mxu0
  %6856 = vdwg.mxu0
  %6857 = vmatprep.subr.bf16.mxu0 %v5137
  %6858 = vmatpush1.bf16.msra.mxu0 %v5136
  %6859 = vmatprep.subr.bf16.mxu0 %v5133
  %6860 = vmatpush1.bf16.msra.mxu0 %v5132
  %6861 = vmatprep.subr.bf16.mxu0 %v5129
  %6862 = vmatpush1.bf16.msra.mxu0 %v5128
  %6863 = vmatprep.subr.bf16.mxu0 %v5125
  %6864 = vmatpush1.bf16.msra.mxu0 %v5124
  %6865 = vmatprep.subr.bf16.mxu0 %v5121
  %6866 = vmatpush1.bf16.msra.mxu0 %v5120
  %6867 = vmatprep.subr.bf16.mxu0 %v5117
  %6868 = vmatpush1.bf16.msra.mxu0 %v5116
  %6869 = vmatprep.subr.bf16.mxu0 %v5113
  %6870 = vmatpush1.bf16.msra.mxu0 %v5112
  %6871 = vmatprep.subr.bf16.mxu0 %v5109
  %6872 = vmatpush1.bf16.msra.mxu0 %v5108
  %6873 = vmatprep.subr.bf16.mxu0 %v5169
  %6874 = vmatpush2.bf16.msra.mxu0 %v5168
  %6875 = vmatprep.subr.bf16.mxu0 %v5165
  %6876 = vmatpush2.bf16.msra.mxu0 %v5164
  %6877 = vmatprep.subr.bf16.mxu0 %v5161
  %6878 = vmatpush2.bf16.msra.mxu0 %v5160
  %6879 = vmatprep.subr.bf16.mxu0 %v5157
  %6880 = vmatpush2.bf16.msra.mxu0 %v5156
  %6881 = vmatprep.subr.bf16.mxu0 %v5153
  %6882 = vmatpush2.bf16.msra.mxu0 %v5152
  %6883 = vmatprep.subr.bf16.mxu0 %v5149
  %6884 = vmatpush2.bf16.msra.mxu0 %v5148
  %6885 = vmatprep.subr.bf16.mxu0 %v5145
  %6886 = vmatpush2.bf16.msra.mxu0 %v5144
  %6887 = vmatprep.subr.bf16.mxu0 %v5141
  %6888 = vmatpush2.bf16.msra.mxu0 %v5140
  %6889 = vmatprep.mubr.bf16.mxu0 %v175
  %6890 = vmatmul.mubr.bf16.gmra.mxu0 %v174
  %v6891 = vpop.f32.mrf.mxu0
  %v6892 = vadd.f32 %v6851, %v6891
  %v6893 = vpop.f32.mrf.mxu0
  %v6894 = vadd.f32 %v6853, %v6893
  %v6895 = vpop.f32.mrf.mxu0
  %v6896 = vpop.f32.mrf.mxu0
  %6897 = vdwg.mxu0
  %6898 = vmatprep.subr.bf16.mxu0 %v5201
  %6899 = vmatpush1.bf16.msra.mxu0 %v5200
  %6900 = vmatprep.subr.bf16.mxu0 %v5197
  %6901 = vmatpush1.bf16.msra.mxu0 %v5196
  %6902 = vmatprep.subr.bf16.mxu0 %v5193
  %6903 = vmatpush1.bf16.msra.mxu0 %v5192
  %6904 = vmatprep.subr.bf16.mxu0 %v5189
  %6905 = vmatpush1.bf16.msra.mxu0 %v5188
  %6906 = vmatprep.subr.bf16.mxu0 %v5185
  %6907 = vmatpush1.bf16.msra.mxu0 %v5184
  %6908 = vmatprep.subr.bf16.mxu0 %v5181
  %6909 = vmatpush1.bf16.msra.mxu0 %v5180
  %6910 = vmatprep.subr.bf16.mxu0 %v5177
  %6911 = vmatpush1.bf16.msra.mxu0 %v5176
  %6912 = vmatprep.subr.bf16.mxu0 %v5173
  %6913 = vmatpush1.bf16.msra.mxu0 %v5172
  %6914 = vmatprep.subr.bf16.mxu0 %v5233
  %6915 = vmatpush2.bf16.msra.mxu0 %v5232
  %6916 = vmatprep.subr.bf16.mxu0 %v5229
  %6917 = vmatpush2.bf16.msra.mxu0 %v5228
  %6918 = vmatprep.subr.bf16.mxu0 %v5225
  %6919 = vmatpush2.bf16.msra.mxu0 %v5224
  %6920 = vmatprep.subr.bf16.mxu0 %v5221
  %6921 = vmatpush2.bf16.msra.mxu0 %v5220
  %6922 = vmatprep.subr.bf16.mxu0 %v5217
  %6923 = vmatpush2.bf16.msra.mxu0 %v5216
  %6924 = vmatprep.subr.bf16.mxu0 %v5213
  %6925 = vmatpush2.bf16.msra.mxu0 %v5212
  %6926 = vmatprep.subr.bf16.mxu0 %v5209
  %6927 = vmatpush2.bf16.msra.mxu0 %v5208
  %6928 = vmatprep.subr.bf16.mxu0 %v5205
  %6929 = vmatpush2.bf16.msra.mxu0 %v5204
  %6930 = vmatprep.mubr.bf16.mxu0 %v177
  %6931 = vmatmul.mubr.bf16.gmra.mxu0 %v176
  %v6932 = vpop.f32.mrf.mxu0
  %v6933 = vadd.f32 %v6892, %v6932
  %v6934 = vpop.f32.mrf.mxu0
  %v6935 = vadd.f32 %v6894, %v6934
  %v6936 = vpop.f32.mrf.mxu0
  %v6937 = vpop.f32.mrf.mxu0
  %6938 = vdwg.mxu0
  %6939 = vmatprep.subr.bf16.mxu0 %v5265
  %6940 = vmatpush1.bf16.msra.mxu0 %v5264
  %6941 = vmatprep.subr.bf16.mxu0 %v5261
  %6942 = vmatpush1.bf16.msra.mxu0 %v5260
  %6943 = vmatprep.subr.bf16.mxu0 %v5257
  %6944 = vmatpush1.bf16.msra.mxu0 %v5256
  %6945 = vmatprep.subr.bf16.mxu0 %v5253
  %6946 = vmatpush1.bf16.msra.mxu0 %v5252
  %6947 = vmatprep.subr.bf16.mxu0 %v5249
  %6948 = vmatpush1.bf16.msra.mxu0 %v5248
  %6949 = vmatprep.subr.bf16.mxu0 %v5245
  %6950 = vmatpush1.bf16.msra.mxu0 %v5244
  %6951 = vmatprep.subr.bf16.mxu0 %v5241
  %6952 = vmatpush1.bf16.msra.mxu0 %v5240
  %6953 = vmatprep.subr.bf16.mxu0 %v5237
  %6954 = vmatpush1.bf16.msra.mxu0 %v5236
  %6955 = vmatprep.subr.bf16.mxu0 %v5297
  %6956 = vmatpush2.bf16.msra.mxu0 %v5296
  %6957 = vmatprep.subr.bf16.mxu0 %v5293
  %6958 = vmatpush2.bf16.msra.mxu0 %v5292
  %6959 = vmatprep.subr.bf16.mxu0 %v5289
  %6960 = vmatpush2.bf16.msra.mxu0 %v5288
  %6961 = vmatprep.subr.bf16.mxu0 %v5285
  %6962 = vmatpush2.bf16.msra.mxu0 %v5284
  %6963 = vmatprep.subr.bf16.mxu0 %v5281
  %6964 = vmatpush2.bf16.msra.mxu0 %v5280
  %6965 = vmatprep.subr.bf16.mxu0 %v5277
  %6966 = vmatpush2.bf16.msra.mxu0 %v5276
  %6967 = vmatprep.subr.bf16.mxu0 %v5273
  %6968 = vmatpush2.bf16.msra.mxu0 %v5272
  %6969 = vmatprep.subr.bf16.mxu0 %v5269
  %6970 = vmatpush2.bf16.msra.mxu0 %v5268
  %6971 = vmatprep.mubr.bf16.mxu0 %v179
  %6972 = vmatmul.mubr.bf16.gmra.mxu0 %v178
  %v6973 = vpop.f32.mrf.mxu0
  %v6974 = vadd.f32 %v6933, %v6973
  %v6975 = vpop.f32.mrf.mxu0
  %v6976 = vadd.f32 %v6935, %v6975
  %v6977 = vpop.f32.mrf.mxu0
  %v6978 = vpop.f32.mrf.mxu0
  %6979 = vdwg.mxu0
  %6980 = vmatprep.subr.bf16.mxu0 %v4307
  %6981 = vmatpush1.bf16.msra.mxu0 %v4306
  %6982 = vmatprep.subr.bf16.mxu0 %v4303
  %6983 = vmatpush1.bf16.msra.mxu0 %v4302
  %6984 = vmatprep.subr.bf16.mxu0 %v4299
  %6985 = vmatpush1.bf16.msra.mxu0 %v4298
  %6986 = vmatprep.subr.bf16.mxu0 %v4295
  %6987 = vmatpush1.bf16.msra.mxu0 %v4294
  %6988 = vmatprep.subr.bf16.mxu0 %v4291
  %6989 = vmatpush1.bf16.msra.mxu0 %v4290
  %6990 = vmatprep.subr.bf16.mxu0 %v4287
  %6991 = vmatpush1.bf16.msra.mxu0 %v4286
  %6992 = vmatprep.subr.bf16.mxu0 %v4283
  %6993 = vmatpush1.bf16.msra.mxu0 %v4282
  %6994 = vmatprep.subr.bf16.mxu0 %v4279
  %6995 = vmatpush1.bf16.msra.mxu0 %v4278
  %6996 = vmatprep.subr.bf16.mxu0 %v4339
  %6997 = vmatpush2.bf16.msra.mxu0 %v4338
  %6998 = vmatprep.subr.bf16.mxu0 %v4335
  %6999 = vmatpush2.bf16.msra.mxu0 %v4334
  %7000 = vmatprep.subr.bf16.mxu0 %v4331
  %7001 = vmatpush2.bf16.msra.mxu0 %v4330
  %7002 = vmatprep.subr.bf16.mxu0 %v4327
  %7003 = vmatpush2.bf16.msra.mxu0 %v4326
  %7004 = vmatprep.subr.bf16.mxu0 %v4323
  %7005 = vmatpush2.bf16.msra.mxu0 %v4322
  %7006 = vmatprep.subr.bf16.mxu0 %v4319
  %7007 = vmatpush2.bf16.msra.mxu0 %v4318
  %7008 = vmatprep.subr.bf16.mxu0 %v4315
  %7009 = vmatpush2.bf16.msra.mxu0 %v4314
  %7010 = vmatprep.subr.bf16.mxu0 %v4311
  %7011 = vmatpush2.bf16.msra.mxu0 %v4310
  %7012 = vmatprep.mubr.bf16.mxu0 %v149
  %7013 = vmatmul.mubr.bf16.gmra.mxu0 %v148
  %v7014 = vpop.f32.mrf.mxu0
  %v7015 = vadd.f32 0.0, %v7014
  %v7016 = vpop.f32.mrf.mxu0
  %v7017 = vadd.f32 0.0, %v7016
  %v7018 = vpop.f32.mrf.mxu0
  %v7019 = vpop.f32.mrf.mxu0
  %7020 = vdwg.mxu0
  %7021 = vmatprep.subr.bf16.mxu0 %v4371
  %7022 = vmatpush1.bf16.msra.mxu0 %v4370
  %7023 = vmatprep.subr.bf16.mxu0 %v4367
  %7024 = vmatpush1.bf16.msra.mxu0 %v4366
  %7025 = vmatprep.subr.bf16.mxu0 %v4363
  %7026 = vmatpush1.bf16.msra.mxu0 %v4362
  %7027 = vmatprep.subr.bf16.mxu0 %v4359
  %7028 = vmatpush1.bf16.msra.mxu0 %v4358
  %7029 = vmatprep.subr.bf16.mxu0 %v4355
  %7030 = vmatpush1.bf16.msra.mxu0 %v4354
  %7031 = vmatprep.subr.bf16.mxu0 %v4351
  %7032 = vmatpush1.bf16.msra.mxu0 %v4350
  %7033 = vmatprep.subr.bf16.mxu0 %v4347
  %7034 = vmatpush1.bf16.msra.mxu0 %v4346
  %7035 = vmatprep.subr.bf16.mxu0 %v4343
  %7036 = vmatpush1.bf16.msra.mxu0 %v4342
  %7037 = vmatprep.subr.bf16.mxu0 %v4403
  %7038 = vmatpush2.bf16.msra.mxu0 %v4402
  %7039 = vmatprep.subr.bf16.mxu0 %v4399
  %7040 = vmatpush2.bf16.msra.mxu0 %v4398
  %7041 = vmatprep.subr.bf16.mxu0 %v4395
  %7042 = vmatpush2.bf16.msra.mxu0 %v4394
  %7043 = vmatprep.subr.bf16.mxu0 %v4391
  %7044 = vmatpush2.bf16.msra.mxu0 %v4390
  %7045 = vmatprep.subr.bf16.mxu0 %v4387
  %7046 = vmatpush2.bf16.msra.mxu0 %v4386
  %7047 = vmatprep.subr.bf16.mxu0 %v4383
  %7048 = vmatpush2.bf16.msra.mxu0 %v4382
  %7049 = vmatprep.subr.bf16.mxu0 %v4379
  %7050 = vmatpush2.bf16.msra.mxu0 %v4378
  %7051 = vmatprep.subr.bf16.mxu0 %v4375
  %7052 = vmatpush2.bf16.msra.mxu0 %v4374
  %7053 = vmatprep.mubr.bf16.mxu0 %v151
  %7054 = vmatmul.mubr.bf16.gmra.mxu0 %v150
  %v7055 = vpop.f32.mrf.mxu0
  %v7056 = vadd.f32 %v7015, %v7055
  %v7057 = vpop.f32.mrf.mxu0
  %v7058 = vadd.f32 %v7017, %v7057
  %v7059 = vpop.f32.mrf.mxu0
  %v7060 = vpop.f32.mrf.mxu0
  %7061 = vdwg.mxu0
  %7062 = vmatprep.subr.bf16.mxu0 %v4435
  %7063 = vmatpush1.bf16.msra.mxu0 %v4434
  %7064 = vmatprep.subr.bf16.mxu0 %v4431
  %7065 = vmatpush1.bf16.msra.mxu0 %v4430
  %7066 = vmatprep.subr.bf16.mxu0 %v4427
  %7067 = vmatpush1.bf16.msra.mxu0 %v4426
  %7068 = vmatprep.subr.bf16.mxu0 %v4423
  %7069 = vmatpush1.bf16.msra.mxu0 %v4422
  %7070 = vmatprep.subr.bf16.mxu0 %v4419
  %7071 = vmatpush1.bf16.msra.mxu0 %v4418
  %7072 = vmatprep.subr.bf16.mxu0 %v4415
  %7073 = vmatpush1.bf16.msra.mxu0 %v4414
  %7074 = vmatprep.subr.bf16.mxu0 %v4411
  %7075 = vmatpush1.bf16.msra.mxu0 %v4410
  %7076 = vmatprep.subr.bf16.mxu0 %v4407
  %7077 = vmatpush1.bf16.msra.mxu0 %v4406
  %7078 = vmatprep.subr.bf16.mxu0 %v4467
  %7079 = vmatpush2.bf16.msra.mxu0 %v4466
  %7080 = vmatprep.subr.bf16.mxu0 %v4463
  %7081 = vmatpush2.bf16.msra.mxu0 %v4462
  %7082 = vmatprep.subr.bf16.mxu0 %v4459
  %7083 = vmatpush2.bf16.msra.mxu0 %v4458
  %7084 = vmatprep.subr.bf16.mxu0 %v4455
  %7085 = vmatpush2.bf16.msra.mxu0 %v4454
  %7086 = vmatprep.subr.bf16.mxu0 %v4451
  %7087 = vmatpush2.bf16.msra.mxu0 %v4450
  %7088 = vmatprep.subr.bf16.mxu0 %v4447
  %7089 = vmatpush2.bf16.msra.mxu0 %v4446
  %7090 = vmatprep.subr.bf16.mxu0 %v4443
  %7091 = vmatpush2.bf16.msra.mxu0 %v4442
  %7092 = vmatprep.subr.bf16.mxu0 %v4439
  %7093 = vmatpush2.bf16.msra.mxu0 %v4438
  %7094 = vmatprep.mubr.bf16.mxu0 %v153
  %7095 = vmatmul.mubr.bf16.gmra.mxu0 %v152
  %v7096 = vpop.f32.mrf.mxu0
  %v7097 = vadd.f32 %v7056, %v7096
  %v7098 = vpop.f32.mrf.mxu0
  %v7099 = vadd.f32 %v7058, %v7098
  %v7100 = vpop.f32.mrf.mxu0
  %v7101 = vpop.f32.mrf.mxu0
  %7102 = vdwg.mxu0
  %7103 = vmatprep.subr.bf16.mxu0 %v4499
  %7104 = vmatpush1.bf16.msra.mxu0 %v4498
  %7105 = vmatprep.subr.bf16.mxu0 %v4495
  %7106 = vmatpush1.bf16.msra.mxu0 %v4494
  %7107 = vmatprep.subr.bf16.mxu0 %v4491
  %7108 = vmatpush1.bf16.msra.mxu0 %v4490
  %7109 = vmatprep.subr.bf16.mxu0 %v4487
  %7110 = vmatpush1.bf16.msra.mxu0 %v4486
  %7111 = vmatprep.subr.bf16.mxu0 %v4483
  %7112 = vmatpush1.bf16.msra.mxu0 %v4482
  %7113 = vmatprep.subr.bf16.mxu0 %v4479
  %7114 = vmatpush1.bf16.msra.mxu0 %v4478
  %7115 = vmatprep.subr.bf16.mxu0 %v4475
  %7116 = vmatpush1.bf16.msra.mxu0 %v4474
  %7117 = vmatprep.subr.bf16.mxu0 %v4471
  %7118 = vmatpush1.bf16.msra.mxu0 %v4470
  %7119 = vmatprep.subr.bf16.mxu0 %v4531
  %7120 = vmatpush2.bf16.msra.mxu0 %v4530
  %7121 = vmatprep.subr.bf16.mxu0 %v4527
  %7122 = vmatpush2.bf16.msra.mxu0 %v4526
  %7123 = vmatprep.subr.bf16.mxu0 %v4523
  %7124 = vmatpush2.bf16.msra.mxu0 %v4522
  %7125 = vmatprep.subr.bf16.mxu0 %v4519
  %7126 = vmatpush2.bf16.msra.mxu0 %v4518
  %7127 = vmatprep.subr.bf16.mxu0 %v4515
  %7128 = vmatpush2.bf16.msra.mxu0 %v4514
  %7129 = vmatprep.subr.bf16.mxu0 %v4511
  %7130 = vmatpush2.bf16.msra.mxu0 %v4510
  %7131 = vmatprep.subr.bf16.mxu0 %v4507
  %7132 = vmatpush2.bf16.msra.mxu0 %v4506
  %7133 = vmatprep.subr.bf16.mxu0 %v4503
  %7134 = vmatpush2.bf16.msra.mxu0 %v4502
  %7135 = vmatprep.mubr.bf16.mxu0 %v155
  %7136 = vmatmul.mubr.bf16.gmra.mxu0 %v154
  %v7137 = vpop.f32.mrf.mxu0
  %v7138 = vadd.f32 %v7097, %v7137
  %v7139 = vpop.f32.mrf.mxu0
  %v7140 = vadd.f32 %v7099, %v7139
  %v7141 = vpop.f32.mrf.mxu0
  %v7142 = vpop.f32.mrf.mxu0
  %7143 = vdwg.mxu0
  %7144 = vmatprep.subr.bf16.mxu0 %v4563
  %7145 = vmatpush1.bf16.msra.mxu0 %v4562
  %7146 = vmatprep.subr.bf16.mxu0 %v4559
  %7147 = vmatpush1.bf16.msra.mxu0 %v4558
  %7148 = vmatprep.subr.bf16.mxu0 %v4555
  %7149 = vmatpush1.bf16.msra.mxu0 %v4554
  %7150 = vmatprep.subr.bf16.mxu0 %v4551
  %7151 = vmatpush1.bf16.msra.mxu0 %v4550
  %7152 = vmatprep.subr.bf16.mxu0 %v4547
  %7153 = vmatpush1.bf16.msra.mxu0 %v4546
  %7154 = vmatprep.subr.bf16.mxu0 %v4543
  %7155 = vmatpush1.bf16.msra.mxu0 %v4542
  %7156 = vmatprep.subr.bf16.mxu0 %v4539
  %7157 = vmatpush1.bf16.msra.mxu0 %v4538
  %7158 = vmatprep.subr.bf16.mxu0 %v4535
  %7159 = vmatpush1.bf16.msra.mxu0 %v4534
  %7160 = vmatprep.subr.bf16.mxu0 %v4595
  %7161 = vmatpush2.bf16.msra.mxu0 %v4594
  %7162 = vmatprep.subr.bf16.mxu0 %v4591
  %7163 = vmatpush2.bf16.msra.mxu0 %v4590
  %7164 = vmatprep.subr.bf16.mxu0 %v4587
  %7165 = vmatpush2.bf16.msra.mxu0 %v4586
  %7166 = vmatprep.subr.bf16.mxu0 %v4583
  %7167 = vmatpush2.bf16.msra.mxu0 %v4582
  %7168 = vmatprep.subr.bf16.mxu0 %v4579
  %7169 = vmatpush2.bf16.msra.mxu0 %v4578
  %7170 = vmatprep.subr.bf16.mxu0 %v4575
  %7171 = vmatpush2.bf16.msra.mxu0 %v4574
  %7172 = vmatprep.subr.bf16.mxu0 %v4571
  %7173 = vmatpush2.bf16.msra.mxu0 %v4570
  %7174 = vmatprep.subr.bf16.mxu0 %v4567
  %7175 = vmatpush2.bf16.msra.mxu0 %v4566
  %7176 = vmatprep.mubr.bf16.mxu0 %v157
  %7177 = vmatmul.mubr.bf16.gmra.mxu0 %v156
  %v7178 = vpop.f32.mrf.mxu0
  %v7179 = vadd.f32 %v7138, %v7178
  %v7180 = vpop.f32.mrf.mxu0
  %v7181 = vadd.f32 %v7140, %v7180
  %v7182 = vpop.f32.mrf.mxu0
  %v7183 = vpop.f32.mrf.mxu0
  %7184 = vdwg.mxu0
  %7185 = vmatprep.subr.bf16.mxu0 %v4627
  %7186 = vmatpush1.bf16.msra.mxu0 %v4626
  %7187 = vmatprep.subr.bf16.mxu0 %v4623
  %7188 = vmatpush1.bf16.msra.mxu0 %v4622
  %7189 = vmatprep.subr.bf16.mxu0 %v4619
  %7190 = vmatpush1.bf16.msra.mxu0 %v4618
  %7191 = vmatprep.subr.bf16.mxu0 %v4615
  %7192 = vmatpush1.bf16.msra.mxu0 %v4614
  %7193 = vmatprep.subr.bf16.mxu0 %v4611
  %7194 = vmatpush1.bf16.msra.mxu0 %v4610
  %7195 = vmatprep.subr.bf16.mxu0 %v4607
  %7196 = vmatpush1.bf16.msra.mxu0 %v4606
  %7197 = vmatprep.subr.bf16.mxu0 %v4603
  %7198 = vmatpush1.bf16.msra.mxu0 %v4602
  %7199 = vmatprep.subr.bf16.mxu0 %v4599
  %7200 = vmatpush1.bf16.msra.mxu0 %v4598
  %7201 = vmatprep.subr.bf16.mxu0 %v4659
  %7202 = vmatpush2.bf16.msra.mxu0 %v4658
  %7203 = vmatprep.subr.bf16.mxu0 %v4655
  %7204 = vmatpush2.bf16.msra.mxu0 %v4654
  %7205 = vmatprep.subr.bf16.mxu0 %v4651
  %7206 = vmatpush2.bf16.msra.mxu0 %v4650
  %7207 = vmatprep.subr.bf16.mxu0 %v4647
  %7208 = vmatpush2.bf16.msra.mxu0 %v4646
  %7209 = vmatprep.subr.bf16.mxu0 %v4643
  %7210 = vmatpush2.bf16.msra.mxu0 %v4642
  %7211 = vmatprep.subr.bf16.mxu0 %v4639
  %7212 = vmatpush2.bf16.msra.mxu0 %v4638
  %7213 = vmatprep.subr.bf16.mxu0 %v4635
  %7214 = vmatpush2.bf16.msra.mxu0 %v4634
  %7215 = vmatprep.subr.bf16.mxu0 %v4631
  %7216 = vmatpush2.bf16.msra.mxu0 %v4630
  %7217 = vmatprep.mubr.bf16.mxu0 %v159
  %7218 = vmatmul.mubr.bf16.gmra.mxu0 %v158
  %v7219 = vpop.f32.mrf.mxu0
  %v7220 = vadd.f32 %v7179, %v7219
  %v7221 = vpop.f32.mrf.mxu0
  %v7222 = vadd.f32 %v7181, %v7221
  %v7223 = vpop.f32.mrf.mxu0
  %v7224 = vpop.f32.mrf.mxu0
  %7225 = vdwg.mxu0
  %7226 = vmatprep.subr.bf16.mxu0 %v4691
  %7227 = vmatpush1.bf16.msra.mxu0 %v4690
  %7228 = vmatprep.subr.bf16.mxu0 %v4687
  %7229 = vmatpush1.bf16.msra.mxu0 %v4686
  %7230 = vmatprep.subr.bf16.mxu0 %v4683
  %7231 = vmatpush1.bf16.msra.mxu0 %v4682
  %7232 = vmatprep.subr.bf16.mxu0 %v4679
  %7233 = vmatpush1.bf16.msra.mxu0 %v4678
  %7234 = vmatprep.subr.bf16.mxu0 %v4675
  %7235 = vmatpush1.bf16.msra.mxu0 %v4674
  %7236 = vmatprep.subr.bf16.mxu0 %v4671
  %7237 = vmatpush1.bf16.msra.mxu0 %v4670
  %7238 = vmatprep.subr.bf16.mxu0 %v4667
  %7239 = vmatpush1.bf16.msra.mxu0 %v4666
  %7240 = vmatprep.subr.bf16.mxu0 %v4663
  %7241 = vmatpush1.bf16.msra.mxu0 %v4662
  %7242 = vmatprep.subr.bf16.mxu0 %v4723
  %7243 = vmatpush2.bf16.msra.mxu0 %v4722
  %7244 = vmatprep.subr.bf16.mxu0 %v4719
  %7245 = vmatpush2.bf16.msra.mxu0 %v4718
  %7246 = vmatprep.subr.bf16.mxu0 %v4715
  %7247 = vmatpush2.bf16.msra.mxu0 %v4714
  %7248 = vmatprep.subr.bf16.mxu0 %v4711
  %7249 = vmatpush2.bf16.msra.mxu0 %v4710
  %7250 = vmatprep.subr.bf16.mxu0 %v4707
  %7251 = vmatpush2.bf16.msra.mxu0 %v4706
  %7252 = vmatprep.subr.bf16.mxu0 %v4703
  %7253 = vmatpush2.bf16.msra.mxu0 %v4702
  %7254 = vmatprep.subr.bf16.mxu0 %v4699
  %7255 = vmatpush2.bf16.msra.mxu0 %v4698
  %7256 = vmatprep.subr.bf16.mxu0 %v4695
  %7257 = vmatpush2.bf16.msra.mxu0 %v4694
  %7258 = vmatprep.mubr.bf16.mxu0 %v161
  %7259 = vmatmul.mubr.bf16.gmra.mxu0 %v160
  %v7260 = vpop.f32.mrf.mxu0
  %v7261 = vadd.f32 %v7220, %v7260
  %v7262 = vpop.f32.mrf.mxu0
  %v7263 = vadd.f32 %v7222, %v7262
  %v7264 = vpop.f32.mrf.mxu0
  %v7265 = vpop.f32.mrf.mxu0
  %7266 = vdwg.mxu0
  %7267 = vmatprep.subr.bf16.mxu0 %v4755
  %7268 = vmatpush1.bf16.msra.mxu0 %v4754
  %7269 = vmatprep.subr.bf16.mxu0 %v4751
  %7270 = vmatpush1.bf16.msra.mxu0 %v4750
  %7271 = vmatprep.subr.bf16.mxu0 %v4747
  %7272 = vmatpush1.bf16.msra.mxu0 %v4746
  %7273 = vmatprep.subr.bf16.mxu0 %v4743
  %7274 = vmatpush1.bf16.msra.mxu0 %v4742
  %7275 = vmatprep.subr.bf16.mxu0 %v4739
  %7276 = vmatpush1.bf16.msra.mxu0 %v4738
  %7277 = vmatprep.subr.bf16.mxu0 %v4735
  %7278 = vmatpush1.bf16.msra.mxu0 %v4734
  %7279 = vmatprep.subr.bf16.mxu0 %v4731
  %7280 = vmatpush1.bf16.msra.mxu0 %v4730
  %7281 = vmatprep.subr.bf16.mxu0 %v4727
  %7282 = vmatpush1.bf16.msra.mxu0 %v4726
  %7283 = vmatprep.subr.bf16.mxu0 %v4787
  %7284 = vmatpush2.bf16.msra.mxu0 %v4786
  %7285 = vmatprep.subr.bf16.mxu0 %v4783
  %7286 = vmatpush2.bf16.msra.mxu0 %v4782
  %7287 = vmatprep.subr.bf16.mxu0 %v4779
  %7288 = vmatpush2.bf16.msra.mxu0 %v4778
  %7289 = vmatprep.subr.bf16.mxu0 %v4775
  %7290 = vmatpush2.bf16.msra.mxu0 %v4774
  %7291 = vmatprep.subr.bf16.mxu0 %v4771
  %7292 = vmatpush2.bf16.msra.mxu0 %v4770
  %7293 = vmatprep.subr.bf16.mxu0 %v4767
  %7294 = vmatpush2.bf16.msra.mxu0 %v4766
  %7295 = vmatprep.subr.bf16.mxu0 %v4763
  %7296 = vmatpush2.bf16.msra.mxu0 %v4762
  %7297 = vmatprep.subr.bf16.mxu0 %v4759
  %7298 = vmatpush2.bf16.msra.mxu0 %v4758
  %7299 = vmatprep.mubr.bf16.mxu0 %v163
  %7300 = vmatmul.mubr.bf16.gmra.mxu0 %v162
  %v7301 = vpop.f32.mrf.mxu0
  %v7302 = vadd.f32 %v7261, %v7301
  %v7303 = vpop.f32.mrf.mxu0
  %v7304 = vadd.f32 %v7263, %v7303
  %v7305 = vpop.f32.mrf.mxu0
  %v7306 = vpop.f32.mrf.mxu0
  %7307 = vdwg.mxu0
  %7308 = vmatprep.subr.bf16.mxu0 %v4819
  %7309 = vmatpush1.bf16.msra.mxu0 %v4818
  %7310 = vmatprep.subr.bf16.mxu0 %v4815
  %7311 = vmatpush1.bf16.msra.mxu0 %v4814
  %7312 = vmatprep.subr.bf16.mxu0 %v4811
  %7313 = vmatpush1.bf16.msra.mxu0 %v4810
  %7314 = vmatprep.subr.bf16.mxu0 %v4807
  %7315 = vmatpush1.bf16.msra.mxu0 %v4806
  %7316 = vmatprep.subr.bf16.mxu0 %v4803
  %7317 = vmatpush1.bf16.msra.mxu0 %v4802
  %7318 = vmatprep.subr.bf16.mxu0 %v4799
  %7319 = vmatpush1.bf16.msra.mxu0 %v4798
  %7320 = vmatprep.subr.bf16.mxu0 %v4795
  %7321 = vmatpush1.bf16.msra.mxu0 %v4794
  %7322 = vmatprep.subr.bf16.mxu0 %v4791
  %7323 = vmatpush1.bf16.msra.mxu0 %v4790
  %7324 = vmatprep.subr.bf16.mxu0 %v4851
  %7325 = vmatpush2.bf16.msra.mxu0 %v4850
  %7326 = vmatprep.subr.bf16.mxu0 %v4847
  %7327 = vmatpush2.bf16.msra.mxu0 %v4846
  %7328 = vmatprep.subr.bf16.mxu0 %v4843
  %7329 = vmatpush2.bf16.msra.mxu0 %v4842
  %7330 = vmatprep.subr.bf16.mxu0 %v4839
  %7331 = vmatpush2.bf16.msra.mxu0 %v4838
  %7332 = vmatprep.subr.bf16.mxu0 %v4835
  %7333 = vmatpush2.bf16.msra.mxu0 %v4834
  %7334 = vmatprep.subr.bf16.mxu0 %v4831
  %7335 = vmatpush2.bf16.msra.mxu0 %v4830
  %7336 = vmatprep.subr.bf16.mxu0 %v4827
  %7337 = vmatpush2.bf16.msra.mxu0 %v4826
  %7338 = vmatprep.subr.bf16.mxu0 %v4823
  %7339 = vmatpush2.bf16.msra.mxu0 %v4822
  %7340 = vmatprep.mubr.bf16.mxu0 %v165
  %7341 = vmatmul.mubr.bf16.gmra.mxu0 %v164
  %v7342 = vpop.f32.mrf.mxu0
  %v7343 = vadd.f32 %v7302, %v7342
  %v7344 = vpop.f32.mrf.mxu0
  %v7345 = vadd.f32 %v7304, %v7344
  %v7346 = vpop.f32.mrf.mxu0
  %v7347 = vpop.f32.mrf.mxu0
  %7348 = vdwg.mxu0
  %7349 = vmatprep.subr.bf16.mxu0 %v4883
  %7350 = vmatpush1.bf16.msra.mxu0 %v4882
  %7351 = vmatprep.subr.bf16.mxu0 %v4879
  %7352 = vmatpush1.bf16.msra.mxu0 %v4878
  %7353 = vmatprep.subr.bf16.mxu0 %v4875
  %7354 = vmatpush1.bf16.msra.mxu0 %v4874
  %7355 = vmatprep.subr.bf16.mxu0 %v4871
  %7356 = vmatpush1.bf16.msra.mxu0 %v4870
  %7357 = vmatprep.subr.bf16.mxu0 %v4867
  %7358 = vmatpush1.bf16.msra.mxu0 %v4866
  %7359 = vmatprep.subr.bf16.mxu0 %v4863
  %7360 = vmatpush1.bf16.msra.mxu0 %v4862
  %7361 = vmatprep.subr.bf16.mxu0 %v4859
  %7362 = vmatpush1.bf16.msra.mxu0 %v4858
  %7363 = vmatprep.subr.bf16.mxu0 %v4855
  %7364 = vmatpush1.bf16.msra.mxu0 %v4854
  %7365 = vmatprep.subr.bf16.mxu0 %v4915
  %7366 = vmatpush2.bf16.msra.mxu0 %v4914
  %7367 = vmatprep.subr.bf16.mxu0 %v4911
  %7368 = vmatpush2.bf16.msra.mxu0 %v4910
  %7369 = vmatprep.subr.bf16.mxu0 %v4907
  %7370 = vmatpush2.bf16.msra.mxu0 %v4906
  %7371 = vmatprep.subr.bf16.mxu0 %v4903
  %7372 = vmatpush2.bf16.msra.mxu0 %v4902
  %7373 = vmatprep.subr.bf16.mxu0 %v4899
  %7374 = vmatpush2.bf16.msra.mxu0 %v4898
  %7375 = vmatprep.subr.bf16.mxu0 %v4895
  %7376 = vmatpush2.bf16.msra.mxu0 %v4894
  %7377 = vmatprep.subr.bf16.mxu0 %v4891
  %7378 = vmatpush2.bf16.msra.mxu0 %v4890
  %7379 = vmatprep.subr.bf16.mxu0 %v4887
  %7380 = vmatpush2.bf16.msra.mxu0 %v4886
  %7381 = vmatprep.mubr.bf16.mxu0 %v167
  %7382 = vmatmul.mubr.bf16.gmra.mxu0 %v166
  %v7383 = vpop.f32.mrf.mxu0
  %v7384 = vadd.f32 %v7343, %v7383
  %v7385 = vpop.f32.mrf.mxu0
  %v7386 = vadd.f32 %v7345, %v7385
  %v7387 = vpop.f32.mrf.mxu0
  %v7388 = vpop.f32.mrf.mxu0
  %7389 = vdwg.mxu0
  %7390 = vmatprep.subr.bf16.mxu0 %v4947
  %7391 = vmatpush1.bf16.msra.mxu0 %v4946
  %7392 = vmatprep.subr.bf16.mxu0 %v4943
  %7393 = vmatpush1.bf16.msra.mxu0 %v4942
  %7394 = vmatprep.subr.bf16.mxu0 %v4939
  %7395 = vmatpush1.bf16.msra.mxu0 %v4938
  %7396 = vmatprep.subr.bf16.mxu0 %v4935
  %7397 = vmatpush1.bf16.msra.mxu0 %v4934
  %7398 = vmatprep.subr.bf16.mxu0 %v4931
  %7399 = vmatpush1.bf16.msra.mxu0 %v4930
  %7400 = vmatprep.subr.bf16.mxu0 %v4927
  %7401 = vmatpush1.bf16.msra.mxu0 %v4926
  %7402 = vmatprep.subr.bf16.mxu0 %v4923
  %7403 = vmatpush1.bf16.msra.mxu0 %v4922
  %7404 = vmatprep.subr.bf16.mxu0 %v4919
  %7405 = vmatpush1.bf16.msra.mxu0 %v4918
  %7406 = vmatprep.subr.bf16.mxu0 %v4979
  %7407 = vmatpush2.bf16.msra.mxu0 %v4978
  %7408 = vmatprep.subr.bf16.mxu0 %v4975
  %7409 = vmatpush2.bf16.msra.mxu0 %v4974
  %7410 = vmatprep.subr.bf16.mxu0 %v4971
  %7411 = vmatpush2.bf16.msra.mxu0 %v4970
  %7412 = vmatprep.subr.bf16.mxu0 %v4967
  %7413 = vmatpush2.bf16.msra.mxu0 %v4966
  %7414 = vmatprep.subr.bf16.mxu0 %v4963
  %7415 = vmatpush2.bf16.msra.mxu0 %v4962
  %7416 = vmatprep.subr.bf16.mxu0 %v4959
  %7417 = vmatpush2.bf16.msra.mxu0 %v4958
  %7418 = vmatprep.subr.bf16.mxu0 %v4955
  %7419 = vmatpush2.bf16.msra.mxu0 %v4954
  %7420 = vmatprep.subr.bf16.mxu0 %v4951
  %7421 = vmatpush2.bf16.msra.mxu0 %v4950
  %7422 = vmatprep.mubr.bf16.mxu0 %v169
  %7423 = vmatmul.mubr.bf16.gmra.mxu0 %v168
  %v7424 = vpop.f32.mrf.mxu0
  %v7425 = vadd.f32 %v7384, %v7424
  %v7426 = vpop.f32.mrf.mxu0
  %v7427 = vadd.f32 %v7386, %v7426
  %v7428 = vpop.f32.mrf.mxu0
  %v7429 = vpop.f32.mrf.mxu0
  %7430 = vdwg.mxu0
  %7431 = vmatprep.subr.bf16.mxu0 %v5011
  %7432 = vmatpush1.bf16.msra.mxu0 %v5010
  %7433 = vmatprep.subr.bf16.mxu0 %v5007
  %7434 = vmatpush1.bf16.msra.mxu0 %v5006
  %7435 = vmatprep.subr.bf16.mxu0 %v5003
  %7436 = vmatpush1.bf16.msra.mxu0 %v5002
  %7437 = vmatprep.subr.bf16.mxu0 %v4999
  %7438 = vmatpush1.bf16.msra.mxu0 %v4998
  %7439 = vmatprep.subr.bf16.mxu0 %v4995
  %7440 = vmatpush1.bf16.msra.mxu0 %v4994
  %7441 = vmatprep.subr.bf16.mxu0 %v4991
  %7442 = vmatpush1.bf16.msra.mxu0 %v4990
  %7443 = vmatprep.subr.bf16.mxu0 %v4987
  %7444 = vmatpush1.bf16.msra.mxu0 %v4986
  %7445 = vmatprep.subr.bf16.mxu0 %v4983
  %7446 = vmatpush1.bf16.msra.mxu0 %v4982
  %7447 = vmatprep.subr.bf16.mxu0 %v5043
  %7448 = vmatpush2.bf16.msra.mxu0 %v5042
  %7449 = vmatprep.subr.bf16.mxu0 %v5039
  %7450 = vmatpush2.bf16.msra.mxu0 %v5038
  %7451 = vmatprep.subr.bf16.mxu0 %v5035
  %7452 = vmatpush2.bf16.msra.mxu0 %v5034
  %7453 = vmatprep.subr.bf16.mxu0 %v5031
  %7454 = vmatpush2.bf16.msra.mxu0 %v5030
  %7455 = vmatprep.subr.bf16.mxu0 %v5027
  %7456 = vmatpush2.bf16.msra.mxu0 %v5026
  %7457 = vmatprep.subr.bf16.mxu0 %v5023
  %7458 = vmatpush2.bf16.msra.mxu0 %v5022
  %7459 = vmatprep.subr.bf16.mxu0 %v5019
  %7460 = vmatpush2.bf16.msra.mxu0 %v5018
  %7461 = vmatprep.subr.bf16.mxu0 %v5015
  %7462 = vmatpush2.bf16.msra.mxu0 %v5014
  %7463 = vmatprep.mubr.bf16.mxu0 %v171
  %7464 = vmatmul.mubr.bf16.gmra.mxu0 %v170
  %v7465 = vpop.f32.mrf.mxu0
  %v7466 = vadd.f32 %v7425, %v7465
  %v7467 = vpop.f32.mrf.mxu0
  %v7468 = vadd.f32 %v7427, %v7467
  %v7469 = vpop.f32.mrf.mxu0
  %v7470 = vpop.f32.mrf.mxu0
  %7471 = vdwg.mxu0
  %7472 = vmatprep.subr.bf16.mxu0 %v5075
  %7473 = vmatpush1.bf16.msra.mxu0 %v5074
  %7474 = vmatprep.subr.bf16.mxu0 %v5071
  %7475 = vmatpush1.bf16.msra.mxu0 %v5070
  %7476 = vmatprep.subr.bf16.mxu0 %v5067
  %7477 = vmatpush1.bf16.msra.mxu0 %v5066
  %7478 = vmatprep.subr.bf16.mxu0 %v5063
  %7479 = vmatpush1.bf16.msra.mxu0 %v5062
  %7480 = vmatprep.subr.bf16.mxu0 %v5059
  %7481 = vmatpush1.bf16.msra.mxu0 %v5058
  %7482 = vmatprep.subr.bf16.mxu0 %v5055
  %7483 = vmatpush1.bf16.msra.mxu0 %v5054
  %7484 = vmatprep.subr.bf16.mxu0 %v5051
  %7485 = vmatpush1.bf16.msra.mxu0 %v5050
  %7486 = vmatprep.subr.bf16.mxu0 %v5047
  %7487 = vmatpush1.bf16.msra.mxu0 %v5046
  %7488 = vmatprep.subr.bf16.mxu0 %v5107
  %7489 = vmatpush2.bf16.msra.mxu0 %v5106
  %7490 = vmatprep.subr.bf16.mxu0 %v5103
  %7491 = vmatpush2.bf16.msra.mxu0 %v5102
  %7492 = vmatprep.subr.bf16.mxu0 %v5099
  %7493 = vmatpush2.bf16.msra.mxu0 %v5098
  %7494 = vmatprep.subr.bf16.mxu0 %v5095
  %7495 = vmatpush2.bf16.msra.mxu0 %v5094
  %7496 = vmatprep.subr.bf16.mxu0 %v5091
  %7497 = vmatpush2.bf16.msra.mxu0 %v5090
  %7498 = vmatprep.subr.bf16.mxu0 %v5087
  %7499 = vmatpush2.bf16.msra.mxu0 %v5086
  %7500 = vmatprep.subr.bf16.mxu0 %v5083
  %7501 = vmatpush2.bf16.msra.mxu0 %v5082
  %7502 = vmatprep.subr.bf16.mxu0 %v5079
  %7503 = vmatpush2.bf16.msra.mxu0 %v5078
  %7504 = vmatprep.mubr.bf16.mxu0 %v173
  %7505 = vmatmul.mubr.bf16.gmra.mxu0 %v172
  %v7506 = vpop.f32.mrf.mxu0
  %v7507 = vadd.f32 %v7466, %v7506
  %v7508 = vpop.f32.mrf.mxu0
  %v7509 = vadd.f32 %v7468, %v7508
  %v7510 = vpop.f32.mrf.mxu0
  %v7511 = vpop.f32.mrf.mxu0
  %7512 = vdwg.mxu0
  %7513 = vmatprep.subr.bf16.mxu0 %v5139
  %7514 = vmatpush1.bf16.msra.mxu0 %v5138
  %7515 = vmatprep.subr.bf16.mxu0 %v5135
  %7516 = vmatpush1.bf16.msra.mxu0 %v5134
  %7517 = vmatprep.subr.bf16.mxu0 %v5131
  %7518 = vmatpush1.bf16.msra.mxu0 %v5130
  %7519 = vmatprep.subr.bf16.mxu0 %v5127
  %7520 = vmatpush1.bf16.msra.mxu0 %v5126
  %7521 = vmatprep.subr.bf16.mxu0 %v5123
  %7522 = vmatpush1.bf16.msra.mxu0 %v5122
  %7523 = vmatprep.subr.bf16.mxu0 %v5119
  %7524 = vmatpush1.bf16.msra.mxu0 %v5118
  %7525 = vmatprep.subr.bf16.mxu0 %v5115
  %7526 = vmatpush1.bf16.msra.mxu0 %v5114
  %7527 = vmatprep.subr.bf16.mxu0 %v5111
  %7528 = vmatpush1.bf16.msra.mxu0 %v5110
  %7529 = vmatprep.subr.bf16.mxu0 %v5171
  %7530 = vmatpush2.bf16.msra.mxu0 %v5170
  %7531 = vmatprep.subr.bf16.mxu0 %v5167
  %7532 = vmatpush2.bf16.msra.mxu0 %v5166
  %7533 = vmatprep.subr.bf16.mxu0 %v5163
  %7534 = vmatpush2.bf16.msra.mxu0 %v5162
  %7535 = vmatprep.subr.bf16.mxu0 %v5159
  %7536 = vmatpush2.bf16.msra.mxu0 %v5158
  %7537 = vmatprep.subr.bf16.mxu0 %v5155
  %7538 = vmatpush2.bf16.msra.mxu0 %v5154
  %7539 = vmatprep.subr.bf16.mxu0 %v5151
  %7540 = vmatpush2.bf16.msra.mxu0 %v5150
  %7541 = vmatprep.subr.bf16.mxu0 %v5147
  %7542 = vmatpush2.bf16.msra.mxu0 %v5146
  %7543 = vmatprep.subr.bf16.mxu0 %v5143
  %7544 = vmatpush2.bf16.msra.mxu0 %v5142
  %7545 = vmatprep.mubr.bf16.mxu0 %v175
  %7546 = vmatmul.mubr.bf16.gmra.mxu0 %v174
  %v7547 = vpop.f32.mrf.mxu0
  %v7548 = vadd.f32 %v7507, %v7547
  %v7549 = vpop.f32.mrf.mxu0
  %v7550 = vadd.f32 %v7509, %v7549
  %v7551 = vpop.f32.mrf.mxu0
  %v7552 = vpop.f32.mrf.mxu0
  %7553 = vdwg.mxu0
  %7554 = vmatprep.subr.bf16.mxu0 %v5203
  %7555 = vmatpush1.bf16.msra.mxu0 %v5202
  %7556 = vmatprep.subr.bf16.mxu0 %v5199
  %7557 = vmatpush1.bf16.msra.mxu0 %v5198
  %7558 = vmatprep.subr.bf16.mxu0 %v5195
  %7559 = vmatpush1.bf16.msra.mxu0 %v5194
  %7560 = vmatprep.subr.bf16.mxu0 %v5191
  %7561 = vmatpush1.bf16.msra.mxu0 %v5190
  %7562 = vmatprep.subr.bf16.mxu0 %v5187
  %7563 = vmatpush1.bf16.msra.mxu0 %v5186
  %7564 = vmatprep.subr.bf16.mxu0 %v5183
  %7565 = vmatpush1.bf16.msra.mxu0 %v5182
  %7566 = vmatprep.subr.bf16.mxu0 %v5179
  %7567 = vmatpush1.bf16.msra.mxu0 %v5178
  %7568 = vmatprep.subr.bf16.mxu0 %v5175
  %7569 = vmatpush1.bf16.msra.mxu0 %v5174
  %7570 = vmatprep.subr.bf16.mxu0 %v5235
  %7571 = vmatpush2.bf16.msra.mxu0 %v5234
  %7572 = vmatprep.subr.bf16.mxu0 %v5231
  %7573 = vmatpush2.bf16.msra.mxu0 %v5230
  %7574 = vmatprep.subr.bf16.mxu0 %v5227
  %7575 = vmatpush2.bf16.msra.mxu0 %v5226
  %7576 = vmatprep.subr.bf16.mxu0 %v5223
  %7577 = vmatpush2.bf16.msra.mxu0 %v5222
  %7578 = vmatprep.subr.bf16.mxu0 %v5219
  %7579 = vmatpush2.bf16.msra.mxu0 %v5218
  %7580 = vmatprep.subr.bf16.mxu0 %v5215
  %7581 = vmatpush2.bf16.msra.mxu0 %v5214
  %7582 = vmatprep.subr.bf16.mxu0 %v5211
  %7583 = vmatpush2.bf16.msra.mxu0 %v5210
  %7584 = vmatprep.subr.bf16.mxu0 %v5207
  %7585 = vmatpush2.bf16.msra.mxu0 %v5206
  %7586 = vmatprep.mubr.bf16.mxu0 %v177
  %7587 = vmatmul.mubr.bf16.gmra.mxu0 %v176
  %v7588 = vpop.f32.mrf.mxu0
  %v7589 = vadd.f32 %v7548, %v7588
  %v7590 = vpop.f32.mrf.mxu0
  %v7591 = vadd.f32 %v7550, %v7590
  %v7592 = vpop.f32.mrf.mxu0
  %v7593 = vpop.f32.mrf.mxu0
  %7594 = vdwg.mxu0
  %7595 = vmatprep.subr.bf16.mxu0 %v5267
  %7596 = vmatpush1.bf16.msra.mxu0 %v5266
  %7597 = vmatprep.subr.bf16.mxu0 %v5263
  %7598 = vmatpush1.bf16.msra.mxu0 %v5262
  %7599 = vmatprep.subr.bf16.mxu0 %v5259
  %7600 = vmatpush1.bf16.msra.mxu0 %v5258
  %7601 = vmatprep.subr.bf16.mxu0 %v5255
  %7602 = vmatpush1.bf16.msra.mxu0 %v5254
  %7603 = vmatprep.subr.bf16.mxu0 %v5251
  %7604 = vmatpush1.bf16.msra.mxu0 %v5250
  %7605 = vmatprep.subr.bf16.mxu0 %v5247
  %7606 = vmatpush1.bf16.msra.mxu0 %v5246
  %7607 = vmatprep.subr.bf16.mxu0 %v5243
  %7608 = vmatpush1.bf16.msra.mxu0 %v5242
  %7609 = vmatprep.subr.bf16.mxu0 %v5239
  %7610 = vmatpush1.bf16.msra.mxu0 %v5238
  %7611 = vmatprep.subr.bf16.mxu0 %v5299
  %7612 = vmatpush2.bf16.msra.mxu0 %v5298
  %7613 = vmatprep.subr.bf16.mxu0 %v5295
  %7614 = vmatpush2.bf16.msra.mxu0 %v5294
  %7615 = vmatprep.subr.bf16.mxu0 %v5291
  %7616 = vmatpush2.bf16.msra.mxu0 %v5290
  %7617 = vmatprep.subr.bf16.mxu0 %v5287
  %7618 = vmatpush2.bf16.msra.mxu0 %v5286
  %7619 = vmatprep.subr.bf16.mxu0 %v5283
  %7620 = vmatpush2.bf16.msra.mxu0 %v5282
  %7621 = vmatprep.subr.bf16.mxu0 %v5279
  %7622 = vmatpush2.bf16.msra.mxu0 %v5278
  %7623 = vmatprep.subr.bf16.mxu0 %v5275
  %7624 = vmatpush2.bf16.msra.mxu0 %v5274
  %7625 = vmatprep.subr.bf16.mxu0 %v5271
  %7626 = vmatpush2.bf16.msra.mxu0 %v5270
  %7627 = vmatprep.mubr.bf16.mxu0 %v179
  %7628 = vmatmul.mubr.bf16.gmra.mxu0 %v178
  %v7629 = vpop.f32.mrf.mxu0
  %v7630 = vadd.f32 %v7589, %v7629
  %v7631 = vpop.f32.mrf.mxu0
  %v7632 = vadd.f32 %v7591, %v7631
  %v7633 = vpop.f32.mrf.mxu0
  %v7634 = vpop.f32.mrf.mxu0
  %7635 = vdwg.mxu0
  %v7636 = vrot.slane %v6974, 4
  %v7637 = vadd.f32 %v6974, %v7636
  %v7638 = vrot.slane %v7637, 2
  %v7639 = vadd.f32 %v7637, %v7638
  %v7640 = vrot.slane %v7639, 1
  %v7641 = vadd.f32 %v7639, %v7640
  %v7642 = vrot.slane %v6976, 4
  %v7643 = vadd.f32 %v6976, %v7642
  %v7644 = vrot.slane %v7643, 2
  %v7645 = vadd.f32 %v7643, %v7644
  %v7646 = vrot.slane %v7645, 1
  %v7647 = vadd.f32 %v7645, %v7646
  %v7648 = vrot.slane %v7630, 4
  %v7649 = vadd.f32 %v7630, %v7648
  %v7650 = vrot.slane %v7649, 2
  %v7651 = vadd.f32 %v7649, %v7650
  %v7652 = vrot.slane %v7651, 1
  %v7653 = vadd.f32 %v7651, %v7652
  %v7654 = vrot.slane %v7632, 4
  %v7655 = vadd.f32 %v7632, %v7654
  %v7656 = vrot.slane %v7655, 2
  %v7657 = vadd.f32 %v7655, %v7656
  %v7658 = vrot.slane %v7657, 1
  %v7659 = vadd.f32 %v7657, %v7658
  %v7660 = vmul.f32 %v6974, %v6974
  %v7661 = vmul.f32 %v6976, %v6976
  %v7662 = vmul.f32 %v7630, %v7630
  %v7663 = vmul.f32 %v7632, %v7632
  %v7664 = vrot.slane %v7660, 4
  %v7665 = vadd.f32 %v7660, %v7664
  %v7666 = vrot.slane %v7665, 2
  %v7667 = vadd.f32 %v7665, %v7666
  %v7668 = vrot.slane %v7667, 1
  %v7669 = vadd.f32 %v7667, %v7668
  %v7670 = vrot.slane %v7661, 4
  %v7671 = vadd.f32 %v7661, %v7670
  %v7672 = vrot.slane %v7671, 2
  %v7673 = vadd.f32 %v7671, %v7672
  %v7674 = vrot.slane %v7673, 1
  %v7675 = vadd.f32 %v7673, %v7674
  %v7676 = vrot.slane %v7662, 4
  %v7677 = vadd.f32 %v7662, %v7676
  %v7678 = vrot.slane %v7677, 2
  %v7679 = vadd.f32 %v7677, %v7678
  %v7680 = vrot.slane %v7679, 1
  %v7681 = vadd.f32 %v7679, %v7680
  %v7682 = vrot.slane %v7663, 4
  %v7683 = vadd.f32 %v7663, %v7682
  %v7684 = vrot.slane %v7683, 2
  %v7685 = vadd.f32 %v7683, %v7684
  %v7686 = vrot.slane %v7685, 1
  %v7687 = vadd.f32 %v7685, %v7686
  %v7688 = vmul.f32 %v7641, 0.125
  %v7689 = vmul.f32 %v7647, 0.125
  %v7690 = vmul.f32 %v7653, 0.125
  %v7691 = vmul.f32 %v7659, 0.125
  %v7692 = vmul.f32 %v7669, 0.125
  %v7693 = vmul.f32 %v7675, 0.125
  %v7694 = vmul.f32 %v7681, 0.125
  %v7695 = vmul.f32 %v7687, 0.125
  %v7696 = vmul.f32 %v7688, %v7688
  %v7697 = vmul.f32 %v7689, %v7689
  %v7698 = vmul.f32 %v7690, %v7690
  %v7699 = vmul.f32 %v7691, %v7691
  %v7700 = vsub.f32 %v7692, %v7696
  %v7701 = vsub.f32 %v7693, %v7697
  %v7702 = vsub.f32 %v7694, %v7698
  %v7703 = vsub.f32 %v7695, %v7699
  %v7704 = vld [vmem:[%s3] sm:$0xf]
  %v7705 = vadd.f32 %v7700, 1e-05
  %v7706 = vadd.f32 %v7701, 1e-05
  %v7707 = vadd.f32 %v7702, 1e-05
  %v7708 = vadd.f32 %v7703, 1e-05
  %v7709 = vrsqrt.pop %v7705
  %v7710 = vrsqrt.pop %v7706
  %v7711 = vrsqrt.pop %v7707
  %v7712 = vrsqrt.pop %v7708
  %v7717 = vcombine.low %v7709, %v7710
  %v7718 = vcombine.low %v7711, %v7712
  %v7720 = vunpack.c.l.s4 1966171168
  %v7721 = vunpack.c.0.s8 %v7720
  %v7722 = vlaneseq
  %v7723 = vshrl.u32 %v7722, 7
  %v7724 = vsub.s32 %v7721, %v7723
  %v7725 = vrot.slane %v7717, %v7724
  %v7727 = vunpack.c.l.s4 1966171168
  %v7728 = vunpack.c.0.s8 %v7727
  %v7729 = vlaneseq
  %v7730 = vshrl.u32 %v7729, 7
  %v7731 = vsub.s32 %v7728, %v7730
  %v7732 = vrot.slane %v7718, %v7731
  %v7733 = vcombine.low %v7725, %v7732
  %v7735 = vunpack.c.l.s4 1966171168
  %v7736 = vunpack.c.0.s8 %v7735
  %v7737 = vlaneseq
  %v7738 = vshrl.u32 %v7737, 7
  %v7739 = vsub.s32 %v7736, %v7738
  %v7740 = vrot.slane %v7733, %v7739
  %v7742 = vmul.f32 %v7704, %v7740
  %v7743 = vld [vmem:[%s4] sm:$0xf]
  %v7745 = vlaneseq
  %v7746 = vshrl.u32 %v7745, 7
  %v7747 = vsub.s32 0, %v7746
  %v7748 = vrot.slane %v7742, %v7747
  %v7749 = vlaneseq
  %v7750 = vshrl.u32 %v7749, 7
  %v7751 = vsub.s32 1, %v7750
  %v7752 = vrot.slane %v7742, %v7751
  %v7753 = vlaneseq
  %v7754 = vshrl.u32 %v7753, 7
  %v7755 = vsub.s32 2, %v7754
  %v7756 = vrot.slane %v7742, %v7755
  %v7757 = vlaneseq
  %v7758 = vshrl.u32 %v7757, 7
  %v7759 = vsub.s32 3, %v7758
  %v7760 = vrot.slane %v7742, %v7759
  %v7765 = vmul.f32 %v7688, %v7748
  %v7766 = vmul.f32 %v7689, %v7752
  %v7767 = vmul.f32 %v7690, %v7756
  %v7768 = vmul.f32 %v7691, %v7760
  %v7773 = vcombine.low %v7765, %v7766
  %v7774 = vcombine.low %v7767, %v7768
  %v7776 = vunpack.c.l.s4 1966171168
  %v7777 = vunpack.c.0.s8 %v7776
  %v7778 = vlaneseq
  %v7779 = vshrl.u32 %v7778, 7
  %v7780 = vsub.s32 %v7777, %v7779
  %v7781 = vrot.slane %v7773, %v7780
  %v7783 = vunpack.c.l.s4 1966171168
  %v7784 = vunpack.c.0.s8 %v7783
  %v7785 = vlaneseq
  %v7786 = vshrl.u32 %v7785, 7
  %v7787 = vsub.s32 %v7784, %v7786
  %v7788 = vrot.slane %v7774, %v7787
  %v7789 = vcombine.low %v7781, %v7788
  %v7791 = vunpack.c.l.s4 1966171168
  %v7792 = vunpack.c.0.s8 %v7791
  %v7793 = vlaneseq
  %v7794 = vshrl.u32 %v7793, 7
  %v7795 = vsub.s32 %v7792, %v7794
  %v7796 = vrot.slane %v7789, %v7795
  %v7798 = vsub.f32 %v7743, %v7796
  %v7799 = vmul.f32 %v6974, %v7748
  %v7800 = vmul.f32 %v6976, %v7752
  %v7801 = vmul.f32 %v7630, %v7756
  %v7802 = vmul.f32 %v7632, %v7760
  %v7804 = vlaneseq
  %v7805 = vshrl.u32 %v7804, 7
  %v7806 = vsub.s32 0, %v7805
  %v7807 = vrot.slane %v7798, %v7806
  %v7808 = vlaneseq
  %v7809 = vshrl.u32 %v7808, 7
  %v7810 = vsub.s32 1, %v7809
  %v7811 = vrot.slane %v7798, %v7810
  %v7812 = vlaneseq
  %v7813 = vshrl.u32 %v7812, 7
  %v7814 = vsub.s32 2, %v7813
  %v7815 = vrot.slane %v7798, %v7814
  %v7816 = vlaneseq
  %v7817 = vshrl.u32 %v7816, 7
  %v7818 = vsub.s32 3, %v7817
  %v7819 = vrot.slane %v7798, %v7818
  %v7824 = vadd.f32 %v7799, %v7807
  %v7825 = vadd.f32 %v7800, %v7811
  %v7826 = vadd.f32 %v7801, %v7815
  %v7827 = vadd.f32 %v7802, %v7819
  %vm7828 = vcmp.ge.f32.partialorder %v7824, 0.0
  %vm7829 = vcmp.ge.f32.partialorder %v7825, 0.0
  %vm7830 = vcmp.ge.f32.partialorder %v7826, 0.0
  %vm7831 = vcmp.ge.f32.partialorder %v7827, 0.0
  %v7832 = vmul.f32 %v7824, 0.2
  %v7833 = vmul.f32 %v7825, 0.2
  %v7834 = vmul.f32 %v7826, 0.2
  %v7835 = vmul.f32 %v7827, 0.2
  %v7836 = vsel %vm7828, %v7824, %v7832
  %v7837 = vsel %vm7829, %v7825, %v7833
  %v7838 = vsel %vm7830, %v7826, %v7834
  %v7839 = vsel %vm7831, %v7827, %v7835
  %7840 = vst [vmem:[%s5] sm:$0xff] %v7836
  %7841 = vst [vmem:[%s5 + $0x8] sm:$0xff] %v7837
  %7842 = vst [vmem:[%s5 + $0x10] sm:$0xff] %v7838
  %7843 = vst [vmem:[%s5 + $0x18] sm:$0xff] %v7839
  // Predicated region
  $region22: #{discriminator_forward.14} parent=0 // pred_check
    _
  $region23: #{discriminator_forward.14} parent=0 // pred_check_branch
    %7845 = sbr.rel (0) target = $region25
  $region24: #{discriminator_forward.14} parent=0 // pred_region
    _
  $region25: #{discriminator_forward.14} parent=0 // pred_fallthru
    _
  // Predicated region
  $region26: #{discriminator_forward.14} parent=0 // pred_check
    _
  $region27: #{discriminator_forward.14} parent=0 // pred_check_branch
    %7847 = sbr.rel (0) target = $region29
  $region28: #{discriminator_forward.14} parent=0 // pred_region
    _
  $region29: #{discriminator_forward.14} parent=0 // pred_fallthru
    _

</llo_original>
